<compile_context>
chip_gen: v7x
topology: tpu7x:2x2x1
jax: 0.10.0
libtpu: 0.0.40
codegen_flags: <defaults>
</compile_context>

<pallas_src>
import jax
import jax.numpy as jnp
from jax.experimental import pallas as pl
from jax.experimental.pallas import tpu as pltpu

# Fixed LeNet geometry (the torch module hard-codes 32x32 via fc1 = 16*5*5).
H_IN = W_IN = 32
K = 5
C1, C2 = 6, 16                  # conv1 / conv2 output channels
OH1 = H_IN - K + 1              # 28  conv1 output side
PH1 = OH1 // 2                  # 14  after 2x2 maxpool
OH2 = PH1 - K + 1               # 10  conv2 output side
PH2 = OH2 // 2                  # 5   after 2x2 maxpool
FC_PAD = 128                    # fc1 (120) / fc2 (84) hidden dims padded to 128
OUT_PAD = 128                   # logits padded to a full lane tile
N_CLASSES = 10
B_TILE = 16                     # images per grid step (== bf16 sublane tile)


# ----------------------------------------------------------------------------
# Fused kernel: B_TILE images per grid step, everything resident in VMEM.
# Activation layout: rows = (h, b) with b fastest (B_TILE per h),
#                    lanes = (w, c) with c fastest.
# ----------------------------------------------------------------------------
def _lenet_kernel(x_ref, w1rb_ref, s1_ref, bt1_ref, w2rb_ref, s2_ref, bt2_ref,
                  w1f_ref, b1f_ref, w2f_ref, b2f_ref, w3f_ref, b3f_ref,
                  o_ref,
                  acc1_ref, hp1_ref, pool1_ref, acc2_ref, hp2_ref):
    f32, bf16 = jnp.float32, jnp.bfloat16
    BT = B_TILE

    # ---- conv block 1: 5 banded matmuls (kw folded into the weights) --------
    n1 = OH1 * BT                                         # 448 rows = (oh, b)
    acc1_ref[...] = jnp.dot(x_ref[0:n1, :], w1rb_ref[0],
                            preferred_element_type=f32)
    for kh in range(1, K):
        acc1_ref[...] += jnp.dot(x_ref[kh * BT:kh * BT + n1, :], w1rb_ref[kh],
                                 preferred_element_type=f32)
    # height pool: rows are (oh, b) with b fastest -> whole-tile maxima
    for u in range(PH1):
        hp1_ref[u * BT:(u + 1) * BT, :] = jnp.maximum(
            acc1_ref[(2 * u) * BT:(2 * u + 1) * BT, :],
            acc1_ref[(2 * u + 1) * BT:(2 * u + 2) * BT, :])
    # width pool on (ow, c) lanes: shifted-lane max, compact via 0/1 matmul,
    # then bias + ReLU once on the pooled block.
    m1 = jnp.maximum(hp1_ref[:, 0:OH1 * C1 - C1], hp1_ref[:, C1:OH1 * C1])
    p1 = jnp.dot(m1.astype(bf16), s1_ref[...], preferred_element_type=f32)
    pool1_ref[...] = jnp.maximum(p1 + bt1_ref[...], 0.0).astype(bf16)

    # ---- conv block 2 --------------------------------------------------------
    n2 = OH2 * BT                                         # 160 rows
    acc2_ref[...] = jnp.dot(pool1_ref[0:n2, :], w2rb_ref[0],
                            preferred_element_type=f32)
    for kh in range(1, K):
        acc2_ref[...] += jnp.dot(pool1_ref[kh * BT:kh * BT + n2, :],
                                 w2rb_ref[kh], preferred_element_type=f32)
    for u in range(PH2):
        hp2_ref[u * BT:(u + 1) * BT, :] = jnp.maximum(
            acc2_ref[(2 * u) * BT:(2 * u + 1) * BT, :],
            acc2_ref[(2 * u + 1) * BT:(2 * u + 2) * BT, :])
    m2 = jnp.maximum(hp2_ref[:, 0:OH2 * C2 - C2], hp2_ref[:, C2:OH2 * C2])
    p2 = jnp.dot(m2.astype(bf16), s2_ref[...], preferred_element_type=f32)
    pool2 = jnp.maximum(p2 + bt2_ref[...], 0.0).astype(bf16)   # (5*BT, 80)

    # ---- MLP head (NCHW flatten folded into fc1's packed weights) ------------
    h1 = b1f_ref[...]                                           # (1, 128) f32
    for h in range(PH2):
        h1 = h1 + jnp.dot(pool2[h * BT:(h + 1) * BT, :], w1f_ref[h],
                          preferred_element_type=f32)
    h1 = jnp.maximum(h1, 0.0).astype(bf16)                      # (BT, 128)
    h2 = jnp.dot(h1, w2f_ref[...], preferred_element_type=f32) + b2f_ref[...]
    h2 = jnp.maximum(h2, 0.0).astype(bf16)
    o_ref[...] = jnp.dot(h2, w3f_ref[...],
                         preferred_element_type=f32) + b3f_ref[...]


# ----------------------------------------------------------------------------
# Wrapper: one pallas_call for the whole network.
# ----------------------------------------------------------------------------
def lenet_forward_packed(x_nchw, packed):
    """x_nchw: (B, Cin, 32, 32) float32 -> logits (B, 10) float32."""
    (w1rb, s1, bt1, w2rb, s2, bt2, w1f, b1f, w2f, b2f, w3f, b3f) = packed
    B, c_in = x_nchw.shape[0], x_nchw.shape[1]
    nt = -(-B // B_TILE)
    b_pad = nt * B_TILE

    # NCHW -> (B, H, W*C) lane-dense layout, batch padded to a multiple of
    # B_TILE, then rows reordered to (h, b) within each batch tile.
    x = jnp.transpose(x_nchw, (0, 2, 3, 1)).reshape(B, H_IN, W_IN * c_in)
    if b_pad != B:
        x = jnp.pad(x, ((0, b_pad - B), (0, 0), (0, 0)))
    x = x.reshape(nt, B_TILE, H_IN, W_IN * c_in).transpose(0, 2, 1, 3)
    x = x.reshape(nt, H_IN * B_TILE, W_IN * c_in).astype(jnp.bfloat16)

    def full(a):  # whole-array block, resident across all grid steps
        return pl.BlockSpec(a.shape, lambda i, _nd=a.ndim: (0,) * _nd)

    out = pl.pallas_call(
        _lenet_kernel,
        out_shape=jax.ShapeDtypeStruct((b_pad, OUT_PAD), jnp.float32),
        grid=(nt,),
        in_specs=[
            pl.BlockSpec((None, H_IN * B_TILE, W_IN * c_in),
                         lambda i: (i, 0, 0)),
            full(w1rb), full(s1), full(bt1),
            full(w2rb), full(s2), full(bt2),
            full(w1f), full(b1f), full(w2f), full(b2f), full(w3f), full(b3f),
        ],
        out_specs=pl.BlockSpec((B_TILE, OUT_PAD), lambda i: (i, 0)),
        scratch_shapes=[
            pltpu.VMEM((OH1 * B_TILE, OH1 * C1), jnp.float32),   # conv1 acc
            pltpu.VMEM((PH1 * B_TILE, OH1 * C1), jnp.float32),   # conv1 h-pool
            pltpu.VMEM((PH1 * B_TILE, PH1 * C1), jnp.bfloat16),  # pooled1
            pltpu.VMEM((OH2 * B_TILE, OH2 * C2), jnp.float32),   # conv2 acc
            pltpu.VMEM((PH2 * B_TILE, OH2 * C2), jnp.float32),   # conv2 h-pool
        ],
        compiler_params=pltpu.CompilerParams(
            dimension_semantics=("parallel",),
            vmem_limit_bytes=32 * 1024 * 1024),
    )(x, w1rb, s1, bt1, w2rb, s2, bt2, w1f, b1f, w2f, b2f, w3f, b3f)
    return out[:B, :N_CLASSES]


def lenet_forward(x_nchw, params):
    return lenet_forward_packed(x_nchw, pack_params(params))


# ----------------------------------------------------------------------------
# Parameter init (PyTorch layouts) and packing into kernel layouts.
# ----------------------------------------------------------------------------
def init_params(key, color_channels=3):
    ks = jax.random.split(key, 10)

    def uni(k, shape, fan_in):
        bound = 1.0 / jnp.sqrt(jnp.float32(fan_in))
        return jax.random.uniform(k, shape, jnp.float32, -bound, bound)

    return {  # PyTorch conventions: conv (Cout,Cin,KH,KW), fc (out,in)
        "conv1_w": uni(ks[0], (C1, color_channels, K, K), color_channels * K * K),
        "conv1_b": uni(ks[1], (C1,), color_channels * K * K),
        "conv2_w": uni(ks[2], (C2, C1, K, K), C1 * K * K),
        "conv2_b": uni(ks[3], (C2,), C1 * K * K),
        "fc1_w": uni(ks[4], (120, C2 * PH2 * PH2), 400), "fc1_b": uni(ks[5], (120,), 400),
        "fc2_w": uni(ks[6], (84, 120), 120),             "fc2_b": uni(ks[7], (84,), 120),
        "fc3_w": uni(ks[8], (N_CLASSES, 84), 84),        "fc3_b": uni(ks[9], (N_CLASSES,), 84),
    }


def _banded_conv_weight(w_oihw, in_w, out_w):
    """Banded ("row-tap") matrices: (K, in_w*Cin, out_w*Cout); B[kh][w*Ci+ci,
    ow*Co+co] = W[co, ci, kh, w-ow] for 0 <= w-ow < K, else 0."""
    f32 = jnp.float32
    band = (jnp.arange(in_w)[:, None, None]
            == (jnp.arange(out_w)[None, :, None]
                + jnp.arange(K)[None, None, :])).astype(f32)      # (in_w, out_w, K)
    wt = jnp.transpose(w_oihw, (2, 3, 1, 0)).astype(f32)          # (kh, kw, ci, co)
    cin, cout = wt.shape[2], wt.shape[3]
    big = jnp.einsum('wok,hkic->hwioc', band, wt)                 # (K,in_w,ci,out_w,co)
    return big.reshape(K, in_w * cin, out_w * cout).astype(jnp.bfloat16)


def _pool_select(out_w, c):
    """0/1 matrix compacting shifted-max lanes (2v*c + j) -> (v*c + j)."""
    rows = (2 * c * jnp.arange(out_w)[:, None] + jnp.arange(c)[None, :]).reshape(-1)
    cols = (c * jnp.arange(out_w)[:, None] + jnp.arange(c)[None, :]).reshape(-1)
    s = jnp.zeros((2 * out_w * c - c, out_w * c), jnp.float32)
    return s.at[rows, cols].set(1.0).astype(jnp.bfloat16)


def pack_params(p):
    bf16, f32 = jnp.bfloat16, jnp.float32
    c_in = p["conv1_w"].shape[1]

    # Conv layers -> banded matmul weights, (w, c)-lane layout.
    w1rb = _banded_conv_weight(p["conv1_w"], W_IN, OH1)           # (5, 32*Cin, 168)
    w2rb = _banded_conv_weight(p["conv2_w"], PH1, OH2)            # (5, 84, 160)
    # Width-pool compaction matrices and per-lane bias tiles.
    s1 = _pool_select(PH1, C1)                                    # (162, 84)
    s2 = _pool_select(PH2, C2)                                    # (144, 80)
    bt1 = jnp.tile(p["conv1_b"], PH1).reshape(1, PH1 * C1).astype(f32)
    bt2 = jnp.tile(p["conv2_b"], PH2).reshape(1, PH2 * C2).astype(f32)

    # fc1: fold the NCHW flatten permutation (c,h,w) -> in-kernel (h, w*C2+c).
    w1f = p["fc1_w"].reshape(120, C2, PH2, PH2)                   # (n, c, h, w)
    w1f = jnp.transpose(w1f, (2, 3, 1, 0)).reshape(PH2, PH2 * C2, 120)
    w1f = jnp.pad(w1f, ((0, 0), (0, 0), (0, FC_PAD - 120))).astype(bf16)
    b1f = jnp.pad(p["fc1_b"], (0, FC_PAD - 120)).reshape(1, FC_PAD).astype(f32)
    w2f = jnp.pad(p["fc2_w"].T, ((0, FC_PAD - 120), (0, FC_PAD - 84))).astype(bf16)
    b2f = jnp.pad(p["fc2_b"], (0, FC_PAD - 84)).reshape(1, FC_PAD).astype(f32)
    w3f = jnp.pad(p["fc3_w"].T,
                  ((0, FC_PAD - 84), (0, OUT_PAD - N_CLASSES))).astype(bf16)
    b3f = jnp.pad(p["fc3_b"], (0, OUT_PAD - N_CLASSES)).reshape(1, OUT_PAD).astype(f32)
    return (w1rb, s1, bt1, w2rb, s2, bt2, w1f, b1f, w2f, b2f, w3f, b3f)


# ----------------------------------------------------------------------------
# Pure-JAX f32 reference (mirrors the PyTorch module) for a tolerance check.
# ----------------------------------------------------------------------------
def lenet_reference(x_nchw, p):
    def conv(x, w, b):
        y = jax.lax.conv_general_dilated(
            x, w, (1, 1), "VALID", dimension_numbers=("NCHW", "OIHW", "NCHW"))
        return y + b[None, :, None, None]

    def pool(x):
        return jax.lax.reduce_window(x, -jnp.inf, jax.lax.max,
                                     (1, 1, 2, 2), (1, 1, 2, 2), "VALID")

    y = pool(jax.nn.relu(conv(x_nchw, p["conv1_w"], p["conv1_b"])))
    y = pool(jax.nn.relu(conv(y, p["conv2_w"], p["conv2_b"])))
    y = y.reshape(y.shape[0], -1)                       # NCHW flatten
    y = jax.nn.relu(y @ p["fc1_w"].T + p["fc1_b"])
    y = jax.nn.relu(y @ p["fc2_w"].T + p["fc2_b"])
    return y @ p["fc3_w"].T + p["fc3_b"]


if __name__ == "__main__":
    key = jax.random.PRNGKey(0)
    k_x, k_p = jax.random.split(key)

    # Shapes fixed by the module (fc1 = 16*5*5 forces 32x32); batch of 32 gives
    # two grid steps of B_TILE=16 images each.
    B = 32
    x = jax.random.normal(k_x, (B, 3, H_IN, W_IN), jnp.float32)
    params = init_params(k_p, color_channels=3)
    packed = pack_params(params)          # pack once, outside the hot path

    fwd = jax.jit(lenet_forward_packed)
    out = jax.block_until_ready(fwd(x, packed))
    assert out.shape == (B, N_CLASSES) and out.dtype == jnp.float32

    ref = lenet_reference(x, params)
    err = float(jnp.max(jnp.abs(out - ref)))
    assert err < 5e-2, f"max abs error vs f32 reference: {err}"

    print("KERNEL_OK")
</pallas_src>

<mosaic_0001>
module attributes {stable_mosaic.version = 11 : i64} {
  func.func @_lenet_kernel(%arg0: i32, %arg1: memref<1x512x96xbf16, #tpu.memory_space<vmem>>, %arg2: memref<5x96x168xbf16, #tpu.memory_space<vmem>>, %arg3: memref<162x84xbf16, #tpu.memory_space<vmem>>, %arg4: memref<1x84xf32, #tpu.memory_space<vmem>>, %arg5: memref<5x84x160xbf16, #tpu.memory_space<vmem>>, %arg6: memref<144x80xbf16, #tpu.memory_space<vmem>>, %arg7: memref<1x80xf32, #tpu.memory_space<vmem>>, %arg8: memref<5x80x128xbf16, #tpu.memory_space<vmem>>, %arg9: memref<1x128xf32, #tpu.memory_space<vmem>>, %arg10: memref<128x128xbf16, #tpu.memory_space<vmem>>, %arg11: memref<1x128xf32, #tpu.memory_space<vmem>>, %arg12: memref<128x128xbf16, #tpu.memory_space<vmem>>, %arg13: memref<1x128xf32, #tpu.memory_space<vmem>>, %arg14: memref<16x128xf32, #tpu.memory_space<vmem>>, %arg15: memref<448x168xf32, #tpu.memory_space<vmem>>, %arg16: memref<224x168xf32, #tpu.memory_space<vmem>>, %arg17: memref<224x84xbf16, #tpu.memory_space<vmem>>, %arg18: memref<160x160xf32, #tpu.memory_space<vmem>>, %arg19: memref<80x160xf32, #tpu.memory_space<vmem>>) attributes {dimension_semantics = [#tpu.dimension_semantics<parallel>], iteration_bounds = array<i64: 2>, scalar_prefetch = 0 : i64, scratch_operands = 5 : i64, tpu.core_type = #tpu.core_type<tc>, window_params = [{transform_indices = @transform_0, window_bounds = array<i64: 1, 512, 96>}, {pipeline_mode = #tpu.pipeline_mode<synchronous>, transform_indices = @transform_1, window_bounds = array<i64: 5, 96, 168>}, {pipeline_mode = #tpu.pipeline_mode<synchronous>, transform_indices = @transform_2, window_bounds = array<i64: 162, 84>}, {pipeline_mode = #tpu.pipeline_mode<synchronous>, transform_indices = @transform_3, window_bounds = array<i64: 1, 84>}, {pipeline_mode = #tpu.pipeline_mode<synchronous>, transform_indices = @transform_4, window_bounds = array<i64: 5, 84, 160>}, {pipeline_mode = #tpu.pipeline_mode<synchronous>, transform_indices = @transform_5, window_bounds = array<i64: 144, 80>}, {pipeline_mode = #tpu.pipeline_mode<synchronous>, transform_indices = @transform_6, window_bounds = array<i64: 1, 80>}, {pipeline_mode = #tpu.pipeline_mode<synchronous>, transform_indices = @transform_7, window_bounds = array<i64: 5, 80, 128>}, {pipeline_mode = #tpu.pipeline_mode<synchronous>, transform_indices = @transform_8, window_bounds = array<i64: 1, 128>}, {pipeline_mode = #tpu.pipeline_mode<synchronous>, transform_indices = @transform_9, window_bounds = array<i64: 128, 128>}, {pipeline_mode = #tpu.pipeline_mode<synchronous>, transform_indices = @transform_10, window_bounds = array<i64: 1, 128>}, {pipeline_mode = #tpu.pipeline_mode<synchronous>, transform_indices = @transform_11, window_bounds = array<i64: 128, 128>}, {pipeline_mode = #tpu.pipeline_mode<synchronous>, transform_indices = @transform_12, window_bounds = array<i64: 1, 128>}, {transform_indices = @transform_13, window_bounds = array<i64: 16, 128>}]} {
    %c0 = arith.constant 0 : index
    %c0_0 = arith.constant 0 : index
    %c0_1 = arith.constant 0 : index
    %0 = vector.load %arg1[%c0, %c0_0, %c0_1] : memref<1x512x96xbf16, #tpu.memory_space<vmem>>, vector<1x448x96xbf16>
    %1 = vector.shape_cast %0 : vector<1x448x96xbf16> to vector<448x96xbf16>
    %c0_2 = arith.constant 0 : index
    %c0_3 = arith.constant 0 : index
    %c0_4 = arith.constant 0 : index
    %2 = vector.load %arg2[%c0_2, %c0_3, %c0_4] : memref<5x96x168xbf16, #tpu.memory_space<vmem>>, vector<1x96x168xbf16>
    %3 = vector.shape_cast %2 : vector<1x96x168xbf16> to vector<96x168xbf16>
    %cst = arith.constant dense<0.000000e+00> : vector<448x168xf32>
    %4 = tpu.matmul %1, %3, %cst {dimension_numbers = #tpu.dot_dimension_numbers<[1], [0], [0], [1], [0, 0, 1, 1], [], []>} : vector<448x96xbf16>, vector<96x168xbf16>, vector<448x168xf32> -> vector<448x168xf32>
    %c0_5 = arith.constant 0 : index
    %c0_6 = arith.constant 0 : index
    %5 = vector.load %arg15[%c0_5, %c0_6] : memref<448x168xf32, #tpu.memory_space<vmem>>, vector<448x168xf32>
    tpu.vector_store %arg15[%c0_5, %c0_6], %4 {strides = array<i32>} : memref<448x168xf32, #tpu.memory_space<vmem>>, vector<448x168xf32>,
    %c0_7 = arith.constant 0 : index
    %c0_8 = arith.constant 0 : index
    %6 = vector.load %arg15[%c0_7, %c0_8] : memref<448x168xf32, #tpu.memory_space<vmem>>, vector<448x168xf32>
    %c0_9 = arith.constant 0 : index
    %c16 = arith.constant 16 : index
    %c0_10 = arith.constant 0 : index
    %7 = vector.load %arg1[%c0_9, %c16, %c0_10] : memref<1x512x96xbf16, #tpu.memory_space<vmem>>, vector<1x448x96xbf16>
    %8 = vector.shape_cast %7 : vector<1x448x96xbf16> to vector<448x96xbf16>
    %c1 = arith.constant 1 : index
    %c0_11 = arith.constant 0 : index
    %c0_12 = arith.constant 0 : index
    %9 = vector.load %arg2[%c1, %c0_11, %c0_12] : memref<5x96x168xbf16, #tpu.memory_space<vmem>>, vector<1x96x168xbf16>
    %10 = vector.shape_cast %9 : vector<1x96x168xbf16> to vector<96x168xbf16>
    %cst_13 = arith.constant dense<0.000000e+00> : vector<448x168xf32>
    %11 = tpu.matmul %8, %10, %cst_13 {dimension_numbers = #tpu.dot_dimension_numbers<[1], [0], [0], [1], [0, 0, 1, 1], [], []>} : vector<448x96xbf16>, vector<96x168xbf16>, vector<448x168xf32> -> vector<448x168xf32>
    %12 = arith.addf %6, %11 : vector<448x168xf32>
    %c0_14 = arith.constant 0 : index
    %c0_15 = arith.constant 0 : index
    %13 = vector.load %arg15[%c0_14, %c0_15] : memref<448x168xf32, #tpu.memory_space<vmem>>, vector<448x168xf32>
    tpu.vector_store %arg15[%c0_14, %c0_15], %12 {strides = array<i32>} : memref<448x168xf32, #tpu.memory_space<vmem>>, vector<448x168xf32>,
    %c0_16 = arith.constant 0 : index
    %c0_17 = arith.constant 0 : index
    %14 = vector.load %arg15[%c0_16, %c0_17] : memref<448x168xf32, #tpu.memory_space<vmem>>, vector<448x168xf32>
    %c0_18 = arith.constant 0 : index
    %c32 = arith.constant 32 : index
    %c0_19 = arith.constant 0 : index
    %15 = vector.load %arg1[%c0_18, %c32, %c0_19] : memref<1x512x96xbf16, #tpu.memory_space<vmem>>, vector<1x448x96xbf16>
    %16 = vector.shape_cast %15 : vector<1x448x96xbf16> to vector<448x96xbf16>
    %c2 = arith.constant 2 : index
    %c0_20 = arith.constant 0 : index
    %c0_21 = arith.constant 0 : index
    %17 = vector.load %arg2[%c2, %c0_20, %c0_21] : memref<5x96x168xbf16, #tpu.memory_space<vmem>>, vector<1x96x168xbf16>
    %18 = vector.shape_cast %17 : vector<1x96x168xbf16> to vector<96x168xbf16>
    %cst_22 = arith.constant dense<0.000000e+00> : vector<448x168xf32>
    %19 = tpu.matmul %16, %18, %cst_22 {dimension_numbers = #tpu.dot_dimension_numbers<[1], [0], [0], [1], [0, 0, 1, 1], [], []>} : vector<448x96xbf16>, vector<96x168xbf16>, vector<448x168xf32> -> vector<448x168xf32>
    %20 = arith.addf %14, %19 : vector<448x168xf32>
    %c0_23 = arith.constant 0 : index
    %c0_24 = arith.constant 0 : index
    %21 = vector.load %arg15[%c0_23, %c0_24] : memref<448x168xf32, #tpu.memory_space<vmem>>, vector<448x168xf32>
    tpu.vector_store %arg15[%c0_23, %c0_24], %20 {strides = array<i32>} : memref<448x168xf32, #tpu.memory_space<vmem>>, vector<448x168xf32>,
    %c0_25 = arith.constant 0 : index
    %c0_26 = arith.constant 0 : index
    %22 = vector.load %arg15[%c0_25, %c0_26] : memref<448x168xf32, #tpu.memory_space<vmem>>, vector<448x168xf32>
    %c0_27 = arith.constant 0 : index
    %c48 = arith.constant 48 : index
    %c0_28 = arith.constant 0 : index
    %23 = vector.load %arg1[%c0_27, %c48, %c0_28] : memref<1x512x96xbf16, #tpu.memory_space<vmem>>, vector<1x448x96xbf16>
    %24 = vector.shape_cast %23 : vector<1x448x96xbf16> to vector<448x96xbf16>
    %c3 = arith.constant 3 : index
    %c0_29 = arith.constant 0 : index
    %c0_30 = arith.constant 0 : index
    %25 = vector.load %arg2[%c3, %c0_29, %c0_30] : memref<5x96x168xbf16, #tpu.memory_space<vmem>>, vector<1x96x168xbf16>
    %26 = vector.shape_cast %25 : vector<1x96x168xbf16> to vector<96x168xbf16>
    %cst_31 = arith.constant dense<0.000000e+00> : vector<448x168xf32>
    %27 = tpu.matmul %24, %26, %cst_31 {dimension_numbers = #tpu.dot_dimension_numbers<[1], [0], [0], [1], [0, 0, 1, 1], [], []>} : vector<448x96xbf16>, vector<96x168xbf16>, vector<448x168xf32> -> vector<448x168xf32>
    %28 = arith.addf %22, %27 : vector<448x168xf32>
    %c0_32 = arith.constant 0 : index
    %c0_33 = arith.constant 0 : index
    %29 = vector.load %arg15[%c0_32, %c0_33] : memref<448x168xf32, #tpu.memory_space<vmem>>, vector<448x168xf32>
    tpu.vector_store %arg15[%c0_32, %c0_33], %28 {strides = array<i32>} : memref<448x168xf32, #tpu.memory_space<vmem>>, vector<448x168xf32>,
    %c0_34 = arith.constant 0 : index
    %c0_35 = arith.constant 0 : index
    %30 = vector.load %arg15[%c0_34, %c0_35] : memref<448x168xf32, #tpu.memory_space<vmem>>, vector<448x168xf32>
    %c0_36 = arith.constant 0 : index
    %c64 = arith.constant 64 : index
    %c0_37 = arith.constant 0 : index
    %31 = vector.load %arg1[%c0_36, %c64, %c0_37] : memref<1x512x96xbf16, #tpu.memory_space<vmem>>, vector<1x448x96xbf16>
    %32 = vector.shape_cast %31 : vector<1x448x96xbf16> to vector<448x96xbf16>
    %c4 = arith.constant 4 : index
    %c0_38 = arith.constant 0 : index
    %c0_39 = arith.constant 0 : index
    %33 = vector.load %arg2[%c4, %c0_38, %c0_39] : memref<5x96x168xbf16, #tpu.memory_space<vmem>>, vector<1x96x168xbf16>
    %34 = vector.shape_cast %33 : vector<1x96x168xbf16> to vector<96x168xbf16>
    %cst_40 = arith.constant dense<0.000000e+00> : vector<448x168xf32>
    %35 = tpu.matmul %32, %34, %cst_40 {dimension_numbers = #tpu.dot_dimension_numbers<[1], [0], [0], [1], [0, 0, 1, 1], [], []>} : vector<448x96xbf16>, vector<96x168xbf16>, vector<448x168xf32> -> vector<448x168xf32>
    %36 = arith.addf %30, %35 : vector<448x168xf32>
    %c0_41 = arith.constant 0 : index
    %c0_42 = arith.constant 0 : index
    %37 = vector.load %arg15[%c0_41, %c0_42] : memref<448x168xf32, #tpu.memory_space<vmem>>, vector<448x168xf32>
    tpu.vector_store %arg15[%c0_41, %c0_42], %36 {strides = array<i32>} : memref<448x168xf32, #tpu.memory_space<vmem>>, vector<448x168xf32>,
    %c0_43 = arith.constant 0 : index
    %c0_44 = arith.constant 0 : index
    %38 = vector.load %arg15[%c0_43, %c0_44] : memref<448x168xf32, #tpu.memory_space<vmem>>, vector<16x168xf32>
    %c16_45 = arith.constant 16 : index
    %c0_46 = arith.constant 0 : index
    %39 = vector.load %arg15[%c16_45, %c0_46] : memref<448x168xf32, #tpu.memory_space<vmem>>, vector<16x168xf32>
    %40 = arith.maximumf %38, %39 : vector<16x168xf32>
    %c0_47 = arith.constant 0 : index
    %c0_48 = arith.constant 0 : index
    %41 = vector.load %arg16[%c0_47, %c0_48] : memref<224x168xf32, #tpu.memory_space<vmem>>, vector<16x168xf32>
    tpu.vector_store %arg16[%c0_47, %c0_48], %40 {strides = array<i32>} : memref<224x168xf32, #tpu.memory_space<vmem>>, vector<16x168xf32>,
    %c32_49 = arith.constant 32 : index
    %c0_50 = arith.constant 0 : index
    %42 = vector.load %arg15[%c32_49, %c0_50] : memref<448x168xf32, #tpu.memory_space<vmem>>, vector<16x168xf32>
    %c48_51 = arith.constant 48 : index
    %c0_52 = arith.constant 0 : index
    %43 = vector.load %arg15[%c48_51, %c0_52] : memref<448x168xf32, #tpu.memory_space<vmem>>, vector<16x168xf32>
    %44 = arith.maximumf %42, %43 : vector<16x168xf32>
    %c16_53 = arith.constant 16 : index
    %c0_54 = arith.constant 0 : index
    %45 = vector.load %arg16[%c16_53, %c0_54] : memref<224x168xf32, #tpu.memory_space<vmem>>, vector<16x168xf32>
    tpu.vector_store %arg16[%c16_53, %c0_54], %44 {strides = array<i32>} : memref<224x168xf32, #tpu.memory_space<vmem>>, vector<16x168xf32>,
    %c64_55 = arith.constant 64 : index
    %c0_56 = arith.constant 0 : index
    %46 = vector.load %arg15[%c64_55, %c0_56] : memref<448x168xf32, #tpu.memory_space<vmem>>, vector<16x168xf32>
    %c80 = arith.constant 80 : index
    %c0_57 = arith.constant 0 : index
    %47 = vector.load %arg15[%c80, %c0_57] : memref<448x168xf32, #tpu.memory_space<vmem>>, vector<16x168xf32>
    %48 = arith.maximumf %46, %47 : vector<16x168xf32>
    %c32_58 = arith.constant 32 : index
    %c0_59 = arith.constant 0 : index
    %49 = vector.load %arg16[%c32_58, %c0_59] : memref<224x168xf32, #tpu.memory_space<vmem>>, vector<16x168xf32>
    tpu.vector_store %arg16[%c32_58, %c0_59], %48 {strides = array<i32>} : memref<224x168xf32, #tpu.memory_space<vmem>>, vector<16x168xf32>,
    %c96 = arith.constant 96 : index
    %c0_60 = arith.constant 0 : index
    %50 = vector.load %arg15[%c96, %c0_60] : memref<448x168xf32, #tpu.memory_space<vmem>>, vector<16x168xf32>
    %c112 = arith.constant 112 : index
    %c0_61 = arith.constant 0 : index
    %51 = vector.load %arg15[%c112, %c0_61] : memref<448x168xf32, #tpu.memory_space<vmem>>, vector<16x168xf32>
    %52 = arith.maximumf %50, %51 : vector<16x168xf32>
    %c48_62 = arith.constant 48 : index
    %c0_63 = arith.constant 0 : index
    %53 = vector.load %arg16[%c48_62, %c0_63] : memref<224x168xf32, #tpu.memory_space<vmem>>, vector<16x168xf32>
    tpu.vector_store %arg16[%c48_62, %c0_63], %52 {strides = array<i32>} : memref<224x168xf32, #tpu.memory_space<vmem>>, vector<16x168xf32>,
    %c128 = arith.constant 128 : index
    %c0_64 = arith.constant 0 : index
    %54 = vector.load %arg15[%c128, %c0_64] : memref<448x168xf32, #tpu.memory_space<vmem>>, vector<16x168xf32>
    %c144 = arith.constant 144 : index
    %c0_65 = arith.constant 0 : index
    %55 = vector.load %arg15[%c144, %c0_65] : memref<448x168xf32, #tpu.memory_space<vmem>>, vector<16x168xf32>
    %56 = arith.maximumf %54, %55 : vector<16x168xf32>
    %c64_66 = arith.constant 64 : index
    %c0_67 = arith.constant 0 : index
    %57 = vector.load %arg16[%c64_66, %c0_67] : memref<224x168xf32, #tpu.memory_space<vmem>>, vector<16x168xf32>
    tpu.vector_store %arg16[%c64_66, %c0_67], %56 {strides = array<i32>} : memref<224x168xf32, #tpu.memory_space<vmem>>, vector<16x168xf32>,
    %c160 = arith.constant 160 : index
    %c0_68 = arith.constant 0 : index
    %58 = vector.load %arg15[%c160, %c0_68] : memref<448x168xf32, #tpu.memory_space<vmem>>, vector<16x168xf32>
    %c176 = arith.constant 176 : index
    %c0_69 = arith.constant 0 : index
    %59 = vector.load %arg15[%c176, %c0_69] : memref<448x168xf32, #tpu.memory_space<vmem>>, vector<16x168xf32>
    %60 = arith.maximumf %58, %59 : vector<16x168xf32>
    %c80_70 = arith.constant 80 : index
    %c0_71 = arith.constant 0 : index
    %61 = vector.load %arg16[%c80_70, %c0_71] : memref<224x168xf32, #tpu.memory_space<vmem>>, vector<16x168xf32>
    tpu.vector_store %arg16[%c80_70, %c0_71], %60 {strides = array<i32>} : memref<224x168xf32, #tpu.memory_space<vmem>>, vector<16x168xf32>,
    %c192 = arith.constant 192 : index
    %c0_72 = arith.constant 0 : index
    %62 = vector.load %arg15[%c192, %c0_72] : memref<448x168xf32, #tpu.memory_space<vmem>>, vector<16x168xf32>
    %c208 = arith.constant 208 : index
    %c0_73 = arith.constant 0 : index
    %63 = vector.load %arg15[%c208, %c0_73] : memref<448x168xf32, #tpu.memory_space<vmem>>, vector<16x168xf32>
    %64 = arith.maximumf %62, %63 : vector<16x168xf32>
    %c96_74 = arith.constant 96 : index
    %c0_75 = arith.constant 0 : index
    %65 = vector.load %arg16[%c96_74, %c0_75] : memref<224x168xf32, #tpu.memory_space<vmem>>, vector<16x168xf32>
    tpu.vector_store %arg16[%c96_74, %c0_75], %64 {strides = array<i32>} : memref<224x168xf32, #tpu.memory_space<vmem>>, vector<16x168xf32>,
    %c224 = arith.constant 224 : index
    %c0_76 = arith.constant 0 : index
    %66 = vector.load %arg15[%c224, %c0_76] : memref<448x168xf32, #tpu.memory_space<vmem>>, vector<16x168xf32>
    %c240 = arith.constant 240 : index
    %c0_77 = arith.constant 0 : index
    %67 = vector.load %arg15[%c240, %c0_77] : memref<448x168xf32, #tpu.memory_space<vmem>>, vector<16x168xf32>
    %68 = arith.maximumf %66, %67 : vector<16x168xf32>
    %c112_78 = arith.constant 112 : index
    %c0_79 = arith.constant 0 : index
    %69 = vector.load %arg16[%c112_78, %c0_79] : memref<224x168xf32, #tpu.memory_space<vmem>>, vector<16x168xf32>
    tpu.vector_store %arg16[%c112_78, %c0_79], %68 {strides = array<i32>} : memref<224x168xf32, #tpu.memory_space<vmem>>, vector<16x168xf32>,
    %c256 = arith.constant 256 : index
    %c0_80 = arith.constant 0 : index
    %70 = vector.load %arg15[%c256, %c0_80] : memref<448x168xf32, #tpu.memory_space<vmem>>, vector<16x168xf32>
    %c272 = arith.constant 272 : index
    %c0_81 = arith.constant 0 : index
    %71 = vector.load %arg15[%c272, %c0_81] : memref<448x168xf32, #tpu.memory_space<vmem>>, vector<16x168xf32>
    %72 = arith.maximumf %70, %71 : vector<16x168xf32>
    %c128_82 = arith.constant 128 : index
    %c0_83 = arith.constant 0 : index
    %73 = vector.load %arg16[%c128_82, %c0_83] : memref<224x168xf32, #tpu.memory_space<vmem>>, vector<16x168xf32>
    tpu.vector_store %arg16[%c128_82, %c0_83], %72 {strides = array<i32>} : memref<224x168xf32, #tpu.memory_space<vmem>>, vector<16x168xf32>,
    %c288 = arith.constant 288 : index
    %c0_84 = arith.constant 0 : index
    %74 = vector.load %arg15[%c288, %c0_84] : memref<448x168xf32, #tpu.memory_space<vmem>>, vector<16x168xf32>
    %c304 = arith.constant 304 : index
    %c0_85 = arith.constant 0 : index
    %75 = vector.load %arg15[%c304, %c0_85] : memref<448x168xf32, #tpu.memory_space<vmem>>, vector<16x168xf32>
    %76 = arith.maximumf %74, %75 : vector<16x168xf32>
    %c144_86 = arith.constant 144 : index
    %c0_87 = arith.constant 0 : index
    %77 = vector.load %arg16[%c144_86, %c0_87] : memref<224x168xf32, #tpu.memory_space<vmem>>, vector<16x168xf32>
    tpu.vector_store %arg16[%c144_86, %c0_87], %76 {strides = array<i32>} : memref<224x168xf32, #tpu.memory_space<vmem>>, vector<16x168xf32>,
    %c320 = arith.constant 320 : index
    %c0_88 = arith.constant 0 : index
    %78 = vector.load %arg15[%c320, %c0_88] : memref<448x168xf32, #tpu.memory_space<vmem>>, vector<16x168xf32>
    %c336 = arith.constant 336 : index
    %c0_89 = arith.constant 0 : index
    %79 = vector.load %arg15[%c336, %c0_89] : memref<448x168xf32, #tpu.memory_space<vmem>>, vector<16x168xf32>
    %80 = arith.maximumf %78, %79 : vector<16x168xf32>
    %c160_90 = arith.constant 160 : index
    %c0_91 = arith.constant 0 : index
    %81 = vector.load %arg16[%c160_90, %c0_91] : memref<224x168xf32, #tpu.memory_space<vmem>>, vector<16x168xf32>
    tpu.vector_store %arg16[%c160_90, %c0_91], %80 {strides = array<i32>} : memref<224x168xf32, #tpu.memory_space<vmem>>, vector<16x168xf32>,
    %c352 = arith.constant 352 : index
    %c0_92 = arith.constant 0 : index
    %82 = vector.load %arg15[%c352, %c0_92] : memref<448x168xf32, #tpu.memory_space<vmem>>, vector<16x168xf32>
    %c368 = arith.constant 368 : index
    %c0_93 = arith.constant 0 : index
    %83 = vector.load %arg15[%c368, %c0_93] : memref<448x168xf32, #tpu.memory_space<vmem>>, vector<16x168xf32>
    %84 = arith.maximumf %82, %83 : vector<16x168xf32>
    %c176_94 = arith.constant 176 : index
    %c0_95 = arith.constant 0 : index
    %85 = vector.load %arg16[%c176_94, %c0_95] : memref<224x168xf32, #tpu.memory_space<vmem>>, vector<16x168xf32>
    tpu.vector_store %arg16[%c176_94, %c0_95], %84 {strides = array<i32>} : memref<224x168xf32, #tpu.memory_space<vmem>>, vector<16x168xf32>,
    %c384 = arith.constant 384 : index
    %c0_96 = arith.constant 0 : index
    %86 = vector.load %arg15[%c384, %c0_96] : memref<448x168xf32, #tpu.memory_space<vmem>>, vector<16x168xf32>
    %c400 = arith.constant 400 : index
    %c0_97 = arith.constant 0 : index
    %87 = vector.load %arg15[%c400, %c0_97] : memref<448x168xf32, #tpu.memory_space<vmem>>, vector<16x168xf32>
    %88 = arith.maximumf %86, %87 : vector<16x168xf32>
    %c192_98 = arith.constant 192 : index
    %c0_99 = arith.constant 0 : index
    %89 = vector.load %arg16[%c192_98, %c0_99] : memref<224x168xf32, #tpu.memory_space<vmem>>, vector<16x168xf32>
    tpu.vector_store %arg16[%c192_98, %c0_99], %88 {strides = array<i32>} : memref<224x168xf32, #tpu.memory_space<vmem>>, vector<16x168xf32>,
    %c416 = arith.constant 416 : index
    %c0_100 = arith.constant 0 : index
    %90 = vector.load %arg15[%c416, %c0_100] : memref<448x168xf32, #tpu.memory_space<vmem>>, vector<16x168xf32>
    %c432 = arith.constant 432 : index
    %c0_101 = arith.constant 0 : index
    %91 = vector.load %arg15[%c432, %c0_101] : memref<448x168xf32, #tpu.memory_space<vmem>>, vector<16x168xf32>
    %92 = arith.maximumf %90, %91 : vector<16x168xf32>
    %c208_102 = arith.constant 208 : index
    %c0_103 = arith.constant 0 : index
    %93 = vector.load %arg16[%c208_102, %c0_103] : memref<224x168xf32, #tpu.memory_space<vmem>>, vector<16x168xf32>
    tpu.vector_store %arg16[%c208_102, %c0_103], %92 {strides = array<i32>} : memref<224x168xf32, #tpu.memory_space<vmem>>, vector<16x168xf32>,
    %c0_104 = arith.constant 0 : index
    %c0_105 = arith.constant 0 : index
    %94 = vector.load %arg16[%c0_104, %c0_105] : memref<224x168xf32, #tpu.memory_space<vmem>>, vector<224x162xf32>
    %c0_106 = arith.constant 0 : index
    %c6 = arith.constant 6 : index
    %95 = vector.load %arg16[%c0_106, %c6] : memref<224x168xf32, #tpu.memory_space<vmem>>, vector<224x162xf32>
    %96 = arith.maximumf %94, %95 : vector<224x162xf32>
    %97 = arith.truncf %96 : vector<224x162xf32> to vector<224x162xbf16>
    %c0_107 = arith.constant 0 : index
    %c0_108 = arith.constant 0 : index
    %98 = vector.load %arg3[%c0_107, %c0_108] : memref<162x84xbf16, #tpu.memory_space<vmem>>, vector<162x84xbf16>
    %cst_109 = arith.constant dense<0.000000e+00> : vector<224x84xf32>
    %99 = tpu.matmul %97, %98, %cst_109 {dimension_numbers = #tpu.dot_dimension_numbers<[1], [0], [0], [1], [0, 0, 1, 1], [], []>} : vector<224x162xbf16>, vector<162x84xbf16>, vector<224x84xf32> -> vector<224x84xf32>
    %c0_110 = arith.constant 0 : index
    %c0_111 = arith.constant 0 : index
    %100 = vector.load %arg4[%c0_110, %c0_111] : memref<1x84xf32, #tpu.memory_space<vmem>>, vector<1x84xf32>
    %101 = vector.broadcast %100 : vector<1x84xf32> to vector<224x84xf32>
    %102 = arith.addf %99, %101 : vector<224x84xf32>
    %cst_112 = arith.constant 0.000000e+00 : f32
    %103 = vector.broadcast %cst_112 : f32 to vector<224x84xf32>
    %104 = arith.maximumf %102, %103 : vector<224x84xf32>
    %105 = arith.truncf %104 : vector<224x84xf32> to vector<224x84xbf16>
    %c0_113 = arith.constant 0 : index
    %c0_114 = arith.constant 0 : index
    %106 = vector.load %arg17[%c0_113, %c0_114] : memref<224x84xbf16, #tpu.memory_space<vmem>>, vector<224x84xbf16>
    tpu.vector_store %arg17[%c0_113, %c0_114], %105 {strides = array<i32>} : memref<224x84xbf16, #tpu.memory_space<vmem>>, vector<224x84xbf16>,
    %c0_115 = arith.constant 0 : index
    %c0_116 = arith.constant 0 : index
    %107 = vector.load %arg17[%c0_115, %c0_116] : memref<224x84xbf16, #tpu.memory_space<vmem>>, vector<160x84xbf16>
    %c0_117 = arith.constant 0 : index
    %c0_118 = arith.constant 0 : index
    %c0_119 = arith.constant 0 : index
    %108 = vector.load %arg5[%c0_117, %c0_118, %c0_119] : memref<5x84x160xbf16, #tpu.memory_space<vmem>>, vector<1x84x160xbf16>
    %109 = vector.shape_cast %108 : vector<1x84x160xbf16> to vector<84x160xbf16>
    %cst_120 = arith.constant dense<0.000000e+00> : vector<160x160xf32>
    %110 = tpu.matmul %107, %109, %cst_120 {dimension_numbers = #tpu.dot_dimension_numbers<[1], [0], [0], [1], [0, 0, 1, 1], [], []>} : vector<160x84xbf16>, vector<84x160xbf16>, vector<160x160xf32> -> vector<160x160xf32>
    %c0_121 = arith.constant 0 : index
    %c0_122 = arith.constant 0 : index
    %111 = vector.load %arg18[%c0_121, %c0_122] : memref<160x160xf32, #tpu.memory_space<vmem>>, vector<160x160xf32>
    tpu.vector_store %arg18[%c0_121, %c0_122], %110 {strides = array<i32>} : memref<160x160xf32, #tpu.memory_space<vmem>>, vector<160x160xf32>,
    %c0_123 = arith.constant 0 : index
    %c0_124 = arith.constant 0 : index
    %112 = vector.load %arg18[%c0_123, %c0_124] : memref<160x160xf32, #tpu.memory_space<vmem>>, vector<160x160xf32>
    %c16_125 = arith.constant 16 : index
    %c0_126 = arith.constant 0 : index
    %113 = vector.load %arg17[%c16_125, %c0_126] : memref<224x84xbf16, #tpu.memory_space<vmem>>, vector<160x84xbf16>
    %c1_127 = arith.constant 1 : index
    %c0_128 = arith.constant 0 : index
    %c0_129 = arith.constant 0 : index
    %114 = vector.load %arg5[%c1_127, %c0_128, %c0_129] : memref<5x84x160xbf16, #tpu.memory_space<vmem>>, vector<1x84x160xbf16>
    %115 = vector.shape_cast %114 : vector<1x84x160xbf16> to vector<84x160xbf16>
    %cst_130 = arith.constant dense<0.000000e+00> : vector<160x160xf32>
    %116 = tpu.matmul %113, %115, %cst_130 {dimension_numbers = #tpu.dot_dimension_numbers<[1], [0], [0], [1], [0, 0, 1, 1], [], []>} : vector<160x84xbf16>, vector<84x160xbf16>, vector<160x160xf32> -> vector<160x160xf32>
    %117 = arith.addf %112, %116 : vector<160x160xf32>
    %c0_131 = arith.constant 0 : index
    %c0_132 = arith.constant 0 : index
    %118 = vector.load %arg18[%c0_131, %c0_132] : memref<160x160xf32, #tpu.memory_space<vmem>>, vector<160x160xf32>
    tpu.vector_store %arg18[%c0_131, %c0_132], %117 {strides = array<i32>} : memref<160x160xf32, #tpu.memory_space<vmem>>, vector<160x160xf32>,
    %c0_133 = arith.constant 0 : index
    %c0_134 = arith.constant 0 : index
    %119 = vector.load %arg18[%c0_133, %c0_134] : memref<160x160xf32, #tpu.memory_space<vmem>>, vector<160x160xf32>
    %c32_135 = arith.constant 32 : index
    %c0_136 = arith.constant 0 : index
    %120 = vector.load %arg17[%c32_135, %c0_136] : memref<224x84xbf16, #tpu.memory_space<vmem>>, vector<160x84xbf16>
    %c2_137 = arith.constant 2 : index
    %c0_138 = arith.constant 0 : index
    %c0_139 = arith.constant 0 : index
    %121 = vector.load %arg5[%c2_137, %c0_138, %c0_139] : memref<5x84x160xbf16, #tpu.memory_space<vmem>>, vector<1x84x160xbf16>
    %122 = vector.shape_cast %121 : vector<1x84x160xbf16> to vector<84x160xbf16>
    %cst_140 = arith.constant dense<0.000000e+00> : vector<160x160xf32>
    %123 = tpu.matmul %120, %122, %cst_140 {dimension_numbers = #tpu.dot_dimension_numbers<[1], [0], [0], [1], [0, 0, 1, 1], [], []>} : vector<160x84xbf16>, vector<84x160xbf16>, vector<160x160xf32> -> vector<160x160xf32>
    %124 = arith.addf %119, %123 : vector<160x160xf32>
    %c0_141 = arith.constant 0 : index
    %c0_142 = arith.constant 0 : index
    %125 = vector.load %arg18[%c0_141, %c0_142] : memref<160x160xf32, #tpu.memory_space<vmem>>, vector<160x160xf32>
    tpu.vector_store %arg18[%c0_141, %c0_142], %124 {strides = array<i32>} : memref<160x160xf32, #tpu.memory_space<vmem>>, vector<160x160xf32>,
    %c0_143 = arith.constant 0 : index
    %c0_144 = arith.constant 0 : index
    %126 = vector.load %arg18[%c0_143, %c0_144] : memref<160x160xf32, #tpu.memory_space<vmem>>, vector<160x160xf32>
    %c48_145 = arith.constant 48 : index
    %c0_146 = arith.constant 0 : index
    %127 = vector.load %arg17[%c48_145, %c0_146] : memref<224x84xbf16, #tpu.memory_space<vmem>>, vector<160x84xbf16>
    %c3_147 = arith.constant 3 : index
    %c0_148 = arith.constant 0 : index
    %c0_149 = arith.constant 0 : index
    %128 = vector.load %arg5[%c3_147, %c0_148, %c0_149] : memref<5x84x160xbf16, #tpu.memory_space<vmem>>, vector<1x84x160xbf16>
    %129 = vector.shape_cast %128 : vector<1x84x160xbf16> to vector<84x160xbf16>
    %cst_150 = arith.constant dense<0.000000e+00> : vector<160x160xf32>
    %130 = tpu.matmul %127, %129, %cst_150 {dimension_numbers = #tpu.dot_dimension_numbers<[1], [0], [0], [1], [0, 0, 1, 1], [], []>} : vector<160x84xbf16>, vector<84x160xbf16>, vector<160x160xf32> -> vector<160x160xf32>
    %131 = arith.addf %126, %130 : vector<160x160xf32>
    %c0_151 = arith.constant 0 : index
    %c0_152 = arith.constant 0 : index
    %132 = vector.load %arg18[%c0_151, %c0_152] : memref<160x160xf32, #tpu.memory_space<vmem>>, vector<160x160xf32>
    tpu.vector_store %arg18[%c0_151, %c0_152], %131 {strides = array<i32>} : memref<160x160xf32, #tpu.memory_space<vmem>>, vector<160x160xf32>,
    %c0_153 = arith.constant 0 : index
    %c0_154 = arith.constant 0 : index
    %133 = vector.load %arg18[%c0_153, %c0_154] : memref<160x160xf32, #tpu.memory_space<vmem>>, vector<160x160xf32>
    %c64_155 = arith.constant 64 : index
    %c0_156 = arith.constant 0 : index
    %134 = vector.load %arg17[%c64_155, %c0_156] : memref<224x84xbf16, #tpu.memory_space<vmem>>, vector<160x84xbf16>
    %c4_157 = arith.constant 4 : index
    %c0_158 = arith.constant 0 : index
    %c0_159 = arith.constant 0 : index
    %135 = vector.load %arg5[%c4_157, %c0_158, %c0_159] : memref<5x84x160xbf16, #tpu.memory_space<vmem>>, vector<1x84x160xbf16>
    %136 = vector.shape_cast %135 : vector<1x84x160xbf16> to vector<84x160xbf16>
    %cst_160 = arith.constant dense<0.000000e+00> : vector<160x160xf32>
    %137 = tpu.matmul %134, %136, %cst_160 {dimension_numbers = #tpu.dot_dimension_numbers<[1], [0], [0], [1], [0, 0, 1, 1], [], []>} : vector<160x84xbf16>, vector<84x160xbf16>, vector<160x160xf32> -> vector<160x160xf32>
    %138 = arith.addf %133, %137 : vector<160x160xf32>
    %c0_161 = arith.constant 0 : index
    %c0_162 = arith.constant 0 : index
    %139 = vector.load %arg18[%c0_161, %c0_162] : memref<160x160xf32, #tpu.memory_space<vmem>>, vector<160x160xf32>
    tpu.vector_store %arg18[%c0_161, %c0_162], %138 {strides = array<i32>} : memref<160x160xf32, #tpu.memory_space<vmem>>, vector<160x160xf32>,
    %c0_163 = arith.constant 0 : index
    %c0_164 = arith.constant 0 : index
    %140 = vector.load %arg18[%c0_163, %c0_164] : memref<160x160xf32, #tpu.memory_space<vmem>>, vector<16x160xf32>
    %c16_165 = arith.constant 16 : index
    %c0_166 = arith.constant 0 : index
    %141 = vector.load %arg18[%c16_165, %c0_166] : memref<160x160xf32, #tpu.memory_space<vmem>>, vector<16x160xf32>
    %142 = arith.maximumf %140, %141 : vector<16x160xf32>
    %c0_167 = arith.constant 0 : index
    %c0_168 = arith.constant 0 : index
    %143 = vector.load %arg19[%c0_167, %c0_168] : memref<80x160xf32, #tpu.memory_space<vmem>>, vector<16x160xf32>
    tpu.vector_store %arg19[%c0_167, %c0_168], %142 {strides = array<i32>} : memref<80x160xf32, #tpu.memory_space<vmem>>, vector<16x160xf32>,
    %c32_169 = arith.constant 32 : index
    %c0_170 = arith.constant 0 : index
    %144 = vector.load %arg18[%c32_169, %c0_170] : memref<160x160xf32, #tpu.memory_space<vmem>>, vector<16x160xf32>
    %c48_171 = arith.constant 48 : index
    %c0_172 = arith.constant 0 : index
    %145 = vector.load %arg18[%c48_171, %c0_172] : memref<160x160xf32, #tpu.memory_space<vmem>>, vector<16x160xf32>
    %146 = arith.maximumf %144, %145 : vector<16x160xf32>
    %c16_173 = arith.constant 16 : index
    %c0_174 = arith.constant 0 : index
    %147 = vector.load %arg19[%c16_173, %c0_174] : memref<80x160xf32, #tpu.memory_space<vmem>>, vector<16x160xf32>
    tpu.vector_store %arg19[%c16_173, %c0_174], %146 {strides = array<i32>} : memref<80x160xf32, #tpu.memory_space<vmem>>, vector<16x160xf32>,
    %c64_175 = arith.constant 64 : index
    %c0_176 = arith.constant 0 : index
    %148 = vector.load %arg18[%c64_175, %c0_176] : memref<160x160xf32, #tpu.memory_space<vmem>>, vector<16x160xf32>
    %c80_177 = arith.constant 80 : index
    %c0_178 = arith.constant 0 : index
    %149 = vector.load %arg18[%c80_177, %c0_178] : memref<160x160xf32, #tpu.memory_space<vmem>>, vector<16x160xf32>
    %150 = arith.maximumf %148, %149 : vector<16x160xf32>
    %c32_179 = arith.constant 32 : index
    %c0_180 = arith.constant 0 : index
    %151 = vector.load %arg19[%c32_179, %c0_180] : memref<80x160xf32, #tpu.memory_space<vmem>>, vector<16x160xf32>
    tpu.vector_store %arg19[%c32_179, %c0_180], %150 {strides = array<i32>} : memref<80x160xf32, #tpu.memory_space<vmem>>, vector<16x160xf32>,
    %c96_181 = arith.constant 96 : index
    %c0_182 = arith.constant 0 : index
    %152 = vector.load %arg18[%c96_181, %c0_182] : memref<160x160xf32, #tpu.memory_space<vmem>>, vector<16x160xf32>
    %c112_183 = arith.constant 112 : index
    %c0_184 = arith.constant 0 : index
    %153 = vector.load %arg18[%c112_183, %c0_184] : memref<160x160xf32, #tpu.memory_space<vmem>>, vector<16x160xf32>
    %154 = arith.maximumf %152, %153 : vector<16x160xf32>
    %c48_185 = arith.constant 48 : index
    %c0_186 = arith.constant 0 : index
    %155 = vector.load %arg19[%c48_185, %c0_186] : memref<80x160xf32, #tpu.memory_space<vmem>>, vector<16x160xf32>
    tpu.vector_store %arg19[%c48_185, %c0_186], %154 {strides = array<i32>} : memref<80x160xf32, #tpu.memory_space<vmem>>, vector<16x160xf32>,
    %c128_187 = arith.constant 128 : index
    %c0_188 = arith.constant 0 : index
    %156 = vector.load %arg18[%c128_187, %c0_188] : memref<160x160xf32, #tpu.memory_space<vmem>>, vector<16x160xf32>
    %c144_189 = arith.constant 144 : index
    %c0_190 = arith.constant 0 : index
    %157 = vector.load %arg18[%c144_189, %c0_190] : memref<160x160xf32, #tpu.memory_space<vmem>>, vector<16x160xf32>
    %158 = arith.maximumf %156, %157 : vector<16x160xf32>
    %c64_191 = arith.constant 64 : index
    %c0_192 = arith.constant 0 : index
    %159 = vector.load %arg19[%c64_191, %c0_192] : memref<80x160xf32, #tpu.memory_space<vmem>>, vector<16x160xf32>
    tpu.vector_store %arg19[%c64_191, %c0_192], %158 {strides = array<i32>} : memref<80x160xf32, #tpu.memory_space<vmem>>, vector<16x160xf32>,
    %c0_193 = arith.constant 0 : index
    %c0_194 = arith.constant 0 : index
    %160 = vector.load %arg19[%c0_193, %c0_194] : memref<80x160xf32, #tpu.memory_space<vmem>>, vector<80x144xf32>
    %c0_195 = arith.constant 0 : index
    %c16_196 = arith.constant 16 : index
    %161 = vector.load %arg19[%c0_195, %c16_196] : memref<80x160xf32, #tpu.memory_space<vmem>>, vector<80x144xf32>
    %162 = arith.maximumf %160, %161 : vector<80x144xf32>
    %163 = arith.truncf %162 : vector<80x144xf32> to vector<80x144xbf16>
    %c0_197 = arith.constant 0 : index
    %c0_198 = arith.constant 0 : index
    %164 = vector.load %arg6[%c0_197, %c0_198] : memref<144x80xbf16, #tpu.memory_space<vmem>>, vector<144x80xbf16>
    %cst_199 = arith.constant dense<0.000000e+00> : vector<80x80xf32>
    %165 = tpu.matmul %163, %164, %cst_199 {dimension_numbers = #tpu.dot_dimension_numbers<[1], [0], [0], [1], [0, 0, 1, 1], [], []>} : vector<80x144xbf16>, vector<144x80xbf16>, vector<80x80xf32> -> vector<80x80xf32>
    %c0_200 = arith.constant 0 : index
    %c0_201 = arith.constant 0 : index
    %166 = vector.load %arg7[%c0_200, %c0_201] : memref<1x80xf32, #tpu.memory_space<vmem>>, vector<1x80xf32>
    %167 = vector.broadcast %166 : vector<1x80xf32> to vector<80x80xf32>
    %168 = arith.addf %165, %167 : vector<80x80xf32>
    %cst_202 = arith.constant 0.000000e+00 : f32
    %169 = vector.broadcast %cst_202 : f32 to vector<80x80xf32>
    %170 = arith.maximumf %168, %169 : vector<80x80xf32>
    %171 = arith.truncf %170 : vector<80x80xf32> to vector<80x80xbf16>
    %c0_203 = arith.constant 0 : index
    %c0_204 = arith.constant 0 : index
    %172 = vector.load %arg9[%c0_203, %c0_204] : memref<1x128xf32, #tpu.memory_space<vmem>>, vector<1x128xf32>
    %173 = vector.extract_strided_slice %171 {offsets = [0, 0], sizes = [16, 80], strides = [1, 1]} : vector<80x80xbf16> to vector<16x80xbf16>
    %c0_205 = arith.constant 0 : index
    %c0_206 = arith.constant 0 : index
    %c0_207 = arith.constant 0 : index
    %174 = vector.load %arg8[%c0_205, %c0_206, %c0_207] : memref<5x80x128xbf16, #tpu.memory_space<vmem>>, vector<1x80x128xbf16>
    %175 = vector.shape_cast %174 : vector<1x80x128xbf16> to vector<80x128xbf16>
    %cst_208 = arith.constant dense<0.000000e+00> : vector<16x128xf32>
    %176 = tpu.matmul %173, %175, %cst_208 {dimension_numbers = #tpu.dot_dimension_numbers<[1], [0], [0], [1], [0, 0, 1, 1], [], []>} : vector<16x80xbf16>, vector<80x128xbf16>, vector<16x128xf32> -> vector<16x128xf32>
    %177 = vector.broadcast %172 : vector<1x128xf32> to vector<16x128xf32>
    %178 = arith.addf %177, %176 : vector<16x128xf32>
    %179 = vector.extract_strided_slice %171 {offsets = [16, 0], sizes = [16, 80], strides = [1, 1]} : vector<80x80xbf16> to vector<16x80xbf16>
    %c1_209 = arith.constant 1 : index
    %c0_210 = arith.constant 0 : index
    %c0_211 = arith.constant 0 : index
    %180 = vector.load %arg8[%c1_209, %c0_210, %c0_211] : memref<5x80x128xbf16, #tpu.memory_space<vmem>>, vector<1x80x128xbf16>
    %181 = vector.shape_cast %180 : vector<1x80x128xbf16> to vector<80x128xbf16>
    %cst_212 = arith.constant dense<0.000000e+00> : vector<16x128xf32>
    %182 = tpu.matmul %179, %181, %cst_212 {dimension_numbers = #tpu.dot_dimension_numbers<[1], [0], [0], [1], [0, 0, 1, 1], [], []>} : vector<16x80xbf16>, vector<80x128xbf16>, vector<16x128xf32> -> vector<16x128xf32>
    %183 = arith.addf %178, %182 : vector<16x128xf32>
    %184 = vector.extract_strided_slice %171 {offsets = [32, 0], sizes = [16, 80], strides = [1, 1]} : vector<80x80xbf16> to vector<16x80xbf16>
    %c2_213 = arith.constant 2 : index
    %c0_214 = arith.constant 0 : index
    %c0_215 = arith.constant 0 : index
    %185 = vector.load %arg8[%c2_213, %c0_214, %c0_215] : memref<5x80x128xbf16, #tpu.memory_space<vmem>>, vector<1x80x128xbf16>
    %186 = vector.shape_cast %185 : vector<1x80x128xbf16> to vector<80x128xbf16>
    %cst_216 = arith.constant dense<0.000000e+00> : vector<16x128xf32>
    %187 = tpu.matmul %184, %186, %cst_216 {dimension_numbers = #tpu.dot_dimension_numbers<[1], [0], [0], [1], [0, 0, 1, 1], [], []>} : vector<16x80xbf16>, vector<80x128xbf16>, vector<16x128xf32> -> vector<16x128xf32>
    %188 = arith.addf %183, %187 : vector<16x128xf32>
    %189 = vector.extract_strided_slice %171 {offsets = [48, 0], sizes = [16, 80], strides = [1, 1]} : vector<80x80xbf16> to vector<16x80xbf16>
    %c3_217 = arith.constant 3 : index
    %c0_218 = arith.constant 0 : index
    %c0_219 = arith.constant 0 : index
    %190 = vector.load %arg8[%c3_217, %c0_218, %c0_219] : memref<5x80x128xbf16, #tpu.memory_space<vmem>>, vector<1x80x128xbf16>
    %191 = vector.shape_cast %190 : vector<1x80x128xbf16> to vector<80x128xbf16>
    %cst_220 = arith.constant dense<0.000000e+00> : vector<16x128xf32>
    %192 = tpu.matmul %189, %191, %cst_220 {dimension_numbers = #tpu.dot_dimension_numbers<[1], [0], [0], [1], [0, 0, 1, 1], [], []>} : vector<16x80xbf16>, vector<80x128xbf16>, vector<16x128xf32> -> vector<16x128xf32>
    %193 = arith.addf %188, %192 : vector<16x128xf32>
    %194 = vector.extract_strided_slice %171 {offsets = [64, 0], sizes = [16, 80], strides = [1, 1]} : vector<80x80xbf16> to vector<16x80xbf16>
    %c4_221 = arith.constant 4 : index
    %c0_222 = arith.constant 0 : index
    %c0_223 = arith.constant 0 : index
    %195 = vector.load %arg8[%c4_221, %c0_222, %c0_223] : memref<5x80x128xbf16, #tpu.memory_space<vmem>>, vector<1x80x128xbf16>
    %196 = vector.shape_cast %195 : vector<1x80x128xbf16> to vector<80x128xbf16>
    %cst_224 = arith.constant dense<0.000000e+00> : vector<16x128xf32>
    %197 = tpu.matmul %194, %196, %cst_224 {dimension_numbers = #tpu.dot_dimension_numbers<[1], [0], [0], [1], [0, 0, 1, 1], [], []>} : vector<16x80xbf16>, vector<80x128xbf16>, vector<16x128xf32> -> vector<16x128xf32>
    %198 = arith.addf %193, %197 : vector<16x128xf32>
    %cst_225 = arith.constant 0.000000e+00 : f32
    %199 = vector.broadcast %cst_225 : f32 to vector<16x128xf32>
    %200 = arith.maximumf %198, %199 : vector<16x128xf32>
    %201 = arith.truncf %200 : vector<16x128xf32> to vector<16x128xbf16>
    %c0_226 = arith.constant 0 : index
    %c0_227 = arith.constant 0 : index
    %202 = vector.load %arg10[%c0_226, %c0_227] : memref<128x128xbf16, #tpu.memory_space<vmem>>, vector<128x128xbf16>
    %cst_228 = arith.constant dense<0.000000e+00> : vector<16x128xf32>
    %203 = tpu.matmul %201, %202, %cst_228 {dimension_numbers = #tpu.dot_dimension_numbers<[1], [0], [0], [1], [0, 0, 1, 1], [], []>} : vector<16x128xbf16>, vector<128x128xbf16>, vector<16x128xf32> -> vector<16x128xf32>
    %c0_229 = arith.constant 0 : index
    %c0_230 = arith.constant 0 : index
    %204 = vector.load %arg11[%c0_229, %c0_230] : memref<1x128xf32, #tpu.memory_space<vmem>>, vector<1x128xf32>
    %205 = vector.broadcast %204 : vector<1x128xf32> to vector<16x128xf32>
    %206 = arith.addf %203, %205 : vector<16x128xf32>
    %cst_231 = arith.constant 0.000000e+00 : f32
    %207 = vector.broadcast %cst_231 : f32 to vector<16x128xf32>
    %208 = arith.maximumf %206, %207 : vector<16x128xf32>
    %209 = arith.truncf %208 : vector<16x128xf32> to vector<16x128xbf16>
    %c0_232 = arith.constant 0 : index
    %c0_233 = arith.constant 0 : index
    %210 = vector.load %arg12[%c0_232, %c0_233] : memref<128x128xbf16, #tpu.memory_space<vmem>>, vector<128x128xbf16>
    %cst_234 = arith.constant dense<0.000000e+00> : vector<16x128xf32>
    %211 = tpu.matmul %209, %210, %cst_234 {dimension_numbers = #tpu.dot_dimension_numbers<[1], [0], [0], [1], [0, 0, 1, 1], [], []>} : vector<16x128xbf16>, vector<128x128xbf16>, vector<16x128xf32> -> vector<16x128xf32>
    %c0_235 = arith.constant 0 : index
    %c0_236 = arith.constant 0 : index
    %212 = vector.load %arg13[%c0_235, %c0_236] : memref<1x128xf32, #tpu.memory_space<vmem>>, vector<1x128xf32>
    %213 = vector.broadcast %212 : vector<1x128xf32> to vector<16x128xf32>
    %214 = arith.addf %211, %213 : vector<16x128xf32>
    %c0_237 = arith.constant 0 : index
    %c0_238 = arith.constant 0 : index
    %215 = vector.load %arg14[%c0_237, %c0_238] : memref<16x128xf32, #tpu.memory_space<vmem>>, vector<16x128xf32>
    tpu.vector_store %arg14[%c0_237, %c0_238], %214 {strides = array<i32>} : memref<16x128xf32, #tpu.memory_space<vmem>>, vector<16x128xf32>,
    return
  }
  func.func @transform_0(%arg0: i32) -> (i32, i32, i32) {
    %c0_i32 = arith.constant 0 : i32
    %c0_i32_0 = arith.constant 0 : i32
    %c0_i32_1 = arith.constant 0 : i32
    return %arg0, %c0_i32, %c0_i32_0 : i32, i32, i32
  }
  func.func @transform_1(%arg0: i32) -> (i32, i32, i32) {
    %c0_i32 = arith.constant 0 : i32
    %c0_i32_0 = arith.constant 0 : i32
    %c0_i32_1 = arith.constant 0 : i32
    %c0_i32_2 = arith.constant 0 : i32
    return %c0_i32, %c0_i32_0, %c0_i32_1 : i32, i32, i32
  }
  func.func @transform_2(%arg0: i32) -> (i32, i32) {
    %c0_i32 = arith.constant 0 : i32
    %c0_i32_0 = arith.constant 0 : i32
    %c0_i32_1 = arith.constant 0 : i32
    return %c0_i32, %c0_i32_0 : i32, i32
  }
  func.func @transform_3(%arg0: i32) -> (i32, i32) {
    %c0_i32 = arith.constant 0 : i32
    %c0_i32_0 = arith.constant 0 : i32
    %c0_i32_1 = arith.constant 0 : i32
    return %c0_i32, %c0_i32_0 : i32, i32
  }
  func.func @transform_4(%arg0: i32) -> (i32, i32, i32) {
    %c0_i32 = arith.constant 0 : i32
    %c0_i32_0 = arith.constant 0 : i32
    %c0_i32_1 = arith.constant 0 : i32
    %c0_i32_2 = arith.constant 0 : i32
    return %c0_i32, %c0_i32_0, %c0_i32_1 : i32, i32, i32
  }
  func.func @transform_5(%arg0: i32) -> (i32, i32) {
    %c0_i32 = arith.constant 0 : i32
    %c0_i32_0 = arith.constant 0 : i32
    %c0_i32_1 = arith.constant 0 : i32
    return %c0_i32, %c0_i32_0 : i32, i32
  }
  func.func @transform_6(%arg0: i32) -> (i32, i32) {
    %c0_i32 = arith.constant 0 : i32
    %c0_i32_0 = arith.constant 0 : i32
    %c0_i32_1 = arith.constant 0 : i32
    return %c0_i32, %c0_i32_0 : i32, i32
  }
  func.func @transform_7(%arg0: i32) -> (i32, i32, i32) {
    %c0_i32 = arith.constant 0 : i32
    %c0_i32_0 = arith.constant 0 : i32
    %c0_i32_1 = arith.constant 0 : i32
    %c0_i32_2 = arith.constant 0 : i32
    return %c0_i32, %c0_i32_0, %c0_i32_1 : i32, i32, i32
  }
  func.func @transform_8(%arg0: i32) -> (i32, i32) {
    %c0_i32 = arith.constant 0 : i32
    %c0_i32_0 = arith.constant 0 : i32
    %c0_i32_1 = arith.constant 0 : i32
    return %c0_i32, %c0_i32_0 : i32, i32
  }
  func.func @transform_9(%arg0: i32) -> (i32, i32) {
    %c0_i32 = arith.constant 0 : i32
    %c0_i32_0 = arith.constant 0 : i32
    %c0_i32_1 = arith.constant 0 : i32
    return %c0_i32, %c0_i32_0 : i32, i32
  }
  func.func @transform_10(%arg0: i32) -> (i32, i32) {
    %c0_i32 = arith.constant 0 : i32
    %c0_i32_0 = arith.constant 0 : i32
    %c0_i32_1 = arith.constant 0 : i32
    return %c0_i32, %c0_i32_0 : i32, i32
  }
  func.func @transform_11(%arg0: i32) -> (i32, i32) {
    %c0_i32 = arith.constant 0 : i32
    %c0_i32_0 = arith.constant 0 : i32
    %c0_i32_1 = arith.constant 0 : i32
    return %c0_i32, %c0_i32_0 : i32, i32
  }
  func.func @transform_12(%arg0: i32) -> (i32, i32) {
    %c0_i32 = arith.constant 0 : i32
    %c0_i32_0 = arith.constant 0 : i32
    %c0_i32_1 = arith.constant 0 : i32
    return %c0_i32, %c0_i32_0 : i32, i32
  }
  func.func @transform_13(%arg0: i32) -> (i32, i32) {
    %c0_i32 = arith.constant 0 : i32
    %c0_i32_0 = arith.constant 0 : i32
    return %arg0, %c0_i32 : i32, i32
  }
}

</mosaic_0001>

<llo_original>
// kernel: lenet_forward_packed.1
$region0: #{lenet_forward_packed.1}
  #allocation0 [shape = 'u32[]', space=smem, size = 0x4, offset = 0x4, fixed_abs, tag = 'smem constant byte address 0x4 - core index']
  #allocation1 [shape = 'u32[144,128]{1,0:T(1,128)}', space=vmem, size = 0x12000, scoped, tag = 'internal scratch']
  #allocation2 [shape = 'f32[448,168]{1,0:T(8,128)}', space=vmem, size = 0x70000, scoped, tag = 'scratch operand']
  #allocation3 [shape = 'f32[224,168]{1,0:T(8,128)}', space=vmem, size = 0x38000, scoped, tag = 'scratch operand']
  #allocation4 [shape = 'bf16[224,84]{1,0:T(16,128)(2,1)}', space=vmem, size = 0xe000, scoped, tag = 'scratch operand']
  #allocation5 [shape = 'f32[160,160]{1,0:T(8,128)}', space=vmem, size = 0x28000, scoped, tag = 'scratch operand']
  #allocation6 [shape = 'f32[80,160]{1,0:T(8,128)}', space=vmem, size = 0x14000, scoped, tag = 'scratch operand']
  %s0 = inlined_call_operand.vmem [shape: bf16[2,512,96], index: 0, kind: input, shape index: {}]
  %s1 = inlined_call_operand.vmem [shape: bf16[5,96,168], index: 1, kind: input, shape index: {}]
  %s2 = inlined_call_operand.vmem [shape: bf16[162,84], index: 2, kind: input, shape index: {}]
  %s3 = inlined_call_operand.vmem [shape: f32[1,84], index: 3, kind: input, shape index: {}]
  %s4 = inlined_call_operand.vmem [shape: bf16[5,84,160], index: 4, kind: input, shape index: {}]
  %s5 = inlined_call_operand.vmem [shape: bf16[144,80], index: 5, kind: input, shape index: {}]
  %s6 = inlined_call_operand.vmem [shape: f32[1,80], index: 6, kind: input, shape index: {}]
  %s7 = inlined_call_operand.vmem [shape: bf16[5,80,128], index: 7, kind: input, shape index: {}]
  %s8 = inlined_call_operand.vmem [shape: f32[1,128], index: 8, kind: input, shape index: {}]
  %s9 = inlined_call_operand.vmem [shape: bf16[128,128], index: 9, kind: input, shape index: {}]
  %s10 = inlined_call_operand.vmem [shape: f32[1,128], index: 10, kind: input, shape index: {}]
  %s11 = inlined_call_operand.vmem [shape: bf16[128,128], index: 11, kind: input, shape index: {}]
  %s12 = inlined_call_operand.vmem [shape: f32[1,128], index: 12, kind: input, shape index: {}]
  %s13 = inlined_call_operand.vmem [shape: f32[32,128], index: 13, kind: output, shape index: {}]
  %s14 = sld [smem:[#allocation0]]
  $region85: #{lenet_forward_packed.1} parent=0
    _
  %s16 = ssub.s32 1, %s14
  %s17 = scalar_select 0, %s16, %s14
  loop: start=0, step=1, limit=4
  $region2: #{lenet_forward_packed.1} parent=0 // loop_pre_header
    _
  $region3: #{lenet_forward_packed.1} parent=0 // loop_header
    %s19 = sphi 0, %s23
    %p20 = scmp.ge.s32.totalorder %s19, 4
    %s29 = sphi 0, %s31
    %s32 = sphi 0, %s29
    %s33 = sphi 0, %s32
    %s49 = sphi 0, %s33
    %s53 = sphi 0, %s53
    %s55 = sphi 0, %s53
    %s56 = sphi 0, %s55
    %s70 = sphi 0, %s56
    %s74 = sphi 0, %s74
    %s76 = sphi 0, %s74
    %s77 = sphi 0, %s76
    %s91 = sphi 0, %s77
    %s95 = sphi 0, %s95
    %s97 = sphi 0, %s95
    %s98 = sphi 0, %s97
    %s112 = sphi 0, %s98
    %s116 = sphi 0, %s116
    %s118 = sphi 0, %s116
    %s119 = sphi 0, %s118
    %s133 = sphi 0, %s119
    %s137 = sphi 0, %s137
    %s139 = sphi 0, %s137
    %s140 = sphi 0, %s139
    %s154 = sphi 0, %s140
    %s158 = sphi 0, %s158
    %s160 = sphi 0, %s158
    %s161 = sphi 0, %s160
    %s175 = sphi 0, %s161
    %s179 = sphi 0, %s179
    %s181 = sphi 0, %s179
    %s182 = sphi 0, %s181
    %s196 = sphi 0, %s182
    %s200 = sphi 0, %s200
    %s202 = sphi 0, %s200
    %s203 = sphi 0, %s202
    %s217 = sphi 0, %s203
    %s221 = sphi 0, %s221
    %s223 = sphi 0, %s221
    %s224 = sphi 0, %s223
    %s238 = sphi 0, %s224
    %s242 = sphi 0, %s242
    %s244 = sphi 0, %s242
    %s245 = sphi 0, %s244
    %s259 = sphi 0, %s245
    %s263 = sphi 0, %s263
    %s265 = sphi 0, %s263
    %s266 = sphi 0, %s265
    %s280 = sphi 0, %s266
    %s284 = sphi 0, %s284
    %s286 = sphi 0, %s284
    %s287 = sphi 0, %s286
    %s301 = sphi 0, %s287
    %s307 = sphi 0, %s309
    %s310 = sphi 0, %s307
    %s311 = sphi 0, %s310
    %s327 = sphi 0, %s311
  $region4: #{lenet_forward_packed.1} parent=0 // loop_header_branch
    %22 = sbr.rel (%p20) target = $region8
  $region5: #{lenet_forward_packed.1} parent=0 // loop_body
    %s24 = ssub.s32 %s19, 1
    %s25 = ssub.s32 %s19, 2
    %s26 = sadd.s32 %s19, 1
    %s27 = ssub.s32 %s19, %s26
    %p28 = scmp.eq.s32.totalorder %s27, 0
    %s30 = sadd.s32 %s29, 1
    %s31 = scalar_select %p28, %s29, %s30
    %p34 = pneg %p28
    %p35 = scmp.eq.s32.totalorder %s19, 1
    %p36 = por %p34, %p35
    %p37 = scmp.ne.s32.totalorder %s29, %s32
    %p38 = scmp.eq.s32.totalorder %s19, 0
    %p39 = por %p37, %p38
    %p40 = scmp.ne.s32.totalorder %s29, %s32
    %p41 = scmp.eq.s32.totalorder %s24, 1
    %p42 = por %p40, %p41
    %p43 = scmp.ne.s32.totalorder %s32, %s33
    %p44 = scmp.eq.s32.totalorder %s24, 0
    %p45 = por %p43, %p44
    %p46 = scmp.ne.s32.totalorder %s32, %s33
    %p47 = scmp.eq.s32.totalorder %s25, 1
    %p48 = por %p46, %p47
    %p50 = scmp.ne.s32.totalorder %s33, %s49
    %p51 = scmp.eq.s32.totalorder %s25, 0
    %p52 = por %p50, %p51
    %s54 = sadd.s32 %s53, 1
    %p57 = scmp.eq.s32.totalorder %s19, 1
    %p58 = scmp.ne.s32.totalorder %s53, %s55
    %p59 = scmp.eq.s32.totalorder %s19, 0
    %p60 = por %p58, %p59
    %p61 = scmp.ne.s32.totalorder %s53, %s55
    %p62 = scmp.eq.s32.totalorder %s24, 1
    %p63 = por %p61, %p62
    %p64 = scmp.ne.s32.totalorder %s55, %s56
    %p65 = scmp.eq.s32.totalorder %s24, 0
    %p66 = por %p64, %p65
    %p67 = scmp.ne.s32.totalorder %s55, %s56
    %p68 = scmp.eq.s32.totalorder %s25, 1
    %p69 = por %p67, %p68
    %p71 = scmp.ne.s32.totalorder %s56, %s70
    %p72 = scmp.eq.s32.totalorder %s25, 0
    %p73 = por %p71, %p72
    %s75 = sadd.s32 %s74, 1
    %p78 = scmp.eq.s32.totalorder %s19, 1
    %p79 = scmp.ne.s32.totalorder %s74, %s76
    %p80 = scmp.eq.s32.totalorder %s19, 0
    %p81 = por %p79, %p80
    %p82 = scmp.ne.s32.totalorder %s74, %s76
    %p83 = scmp.eq.s32.totalorder %s24, 1
    %p84 = por %p82, %p83
    %p85 = scmp.ne.s32.totalorder %s76, %s77
    %p86 = scmp.eq.s32.totalorder %s24, 0
    %p87 = por %p85, %p86
    %p88 = scmp.ne.s32.totalorder %s76, %s77
    %p89 = scmp.eq.s32.totalorder %s25, 1
    %p90 = por %p88, %p89
    %p92 = scmp.ne.s32.totalorder %s77, %s91
    %p93 = scmp.eq.s32.totalorder %s25, 0
    %p94 = por %p92, %p93
    %s96 = sadd.s32 %s95, 1
    %p99 = scmp.eq.s32.totalorder %s19, 1
    %p100 = scmp.ne.s32.totalorder %s95, %s97
    %p101 = scmp.eq.s32.totalorder %s19, 0
    %p102 = por %p100, %p101
    %p103 = scmp.ne.s32.totalorder %s95, %s97
    %p104 = scmp.eq.s32.totalorder %s24, 1
    %p105 = por %p103, %p104
    %p106 = scmp.ne.s32.totalorder %s97, %s98
    %p107 = scmp.eq.s32.totalorder %s24, 0
    %p108 = por %p106, %p107
    %p109 = scmp.ne.s32.totalorder %s97, %s98
    %p110 = scmp.eq.s32.totalorder %s25, 1
    %p111 = por %p109, %p110
    %p113 = scmp.ne.s32.totalorder %s98, %s112
    %p114 = scmp.eq.s32.totalorder %s25, 0
    %p115 = por %p113, %p114
    %s117 = sadd.s32 %s116, 1
    %p120 = scmp.eq.s32.totalorder %s19, 1
    %p121 = scmp.ne.s32.totalorder %s116, %s118
    %p122 = scmp.eq.s32.totalorder %s19, 0
    %p123 = por %p121, %p122
    %p124 = scmp.ne.s32.totalorder %s116, %s118
    %p125 = scmp.eq.s32.totalorder %s24, 1
    %p126 = por %p124, %p125
    %p127 = scmp.ne.s32.totalorder %s118, %s119
    %p128 = scmp.eq.s32.totalorder %s24, 0
    %p129 = por %p127, %p128
    %p130 = scmp.ne.s32.totalorder %s118, %s119
    %p131 = scmp.eq.s32.totalorder %s25, 1
    %p132 = por %p130, %p131
    %p134 = scmp.ne.s32.totalorder %s119, %s133
    %p135 = scmp.eq.s32.totalorder %s25, 0
    %p136 = por %p134, %p135
    %s138 = sadd.s32 %s137, 1
    %p141 = scmp.eq.s32.totalorder %s19, 1
    %p142 = scmp.ne.s32.totalorder %s137, %s139
    %p143 = scmp.eq.s32.totalorder %s19, 0
    %p144 = por %p142, %p143
    %p145 = scmp.ne.s32.totalorder %s137, %s139
    %p146 = scmp.eq.s32.totalorder %s24, 1
    %p147 = por %p145, %p146
    %p148 = scmp.ne.s32.totalorder %s139, %s140
    %p149 = scmp.eq.s32.totalorder %s24, 0
    %p150 = por %p148, %p149
    %p151 = scmp.ne.s32.totalorder %s139, %s140
    %p152 = scmp.eq.s32.totalorder %s25, 1
    %p153 = por %p151, %p152
    %p155 = scmp.ne.s32.totalorder %s140, %s154
    %p156 = scmp.eq.s32.totalorder %s25, 0
    %p157 = por %p155, %p156
    %s159 = sadd.s32 %s158, 1
    %p162 = scmp.eq.s32.totalorder %s19, 1
    %p163 = scmp.ne.s32.totalorder %s158, %s160
    %p164 = scmp.eq.s32.totalorder %s19, 0
    %p165 = por %p163, %p164
    %p166 = scmp.ne.s32.totalorder %s158, %s160
    %p167 = scmp.eq.s32.totalorder %s24, 1
    %p168 = por %p166, %p167
    %p169 = scmp.ne.s32.totalorder %s160, %s161
    %p170 = scmp.eq.s32.totalorder %s24, 0
    %p171 = por %p169, %p170
    %p172 = scmp.ne.s32.totalorder %s160, %s161
    %p173 = scmp.eq.s32.totalorder %s25, 1
    %p174 = por %p172, %p173
    %p176 = scmp.ne.s32.totalorder %s161, %s175
    %p177 = scmp.eq.s32.totalorder %s25, 0
    %p178 = por %p176, %p177
    %s180 = sadd.s32 %s179, 1
    %p183 = scmp.eq.s32.totalorder %s19, 1
    %p184 = scmp.ne.s32.totalorder %s179, %s181
    %p185 = scmp.eq.s32.totalorder %s19, 0
    %p186 = por %p184, %p185
    %p187 = scmp.ne.s32.totalorder %s179, %s181
    %p188 = scmp.eq.s32.totalorder %s24, 1
    %p189 = por %p187, %p188
    %p190 = scmp.ne.s32.totalorder %s181, %s182
    %p191 = scmp.eq.s32.totalorder %s24, 0
    %p192 = por %p190, %p191
    %p193 = scmp.ne.s32.totalorder %s181, %s182
    %p194 = scmp.eq.s32.totalorder %s25, 1
    %p195 = por %p193, %p194
    %p197 = scmp.ne.s32.totalorder %s182, %s196
    %p198 = scmp.eq.s32.totalorder %s25, 0
    %p199 = por %p197, %p198
    %s201 = sadd.s32 %s200, 1
    %p204 = scmp.eq.s32.totalorder %s19, 1
    %p205 = scmp.ne.s32.totalorder %s200, %s202
    %p206 = scmp.eq.s32.totalorder %s19, 0
    %p207 = por %p205, %p206
    %p208 = scmp.ne.s32.totalorder %s200, %s202
    %p209 = scmp.eq.s32.totalorder %s24, 1
    %p210 = por %p208, %p209
    %p211 = scmp.ne.s32.totalorder %s202, %s203
    %p212 = scmp.eq.s32.totalorder %s24, 0
    %p213 = por %p211, %p212
    %p214 = scmp.ne.s32.totalorder %s202, %s203
    %p215 = scmp.eq.s32.totalorder %s25, 1
    %p216 = por %p214, %p215
    %p218 = scmp.ne.s32.totalorder %s203, %s217
    %p219 = scmp.eq.s32.totalorder %s25, 0
    %p220 = por %p218, %p219
    %s222 = sadd.s32 %s221, 1
    %p225 = scmp.eq.s32.totalorder %s19, 1
    %p226 = scmp.ne.s32.totalorder %s221, %s223
    %p227 = scmp.eq.s32.totalorder %s19, 0
    %p228 = por %p226, %p227
    %p229 = scmp.ne.s32.totalorder %s221, %s223
    %p230 = scmp.eq.s32.totalorder %s24, 1
    %p231 = por %p229, %p230
    %p232 = scmp.ne.s32.totalorder %s223, %s224
    %p233 = scmp.eq.s32.totalorder %s24, 0
    %p234 = por %p232, %p233
    %p235 = scmp.ne.s32.totalorder %s223, %s224
    %p236 = scmp.eq.s32.totalorder %s25, 1
    %p237 = por %p235, %p236
    %p239 = scmp.ne.s32.totalorder %s224, %s238
    %p240 = scmp.eq.s32.totalorder %s25, 0
    %p241 = por %p239, %p240
    %s243 = sadd.s32 %s242, 1
    %p246 = scmp.eq.s32.totalorder %s19, 1
    %p247 = scmp.ne.s32.totalorder %s242, %s244
    %p248 = scmp.eq.s32.totalorder %s19, 0
    %p249 = por %p247, %p248
    %p250 = scmp.ne.s32.totalorder %s242, %s244
    %p251 = scmp.eq.s32.totalorder %s24, 1
    %p252 = por %p250, %p251
    %p253 = scmp.ne.s32.totalorder %s244, %s245
    %p254 = scmp.eq.s32.totalorder %s24, 0
    %p255 = por %p253, %p254
    %p256 = scmp.ne.s32.totalorder %s244, %s245
    %p257 = scmp.eq.s32.totalorder %s25, 1
    %p258 = por %p256, %p257
    %p260 = scmp.ne.s32.totalorder %s245, %s259
    %p261 = scmp.eq.s32.totalorder %s25, 0
    %p262 = por %p260, %p261
    %s264 = sadd.s32 %s263, 1
    %p267 = scmp.eq.s32.totalorder %s19, 1
    %p268 = scmp.ne.s32.totalorder %s263, %s265
    %p269 = scmp.eq.s32.totalorder %s19, 0
    %p270 = por %p268, %p269
    %p271 = scmp.ne.s32.totalorder %s263, %s265
    %p272 = scmp.eq.s32.totalorder %s24, 1
    %p273 = por %p271, %p272
    %p274 = scmp.ne.s32.totalorder %s265, %s266
    %p275 = scmp.eq.s32.totalorder %s24, 0
    %p276 = por %p274, %p275
    %p277 = scmp.ne.s32.totalorder %s265, %s266
    %p278 = scmp.eq.s32.totalorder %s25, 1
    %p279 = por %p277, %p278
    %p281 = scmp.ne.s32.totalorder %s266, %s280
    %p282 = scmp.eq.s32.totalorder %s25, 0
    %p283 = por %p281, %p282
    %s285 = sadd.s32 %s284, 1
    %p288 = scmp.eq.s32.totalorder %s19, 1
    %p289 = scmp.ne.s32.totalorder %s284, %s286
    %p290 = scmp.eq.s32.totalorder %s19, 0
    %p291 = por %p289, %p290
    %p292 = scmp.ne.s32.totalorder %s284, %s286
    %p293 = scmp.eq.s32.totalorder %s24, 1
    %p294 = por %p292, %p293
    %p295 = scmp.ne.s32.totalorder %s286, %s287
    %p296 = scmp.eq.s32.totalorder %s24, 0
    %p297 = por %p295, %p296
    %p298 = scmp.ne.s32.totalorder %s286, %s287
    %p299 = scmp.eq.s32.totalorder %s25, 1
    %p300 = por %p298, %p299
    %p302 = scmp.ne.s32.totalorder %s287, %s301
    %p303 = scmp.eq.s32.totalorder %s25, 0
    %p304 = por %p302, %p303
    %s305 = ssub.s32 %s19, %s26
    %p306 = scmp.eq.s32.totalorder %s305, 0
    %s308 = sadd.s32 %s307, 1
    %s309 = scalar_select %p306, %s307, %s308
    %p312 = pneg %p306
    %p313 = scmp.eq.s32.totalorder %s19, 1
    %p314 = por %p312, %p313
    %p315 = scmp.ne.s32.totalorder %s307, %s310
    %p316 = scmp.eq.s32.totalorder %s19, 0
    %p317 = por %p315, %p316
    %p318 = scmp.ne.s32.totalorder %s307, %s310
    %p319 = scmp.eq.s32.totalorder %s24, 1
    %p320 = por %p318, %p319
    %p321 = scmp.ne.s32.totalorder %s310, %s311
    %p322 = scmp.eq.s32.totalorder %s24, 0
    %p323 = por %p321, %p322
    %p324 = scmp.ne.s32.totalorder %s310, %s311
    %p325 = scmp.eq.s32.totalorder %s25, 1
    %p326 = por %p324, %p325
    %p328 = scmp.ne.s32.totalorder %s311, %s327
    %p329 = scmp.eq.s32.totalorder %s25, 0
    %p330 = por %p328, %p329
    %p331 = scmp.le.s32.totalorder 1, %s19
    %p332 = scmp.lt.s32.totalorder %s19, 3
    %p333 = pnand %p331, %p332
    %p334 = pneg %p333
    // Predicated region
    $region9: #{lenet_forward_packed.1} parent=5 // pred_check
      _
    $region10: #{lenet_forward_packed.1} parent=5 // pred_check_branch
      %336 = sbr.rel (%p333) target = $region12
    $region11: #{lenet_forward_packed.1} parent=5 // pred_region
      %s337 = ssub.s32 %s19, 1
      // Predicated region
      $region13: #{lenet_forward_packed.1} parent=11 // pred_check
        %p338 = pneg %p66
      $region14: #{lenet_forward_packed.1} parent=11 // pred_check_branch
        %340 = sbr.rel (%p338) target = $region16
      $region15: #{lenet_forward_packed.1} parent=11 // pred_region
        _
      $region16: #{lenet_forward_packed.1} parent=11 // pred_fallthru
        _
      // Predicated region
      $region17: #{lenet_forward_packed.1} parent=11 // pred_check
        %p341 = pneg %p87
      $region18: #{lenet_forward_packed.1} parent=11 // pred_check_branch
        %343 = sbr.rel (%p341) target = $region20
      $region19: #{lenet_forward_packed.1} parent=11 // pred_region
        _
      $region20: #{lenet_forward_packed.1} parent=11 // pred_fallthru
        _
      // Predicated region
      $region21: #{lenet_forward_packed.1} parent=11 // pred_check
        %p344 = pneg %p108
      $region22: #{lenet_forward_packed.1} parent=11 // pred_check_branch
        %346 = sbr.rel (%p344) target = $region24
      $region23: #{lenet_forward_packed.1} parent=11 // pred_region
        _
      $region24: #{lenet_forward_packed.1} parent=11 // pred_fallthru
        _
      // Predicated region
      $region25: #{lenet_forward_packed.1} parent=11 // pred_check
        %p347 = pneg %p129
      $region26: #{lenet_forward_packed.1} parent=11 // pred_check_branch
        %349 = sbr.rel (%p347) target = $region28
      $region27: #{lenet_forward_packed.1} parent=11 // pred_region
        _
      $region28: #{lenet_forward_packed.1} parent=11 // pred_fallthru
        _
      // Predicated region
      $region29: #{lenet_forward_packed.1} parent=11 // pred_check
        %p350 = pneg %p150
      $region30: #{lenet_forward_packed.1} parent=11 // pred_check_branch
        %352 = sbr.rel (%p350) target = $region32
      $region31: #{lenet_forward_packed.1} parent=11 // pred_region
        _
      $region32: #{lenet_forward_packed.1} parent=11 // pred_fallthru
        _
      // Predicated region
      $region33: #{lenet_forward_packed.1} parent=11 // pred_check
        %p353 = pneg %p171
      $region34: #{lenet_forward_packed.1} parent=11 // pred_check_branch
        %355 = sbr.rel (%p353) target = $region36
      $region35: #{lenet_forward_packed.1} parent=11 // pred_region
        _
      $region36: #{lenet_forward_packed.1} parent=11 // pred_fallthru
        _
      // Predicated region
      $region37: #{lenet_forward_packed.1} parent=11 // pred_check
        %p356 = pneg %p192
      $region38: #{lenet_forward_packed.1} parent=11 // pred_check_branch
        %358 = sbr.rel (%p356) target = $region40
      $region39: #{lenet_forward_packed.1} parent=11 // pred_region
        _
      $region40: #{lenet_forward_packed.1} parent=11 // pred_fallthru
        _
      // Predicated region
      $region41: #{lenet_forward_packed.1} parent=11 // pred_check
        %p359 = pneg %p213
      $region42: #{lenet_forward_packed.1} parent=11 // pred_check_branch
        %361 = sbr.rel (%p359) target = $region44
      $region43: #{lenet_forward_packed.1} parent=11 // pred_region
        _
      $region44: #{lenet_forward_packed.1} parent=11 // pred_fallthru
        _
      // Predicated region
      $region45: #{lenet_forward_packed.1} parent=11 // pred_check
        %p362 = pneg %p234
      $region46: #{lenet_forward_packed.1} parent=11 // pred_check_branch
        %364 = sbr.rel (%p362) target = $region48
      $region47: #{lenet_forward_packed.1} parent=11 // pred_region
        _
      $region48: #{lenet_forward_packed.1} parent=11 // pred_fallthru
        _
      // Predicated region
      $region49: #{lenet_forward_packed.1} parent=11 // pred_check
        %p365 = pneg %p255
      $region50: #{lenet_forward_packed.1} parent=11 // pred_check_branch
        %367 = sbr.rel (%p365) target = $region52
      $region51: #{lenet_forward_packed.1} parent=11 // pred_region
        _
      $region52: #{lenet_forward_packed.1} parent=11 // pred_fallthru
        _
      // Predicated region
      $region53: #{lenet_forward_packed.1} parent=11 // pred_check
        %p368 = pneg %p276
      $region54: #{lenet_forward_packed.1} parent=11 // pred_check_branch
        %370 = sbr.rel (%p368) target = $region56
      $region55: #{lenet_forward_packed.1} parent=11 // pred_region
        _
      $region56: #{lenet_forward_packed.1} parent=11 // pred_fallthru
        _
      // Predicated region
      $region57: #{lenet_forward_packed.1} parent=11 // pred_check
        %p371 = pneg %p297
      $region58: #{lenet_forward_packed.1} parent=11 // pred_check_branch
        %373 = sbr.rel (%p371) target = $region60
      $region59: #{lenet_forward_packed.1} parent=11 // pred_region
        _
      $region60: #{lenet_forward_packed.1} parent=11 // pred_fallthru
        _
    $region12: #{lenet_forward_packed.1} parent=5 // pred_fallthru
      _
    %p374 = scmp.lt.s32.totalorder %s19, 2
    // Predicated region
    $region61: #{lenet_forward_packed.1} parent=5 // pred_check
      %p375 = pneg %p374
    $region62: #{lenet_forward_packed.1} parent=5 // pred_check_branch
      %377 = sbr.rel (%p375) target = $region64
    $region63: #{lenet_forward_packed.1} parent=5 // pred_region
      // Predicated region
      $region65: #{lenet_forward_packed.1} parent=63 // pred_check
        %p378 = pneg %p39
      $region66: #{lenet_forward_packed.1} parent=63 // pred_check_branch
        %380 = sbr.rel (%p378) target = $region68
      $region67: #{lenet_forward_packed.1} parent=63 // pred_region
        %p381 = scmp.lt.s32.totalorder %s19, 1
        %s382 = scalar_select %p381, %s19, 1
        %s383 = smul.addr %s382, 64
        %s384 = smul.addr %s383, 4
        %s385 = scalar_lea.vmem %s0, %s384
      $region68: #{lenet_forward_packed.1} parent=63 // pred_fallthru
        _
    $region64: #{lenet_forward_packed.1} parent=5 // pred_fallthru
      _
    %p386 = scmp.le.s32.totalorder 1, %s19
    %p387 = scmp.lt.s32.totalorder %s19, 3
    %p388 = pnand %p386, %p387
    %p389 = pneg %p388
    // Predicated region
    $region69: #{lenet_forward_packed.1} parent=5 // pred_check
      _
    $region70: #{lenet_forward_packed.1} parent=5 // pred_check_branch
      %391 = sbr.rel (%p388) target = $region72
    $region71: #{lenet_forward_packed.1} parent=5 // pred_region
      %s392 = ssub.s32 %s19, 1
      %p393 = scmp.lt.s32.totalorder %s24, 1
      %s394 = scalar_select %p393, %s24, 1
      %s395 = smul.addr %s394, 64
      %s396 = smul.addr %s395, 4
      %s397 = scalar_lea.vmem %s0, %s396
      %p398 = pneg %p45
      %p399 = pneg %p42
      %p400 = pneg %p66
      %p401 = pneg %p63
      %p402 = pneg %p87
      %p403 = pneg %p84
      %p404 = pneg %p108
      %p405 = pneg %p105
      %p406 = pneg %p129
      %p407 = pneg %p126
      %p408 = pneg %p150
      %p409 = pneg %p147
      %p410 = pneg %p171
      %p411 = pneg %p168
      %p412 = pneg %p192
      %p413 = pneg %p189
      %p414 = pneg %p213
      %p415 = pneg %p210
      %p416 = pneg %p234
      %p417 = pneg %p231
      %p418 = pneg %p255
      %p419 = pneg %p252
      %p420 = pneg %p276
      %p421 = pneg %p273
      %p422 = pneg %p297
      %p423 = pneg %p294
      %p424 = pneg %p323
      %p425 = pneg %p320
      %s426 = smul.u32 2, %s24
      %p427 = scmp.lt.s32.totalorder %s426, 3
      %s428 = scalar_select %p427, %s426, 3
      %s429 = smul.addr %s428, 8
      %s430 = scalar_lea.vmem %s13, %s429
      %p431 = scmp.lt.s32.totalorder %s24, 1
      %s432 = scalar_select %p431, %s24, 1
      %s433 = smul.addr %s432, 64
      %s434 = smul.addr %s433, 4
      %s435 = scalar_lea.vmem %s0, %s434
      %s436 = smul.u32 2, %s24
      %p437 = scmp.lt.s32.totalorder %s436, 3
      %s438 = scalar_select %p437, %s436, 3
      %s439 = smul.addr %s438, 8
      %s440 = scalar_lea.vmem %s13, %s439
      %s441 = smul.u32 2, %s24
      %v443 = vld [vmem:[%s435] sm:$0xf]
      %v444 = vld [vmem:[%s435 + $0x4] sm:$0xf]
      %v445 = vld [vmem:[%s435 + $0x8] sm:$0xf]
      %v446 = vld [vmem:[%s435 + $0xc] sm:$0xf]
      %v447 = vld [vmem:[%s435 + $0x10] sm:$0xf]
      %v448 = vld [vmem:[%s435 + $0x14] sm:$0xf]
      %v449 = vld [vmem:[%s435 + $0x18] sm:$0xf]
      %v450 = vld [vmem:[%s435 + $0x1c] sm:$0xf]
      %v451 = vld [vmem:[%s435 + $0x20] sm:$0xf]
      %v452 = vld [vmem:[%s435 + $0x24] sm:$0xf]
      %v453 = vld [vmem:[%s435 + $0x28] sm:$0xf]
      %v454 = vld [vmem:[%s435 + $0x2c] sm:$0xf]
      %v455 = vld [vmem:[%s435 + $0x30] sm:$0xf]
      %v456 = vld [vmem:[%s435 + $0x34] sm:$0xf]
      %v457 = vld [vmem:[%s435 + $0x38] sm:$0xf]
      %v458 = vld [vmem:[%s435 + $0x3c] sm:$0xf]
      %v459 = vld [vmem:[%s435 + $0x40] sm:$0xf]
      %v460 = vld [vmem:[%s435 + $0x44] sm:$0xf]
      %v461 = vld [vmem:[%s435 + $0x48] sm:$0xf]
      %v462 = vld [vmem:[%s435 + $0x4c] sm:$0xf]
      %v463 = vld [vmem:[%s435 + $0x50] sm:$0xf]
      %v464 = vld [vmem:[%s435 + $0x54] sm:$0xf]
      %v465 = vld [vmem:[%s435 + $0x58] sm:$0xf]
      %v466 = vld [vmem:[%s435 + $0x5c] sm:$0xf]
      %v467 = vld [vmem:[%s435 + $0x60] sm:$0xf]
      %v468 = vld [vmem:[%s435 + $0x64] sm:$0xf]
      %v469 = vld [vmem:[%s435 + $0x68] sm:$0xf]
      %v470 = vld [vmem:[%s435 + $0x6c] sm:$0xf]
      %v471 = vld [vmem:[%s435 + $0x70] sm:$0xf]
      %v472 = vld [vmem:[%s435 + $0x74] sm:$0xf]
      %v473 = vld [vmem:[%s435 + $0x78] sm:$0xf]
      %v474 = vld [vmem:[%s435 + $0x7c] sm:$0xf]
      %v475 = vld [vmem:[%s435 + $0x80] sm:$0xf]
      %v476 = vld [vmem:[%s435 + $0x84] sm:$0xf]
      %v477 = vld [vmem:[%s435 + $0x88] sm:$0xf]
      %v478 = vld [vmem:[%s435 + $0x8c] sm:$0xf]
      %v479 = vld [vmem:[%s435 + $0x90] sm:$0xf]
      %v480 = vld [vmem:[%s435 + $0x94] sm:$0xf]
      %v481 = vld [vmem:[%s435 + $0x98] sm:$0xf]
      %v482 = vld [vmem:[%s435 + $0x9c] sm:$0xf]
      %v483 = vld [vmem:[%s435 + $0xa0] sm:$0xf]
      %v484 = vld [vmem:[%s435 + $0xa4] sm:$0xf]
      %v485 = vld [vmem:[%s435 + $0xa8] sm:$0xf]
      %v486 = vld [vmem:[%s435 + $0xac] sm:$0xf]
      %v487 = vld [vmem:[%s435 + $0xb0] sm:$0xf]
      %v488 = vld [vmem:[%s435 + $0xb4] sm:$0xf]
      %v489 = vld [vmem:[%s435 + $0xb8] sm:$0xf]
      %v490 = vld [vmem:[%s435 + $0xbc] sm:$0xf]
      %v491 = vld [vmem:[%s435 + $0xc0] sm:$0xf]
      %v492 = vld [vmem:[%s435 + $0xc4] sm:$0xf]
      %v493 = vld [vmem:[%s435 + $0xc8] sm:$0xf]
      %v494 = vld [vmem:[%s435 + $0xcc] sm:$0xf]
      %v495 = vld [vmem:[%s435 + $0xd0] sm:$0xf]
      %v496 = vld [vmem:[%s435 + $0xd4] sm:$0xf]
      %v497 = vld [vmem:[%s435 + $0xd8] sm:$0xf]
      %v498 = vld [vmem:[%s435 + $0xdc] sm:$0xf]
      %v499 = vld [vmem:[%s1] sm:$0xff]
      %v500 = vld [vmem:[%s1 + $0x8] sm:$0xff]
      %v501 = vld [vmem:[%s1 + $0x10] sm:$0xff]
      %v502 = vld [vmem:[%s1 + $0x18] sm:$0xff]
      %v503 = vld [vmem:[%s1 + $0x20] sm:$0xff]
      %v504 = vld [vmem:[%s1 + $0x28] sm:$0xff]
      %v505 = vld [vmem:[%s1 + $0x30] sm:$0xff]
      %v506 = vld [vmem:[%s1 + $0x38] sm:$0xff]
      %v507 = vld [vmem:[%s1 + $0x40] sm:$0xff]
      %v508 = vld [vmem:[%s1 + $0x48] sm:$0xff]
      %v509 = vld [vmem:[%s1 + $0x50] sm:$0xff]
      %v510 = vld [vmem:[%s1 + $0x58] sm:$0xff]
      %v567 = vunpack.c.l.b16 %v443
      %v568 = vunpack.c.l.b16 %v444
      %v569 = vunpack.c.l.b16 %v445
      %v570 = vunpack.c.l.b16 %v446
      %v571 = vunpack.c.l.b16 %v447
      %v572 = vunpack.c.l.b16 %v448
      %v573 = vunpack.c.l.b16 %v449
      %v574 = vunpack.c.l.b16 %v450
      %v575 = vunpack.c.l.b16 %v451
      %v576 = vunpack.c.l.b16 %v452
      %v577 = vunpack.c.l.b16 %v453
      %v578 = vunpack.c.l.b16 %v454
      %v579 = vunpack.c.l.b16 %v455
      %v580 = vunpack.c.l.b16 %v456
      %v581 = vunpack.c.l.b16 %v457
      %v582 = vunpack.c.l.b16 %v458
      %v583 = vunpack.c.l.b16 %v459
      %v584 = vunpack.c.l.b16 %v460
      %v585 = vunpack.c.l.b16 %v461
      %v586 = vunpack.c.l.b16 %v462
      %v587 = vunpack.c.l.b16 %v463
      %v588 = vunpack.c.l.b16 %v464
      %v589 = vunpack.c.l.b16 %v465
      %v590 = vunpack.c.l.b16 %v466
      %v591 = vunpack.c.l.b16 %v467
      %v592 = vunpack.c.l.b16 %v468
      %v593 = vunpack.c.l.b16 %v469
      %v594 = vunpack.c.l.b16 %v470
      %v595 = vunpack.c.l.b16 %v471
      %v596 = vunpack.c.l.b16 %v472
      %v597 = vunpack.c.l.b16 %v473
      %v598 = vunpack.c.l.b16 %v474
      %v599 = vunpack.c.l.b16 %v475
      %v600 = vunpack.c.l.b16 %v476
      %v601 = vunpack.c.l.b16 %v477
      %v602 = vunpack.c.l.b16 %v478
      %v603 = vunpack.c.l.b16 %v479
      %v604 = vunpack.c.l.b16 %v480
      %v605 = vunpack.c.l.b16 %v481
      %v606 = vunpack.c.l.b16 %v482
      %v607 = vunpack.c.l.b16 %v483
      %v608 = vunpack.c.l.b16 %v484
      %v609 = vunpack.c.l.b16 %v485
      %v610 = vunpack.c.l.b16 %v486
      %v611 = vunpack.c.l.b16 %v487
      %v612 = vunpack.c.l.b16 %v488
      %v613 = vunpack.c.l.b16 %v489
      %v614 = vunpack.c.l.b16 %v490
      %v615 = vunpack.c.l.b16 %v491
      %v616 = vunpack.c.l.b16 %v492
      %v617 = vunpack.c.l.b16 %v493
      %v618 = vunpack.c.l.b16 %v494
      %v619 = vunpack.c.l.b16 %v495
      %v620 = vunpack.c.l.b16 %v496
      %v621 = vunpack.c.l.b16 %v497
      %v622 = vunpack.c.l.b16 %v498
      %v623 = vpack.c.b16 %v568, %v567
      %v624 = vpack.c.b16 %v570, %v569
      %v625 = vpack.c.b16 %v572, %v571
      %v626 = vpack.c.b16 %v574, %v573
      %v627 = vpack.c.b16 %v576, %v575
      %v628 = vpack.c.b16 %v578, %v577
      %v629 = vpack.c.b16 %v580, %v579
      %v630 = vpack.c.b16 %v582, %v581
      %v631 = vpack.c.b16 %v584, %v583
      %v632 = vpack.c.b16 %v586, %v585
      %v633 = vpack.c.b16 %v588, %v587
      %v634 = vpack.c.b16 %v590, %v589
      %v635 = vpack.c.b16 %v592, %v591
      %v636 = vpack.c.b16 %v594, %v593
      %v637 = vpack.c.b16 %v596, %v595
      %v638 = vpack.c.b16 %v598, %v597
      %v639 = vpack.c.b16 %v600, %v599
      %v640 = vpack.c.b16 %v602, %v601
      %v641 = vpack.c.b16 %v604, %v603
      %v642 = vpack.c.b16 %v606, %v605
      %v643 = vpack.c.b16 %v608, %v607
      %v644 = vpack.c.b16 %v610, %v609
      %v645 = vpack.c.b16 %v612, %v611
      %v646 = vpack.c.b16 %v614, %v613
      %v647 = vpack.c.b16 %v616, %v615
      %v648 = vpack.c.b16 %v618, %v617
      %v649 = vpack.c.b16 %v620, %v619
      %v650 = vpack.c.b16 %v622, %v621
      %v663 = vunpack.c.l.b16 %v499
      %v664 = vunpack.c.h.b16 %v499
      %v665 = vunpack.c.l.b16 %v500
      %v666 = vunpack.c.h.b16 %v500
      %v667 = vunpack.c.l.b16 %v501
      %v668 = vunpack.c.h.b16 %v501
      %v669 = vunpack.c.l.b16 %v502
      %v670 = vunpack.c.h.b16 %v502
      %v671 = vunpack.c.l.b16 %v503
      %v672 = vunpack.c.h.b16 %v503
      %v673 = vunpack.c.l.b16 %v504
      %v674 = vunpack.c.h.b16 %v504
      %v675 = vunpack.c.l.b16 %v505
      %v676 = vunpack.c.h.b16 %v505
      %v677 = vunpack.c.l.b16 %v506
      %v678 = vunpack.c.h.b16 %v506
      %v679 = vunpack.c.l.b16 %v507
      %v680 = vunpack.c.h.b16 %v507
      %v681 = vunpack.c.l.b16 %v508
      %v682 = vunpack.c.h.b16 %v508
      %v683 = vunpack.c.l.b16 %v509
      %v684 = vunpack.c.h.b16 %v509
      %v685 = vunpack.c.l.b16 %v510
      %v686 = vunpack.c.h.b16 %v510
      %v687 = vpack.c.b16 %v665, %v663
      %v688 = vpack.c.b16 %v666, %v664
      %v689 = vpack.c.b16 %v669, %v667
      %v690 = vpack.c.b16 %v670, %v668
      %v691 = vpack.c.b16 %v673, %v671
      %v692 = vpack.c.b16 %v674, %v672
      %v693 = vpack.c.b16 %v677, %v675
      %v694 = vpack.c.b16 %v678, %v676
      %v695 = vpack.c.b16 %v681, %v679
      %v696 = vpack.c.b16 %v682, %v680
      %v697 = vpack.c.b16 %v685, %v683
      %v698 = vpack.c.b16 %v686, %v684
      %vm711 = vcmask 785408
      %v713 = vsel %vm711, %v623, 0
      %v716 = vsel %vm711, %v624, 0
      %v719 = vsel %vm711, %v625, 0
      %v722 = vsel %vm711, %v626, 0
      %v725 = vsel %vm711, %v627, 0
      %v728 = vsel %vm711, %v628, 0
      %v731 = vsel %vm711, %v629, 0
      %v734 = vsel %vm711, %v630, 0
      %v737 = vsel %vm711, %v631, 0
      %v740 = vsel %vm711, %v632, 0
      %v743 = vsel %vm711, %v633, 0
      %v746 = vsel %vm711, %v634, 0
      %v749 = vsel %vm711, %v635, 0
      %v752 = vsel %vm711, %v636, 0
      %v755 = vsel %vm711, %v637, 0
      %v758 = vsel %vm711, %v638, 0
      %v761 = vsel %vm711, %v639, 0
      %v764 = vsel %vm711, %v640, 0
      %v767 = vsel %vm711, %v641, 0
      %v770 = vsel %vm711, %v642, 0
      %v773 = vsel %vm711, %v643, 0
      %v776 = vsel %vm711, %v644, 0
      %v779 = vsel %vm711, %v645, 0
      %v782 = vsel %vm711, %v646, 0
      %v785 = vsel %vm711, %v647, 0
      %v788 = vsel %vm711, %v648, 0
      %v791 = vsel %vm711, %v649, 0
      %v794 = vsel %vm711, %v650, 0
      %796 = vmatprep.subr.bf16.mxu0 %v688
      %797 = vmatpush1.bf16.msra.mxu0 %v687
      %798 = vmatprep.subr.bf16.mxu0 %v690
      %799 = vmatpush1.bf16.msra.mxu0 %v689
      %800 = vmatprep.subr.bf16.mxu0 %v692
      %801 = vmatpush1.bf16.msra.mxu0 %v691
      %802 = vmatprep.subr.bf16.mxu0 %v694
      %803 = vmatpush1.bf16.msra.mxu0 %v693
      %804 = vmatprep.subr.bf16.mxu0 %v696
      %805 = vmatpush1.bf16.msra.mxu0 %v695
      %806 = vmatprep.subr.bf16.mxu0 %v698
      %807 = vmatpush1.bf16.msra.mxu0 %v697
      %808 = vmatprep.subr.bf16.mxu0 0
      %809 = vmatpush1.bf16.msra.mxu0 0
      %810 = vmatprep.subr.bf16.mxu0 0
      %811 = vmatpush1.bf16.msra.mxu0 0
      %812 = vmatprep.subr.bf16.mxu0 0
      %813 = vmatpush1.bf16.msra.mxu0 0
      %814 = vmatprep.subr.bf16.mxu0 0
      %815 = vmatpush1.bf16.msra.mxu0 0
      %816 = vmatprep.subr.bf16.mxu0 0
      %817 = vmatpush1.bf16.msra.mxu0 0
      %818 = vmatprep.subr.bf16.mxu0 0
      %819 = vmatpush1.bf16.msra.mxu0 0
      %820 = vmatprep.subr.bf16.mxu0 0
      %821 = vmatpush1.bf16.msra.mxu0 0
      %822 = vmatprep.subr.bf16.mxu0 0
      %823 = vmatpush1.bf16.msra.mxu0 0
      %824 = vmatprep.subr.bf16.mxu0 0
      %825 = vmatpush1.bf16.msra.mxu0 0
      %826 = vmatprep.subr.bf16.mxu0 0
      %827 = vmatpush1.bf16.msra.mxu0 0
      %828 = vmatprep.mubr.bf16.mxu0 0
      %829 = vmatmul.mubr.bf16.gmra.mrb[0].mxu0 %v713
      %v830 = vpop.f32.mrb[0].mxu0
      %v831 = vadd.f32 0.0, %v830
      %v832 = vpop.f32.mrb[0].mxu0
      %v833 = vadd.f32 0.0, %v832
      %v834 = vpop.f32.mrb[0].mxu0
      %v835 = vadd.f32 0.0, %v834
      %v836 = vpop.f32.mrb[0].mxu0
      %v837 = vadd.f32 0.0, %v836
      %838 = vmatprep.mubr.bf16.mxu0 0
      %839 = vmatmul.mubr.bf16.gmra.mrb[0].mxu0 %v716
      %v840 = vpop.f32.mrb[0].mxu0
      %v841 = vadd.f32 0.0, %v840
      %v842 = vpop.f32.mrb[0].mxu0
      %v843 = vadd.f32 0.0, %v842
      %v844 = vpop.f32.mrb[0].mxu0
      %v845 = vadd.f32 0.0, %v844
      %v846 = vpop.f32.mrb[0].mxu0
      %v847 = vadd.f32 0.0, %v846
      %848 = vmatprep.mubr.bf16.mxu0 0
      %849 = vmatmul.mubr.bf16.gmra.mrb[0].mxu0 %v719
      %v850 = vpop.f32.mrb[0].mxu0
      %v851 = vadd.f32 0.0, %v850
      %v852 = vpop.f32.mrb[0].mxu0
      %v853 = vadd.f32 0.0, %v852
      %v854 = vpop.f32.mrb[0].mxu0
      %v855 = vadd.f32 0.0, %v854
      %v856 = vpop.f32.mrb[0].mxu0
      %v857 = vadd.f32 0.0, %v856
      %858 = vmatprep.mubr.bf16.mxu0 0
      %859 = vmatmul.mubr.bf16.gmra.mrb[0].mxu0 %v722
      %v860 = vpop.f32.mrb[0].mxu0
      %v861 = vadd.f32 0.0, %v860
      %v862 = vpop.f32.mrb[0].mxu0
      %v863 = vadd.f32 0.0, %v862
      %v864 = vpop.f32.mrb[0].mxu0
      %v865 = vadd.f32 0.0, %v864
      %v866 = vpop.f32.mrb[0].mxu0
      %v867 = vadd.f32 0.0, %v866
      %868 = vmatprep.mubr.bf16.mxu0 0
      %869 = vmatmul.mubr.bf16.gmra.mrb[0].mxu0 %v725
      %v870 = vpop.f32.mrb[0].mxu0
      %v871 = vadd.f32 0.0, %v870
      %v872 = vpop.f32.mrb[0].mxu0
      %v873 = vadd.f32 0.0, %v872
      %v874 = vpop.f32.mrb[0].mxu0
      %v875 = vadd.f32 0.0, %v874
      %v876 = vpop.f32.mrb[0].mxu0
      %v877 = vadd.f32 0.0, %v876
      %878 = vmatprep.mubr.bf16.mxu0 0
      %879 = vmatmul.mubr.bf16.gmra.mrb[0].mxu0 %v728
      %v880 = vpop.f32.mrb[0].mxu0
      %v881 = vadd.f32 0.0, %v880
      %v882 = vpop.f32.mrb[0].mxu0
      %v883 = vadd.f32 0.0, %v882
      %v884 = vpop.f32.mrb[0].mxu0
      %v885 = vadd.f32 0.0, %v884
      %v886 = vpop.f32.mrb[0].mxu0
      %v887 = vadd.f32 0.0, %v886
      %888 = vmatprep.mubr.bf16.mxu0 0
      %889 = vmatmul.mubr.bf16.gmra.mrb[0].mxu0 %v731
      %v890 = vpop.f32.mrb[0].mxu0
      %v891 = vadd.f32 0.0, %v890
      %v892 = vpop.f32.mrb[0].mxu0
      %v893 = vadd.f32 0.0, %v892
      %v894 = vpop.f32.mrb[0].mxu0
      %v895 = vadd.f32 0.0, %v894
      %v896 = vpop.f32.mrb[0].mxu0
      %v897 = vadd.f32 0.0, %v896
      %898 = vmatprep.mubr.bf16.mxu0 0
      %899 = vmatmul.mubr.bf16.gmra.mrb[0].mxu0 %v734
      %v900 = vpop.f32.mrb[0].mxu0
      %v901 = vadd.f32 0.0, %v900
      %v902 = vpop.f32.mrb[0].mxu0
      %v903 = vadd.f32 0.0, %v902
      %v904 = vpop.f32.mrb[0].mxu0
      %v905 = vadd.f32 0.0, %v904
      %v906 = vpop.f32.mrb[0].mxu0
      %v907 = vadd.f32 0.0, %v906
      %908 = vmatprep.mubr.bf16.mxu0 0
      %909 = vmatmul.mubr.bf16.gmra.mrb[0].mxu0 %v737
      %v910 = vpop.f32.mrb[0].mxu0
      %v911 = vadd.f32 0.0, %v910
      %v912 = vpop.f32.mrb[0].mxu0
      %v913 = vadd.f32 0.0, %v912
      %v914 = vpop.f32.mrb[0].mxu0
      %v915 = vadd.f32 0.0, %v914
      %v916 = vpop.f32.mrb[0].mxu0
      %v917 = vadd.f32 0.0, %v916
      %918 = vmatprep.mubr.bf16.mxu0 0
      %919 = vmatmul.mubr.bf16.gmra.mrb[0].mxu0 %v740
      %v920 = vpop.f32.mrb[0].mxu0
      %v921 = vadd.f32 0.0, %v920
      %v922 = vpop.f32.mrb[0].mxu0
      %v923 = vadd.f32 0.0, %v922
      %v924 = vpop.f32.mrb[0].mxu0
      %v925 = vadd.f32 0.0, %v924
      %v926 = vpop.f32.mrb[0].mxu0
      %v927 = vadd.f32 0.0, %v926
      %928 = vmatprep.mubr.bf16.mxu0 0
      %929 = vmatmul.mubr.bf16.gmra.mrb[0].mxu0 %v743
      %v930 = vpop.f32.mrb[0].mxu0
      %v931 = vadd.f32 0.0, %v930
      %v932 = vpop.f32.mrb[0].mxu0
      %v933 = vadd.f32 0.0, %v932
      %v934 = vpop.f32.mrb[0].mxu0
      %v935 = vadd.f32 0.0, %v934
      %v936 = vpop.f32.mrb[0].mxu0
      %v937 = vadd.f32 0.0, %v936
      %938 = vmatprep.mubr.bf16.mxu0 0
      %939 = vmatmul.mubr.bf16.gmra.mrb[0].mxu0 %v746
      %v940 = vpop.f32.mrb[0].mxu0
      %v941 = vadd.f32 0.0, %v940
      %v942 = vpop.f32.mrb[0].mxu0
      %v943 = vadd.f32 0.0, %v942
      %v944 = vpop.f32.mrb[0].mxu0
      %v945 = vadd.f32 0.0, %v944
      %v946 = vpop.f32.mrb[0].mxu0
      %v947 = vadd.f32 0.0, %v946
      %948 = vmatprep.mubr.bf16.mxu0 0
      %949 = vmatmul.mubr.bf16.gmra.mrb[0].mxu0 %v749
      %v950 = vpop.f32.mrb[0].mxu0
      %v951 = vadd.f32 0.0, %v950
      %v952 = vpop.f32.mrb[0].mxu0
      %v953 = vadd.f32 0.0, %v952
      %v954 = vpop.f32.mrb[0].mxu0
      %v955 = vadd.f32 0.0, %v954
      %v956 = vpop.f32.mrb[0].mxu0
      %v957 = vadd.f32 0.0, %v956
      %958 = vmatprep.mubr.bf16.mxu0 0
      %959 = vmatmul.mubr.bf16.gmra.mrb[0].mxu0 %v752
      %v960 = vpop.f32.mrb[0].mxu0
      %v961 = vadd.f32 0.0, %v960
      %v962 = vpop.f32.mrb[0].mxu0
      %v963 = vadd.f32 0.0, %v962
      %v964 = vpop.f32.mrb[0].mxu0
      %v965 = vadd.f32 0.0, %v964
      %v966 = vpop.f32.mrb[0].mxu0
      %v967 = vadd.f32 0.0, %v966
      %968 = vmatprep.mubr.bf16.mxu0 0
      %969 = vmatmul.mubr.bf16.gmra.mrb[0].mxu0 %v755
      %v970 = vpop.f32.mrb[0].mxu0
      %v971 = vadd.f32 0.0, %v970
      %v972 = vpop.f32.mrb[0].mxu0
      %v973 = vadd.f32 0.0, %v972
      %v974 = vpop.f32.mrb[0].mxu0
      %v975 = vadd.f32 0.0, %v974
      %v976 = vpop.f32.mrb[0].mxu0
      %v977 = vadd.f32 0.0, %v976
      %978 = vmatprep.mubr.bf16.mxu0 0
      %979 = vmatmul.mubr.bf16.gmra.mrb[0].mxu0 %v758
      %v980 = vpop.f32.mrb[0].mxu0
      %v981 = vadd.f32 0.0, %v980
      %v982 = vpop.f32.mrb[0].mxu0
      %v983 = vadd.f32 0.0, %v982
      %v984 = vpop.f32.mrb[0].mxu0
      %v985 = vadd.f32 0.0, %v984
      %v986 = vpop.f32.mrb[0].mxu0
      %v987 = vadd.f32 0.0, %v986
      %988 = vmatprep.mubr.bf16.mxu0 0
      %989 = vmatmul.mubr.bf16.gmra.mrb[0].mxu0 %v761
      %v990 = vpop.f32.mrb[0].mxu0
      %v991 = vadd.f32 0.0, %v990
      %v992 = vpop.f32.mrb[0].mxu0
      %v993 = vadd.f32 0.0, %v992
      %v994 = vpop.f32.mrb[0].mxu0
      %v995 = vadd.f32 0.0, %v994
      %v996 = vpop.f32.mrb[0].mxu0
      %v997 = vadd.f32 0.0, %v996
      %998 = vmatprep.mubr.bf16.mxu0 0
      %999 = vmatmul.mubr.bf16.gmra.mrb[0].mxu0 %v764
      %v1000 = vpop.f32.mrb[0].mxu0
      %v1001 = vadd.f32 0.0, %v1000
      %v1002 = vpop.f32.mrb[0].mxu0
      %v1003 = vadd.f32 0.0, %v1002
      %v1004 = vpop.f32.mrb[0].mxu0
      %v1005 = vadd.f32 0.0, %v1004
      %v1006 = vpop.f32.mrb[0].mxu0
      %v1007 = vadd.f32 0.0, %v1006
      %1008 = vmatprep.mubr.bf16.mxu0 0
      %1009 = vmatmul.mubr.bf16.gmra.mrb[0].mxu0 %v767
      %v1010 = vpop.f32.mrb[0].mxu0
      %v1011 = vadd.f32 0.0, %v1010
      %v1012 = vpop.f32.mrb[0].mxu0
      %v1013 = vadd.f32 0.0, %v1012
      %v1014 = vpop.f32.mrb[0].mxu0
      %v1015 = vadd.f32 0.0, %v1014
      %v1016 = vpop.f32.mrb[0].mxu0
      %v1017 = vadd.f32 0.0, %v1016
      %1018 = vmatprep.mubr.bf16.mxu0 0
      %1019 = vmatmul.mubr.bf16.gmra.mrb[0].mxu0 %v770
      %v1020 = vpop.f32.mrb[0].mxu0
      %v1021 = vadd.f32 0.0, %v1020
      %v1022 = vpop.f32.mrb[0].mxu0
      %v1023 = vadd.f32 0.0, %v1022
      %v1024 = vpop.f32.mrb[0].mxu0
      %v1025 = vadd.f32 0.0, %v1024
      %v1026 = vpop.f32.mrb[0].mxu0
      %v1027 = vadd.f32 0.0, %v1026
      %1028 = vmatprep.mubr.bf16.mxu0 0
      %1029 = vmatmul.mubr.bf16.gmra.mrb[0].mxu0 %v773
      %v1030 = vpop.f32.mrb[0].mxu0
      %v1031 = vadd.f32 0.0, %v1030
      %v1032 = vpop.f32.mrb[0].mxu0
      %v1033 = vadd.f32 0.0, %v1032
      %v1034 = vpop.f32.mrb[0].mxu0
      %v1035 = vadd.f32 0.0, %v1034
      %v1036 = vpop.f32.mrb[0].mxu0
      %v1037 = vadd.f32 0.0, %v1036
      %1038 = vmatprep.mubr.bf16.mxu0 0
      %1039 = vmatmul.mubr.bf16.gmra.mrb[0].mxu0 %v776
      %v1040 = vpop.f32.mrb[0].mxu0
      %v1041 = vadd.f32 0.0, %v1040
      %v1042 = vpop.f32.mrb[0].mxu0
      %v1043 = vadd.f32 0.0, %v1042
      %v1044 = vpop.f32.mrb[0].mxu0
      %v1045 = vadd.f32 0.0, %v1044
      %v1046 = vpop.f32.mrb[0].mxu0
      %v1047 = vadd.f32 0.0, %v1046
      %1048 = vmatprep.mubr.bf16.mxu0 0
      %1049 = vmatmul.mubr.bf16.gmra.mrb[0].mxu0 %v779
      %v1050 = vpop.f32.mrb[0].mxu0
      %v1051 = vadd.f32 0.0, %v1050
      %v1052 = vpop.f32.mrb[0].mxu0
      %v1053 = vadd.f32 0.0, %v1052
      %v1054 = vpop.f32.mrb[0].mxu0
      %v1055 = vadd.f32 0.0, %v1054
      %v1056 = vpop.f32.mrb[0].mxu0
      %v1057 = vadd.f32 0.0, %v1056
      %1058 = vmatprep.mubr.bf16.mxu0 0
      %1059 = vmatmul.mubr.bf16.gmra.mrb[0].mxu0 %v782
      %v1060 = vpop.f32.mrb[0].mxu0
      %v1061 = vadd.f32 0.0, %v1060
      %v1062 = vpop.f32.mrb[0].mxu0
      %v1063 = vadd.f32 0.0, %v1062
      %v1064 = vpop.f32.mrb[0].mxu0
      %v1065 = vadd.f32 0.0, %v1064
      %v1066 = vpop.f32.mrb[0].mxu0
      %v1067 = vadd.f32 0.0, %v1066
      %1068 = vmatprep.mubr.bf16.mxu0 0
      %1069 = vmatmul.mubr.bf16.gmra.mrb[0].mxu0 %v785
      %v1070 = vpop.f32.mrb[0].mxu0
      %v1071 = vadd.f32 0.0, %v1070
      %v1072 = vpop.f32.mrb[0].mxu0
      %v1073 = vadd.f32 0.0, %v1072
      %v1074 = vpop.f32.mrb[0].mxu0
      %v1075 = vadd.f32 0.0, %v1074
      %v1076 = vpop.f32.mrb[0].mxu0
      %v1077 = vadd.f32 0.0, %v1076
      %1078 = vmatprep.mubr.bf16.mxu0 0
      %1079 = vmatmul.mubr.bf16.gmra.mrb[0].mxu0 %v788
      %v1080 = vpop.f32.mrb[0].mxu0
      %v1081 = vadd.f32 0.0, %v1080
      %v1082 = vpop.f32.mrb[0].mxu0
      %v1083 = vadd.f32 0.0, %v1082
      %v1084 = vpop.f32.mrb[0].mxu0
      %v1085 = vadd.f32 0.0, %v1084
      %v1086 = vpop.f32.mrb[0].mxu0
      %v1087 = vadd.f32 0.0, %v1086
      %1088 = vmatprep.mubr.bf16.mxu0 0
      %1089 = vmatmul.mubr.bf16.gmra.mrb[0].mxu0 %v791
      %v1090 = vpop.f32.mrb[0].mxu0
      %v1091 = vadd.f32 0.0, %v1090
      %v1092 = vpop.f32.mrb[0].mxu0
      %v1093 = vadd.f32 0.0, %v1092
      %v1094 = vpop.f32.mrb[0].mxu0
      %v1095 = vadd.f32 0.0, %v1094
      %v1096 = vpop.f32.mrb[0].mxu0
      %v1097 = vadd.f32 0.0, %v1096
      %1098 = vmatprep.mubr.bf16.mxu0 0
      %1099 = vmatmul.mubr.bf16.gmra.mrb[0].mxu0 %v794
      %v1100 = vpop.f32.mrb[0].mxu0
      %v1101 = vadd.f32 0.0, %v1100
      %v1102 = vpop.f32.mrb[0].mxu0
      %v1103 = vadd.f32 0.0, %v1102
      %v1104 = vpop.f32.mrb[0].mxu0
      %v1105 = vadd.f32 0.0, %v1104
      %v1106 = vpop.f32.mrb[0].mxu0
      %v1107 = vadd.f32 0.0, %v1106
      %1108 = vdwg.mxu0
      %1109 = vst [vmem:[#allocation2] sm:$0xff] %v831
      %vm1110 = vcmask 326656
      %1111 = vst.msk [vmem:[#allocation2 + $0x8] sm:$0xff] %vm1110, %v833
      %1112 = vst [vmem:[#allocation2 + $0x10] sm:$0xff] %v835
      %1113 = vst.msk [vmem:[#allocation2 + $0x18] sm:$0xff] %vm1110, %v837
      %1114 = vst [vmem:[#allocation2 + $0x20] sm:$0xff] %v841
      %1115 = vst.msk [vmem:[#allocation2 + $0x28] sm:$0xff] %vm1110, %v843
      %1116 = vst [vmem:[#allocation2 + $0x30] sm:$0xff] %v845
      %1117 = vst.msk [vmem:[#allocation2 + $0x38] sm:$0xff] %vm1110, %v847
      %1118 = vst [vmem:[#allocation2 + $0x40] sm:$0xff] %v851
      %1119 = vst.msk [vmem:[#allocation2 + $0x48] sm:$0xff] %vm1110, %v853
      %1120 = vst [vmem:[#allocation2 + $0x50] sm:$0xff] %v855
      %1121 = vst.msk [vmem:[#allocation2 + $0x58] sm:$0xff] %vm1110, %v857
      %1122 = vst [vmem:[#allocation2 + $0x60] sm:$0xff] %v861
      %1123 = vst.msk [vmem:[#allocation2 + $0x68] sm:$0xff] %vm1110, %v863
      %1124 = vst [vmem:[#allocation2 + $0x70] sm:$0xff] %v865
      %1125 = vst.msk [vmem:[#allocation2 + $0x78] sm:$0xff] %vm1110, %v867
      %1126 = vst [vmem:[#allocation2 + $0x80] sm:$0xff] %v871
      %1127 = vst.msk [vmem:[#allocation2 + $0x88] sm:$0xff] %vm1110, %v873
      %1128 = vst [vmem:[#allocation2 + $0x90] sm:$0xff] %v875
      %1129 = vst.msk [vmem:[#allocation2 + $0x98] sm:$0xff] %vm1110, %v877
      %1130 = vst [vmem:[#allocation2 + $0xa0] sm:$0xff] %v881
      %1131 = vst.msk [vmem:[#allocation2 + $0xa8] sm:$0xff] %vm1110, %v883
      %1132 = vst [vmem:[#allocation2 + $0xb0] sm:$0xff] %v885
      %1133 = vst.msk [vmem:[#allocation2 + $0xb8] sm:$0xff] %vm1110, %v887
      %1134 = vst [vmem:[#allocation2 + $0xc0] sm:$0xff] %v891
      %1135 = vst.msk [vmem:[#allocation2 + $0xc8] sm:$0xff] %vm1110, %v893
      %1136 = vst [vmem:[#allocation2 + $0xd0] sm:$0xff] %v895
      %1137 = vst.msk [vmem:[#allocation2 + $0xd8] sm:$0xff] %vm1110, %v897
      %1138 = vst [vmem:[#allocation2 + $0xe0] sm:$0xff] %v901
      %1139 = vst.msk [vmem:[#allocation2 + $0xe8] sm:$0xff] %vm1110, %v903
      %1140 = vst [vmem:[#allocation2 + $0xf0] sm:$0xff] %v905
      %1141 = vst.msk [vmem:[#allocation2 + $0xf8] sm:$0xff] %vm1110, %v907
      %1142 = vst [vmem:[#allocation2 + $0x100] sm:$0xff] %v911
      %1143 = vst.msk [vmem:[#allocation2 + $0x108] sm:$0xff] %vm1110, %v913
      %1144 = vst [vmem:[#allocation2 + $0x110] sm:$0xff] %v915
      %1145 = vst.msk [vmem:[#allocation2 + $0x118] sm:$0xff] %vm1110, %v917
      %1146 = vst [vmem:[#allocation2 + $0x120] sm:$0xff] %v921
      %1147 = vst.msk [vmem:[#allocation2 + $0x128] sm:$0xff] %vm1110, %v923
      %1148 = vst [vmem:[#allocation2 + $0x130] sm:$0xff] %v925
      %1149 = vst.msk [vmem:[#allocation2 + $0x138] sm:$0xff] %vm1110, %v927
      %1150 = vst [vmem:[#allocation2 + $0x140] sm:$0xff] %v931
      %1151 = vst.msk [vmem:[#allocation2 + $0x148] sm:$0xff] %vm1110, %v933
      %1152 = vst [vmem:[#allocation2 + $0x150] sm:$0xff] %v935
      %1153 = vst.msk [vmem:[#allocation2 + $0x158] sm:$0xff] %vm1110, %v937
      %1154 = vst [vmem:[#allocation2 + $0x160] sm:$0xff] %v941
      %1155 = vst.msk [vmem:[#allocation2 + $0x168] sm:$0xff] %vm1110, %v943
      %1156 = vst [vmem:[#allocation2 + $0x170] sm:$0xff] %v945
      %1157 = vst.msk [vmem:[#allocation2 + $0x178] sm:$0xff] %vm1110, %v947
      %1158 = vst [vmem:[#allocation2 + $0x180] sm:$0xff] %v951
      %1159 = vst.msk [vmem:[#allocation2 + $0x188] sm:$0xff] %vm1110, %v953
      %1160 = vst [vmem:[#allocation2 + $0x190] sm:$0xff] %v955
      %1161 = vst.msk [vmem:[#allocation2 + $0x198] sm:$0xff] %vm1110, %v957
      %1162 = vst [vmem:[#allocation2 + $0x1a0] sm:$0xff] %v961
      %1163 = vst.msk [vmem:[#allocation2 + $0x1a8] sm:$0xff] %vm1110, %v963
      %1164 = vst [vmem:[#allocation2 + $0x1b0] sm:$0xff] %v965
      %1165 = vst.msk [vmem:[#allocation2 + $0x1b8] sm:$0xff] %vm1110, %v967
      %1166 = vst [vmem:[#allocation2 + $0x1c0] sm:$0xff] %v971
      %1167 = vst.msk [vmem:[#allocation2 + $0x1c8] sm:$0xff] %vm1110, %v973
      %1168 = vst [vmem:[#allocation2 + $0x1d0] sm:$0xff] %v975
      %1169 = vst.msk [vmem:[#allocation2 + $0x1d8] sm:$0xff] %vm1110, %v977
      %1170 = vst [vmem:[#allocation2 + $0x1e0] sm:$0xff] %v981
      %1171 = vst.msk [vmem:[#allocation2 + $0x1e8] sm:$0xff] %vm1110, %v983
      %1172 = vst [vmem:[#allocation2 + $0x1f0] sm:$0xff] %v985
      %1173 = vst.msk [vmem:[#allocation2 + $0x1f8] sm:$0xff] %vm1110, %v987
      %1174 = vst [vmem:[#allocation2 + $0x200] sm:$0xff] %v991
      %1175 = vst.msk [vmem:[#allocation2 + $0x208] sm:$0xff] %vm1110, %v993
      %1176 = vst [vmem:[#allocation2 + $0x210] sm:$0xff] %v995
      %1177 = vst.msk [vmem:[#allocation2 + $0x218] sm:$0xff] %vm1110, %v997
      %1178 = vst [vmem:[#allocation2 + $0x220] sm:$0xff] %v1001
      %1179 = vst.msk [vmem:[#allocation2 + $0x228] sm:$0xff] %vm1110, %v1003
      %1180 = vst [vmem:[#allocation2 + $0x230] sm:$0xff] %v1005
      %1181 = vst.msk [vmem:[#allocation2 + $0x238] sm:$0xff] %vm1110, %v1007
      %1182 = vst [vmem:[#allocation2 + $0x240] sm:$0xff] %v1011
      %1183 = vst.msk [vmem:[#allocation2 + $0x248] sm:$0xff] %vm1110, %v1013
      %1184 = vst [vmem:[#allocation2 + $0x250] sm:$0xff] %v1015
      %1185 = vst.msk [vmem:[#allocation2 + $0x258] sm:$0xff] %vm1110, %v1017
      %1186 = vst [vmem:[#allocation2 + $0x260] sm:$0xff] %v1021
      %1187 = vst.msk [vmem:[#allocation2 + $0x268] sm:$0xff] %vm1110, %v1023
      %1188 = vst [vmem:[#allocation2 + $0x270] sm:$0xff] %v1025
      %1189 = vst.msk [vmem:[#allocation2 + $0x278] sm:$0xff] %vm1110, %v1027
      %1190 = vst [vmem:[#allocation2 + $0x280] sm:$0xff] %v1031
      %1191 = vst.msk [vmem:[#allocation2 + $0x288] sm:$0xff] %vm1110, %v1033
      %1192 = vst [vmem:[#allocation2 + $0x290] sm:$0xff] %v1035
      %1193 = vst.msk [vmem:[#allocation2 + $0x298] sm:$0xff] %vm1110, %v1037
      %1194 = vst [vmem:[#allocation2 + $0x2a0] sm:$0xff] %v1041
      %1195 = vst.msk [vmem:[#allocation2 + $0x2a8] sm:$0xff] %vm1110, %v1043
      %1196 = vst [vmem:[#allocation2 + $0x2b0] sm:$0xff] %v1045
      %1197 = vst.msk [vmem:[#allocation2 + $0x2b8] sm:$0xff] %vm1110, %v1047
      %1198 = vst [vmem:[#allocation2 + $0x2c0] sm:$0xff] %v1051
      %1199 = vst.msk [vmem:[#allocation2 + $0x2c8] sm:$0xff] %vm1110, %v1053
      %1200 = vst [vmem:[#allocation2 + $0x2d0] sm:$0xff] %v1055
      %1201 = vst.msk [vmem:[#allocation2 + $0x2d8] sm:$0xff] %vm1110, %v1057
      %1202 = vst [vmem:[#allocation2 + $0x2e0] sm:$0xff] %v1061
      %1203 = vst.msk [vmem:[#allocation2 + $0x2e8] sm:$0xff] %vm1110, %v1063
      %1204 = vst [vmem:[#allocation2 + $0x2f0] sm:$0xff] %v1065
      %1205 = vst.msk [vmem:[#allocation2 + $0x2f8] sm:$0xff] %vm1110, %v1067
      %1206 = vst [vmem:[#allocation2 + $0x300] sm:$0xff] %v1071
      %1207 = vst.msk [vmem:[#allocation2 + $0x308] sm:$0xff] %vm1110, %v1073
      %1208 = vst [vmem:[#allocation2 + $0x310] sm:$0xff] %v1075
      %1209 = vst.msk [vmem:[#allocation2 + $0x318] sm:$0xff] %vm1110, %v1077
      %1210 = vst [vmem:[#allocation2 + $0x320] sm:$0xff] %v1081
      %1211 = vst.msk [vmem:[#allocation2 + $0x328] sm:$0xff] %vm1110, %v1083
      %1212 = vst [vmem:[#allocation2 + $0x330] sm:$0xff] %v1085
      %1213 = vst.msk [vmem:[#allocation2 + $0x338] sm:$0xff] %vm1110, %v1087
      %1214 = vst [vmem:[#allocation2 + $0x340] sm:$0xff] %v1091
      %1215 = vst.msk [vmem:[#allocation2 + $0x348] sm:$0xff] %vm1110, %v1093
      %1216 = vst [vmem:[#allocation2 + $0x350] sm:$0xff] %v1095
      %1217 = vst.msk [vmem:[#allocation2 + $0x358] sm:$0xff] %vm1110, %v1097
      %1218 = vst [vmem:[#allocation2 + $0x360] sm:$0xff] %v1101
      %1219 = vst.msk [vmem:[#allocation2 + $0x368] sm:$0xff] %vm1110, %v1103
      %1220 = vst [vmem:[#allocation2 + $0x370] sm:$0xff] %v1105
      %1221 = vst.msk [vmem:[#allocation2 + $0x378] sm:$0xff] %vm1110, %v1107
      %v1222 = vld [vmem:[#allocation2] sm:$0xff]
      %v1223 = vld [vmem:[#allocation2 + $0x8] sm:$0xff]
      %v1224 = vld [vmem:[#allocation2 + $0x10] sm:$0xff]
      %v1225 = vld [vmem:[#allocation2 + $0x18] sm:$0xff]
      %v1226 = vld [vmem:[#allocation2 + $0x20] sm:$0xff]
      %v1227 = vld [vmem:[#allocation2 + $0x28] sm:$0xff]
      %v1228 = vld [vmem:[#allocation2 + $0x30] sm:$0xff]
      %v1229 = vld [vmem:[#allocation2 + $0x38] sm:$0xff]
      %v1230 = vld [vmem:[#allocation2 + $0x40] sm:$0xff]
      %v1231 = vld [vmem:[#allocation2 + $0x48] sm:$0xff]
      %v1232 = vld [vmem:[#allocation2 + $0x50] sm:$0xff]
      %v1233 = vld [vmem:[#allocation2 + $0x58] sm:$0xff]
      %v1234 = vld [vmem:[#allocation2 + $0x60] sm:$0xff]
      %v1235 = vld [vmem:[#allocation2 + $0x68] sm:$0xff]
      %v1236 = vld [vmem:[#allocation2 + $0x70] sm:$0xff]
      %v1237 = vld [vmem:[#allocation2 + $0x78] sm:$0xff]
      %v1238 = vld [vmem:[#allocation2 + $0x80] sm:$0xff]
      %v1239 = vld [vmem:[#allocation2 + $0x88] sm:$0xff]
      %v1240 = vld [vmem:[#allocation2 + $0x90] sm:$0xff]
      %v1241 = vld [vmem:[#allocation2 + $0x98] sm:$0xff]
      %v1242 = vld [vmem:[#allocation2 + $0xa0] sm:$0xff]
      %v1243 = vld [vmem:[#allocation2 + $0xa8] sm:$0xff]
      %v1244 = vld [vmem:[#allocation2 + $0xb0] sm:$0xff]
      %v1245 = vld [vmem:[#allocation2 + $0xb8] sm:$0xff]
      %v1246 = vld [vmem:[#allocation2 + $0xc0] sm:$0xff]
      %v1247 = vld [vmem:[#allocation2 + $0xc8] sm:$0xff]
      %v1248 = vld [vmem:[#allocation2 + $0xd0] sm:$0xff]
      %v1249 = vld [vmem:[#allocation2 + $0xd8] sm:$0xff]
      %v1250 = vld [vmem:[#allocation2 + $0xe0] sm:$0xff]
      %v1251 = vld [vmem:[#allocation2 + $0xe8] sm:$0xff]
      %v1252 = vld [vmem:[#allocation2 + $0xf0] sm:$0xff]
      %v1253 = vld [vmem:[#allocation2 + $0xf8] sm:$0xff]
      %v1254 = vld [vmem:[#allocation2 + $0x100] sm:$0xff]
      %v1255 = vld [vmem:[#allocation2 + $0x108] sm:$0xff]
      %v1256 = vld [vmem:[#allocation2 + $0x110] sm:$0xff]
      %v1257 = vld [vmem:[#allocation2 + $0x118] sm:$0xff]
      %v1258 = vld [vmem:[#allocation2 + $0x120] sm:$0xff]
      %v1259 = vld [vmem:[#allocation2 + $0x128] sm:$0xff]
      %v1260 = vld [vmem:[#allocation2 + $0x130] sm:$0xff]
      %v1261 = vld [vmem:[#allocation2 + $0x138] sm:$0xff]
      %v1262 = vld [vmem:[#allocation2 + $0x140] sm:$0xff]
      %v1263 = vld [vmem:[#allocation2 + $0x148] sm:$0xff]
      %v1264 = vld [vmem:[#allocation2 + $0x150] sm:$0xff]
      %v1265 = vld [vmem:[#allocation2 + $0x158] sm:$0xff]
      %v1266 = vld [vmem:[#allocation2 + $0x160] sm:$0xff]
      %v1267 = vld [vmem:[#allocation2 + $0x168] sm:$0xff]
      %v1268 = vld [vmem:[#allocation2 + $0x170] sm:$0xff]
      %v1269 = vld [vmem:[#allocation2 + $0x178] sm:$0xff]
      %v1270 = vld [vmem:[#allocation2 + $0x180] sm:$0xff]
      %v1271 = vld [vmem:[#allocation2 + $0x188] sm:$0xff]
      %v1272 = vld [vmem:[#allocation2 + $0x190] sm:$0xff]
      %v1273 = vld [vmem:[#allocation2 + $0x198] sm:$0xff]
      %v1274 = vld [vmem:[#allocation2 + $0x1a0] sm:$0xff]
      %v1275 = vld [vmem:[#allocation2 + $0x1a8] sm:$0xff]
      %v1276 = vld [vmem:[#allocation2 + $0x1b0] sm:$0xff]
      %v1277 = vld [vmem:[#allocation2 + $0x1b8] sm:$0xff]
      %v1278 = vld [vmem:[#allocation2 + $0x1c0] sm:$0xff]
      %v1279 = vld [vmem:[#allocation2 + $0x1c8] sm:$0xff]
      %v1280 = vld [vmem:[#allocation2 + $0x1d0] sm:$0xff]
      %v1281 = vld [vmem:[#allocation2 + $0x1d8] sm:$0xff]
      %v1282 = vld [vmem:[#allocation2 + $0x1e0] sm:$0xff]
      %v1283 = vld [vmem:[#allocation2 + $0x1e8] sm:$0xff]
      %v1284 = vld [vmem:[#allocation2 + $0x1f0] sm:$0xff]
      %v1285 = vld [vmem:[#allocation2 + $0x1f8] sm:$0xff]
      %v1286 = vld [vmem:[#allocation2 + $0x200] sm:$0xff]
      %v1287 = vld [vmem:[#allocation2 + $0x208] sm:$0xff]
      %v1288 = vld [vmem:[#allocation2 + $0x210] sm:$0xff]
      %v1289 = vld [vmem:[#allocation2 + $0x218] sm:$0xff]
      %v1290 = vld [vmem:[#allocation2 + $0x220] sm:$0xff]
      %v1291 = vld [vmem:[#allocation2 + $0x228] sm:$0xff]
      %v1292 = vld [vmem:[#allocation2 + $0x230] sm:$0xff]
      %v1293 = vld [vmem:[#allocation2 + $0x238] sm:$0xff]
      %v1294 = vld [vmem:[#allocation2 + $0x240] sm:$0xff]
      %v1295 = vld [vmem:[#allocation2 + $0x248] sm:$0xff]
      %v1296 = vld [vmem:[#allocation2 + $0x250] sm:$0xff]
      %v1297 = vld [vmem:[#allocation2 + $0x258] sm:$0xff]
      %v1298 = vld [vmem:[#allocation2 + $0x260] sm:$0xff]
      %v1299 = vld [vmem:[#allocation2 + $0x268] sm:$0xff]
      %v1300 = vld [vmem:[#allocation2 + $0x270] sm:$0xff]
      %v1301 = vld [vmem:[#allocation2 + $0x278] sm:$0xff]
      %v1302 = vld [vmem:[#allocation2 + $0x280] sm:$0xff]
      %v1303 = vld [vmem:[#allocation2 + $0x288] sm:$0xff]
      %v1304 = vld [vmem:[#allocation2 + $0x290] sm:$0xff]
      %v1305 = vld [vmem:[#allocation2 + $0x298] sm:$0xff]
      %v1306 = vld [vmem:[#allocation2 + $0x2a0] sm:$0xff]
      %v1307 = vld [vmem:[#allocation2 + $0x2a8] sm:$0xff]
      %v1308 = vld [vmem:[#allocation2 + $0x2b0] sm:$0xff]
      %v1309 = vld [vmem:[#allocation2 + $0x2b8] sm:$0xff]
      %v1310 = vld [vmem:[#allocation2 + $0x2c0] sm:$0xff]
      %v1311 = vld [vmem:[#allocation2 + $0x2c8] sm:$0xff]
      %v1312 = vld [vmem:[#allocation2 + $0x2d0] sm:$0xff]
      %v1313 = vld [vmem:[#allocation2 + $0x2d8] sm:$0xff]
      %v1314 = vld [vmem:[#allocation2 + $0x2e0] sm:$0xff]
      %v1315 = vld [vmem:[#allocation2 + $0x2e8] sm:$0xff]
      %v1316 = vld [vmem:[#allocation2 + $0x2f0] sm:$0xff]
      %v1317 = vld [vmem:[#allocation2 + $0x2f8] sm:$0xff]
      %v1318 = vld [vmem:[#allocation2 + $0x300] sm:$0xff]
      %v1319 = vld [vmem:[#allocation2 + $0x308] sm:$0xff]
      %v1320 = vld [vmem:[#allocation2 + $0x310] sm:$0xff]
      %v1321 = vld [vmem:[#allocation2 + $0x318] sm:$0xff]
      %v1322 = vld [vmem:[#allocation2 + $0x320] sm:$0xff]
      %v1323 = vld [vmem:[#allocation2 + $0x328] sm:$0xff]
      %v1324 = vld [vmem:[#allocation2 + $0x330] sm:$0xff]
      %v1325 = vld [vmem:[#allocation2 + $0x338] sm:$0xff]
      %v1326 = vld [vmem:[#allocation2 + $0x340] sm:$0xff]
      %v1327 = vld [vmem:[#allocation2 + $0x348] sm:$0xff]
      %v1328 = vld [vmem:[#allocation2 + $0x350] sm:$0xff]
      %v1329 = vld [vmem:[#allocation2 + $0x358] sm:$0xff]
      %v1330 = vld [vmem:[#allocation2 + $0x360] sm:$0xff]
      %v1331 = vld [vmem:[#allocation2 + $0x368] sm:$0xff]
      %v1332 = vld [vmem:[#allocation2 + $0x370] sm:$0xff]
      %v1333 = vld [vmem:[#allocation2 + $0x378] sm:$0xff]
      %v1334 = vld [vmem:[%s435 + $0x8] sm:$0xf]
      %v1335 = vld [vmem:[%s435 + $0xc] sm:$0xf]
      %v1336 = vld [vmem:[%s435 + $0x10] sm:$0xf]
      %v1337 = vld [vmem:[%s435 + $0x14] sm:$0xf]
      %v1338 = vld [vmem:[%s435 + $0x18] sm:$0xf]
      %v1339 = vld [vmem:[%s435 + $0x1c] sm:$0xf]
      %v1340 = vld [vmem:[%s435 + $0x20] sm:$0xf]
      %v1341 = vld [vmem:[%s435 + $0x24] sm:$0xf]
      %v1342 = vld [vmem:[%s435 + $0x28] sm:$0xf]
      %v1343 = vld [vmem:[%s435 + $0x2c] sm:$0xf]
      %v1344 = vld [vmem:[%s435 + $0x30] sm:$0xf]
      %v1345 = vld [vmem:[%s435 + $0x34] sm:$0xf]
      %v1346 = vld [vmem:[%s435 + $0x38] sm:$0xf]
      %v1347 = vld [vmem:[%s435 + $0x3c] sm:$0xf]
      %v1348 = vld [vmem:[%s435 + $0x40] sm:$0xf]
      %v1349 = vld [vmem:[%s435 + $0x44] sm:$0xf]
      %v1350 = vld [vmem:[%s435 + $0x48] sm:$0xf]
      %v1351 = vld [vmem:[%s435 + $0x4c] sm:$0xf]
      %v1352 = vld [vmem:[%s435 + $0x50] sm:$0xf]
      %v1353 = vld [vmem:[%s435 + $0x54] sm:$0xf]
      %v1354 = vld [vmem:[%s435 + $0x58] sm:$0xf]
      %v1355 = vld [vmem:[%s435 + $0x5c] sm:$0xf]
      %v1356 = vld [vmem:[%s435 + $0x60] sm:$0xf]
      %v1357 = vld [vmem:[%s435 + $0x64] sm:$0xf]
      %v1358 = vld [vmem:[%s435 + $0x68] sm:$0xf]
      %v1359 = vld [vmem:[%s435 + $0x6c] sm:$0xf]
      %v1360 = vld [vmem:[%s435 + $0x70] sm:$0xf]
      %v1361 = vld [vmem:[%s435 + $0x74] sm:$0xf]
      %v1362 = vld [vmem:[%s435 + $0x78] sm:$0xf]
      %v1363 = vld [vmem:[%s435 + $0x7c] sm:$0xf]
      %v1364 = vld [vmem:[%s435 + $0x80] sm:$0xf]
      %v1365 = vld [vmem:[%s435 + $0x84] sm:$0xf]
      %v1366 = vld [vmem:[%s435 + $0x88] sm:$0xf]
      %v1367 = vld [vmem:[%s435 + $0x8c] sm:$0xf]
      %v1368 = vld [vmem:[%s435 + $0x90] sm:$0xf]
      %v1369 = vld [vmem:[%s435 + $0x94] sm:$0xf]
      %v1370 = vld [vmem:[%s435 + $0x98] sm:$0xf]
      %v1371 = vld [vmem:[%s435 + $0x9c] sm:$0xf]
      %v1372 = vld [vmem:[%s435 + $0xa0] sm:$0xf]
      %v1373 = vld [vmem:[%s435 + $0xa4] sm:$0xf]
      %v1374 = vld [vmem:[%s435 + $0xa8] sm:$0xf]
      %v1375 = vld [vmem:[%s435 + $0xac] sm:$0xf]
      %v1376 = vld [vmem:[%s435 + $0xb0] sm:$0xf]
      %v1377 = vld [vmem:[%s435 + $0xb4] sm:$0xf]
      %v1378 = vld [vmem:[%s435 + $0xb8] sm:$0xf]
      %v1379 = vld [vmem:[%s435 + $0xbc] sm:$0xf]
      %v1380 = vld [vmem:[%s435 + $0xc0] sm:$0xf]
      %v1381 = vld [vmem:[%s435 + $0xc4] sm:$0xf]
      %v1382 = vld [vmem:[%s435 + $0xc8] sm:$0xf]
      %v1383 = vld [vmem:[%s435 + $0xcc] sm:$0xf]
      %v1384 = vld [vmem:[%s435 + $0xd0] sm:$0xf]
      %v1385 = vld [vmem:[%s435 + $0xd4] sm:$0xf]
      %v1386 = vld [vmem:[%s435 + $0xd8] sm:$0xf]
      %v1387 = vld [vmem:[%s435 + $0xdc] sm:$0xf]
      %v1388 = vld [vmem:[%s435 + $0xe0] sm:$0xf]
      %v1389 = vld [vmem:[%s435 + $0xe4] sm:$0xf]
      %s1390 = scalar_lea.vmem %s1, 96
      %v1391 = vld [vmem:[%s1390] sm:$0xff]
      %v1392 = vld [vmem:[%s1390 + $0x8] sm:$0xff]
      %v1393 = vld [vmem:[%s1390 + $0x10] sm:$0xff]
      %v1394 = vld [vmem:[%s1390 + $0x18] sm:$0xff]
      %v1395 = vld [vmem:[%s1390 + $0x20] sm:$0xff]
      %v1396 = vld [vmem:[%s1390 + $0x28] sm:$0xff]
      %v1397 = vld [vmem:[%s1390 + $0x30] sm:$0xff]
      %v1398 = vld [vmem:[%s1390 + $0x38] sm:$0xff]
      %v1399 = vld [vmem:[%s1390 + $0x40] sm:$0xff]
      %v1400 = vld [vmem:[%s1390 + $0x48] sm:$0xff]
      %v1401 = vld [vmem:[%s1390 + $0x50] sm:$0xff]
      %v1402 = vld [vmem:[%s1390 + $0x58] sm:$0xff]
      %v1459 = vunpack.c.l.b16 %v1334
      %v1460 = vunpack.c.l.b16 %v1335
      %v1461 = vunpack.c.l.b16 %v1336
      %v1462 = vunpack.c.l.b16 %v1337
      %v1463 = vunpack.c.l.b16 %v1338
      %v1464 = vunpack.c.l.b16 %v1339
      %v1465 = vunpack.c.l.b16 %v1340
      %v1466 = vunpack.c.l.b16 %v1341
      %v1467 = vunpack.c.l.b16 %v1342
      %v1468 = vunpack.c.l.b16 %v1343
      %v1469 = vunpack.c.l.b16 %v1344
      %v1470 = vunpack.c.l.b16 %v1345
      %v1471 = vunpack.c.l.b16 %v1346
      %v1472 = vunpack.c.l.b16 %v1347
      %v1473 = vunpack.c.l.b16 %v1348
      %v1474 = vunpack.c.l.b16 %v1349
      %v1475 = vunpack.c.l.b16 %v1350
      %v1476 = vunpack.c.l.b16 %v1351
      %v1477 = vunpack.c.l.b16 %v1352
      %v1478 = vunpack.c.l.b16 %v1353
      %v1479 = vunpack.c.l.b16 %v1354
      %v1480 = vunpack.c.l.b16 %v1355
      %v1481 = vunpack.c.l.b16 %v1356
      %v1482 = vunpack.c.l.b16 %v1357
      %v1483 = vunpack.c.l.b16 %v1358
      %v1484 = vunpack.c.l.b16 %v1359
      %v1485 = vunpack.c.l.b16 %v1360
      %v1486 = vunpack.c.l.b16 %v1361
      %v1487 = vunpack.c.l.b16 %v1362
      %v1488 = vunpack.c.l.b16 %v1363
      %v1489 = vunpack.c.l.b16 %v1364
      %v1490 = vunpack.c.l.b16 %v1365
      %v1491 = vunpack.c.l.b16 %v1366
      %v1492 = vunpack.c.l.b16 %v1367
      %v1493 = vunpack.c.l.b16 %v1368
      %v1494 = vunpack.c.l.b16 %v1369
      %v1495 = vunpack.c.l.b16 %v1370
      %v1496 = vunpack.c.l.b16 %v1371
      %v1497 = vunpack.c.l.b16 %v1372
      %v1498 = vunpack.c.l.b16 %v1373
      %v1499 = vunpack.c.l.b16 %v1374
      %v1500 = vunpack.c.l.b16 %v1375
      %v1501 = vunpack.c.l.b16 %v1376
      %v1502 = vunpack.c.l.b16 %v1377
      %v1503 = vunpack.c.l.b16 %v1378
      %v1504 = vunpack.c.l.b16 %v1379
      %v1505 = vunpack.c.l.b16 %v1380
      %v1506 = vunpack.c.l.b16 %v1381
      %v1507 = vunpack.c.l.b16 %v1382
      %v1508 = vunpack.c.l.b16 %v1383
      %v1509 = vunpack.c.l.b16 %v1384
      %v1510 = vunpack.c.l.b16 %v1385
      %v1511 = vunpack.c.l.b16 %v1386
      %v1512 = vunpack.c.l.b16 %v1387
      %v1513 = vunpack.c.l.b16 %v1388
      %v1514 = vunpack.c.l.b16 %v1389
      %v1515 = vpack.c.b16 %v1460, %v1459
      %v1516 = vpack.c.b16 %v1462, %v1461
      %v1517 = vpack.c.b16 %v1464, %v1463
      %v1518 = vpack.c.b16 %v1466, %v1465
      %v1519 = vpack.c.b16 %v1468, %v1467
      %v1520 = vpack.c.b16 %v1470, %v1469
      %v1521 = vpack.c.b16 %v1472, %v1471
      %v1522 = vpack.c.b16 %v1474, %v1473
      %v1523 = vpack.c.b16 %v1476, %v1475
      %v1524 = vpack.c.b16 %v1478, %v1477
      %v1525 = vpack.c.b16 %v1480, %v1479
      %v1526 = vpack.c.b16 %v1482, %v1481
      %v1527 = vpack.c.b16 %v1484, %v1483
      %v1528 = vpack.c.b16 %v1486, %v1485
      %v1529 = vpack.c.b16 %v1488, %v1487
      %v1530 = vpack.c.b16 %v1490, %v1489
      %v1531 = vpack.c.b16 %v1492, %v1491
      %v1532 = vpack.c.b16 %v1494, %v1493
      %v1533 = vpack.c.b16 %v1496, %v1495
      %v1534 = vpack.c.b16 %v1498, %v1497
      %v1535 = vpack.c.b16 %v1500, %v1499
      %v1536 = vpack.c.b16 %v1502, %v1501
      %v1537 = vpack.c.b16 %v1504, %v1503
      %v1538 = vpack.c.b16 %v1506, %v1505
      %v1539 = vpack.c.b16 %v1508, %v1507
      %v1540 = vpack.c.b16 %v1510, %v1509
      %v1541 = vpack.c.b16 %v1512, %v1511
      %v1542 = vpack.c.b16 %v1514, %v1513
      %v1555 = vunpack.c.l.b16 %v1391
      %v1556 = vunpack.c.h.b16 %v1391
      %v1557 = vunpack.c.l.b16 %v1392
      %v1558 = vunpack.c.h.b16 %v1392
      %v1559 = vunpack.c.l.b16 %v1393
      %v1560 = vunpack.c.h.b16 %v1393
      %v1561 = vunpack.c.l.b16 %v1394
      %v1562 = vunpack.c.h.b16 %v1394
      %v1563 = vunpack.c.l.b16 %v1395
      %v1564 = vunpack.c.h.b16 %v1395
      %v1565 = vunpack.c.l.b16 %v1396
      %v1566 = vunpack.c.h.b16 %v1396
      %v1567 = vunpack.c.l.b16 %v1397
      %v1568 = vunpack.c.h.b16 %v1397
      %v1569 = vunpack.c.l.b16 %v1398
      %v1570 = vunpack.c.h.b16 %v1398
      %v1571 = vunpack.c.l.b16 %v1399
      %v1572 = vunpack.c.h.b16 %v1399
      %v1573 = vunpack.c.l.b16 %v1400
      %v1574 = vunpack.c.h.b16 %v1400
      %v1575 = vunpack.c.l.b16 %v1401
      %v1576 = vunpack.c.h.b16 %v1401
      %v1577 = vunpack.c.l.b16 %v1402
      %v1578 = vunpack.c.h.b16 %v1402
      %v1579 = vpack.c.b16 %v1557, %v1555
      %v1580 = vpack.c.b16 %v1558, %v1556
      %v1581 = vpack.c.b16 %v1561, %v1559
      %v1582 = vpack.c.b16 %v1562, %v1560
      %v1583 = vpack.c.b16 %v1565, %v1563
      %v1584 = vpack.c.b16 %v1566, %v1564
      %v1585 = vpack.c.b16 %v1569, %v1567
      %v1586 = vpack.c.b16 %v1570, %v1568
      %v1587 = vpack.c.b16 %v1573, %v1571
      %v1588 = vpack.c.b16 %v1574, %v1572
      %v1589 = vpack.c.b16 %v1577, %v1575
      %v1590 = vpack.c.b16 %v1578, %v1576
      %v1604 = vsel %vm711, %v1515, 0
      %v1607 = vsel %vm711, %v1516, 0
      %v1610 = vsel %vm711, %v1517, 0
      %v1613 = vsel %vm711, %v1518, 0
      %v1616 = vsel %vm711, %v1519, 0
      %v1619 = vsel %vm711, %v1520, 0
      %v1622 = vsel %vm711, %v1521, 0
      %v1625 = vsel %vm711, %v1522, 0
      %v1628 = vsel %vm711, %v1523, 0
      %v1631 = vsel %vm711, %v1524, 0
      %v1634 = vsel %vm711, %v1525, 0
      %v1637 = vsel %vm711, %v1526, 0
      %v1640 = vsel %vm711, %v1527, 0
      %v1643 = vsel %vm711, %v1528, 0
      %v1646 = vsel %vm711, %v1529, 0
      %v1649 = vsel %vm711, %v1530, 0
      %v1652 = vsel %vm711, %v1531, 0
      %v1655 = vsel %vm711, %v1532, 0
      %v1658 = vsel %vm711, %v1533, 0
      %v1661 = vsel %vm711, %v1534, 0
      %v1664 = vsel %vm711, %v1535, 0
      %v1667 = vsel %vm711, %v1536, 0
      %v1670 = vsel %vm711, %v1537, 0
      %v1673 = vsel %vm711, %v1538, 0
      %v1676 = vsel %vm711, %v1539, 0
      %v1679 = vsel %vm711, %v1540, 0
      %v1682 = vsel %vm711, %v1541, 0
      %v1685 = vsel %vm711, %v1542, 0
      %1687 = vmatprep.subr.bf16.mxu0 %v1580
      %1688 = vmatpush1.bf16.msra.mxu0 %v1579
      %1689 = vmatprep.subr.bf16.mxu0 %v1582
      %1690 = vmatpush1.bf16.msra.mxu0 %v1581
      %1691 = vmatprep.subr.bf16.mxu0 %v1584
      %1692 = vmatpush1.bf16.msra.mxu0 %v1583
      %1693 = vmatprep.subr.bf16.mxu0 %v1586
      %1694 = vmatpush1.bf16.msra.mxu0 %v1585
      %1695 = vmatprep.subr.bf16.mxu0 %v1588
      %1696 = vmatpush1.bf16.msra.mxu0 %v1587
      %1697 = vmatprep.subr.bf16.mxu0 %v1590
      %1698 = vmatpush1.bf16.msra.mxu0 %v1589
      %1699 = vmatprep.subr.bf16.mxu0 0
      %1700 = vmatpush1.bf16.msra.mxu0 0
      %1701 = vmatprep.subr.bf16.mxu0 0
      %1702 = vmatpush1.bf16.msra.mxu0 0
      %1703 = vmatprep.subr.bf16.mxu0 0
      %1704 = vmatpush1.bf16.msra.mxu0 0
      %1705 = vmatprep.subr.bf16.mxu0 0
      %1706 = vmatpush1.bf16.msra.mxu0 0
      %1707 = vmatprep.subr.bf16.mxu0 0
      %1708 = vmatpush1.bf16.msra.mxu0 0
      %1709 = vmatprep.subr.bf16.mxu0 0
      %1710 = vmatpush1.bf16.msra.mxu0 0
      %1711 = vmatprep.subr.bf16.mxu0 0
      %1712 = vmatpush1.bf16.msra.mxu0 0
      %1713 = vmatprep.subr.bf16.mxu0 0
      %1714 = vmatpush1.bf16.msra.mxu0 0
      %1715 = vmatprep.subr.bf16.mxu0 0
      %1716 = vmatpush1.bf16.msra.mxu0 0
      %1717 = vmatprep.subr.bf16.mxu0 0
      %1718 = vmatpush1.bf16.msra.mxu0 0
      %1719 = vmatprep.mubr.bf16.mxu0 0
      %1720 = vmatmul.mubr.bf16.gmra.mrb[0].mxu0 %v1604
      %v1721 = vpop.f32.mrb[0].mxu0
      %v1722 = vadd.f32 0.0, %v1721
      %v1723 = vpop.f32.mrb[0].mxu0
      %v1724 = vadd.f32 0.0, %v1723
      %v1725 = vpop.f32.mrb[0].mxu0
      %v1726 = vadd.f32 0.0, %v1725
      %v1727 = vpop.f32.mrb[0].mxu0
      %v1728 = vadd.f32 0.0, %v1727
      %1729 = vmatprep.mubr.bf16.mxu0 0
      %1730 = vmatmul.mubr.bf16.gmra.mrb[0].mxu0 %v1607
      %v1731 = vpop.f32.mrb[0].mxu0
      %v1732 = vadd.f32 0.0, %v1731
      %v1733 = vpop.f32.mrb[0].mxu0
      %v1734 = vadd.f32 0.0, %v1733
      %v1735 = vpop.f32.mrb[0].mxu0
      %v1736 = vadd.f32 0.0, %v1735
      %v1737 = vpop.f32.mrb[0].mxu0
      %v1738 = vadd.f32 0.0, %v1737
      %1739 = vmatprep.mubr.bf16.mxu0 0
      %1740 = vmatmul.mubr.bf16.gmra.mrb[0].mxu0 %v1610
      %v1741 = vpop.f32.mrb[0].mxu0
      %v1742 = vadd.f32 0.0, %v1741
      %v1743 = vpop.f32.mrb[0].mxu0
      %v1744 = vadd.f32 0.0, %v1743
      %v1745 = vpop.f32.mrb[0].mxu0
      %v1746 = vadd.f32 0.0, %v1745
      %v1747 = vpop.f32.mrb[0].mxu0
      %v1748 = vadd.f32 0.0, %v1747
      %1749 = vmatprep.mubr.bf16.mxu0 0
      %1750 = vmatmul.mubr.bf16.gmra.mrb[0].mxu0 %v1613
      %v1751 = vpop.f32.mrb[0].mxu0
      %v1752 = vadd.f32 0.0, %v1751
      %v1753 = vpop.f32.mrb[0].mxu0
      %v1754 = vadd.f32 0.0, %v1753
      %v1755 = vpop.f32.mrb[0].mxu0
      %v1756 = vadd.f32 0.0, %v1755
      %v1757 = vpop.f32.mrb[0].mxu0
      %v1758 = vadd.f32 0.0, %v1757
      %1759 = vmatprep.mubr.bf16.mxu0 0
      %1760 = vmatmul.mubr.bf16.gmra.mrb[0].mxu0 %v1616
      %v1761 = vpop.f32.mrb[0].mxu0
      %v1762 = vadd.f32 0.0, %v1761
      %v1763 = vpop.f32.mrb[0].mxu0
      %v1764 = vadd.f32 0.0, %v1763
      %v1765 = vpop.f32.mrb[0].mxu0
      %v1766 = vadd.f32 0.0, %v1765
      %v1767 = vpop.f32.mrb[0].mxu0
      %v1768 = vadd.f32 0.0, %v1767
      %1769 = vmatprep.mubr.bf16.mxu0 0
      %1770 = vmatmul.mubr.bf16.gmra.mrb[0].mxu0 %v1619
      %v1771 = vpop.f32.mrb[0].mxu0
      %v1772 = vadd.f32 0.0, %v1771
      %v1773 = vpop.f32.mrb[0].mxu0
      %v1774 = vadd.f32 0.0, %v1773
      %v1775 = vpop.f32.mrb[0].mxu0
      %v1776 = vadd.f32 0.0, %v1775
      %v1777 = vpop.f32.mrb[0].mxu0
      %v1778 = vadd.f32 0.0, %v1777
      %1779 = vmatprep.mubr.bf16.mxu0 0
      %1780 = vmatmul.mubr.bf16.gmra.mrb[0].mxu0 %v1622
      %v1781 = vpop.f32.mrb[0].mxu0
      %v1782 = vadd.f32 0.0, %v1781
      %v1783 = vpop.f32.mrb[0].mxu0
      %v1784 = vadd.f32 0.0, %v1783
      %v1785 = vpop.f32.mrb[0].mxu0
      %v1786 = vadd.f32 0.0, %v1785
      %v1787 = vpop.f32.mrb[0].mxu0
      %v1788 = vadd.f32 0.0, %v1787
      %1789 = vmatprep.mubr.bf16.mxu0 0
      %1790 = vmatmul.mubr.bf16.gmra.mrb[0].mxu0 %v1625
      %v1791 = vpop.f32.mrb[0].mxu0
      %v1792 = vadd.f32 0.0, %v1791
      %v1793 = vpop.f32.mrb[0].mxu0
      %v1794 = vadd.f32 0.0, %v1793
      %v1795 = vpop.f32.mrb[0].mxu0
      %v1796 = vadd.f32 0.0, %v1795
      %v1797 = vpop.f32.mrb[0].mxu0
      %v1798 = vadd.f32 0.0, %v1797
      %1799 = vmatprep.mubr.bf16.mxu0 0
      %1800 = vmatmul.mubr.bf16.gmra.mrb[0].mxu0 %v1628
      %v1801 = vpop.f32.mrb[0].mxu0
      %v1802 = vadd.f32 0.0, %v1801
      %v1803 = vpop.f32.mrb[0].mxu0
      %v1804 = vadd.f32 0.0, %v1803
      %v1805 = vpop.f32.mrb[0].mxu0
      %v1806 = vadd.f32 0.0, %v1805
      %v1807 = vpop.f32.mrb[0].mxu0
      %v1808 = vadd.f32 0.0, %v1807
      %1809 = vmatprep.mubr.bf16.mxu0 0
      %1810 = vmatmul.mubr.bf16.gmra.mrb[0].mxu0 %v1631
      %v1811 = vpop.f32.mrb[0].mxu0
      %v1812 = vadd.f32 0.0, %v1811
      %v1813 = vpop.f32.mrb[0].mxu0
      %v1814 = vadd.f32 0.0, %v1813
      %v1815 = vpop.f32.mrb[0].mxu0
      %v1816 = vadd.f32 0.0, %v1815
      %v1817 = vpop.f32.mrb[0].mxu0
      %v1818 = vadd.f32 0.0, %v1817
      %1819 = vmatprep.mubr.bf16.mxu0 0
      %1820 = vmatmul.mubr.bf16.gmra.mrb[0].mxu0 %v1634
      %v1821 = vpop.f32.mrb[0].mxu0
      %v1822 = vadd.f32 0.0, %v1821
      %v1823 = vpop.f32.mrb[0].mxu0
      %v1824 = vadd.f32 0.0, %v1823
      %v1825 = vpop.f32.mrb[0].mxu0
      %v1826 = vadd.f32 0.0, %v1825
      %v1827 = vpop.f32.mrb[0].mxu0
      %v1828 = vadd.f32 0.0, %v1827
      %1829 = vmatprep.mubr.bf16.mxu0 0
      %1830 = vmatmul.mubr.bf16.gmra.mrb[0].mxu0 %v1637
      %v1831 = vpop.f32.mrb[0].mxu0
      %v1832 = vadd.f32 0.0, %v1831
      %v1833 = vpop.f32.mrb[0].mxu0
      %v1834 = vadd.f32 0.0, %v1833
      %v1835 = vpop.f32.mrb[0].mxu0
      %v1836 = vadd.f32 0.0, %v1835
      %v1837 = vpop.f32.mrb[0].mxu0
      %v1838 = vadd.f32 0.0, %v1837
      %1839 = vmatprep.mubr.bf16.mxu0 0
      %1840 = vmatmul.mubr.bf16.gmra.mrb[0].mxu0 %v1640
      %v1841 = vpop.f32.mrb[0].mxu0
      %v1842 = vadd.f32 0.0, %v1841
      %v1843 = vpop.f32.mrb[0].mxu0
      %v1844 = vadd.f32 0.0, %v1843
      %v1845 = vpop.f32.mrb[0].mxu0
      %v1846 = vadd.f32 0.0, %v1845
      %v1847 = vpop.f32.mrb[0].mxu0
      %v1848 = vadd.f32 0.0, %v1847
      %1849 = vmatprep.mubr.bf16.mxu0 0
      %1850 = vmatmul.mubr.bf16.gmra.mrb[0].mxu0 %v1643
      %v1851 = vpop.f32.mrb[0].mxu0
      %v1852 = vadd.f32 0.0, %v1851
      %v1853 = vpop.f32.mrb[0].mxu0
      %v1854 = vadd.f32 0.0, %v1853
      %v1855 = vpop.f32.mrb[0].mxu0
      %v1856 = vadd.f32 0.0, %v1855
      %v1857 = vpop.f32.mrb[0].mxu0
      %v1858 = vadd.f32 0.0, %v1857
      %1859 = vmatprep.mubr.bf16.mxu0 0
      %1860 = vmatmul.mubr.bf16.gmra.mrb[0].mxu0 %v1646
      %v1861 = vpop.f32.mrb[0].mxu0
      %v1862 = vadd.f32 0.0, %v1861
      %v1863 = vpop.f32.mrb[0].mxu0
      %v1864 = vadd.f32 0.0, %v1863
      %v1865 = vpop.f32.mrb[0].mxu0
      %v1866 = vadd.f32 0.0, %v1865
      %v1867 = vpop.f32.mrb[0].mxu0
      %v1868 = vadd.f32 0.0, %v1867
      %1869 = vmatprep.mubr.bf16.mxu0 0
      %1870 = vmatmul.mubr.bf16.gmra.mrb[0].mxu0 %v1649
      %v1871 = vpop.f32.mrb[0].mxu0
      %v1872 = vadd.f32 0.0, %v1871
      %v1873 = vpop.f32.mrb[0].mxu0
      %v1874 = vadd.f32 0.0, %v1873
      %v1875 = vpop.f32.mrb[0].mxu0
      %v1876 = vadd.f32 0.0, %v1875
      %v1877 = vpop.f32.mrb[0].mxu0
      %v1878 = vadd.f32 0.0, %v1877
      %1879 = vmatprep.mubr.bf16.mxu0 0
      %1880 = vmatmul.mubr.bf16.gmra.mrb[0].mxu0 %v1652
      %v1881 = vpop.f32.mrb[0].mxu0
      %v1882 = vadd.f32 0.0, %v1881
      %v1883 = vpop.f32.mrb[0].mxu0
      %v1884 = vadd.f32 0.0, %v1883
      %v1885 = vpop.f32.mrb[0].mxu0
      %v1886 = vadd.f32 0.0, %v1885
      %v1887 = vpop.f32.mrb[0].mxu0
      %v1888 = vadd.f32 0.0, %v1887
      %1889 = vmatprep.mubr.bf16.mxu0 0
      %1890 = vmatmul.mubr.bf16.gmra.mrb[0].mxu0 %v1655
      %v1891 = vpop.f32.mrb[0].mxu0
      %v1892 = vadd.f32 0.0, %v1891
      %v1893 = vpop.f32.mrb[0].mxu0
      %v1894 = vadd.f32 0.0, %v1893
      %v1895 = vpop.f32.mrb[0].mxu0
      %v1896 = vadd.f32 0.0, %v1895
      %v1897 = vpop.f32.mrb[0].mxu0
      %v1898 = vadd.f32 0.0, %v1897
      %1899 = vmatprep.mubr.bf16.mxu0 0
      %1900 = vmatmul.mubr.bf16.gmra.mrb[0].mxu0 %v1658
      %v1901 = vpop.f32.mrb[0].mxu0
      %v1902 = vadd.f32 0.0, %v1901
      %v1903 = vpop.f32.mrb[0].mxu0
      %v1904 = vadd.f32 0.0, %v1903
      %v1905 = vpop.f32.mrb[0].mxu0
      %v1906 = vadd.f32 0.0, %v1905
      %v1907 = vpop.f32.mrb[0].mxu0
      %v1908 = vadd.f32 0.0, %v1907
      %1909 = vmatprep.mubr.bf16.mxu0 0
      %1910 = vmatmul.mubr.bf16.gmra.mrb[0].mxu0 %v1661
      %v1911 = vpop.f32.mrb[0].mxu0
      %v1912 = vadd.f32 0.0, %v1911
      %v1913 = vpop.f32.mrb[0].mxu0
      %v1914 = vadd.f32 0.0, %v1913
      %v1915 = vpop.f32.mrb[0].mxu0
      %v1916 = vadd.f32 0.0, %v1915
      %v1917 = vpop.f32.mrb[0].mxu0
      %v1918 = vadd.f32 0.0, %v1917
      %1919 = vmatprep.mubr.bf16.mxu0 0
      %1920 = vmatmul.mubr.bf16.gmra.mrb[0].mxu0 %v1664
      %v1921 = vpop.f32.mrb[0].mxu0
      %v1922 = vadd.f32 0.0, %v1921
      %v1923 = vpop.f32.mrb[0].mxu0
      %v1924 = vadd.f32 0.0, %v1923
      %v1925 = vpop.f32.mrb[0].mxu0
      %v1926 = vadd.f32 0.0, %v1925
      %v1927 = vpop.f32.mrb[0].mxu0
      %v1928 = vadd.f32 0.0, %v1927
      %1929 = vmatprep.mubr.bf16.mxu0 0
      %1930 = vmatmul.mubr.bf16.gmra.mrb[0].mxu0 %v1667
      %v1931 = vpop.f32.mrb[0].mxu0
      %v1932 = vadd.f32 0.0, %v1931
      %v1933 = vpop.f32.mrb[0].mxu0
      %v1934 = vadd.f32 0.0, %v1933
      %v1935 = vpop.f32.mrb[0].mxu0
      %v1936 = vadd.f32 0.0, %v1935
      %v1937 = vpop.f32.mrb[0].mxu0
      %v1938 = vadd.f32 0.0, %v1937
      %1939 = vmatprep.mubr.bf16.mxu0 0
      %1940 = vmatmul.mubr.bf16.gmra.mrb[0].mxu0 %v1670
      %v1941 = vpop.f32.mrb[0].mxu0
      %v1942 = vadd.f32 0.0, %v1941
      %v1943 = vpop.f32.mrb[0].mxu0
      %v1944 = vadd.f32 0.0, %v1943
      %v1945 = vpop.f32.mrb[0].mxu0
      %v1946 = vadd.f32 0.0, %v1945
      %v1947 = vpop.f32.mrb[0].mxu0
      %v1948 = vadd.f32 0.0, %v1947
      %1949 = vmatprep.mubr.bf16.mxu0 0
      %1950 = vmatmul.mubr.bf16.gmra.mrb[0].mxu0 %v1673
      %v1951 = vpop.f32.mrb[0].mxu0
      %v1952 = vadd.f32 0.0, %v1951
      %v1953 = vpop.f32.mrb[0].mxu0
      %v1954 = vadd.f32 0.0, %v1953
      %v1955 = vpop.f32.mrb[0].mxu0
      %v1956 = vadd.f32 0.0, %v1955
      %v1957 = vpop.f32.mrb[0].mxu0
      %v1958 = vadd.f32 0.0, %v1957
      %1959 = vmatprep.mubr.bf16.mxu0 0
      %1960 = vmatmul.mubr.bf16.gmra.mrb[0].mxu0 %v1676
      %v1961 = vpop.f32.mrb[0].mxu0
      %v1962 = vadd.f32 0.0, %v1961
      %v1963 = vpop.f32.mrb[0].mxu0
      %v1964 = vadd.f32 0.0, %v1963
      %v1965 = vpop.f32.mrb[0].mxu0
      %v1966 = vadd.f32 0.0, %v1965
      %v1967 = vpop.f32.mrb[0].mxu0
      %v1968 = vadd.f32 0.0, %v1967
      %1969 = vmatprep.mubr.bf16.mxu0 0
      %1970 = vmatmul.mubr.bf16.gmra.mrb[0].mxu0 %v1679
      %v1971 = vpop.f32.mrb[0].mxu0
      %v1972 = vadd.f32 0.0, %v1971
      %v1973 = vpop.f32.mrb[0].mxu0
      %v1974 = vadd.f32 0.0, %v1973
      %v1975 = vpop.f32.mrb[0].mxu0
      %v1976 = vadd.f32 0.0, %v1975
      %v1977 = vpop.f32.mrb[0].mxu0
      %v1978 = vadd.f32 0.0, %v1977
      %1979 = vmatprep.mubr.bf16.mxu0 0
      %1980 = vmatmul.mubr.bf16.gmra.mrb[0].mxu0 %v1682
      %v1981 = vpop.f32.mrb[0].mxu0
      %v1982 = vadd.f32 0.0, %v1981
      %v1983 = vpop.f32.mrb[0].mxu0
      %v1984 = vadd.f32 0.0, %v1983
      %v1985 = vpop.f32.mrb[0].mxu0
      %v1986 = vadd.f32 0.0, %v1985
      %v1987 = vpop.f32.mrb[0].mxu0
      %v1988 = vadd.f32 0.0, %v1987
      %1989 = vmatprep.mubr.bf16.mxu0 0
      %1990 = vmatmul.mubr.bf16.gmra.mrb[0].mxu0 %v1685
      %v1991 = vpop.f32.mrb[0].mxu0
      %v1992 = vadd.f32 0.0, %v1991
      %v1993 = vpop.f32.mrb[0].mxu0
      %v1994 = vadd.f32 0.0, %v1993
      %v1995 = vpop.f32.mrb[0].mxu0
      %v1996 = vadd.f32 0.0, %v1995
      %v1997 = vpop.f32.mrb[0].mxu0
      %v1998 = vadd.f32 0.0, %v1997
      %1999 = vdwg.mxu0
      %v2000 = vadd.f32 %v1222, %v1722
      %v2001 = vadd.f32 %v1223, %v1724
      %v2002 = vadd.f32 %v1224, %v1726
      %v2003 = vadd.f32 %v1225, %v1728
      %v2004 = vadd.f32 %v1226, %v1732
      %v2005 = vadd.f32 %v1227, %v1734
      %v2006 = vadd.f32 %v1228, %v1736
      %v2007 = vadd.f32 %v1229, %v1738
      %v2008 = vadd.f32 %v1230, %v1742
      %v2009 = vadd.f32 %v1231, %v1744
      %v2010 = vadd.f32 %v1232, %v1746
      %v2011 = vadd.f32 %v1233, %v1748
      %v2012 = vadd.f32 %v1234, %v1752
      %v2013 = vadd.f32 %v1235, %v1754
      %v2014 = vadd.f32 %v1236, %v1756
      %v2015 = vadd.f32 %v1237, %v1758
      %v2016 = vadd.f32 %v1238, %v1762
      %v2017 = vadd.f32 %v1239, %v1764
      %v2018 = vadd.f32 %v1240, %v1766
      %v2019 = vadd.f32 %v1241, %v1768
      %v2020 = vadd.f32 %v1242, %v1772
      %v2021 = vadd.f32 %v1243, %v1774
      %v2022 = vadd.f32 %v1244, %v1776
      %v2023 = vadd.f32 %v1245, %v1778
      %v2024 = vadd.f32 %v1246, %v1782
      %v2025 = vadd.f32 %v1247, %v1784
      %v2026 = vadd.f32 %v1248, %v1786
      %v2027 = vadd.f32 %v1249, %v1788
      %v2028 = vadd.f32 %v1250, %v1792
      %v2029 = vadd.f32 %v1251, %v1794
      %v2030 = vadd.f32 %v1252, %v1796
      %v2031 = vadd.f32 %v1253, %v1798
      %v2032 = vadd.f32 %v1254, %v1802
      %v2033 = vadd.f32 %v1255, %v1804
      %v2034 = vadd.f32 %v1256, %v1806
      %v2035 = vadd.f32 %v1257, %v1808
      %v2036 = vadd.f32 %v1258, %v1812
      %v2037 = vadd.f32 %v1259, %v1814
      %v2038 = vadd.f32 %v1260, %v1816
      %v2039 = vadd.f32 %v1261, %v1818
      %v2040 = vadd.f32 %v1262, %v1822
      %v2041 = vadd.f32 %v1263, %v1824
      %v2042 = vadd.f32 %v1264, %v1826
      %v2043 = vadd.f32 %v1265, %v1828
      %v2044 = vadd.f32 %v1266, %v1832
      %v2045 = vadd.f32 %v1267, %v1834
      %v2046 = vadd.f32 %v1268, %v1836
      %v2047 = vadd.f32 %v1269, %v1838
      %v2048 = vadd.f32 %v1270, %v1842
      %v2049 = vadd.f32 %v1271, %v1844
      %v2050 = vadd.f32 %v1272, %v1846
      %v2051 = vadd.f32 %v1273, %v1848
      %v2052 = vadd.f32 %v1274, %v1852
      %v2053 = vadd.f32 %v1275, %v1854
      %v2054 = vadd.f32 %v1276, %v1856
      %v2055 = vadd.f32 %v1277, %v1858
      %v2056 = vadd.f32 %v1278, %v1862
      %v2057 = vadd.f32 %v1279, %v1864
      %v2058 = vadd.f32 %v1280, %v1866
      %v2059 = vadd.f32 %v1281, %v1868
      %v2060 = vadd.f32 %v1282, %v1872
      %v2061 = vadd.f32 %v1283, %v1874
      %v2062 = vadd.f32 %v1284, %v1876
      %v2063 = vadd.f32 %v1285, %v1878
      %v2064 = vadd.f32 %v1286, %v1882
      %v2065 = vadd.f32 %v1287, %v1884
      %v2066 = vadd.f32 %v1288, %v1886
      %v2067 = vadd.f32 %v1289, %v1888
      %v2068 = vadd.f32 %v1290, %v1892
      %v2069 = vadd.f32 %v1291, %v1894
      %v2070 = vadd.f32 %v1292, %v1896
      %v2071 = vadd.f32 %v1293, %v1898
      %v2072 = vadd.f32 %v1294, %v1902
      %v2073 = vadd.f32 %v1295, %v1904
      %v2074 = vadd.f32 %v1296, %v1906
      %v2075 = vadd.f32 %v1297, %v1908
      %v2076 = vadd.f32 %v1298, %v1912
      %v2077 = vadd.f32 %v1299, %v1914
      %v2078 = vadd.f32 %v1300, %v1916
      %v2079 = vadd.f32 %v1301, %v1918
      %v2080 = vadd.f32 %v1302, %v1922
      %v2081 = vadd.f32 %v1303, %v1924
      %v2082 = vadd.f32 %v1304, %v1926
      %v2083 = vadd.f32 %v1305, %v1928
      %v2084 = vadd.f32 %v1306, %v1932
      %v2085 = vadd.f32 %v1307, %v1934
      %v2086 = vadd.f32 %v1308, %v1936
      %v2087 = vadd.f32 %v1309, %v1938
      %v2088 = vadd.f32 %v1310, %v1942
      %v2089 = vadd.f32 %v1311, %v1944
      %v2090 = vadd.f32 %v1312, %v1946
      %v2091 = vadd.f32 %v1313, %v1948
      %v2092 = vadd.f32 %v1314, %v1952
      %v2093 = vadd.f32 %v1315, %v1954
      %v2094 = vadd.f32 %v1316, %v1956
      %v2095 = vadd.f32 %v1317, %v1958
      %v2096 = vadd.f32 %v1318, %v1962
      %v2097 = vadd.f32 %v1319, %v1964
      %v2098 = vadd.f32 %v1320, %v1966
      %v2099 = vadd.f32 %v1321, %v1968
      %v2100 = vadd.f32 %v1322, %v1972
      %v2101 = vadd.f32 %v1323, %v1974
      %v2102 = vadd.f32 %v1324, %v1976
      %v2103 = vadd.f32 %v1325, %v1978
      %v2104 = vadd.f32 %v1326, %v1982
      %v2105 = vadd.f32 %v1327, %v1984
      %v2106 = vadd.f32 %v1328, %v1986
      %v2107 = vadd.f32 %v1329, %v1988
      %v2108 = vadd.f32 %v1330, %v1992
      %v2109 = vadd.f32 %v1331, %v1994
      %v2110 = vadd.f32 %v1332, %v1996
      %v2111 = vadd.f32 %v1333, %v1998
      %2112 = vst [vmem:[#allocation2] sm:$0xff] %v2000
      %2113 = vst.msk [vmem:[#allocation2 + $0x8] sm:$0xff] %vm1110, %v2001
      %2114 = vst [vmem:[#allocation2 + $0x10] sm:$0xff] %v2002
      %2115 = vst.msk [vmem:[#allocation2 + $0x18] sm:$0xff] %vm1110, %v2003
      %2116 = vst [vmem:[#allocation2 + $0x20] sm:$0xff] %v2004
      %2117 = vst.msk [vmem:[#allocation2 + $0x28] sm:$0xff] %vm1110, %v2005
      %2118 = vst [vmem:[#allocation2 + $0x30] sm:$0xff] %v2006
      %2119 = vst.msk [vmem:[#allocation2 + $0x38] sm:$0xff] %vm1110, %v2007
      %2120 = vst [vmem:[#allocation2 + $0x40] sm:$0xff] %v2008
      %2121 = vst.msk [vmem:[#allocation2 + $0x48] sm:$0xff] %vm1110, %v2009
      %2122 = vst [vmem:[#allocation2 + $0x50] sm:$0xff] %v2010
      %2123 = vst.msk [vmem:[#allocation2 + $0x58] sm:$0xff] %vm1110, %v2011
      %2124 = vst [vmem:[#allocation2 + $0x60] sm:$0xff] %v2012
      %2125 = vst.msk [vmem:[#allocation2 + $0x68] sm:$0xff] %vm1110, %v2013
      %2126 = vst [vmem:[#allocation2 + $0x70] sm:$0xff] %v2014
      %2127 = vst.msk [vmem:[#allocation2 + $0x78] sm:$0xff] %vm1110, %v2015
      %2128 = vst [vmem:[#allocation2 + $0x80] sm:$0xff] %v2016
      %2129 = vst.msk [vmem:[#allocation2 + $0x88] sm:$0xff] %vm1110, %v2017
      %2130 = vst [vmem:[#allocation2 + $0x90] sm:$0xff] %v2018
      %2131 = vst.msk [vmem:[#allocation2 + $0x98] sm:$0xff] %vm1110, %v2019
      %2132 = vst [vmem:[#allocation2 + $0xa0] sm:$0xff] %v2020
      %2133 = vst.msk [vmem:[#allocation2 + $0xa8] sm:$0xff] %vm1110, %v2021
      %2134 = vst [vmem:[#allocation2 + $0xb0] sm:$0xff] %v2022
      %2135 = vst.msk [vmem:[#allocation2 + $0xb8] sm:$0xff] %vm1110, %v2023
      %2136 = vst [vmem:[#allocation2 + $0xc0] sm:$0xff] %v2024
      %2137 = vst.msk [vmem:[#allocation2 + $0xc8] sm:$0xff] %vm1110, %v2025
      %2138 = vst [vmem:[#allocation2 + $0xd0] sm:$0xff] %v2026
      %2139 = vst.msk [vmem:[#allocation2 + $0xd8] sm:$0xff] %vm1110, %v2027
      %2140 = vst [vmem:[#allocation2 + $0xe0] sm:$0xff] %v2028
      %2141 = vst.msk [vmem:[#allocation2 + $0xe8] sm:$0xff] %vm1110, %v2029
      %2142 = vst [vmem:[#allocation2 + $0xf0] sm:$0xff] %v2030
      %2143 = vst.msk [vmem:[#allocation2 + $0xf8] sm:$0xff] %vm1110, %v2031
      %2144 = vst [vmem:[#allocation2 + $0x100] sm:$0xff] %v2032
      %2145 = vst.msk [vmem:[#allocation2 + $0x108] sm:$0xff] %vm1110, %v2033
      %2146 = vst [vmem:[#allocation2 + $0x110] sm:$0xff] %v2034
      %2147 = vst.msk [vmem:[#allocation2 + $0x118] sm:$0xff] %vm1110, %v2035
      %2148 = vst [vmem:[#allocation2 + $0x120] sm:$0xff] %v2036
      %2149 = vst.msk [vmem:[#allocation2 + $0x128] sm:$0xff] %vm1110, %v2037
      %2150 = vst [vmem:[#allocation2 + $0x130] sm:$0xff] %v2038
      %2151 = vst.msk [vmem:[#allocation2 + $0x138] sm:$0xff] %vm1110, %v2039
      %2152 = vst [vmem:[#allocation2 + $0x140] sm:$0xff] %v2040
      %2153 = vst.msk [vmem:[#allocation2 + $0x148] sm:$0xff] %vm1110, %v2041
      %2154 = vst [vmem:[#allocation2 + $0x150] sm:$0xff] %v2042
      %2155 = vst.msk [vmem:[#allocation2 + $0x158] sm:$0xff] %vm1110, %v2043
      %2156 = vst [vmem:[#allocation2 + $0x160] sm:$0xff] %v2044
      %2157 = vst.msk [vmem:[#allocation2 + $0x168] sm:$0xff] %vm1110, %v2045
      %2158 = vst [vmem:[#allocation2 + $0x170] sm:$0xff] %v2046
      %2159 = vst.msk [vmem:[#allocation2 + $0x178] sm:$0xff] %vm1110, %v2047
      %2160 = vst [vmem:[#allocation2 + $0x180] sm:$0xff] %v2048
      %2161 = vst.msk [vmem:[#allocation2 + $0x188] sm:$0xff] %vm1110, %v2049
      %2162 = vst [vmem:[#allocation2 + $0x190] sm:$0xff] %v2050
      %2163 = vst.msk [vmem:[#allocation2 + $0x198] sm:$0xff] %vm1110, %v2051
      %2164 = vst [vmem:[#allocation2 + $0x1a0] sm:$0xff] %v2052
      %2165 = vst.msk [vmem:[#allocation2 + $0x1a8] sm:$0xff] %vm1110, %v2053
      %2166 = vst [vmem:[#allocation2 + $0x1b0] sm:$0xff] %v2054
      %2167 = vst.msk [vmem:[#allocation2 + $0x1b8] sm:$0xff] %vm1110, %v2055
      %2168 = vst [vmem:[#allocation2 + $0x1c0] sm:$0xff] %v2056
      %2169 = vst.msk [vmem:[#allocation2 + $0x1c8] sm:$0xff] %vm1110, %v2057
      %2170 = vst [vmem:[#allocation2 + $0x1d0] sm:$0xff] %v2058
      %2171 = vst.msk [vmem:[#allocation2 + $0x1d8] sm:$0xff] %vm1110, %v2059
      %2172 = vst [vmem:[#allocation2 + $0x1e0] sm:$0xff] %v2060
      %2173 = vst.msk [vmem:[#allocation2 + $0x1e8] sm:$0xff] %vm1110, %v2061
      %2174 = vst [vmem:[#allocation2 + $0x1f0] sm:$0xff] %v2062
      %2175 = vst.msk [vmem:[#allocation2 + $0x1f8] sm:$0xff] %vm1110, %v2063
      %2176 = vst [vmem:[#allocation2 + $0x200] sm:$0xff] %v2064
      %2177 = vst.msk [vmem:[#allocation2 + $0x208] sm:$0xff] %vm1110, %v2065
      %2178 = vst [vmem:[#allocation2 + $0x210] sm:$0xff] %v2066
      %2179 = vst.msk [vmem:[#allocation2 + $0x218] sm:$0xff] %vm1110, %v2067
      %2180 = vst [vmem:[#allocation2 + $0x220] sm:$0xff] %v2068
      %2181 = vst.msk [vmem:[#allocation2 + $0x228] sm:$0xff] %vm1110, %v2069
      %2182 = vst [vmem:[#allocation2 + $0x230] sm:$0xff] %v2070
      %2183 = vst.msk [vmem:[#allocation2 + $0x238] sm:$0xff] %vm1110, %v2071
      %2184 = vst [vmem:[#allocation2 + $0x240] sm:$0xff] %v2072
      %2185 = vst.msk [vmem:[#allocation2 + $0x248] sm:$0xff] %vm1110, %v2073
      %2186 = vst [vmem:[#allocation2 + $0x250] sm:$0xff] %v2074
      %2187 = vst.msk [vmem:[#allocation2 + $0x258] sm:$0xff] %vm1110, %v2075
      %2188 = vst [vmem:[#allocation2 + $0x260] sm:$0xff] %v2076
      %2189 = vst.msk [vmem:[#allocation2 + $0x268] sm:$0xff] %vm1110, %v2077
      %2190 = vst [vmem:[#allocation2 + $0x270] sm:$0xff] %v2078
      %2191 = vst.msk [vmem:[#allocation2 + $0x278] sm:$0xff] %vm1110, %v2079
      %2192 = vst [vmem:[#allocation2 + $0x280] sm:$0xff] %v2080
      %2193 = vst.msk [vmem:[#allocation2 + $0x288] sm:$0xff] %vm1110, %v2081
      %2194 = vst [vmem:[#allocation2 + $0x290] sm:$0xff] %v2082
      %2195 = vst.msk [vmem:[#allocation2 + $0x298] sm:$0xff] %vm1110, %v2083
      %2196 = vst [vmem:[#allocation2 + $0x2a0] sm:$0xff] %v2084
      %2197 = vst.msk [vmem:[#allocation2 + $0x2a8] sm:$0xff] %vm1110, %v2085
      %2198 = vst [vmem:[#allocation2 + $0x2b0] sm:$0xff] %v2086
      %2199 = vst.msk [vmem:[#allocation2 + $0x2b8] sm:$0xff] %vm1110, %v2087
      %2200 = vst [vmem:[#allocation2 + $0x2c0] sm:$0xff] %v2088
      %2201 = vst.msk [vmem:[#allocation2 + $0x2c8] sm:$0xff] %vm1110, %v2089
      %2202 = vst [vmem:[#allocation2 + $0x2d0] sm:$0xff] %v2090
      %2203 = vst.msk [vmem:[#allocation2 + $0x2d8] sm:$0xff] %vm1110, %v2091
      %2204 = vst [vmem:[#allocation2 + $0x2e0] sm:$0xff] %v2092
      %2205 = vst.msk [vmem:[#allocation2 + $0x2e8] sm:$0xff] %vm1110, %v2093
      %2206 = vst [vmem:[#allocation2 + $0x2f0] sm:$0xff] %v2094
      %2207 = vst.msk [vmem:[#allocation2 + $0x2f8] sm:$0xff] %vm1110, %v2095
      %2208 = vst [vmem:[#allocation2 + $0x300] sm:$0xff] %v2096
      %2209 = vst.msk [vmem:[#allocation2 + $0x308] sm:$0xff] %vm1110, %v2097
      %2210 = vst [vmem:[#allocation2 + $0x310] sm:$0xff] %v2098
      %2211 = vst.msk [vmem:[#allocation2 + $0x318] sm:$0xff] %vm1110, %v2099
      %2212 = vst [vmem:[#allocation2 + $0x320] sm:$0xff] %v2100
      %2213 = vst.msk [vmem:[#allocation2 + $0x328] sm:$0xff] %vm1110, %v2101
      %2214 = vst [vmem:[#allocation2 + $0x330] sm:$0xff] %v2102
      %2215 = vst.msk [vmem:[#allocation2 + $0x338] sm:$0xff] %vm1110, %v2103
      %2216 = vst [vmem:[#allocation2 + $0x340] sm:$0xff] %v2104
      %2217 = vst.msk [vmem:[#allocation2 + $0x348] sm:$0xff] %vm1110, %v2105
      %2218 = vst [vmem:[#allocation2 + $0x350] sm:$0xff] %v2106
      %2219 = vst.msk [vmem:[#allocation2 + $0x358] sm:$0xff] %vm1110, %v2107
      %2220 = vst [vmem:[#allocation2 + $0x360] sm:$0xff] %v2108
      %2221 = vst.msk [vmem:[#allocation2 + $0x368] sm:$0xff] %vm1110, %v2109
      %2222 = vst [vmem:[#allocation2 + $0x370] sm:$0xff] %v2110
      %2223 = vst.msk [vmem:[#allocation2 + $0x378] sm:$0xff] %vm1110, %v2111
      %v2224 = vld [vmem:[#allocation2] sm:$0xff]
      %v2225 = vld [vmem:[#allocation2 + $0x8] sm:$0xff]
      %v2226 = vld [vmem:[#allocation2 + $0x10] sm:$0xff]
      %v2227 = vld [vmem:[#allocation2 + $0x18] sm:$0xff]
      %v2228 = vld [vmem:[#allocation2 + $0x20] sm:$0xff]
      %v2229 = vld [vmem:[#allocation2 + $0x28] sm:$0xff]
      %v2230 = vld [vmem:[#allocation2 + $0x30] sm:$0xff]
      %v2231 = vld [vmem:[#allocation2 + $0x38] sm:$0xff]
      %v2232 = vld [vmem:[#allocation2 + $0x40] sm:$0xff]
      %v2233 = vld [vmem:[#allocation2 + $0x48] sm:$0xff]
      %v2234 = vld [vmem:[#allocation2 + $0x50] sm:$0xff]
      %v2235 = vld [vmem:[#allocation2 + $0x58] sm:$0xff]
      %v2236 = vld [vmem:[#allocation2 + $0x60] sm:$0xff]
      %v2237 = vld [vmem:[#allocation2 + $0x68] sm:$0xff]
      %v2238 = vld [vmem:[#allocation2 + $0x70] sm:$0xff]
      %v2239 = vld [vmem:[#allocation2 + $0x78] sm:$0xff]
      %v2240 = vld [vmem:[#allocation2 + $0x80] sm:$0xff]
      %v2241 = vld [vmem:[#allocation2 + $0x88] sm:$0xff]
      %v2242 = vld [vmem:[#allocation2 + $0x90] sm:$0xff]
      %v2243 = vld [vmem:[#allocation2 + $0x98] sm:$0xff]
      %v2244 = vld [vmem:[#allocation2 + $0xa0] sm:$0xff]
      %v2245 = vld [vmem:[#allocation2 + $0xa8] sm:$0xff]
      %v2246 = vld [vmem:[#allocation2 + $0xb0] sm:$0xff]
      %v2247 = vld [vmem:[#allocation2 + $0xb8] sm:$0xff]
      %v2248 = vld [vmem:[#allocation2 + $0xc0] sm:$0xff]
      %v2249 = vld [vmem:[#allocation2 + $0xc8] sm:$0xff]
      %v2250 = vld [vmem:[#allocation2 + $0xd0] sm:$0xff]
      %v2251 = vld [vmem:[#allocation2 + $0xd8] sm:$0xff]
      %v2252 = vld [vmem:[#allocation2 + $0xe0] sm:$0xff]
      %v2253 = vld [vmem:[#allocation2 + $0xe8] sm:$0xff]
      %v2254 = vld [vmem:[#allocation2 + $0xf0] sm:$0xff]
      %v2255 = vld [vmem:[#allocation2 + $0xf8] sm:$0xff]
      %v2256 = vld [vmem:[#allocation2 + $0x100] sm:$0xff]
      %v2257 = vld [vmem:[#allocation2 + $0x108] sm:$0xff]
      %v2258 = vld [vmem:[#allocation2 + $0x110] sm:$0xff]
      %v2259 = vld [vmem:[#allocation2 + $0x118] sm:$0xff]
      %v2260 = vld [vmem:[#allocation2 + $0x120] sm:$0xff]
      %v2261 = vld [vmem:[#allocation2 + $0x128] sm:$0xff]
      %v2262 = vld [vmem:[#allocation2 + $0x130] sm:$0xff]
      %v2263 = vld [vmem:[#allocation2 + $0x138] sm:$0xff]
      %v2264 = vld [vmem:[#allocation2 + $0x140] sm:$0xff]
      %v2265 = vld [vmem:[#allocation2 + $0x148] sm:$0xff]
      %v2266 = vld [vmem:[#allocation2 + $0x150] sm:$0xff]
      %v2267 = vld [vmem:[#allocation2 + $0x158] sm:$0xff]
      %v2268 = vld [vmem:[#allocation2 + $0x160] sm:$0xff]
      %v2269 = vld [vmem:[#allocation2 + $0x168] sm:$0xff]
      %v2270 = vld [vmem:[#allocation2 + $0x170] sm:$0xff]
      %v2271 = vld [vmem:[#allocation2 + $0x178] sm:$0xff]
      %v2272 = vld [vmem:[#allocation2 + $0x180] sm:$0xff]
      %v2273 = vld [vmem:[#allocation2 + $0x188] sm:$0xff]
      %v2274 = vld [vmem:[#allocation2 + $0x190] sm:$0xff]
      %v2275 = vld [vmem:[#allocation2 + $0x198] sm:$0xff]
      %v2276 = vld [vmem:[#allocation2 + $0x1a0] sm:$0xff]
      %v2277 = vld [vmem:[#allocation2 + $0x1a8] sm:$0xff]
      %v2278 = vld [vmem:[#allocation2 + $0x1b0] sm:$0xff]
      %v2279 = vld [vmem:[#allocation2 + $0x1b8] sm:$0xff]
      %v2280 = vld [vmem:[#allocation2 + $0x1c0] sm:$0xff]
      %v2281 = vld [vmem:[#allocation2 + $0x1c8] sm:$0xff]
      %v2282 = vld [vmem:[#allocation2 + $0x1d0] sm:$0xff]
      %v2283 = vld [vmem:[#allocation2 + $0x1d8] sm:$0xff]
      %v2284 = vld [vmem:[#allocation2 + $0x1e0] sm:$0xff]
      %v2285 = vld [vmem:[#allocation2 + $0x1e8] sm:$0xff]
      %v2286 = vld [vmem:[#allocation2 + $0x1f0] sm:$0xff]
      %v2287 = vld [vmem:[#allocation2 + $0x1f8] sm:$0xff]
      %v2288 = vld [vmem:[#allocation2 + $0x200] sm:$0xff]
      %v2289 = vld [vmem:[#allocation2 + $0x208] sm:$0xff]
      %v2290 = vld [vmem:[#allocation2 + $0x210] sm:$0xff]
      %v2291 = vld [vmem:[#allocation2 + $0x218] sm:$0xff]
      %v2292 = vld [vmem:[#allocation2 + $0x220] sm:$0xff]
      %v2293 = vld [vmem:[#allocation2 + $0x228] sm:$0xff]
      %v2294 = vld [vmem:[#allocation2 + $0x230] sm:$0xff]
      %v2295 = vld [vmem:[#allocation2 + $0x238] sm:$0xff]
      %v2296 = vld [vmem:[#allocation2 + $0x240] sm:$0xff]
      %v2297 = vld [vmem:[#allocation2 + $0x248] sm:$0xff]
      %v2298 = vld [vmem:[#allocation2 + $0x250] sm:$0xff]
      %v2299 = vld [vmem:[#allocation2 + $0x258] sm:$0xff]
      %v2300 = vld [vmem:[#allocation2 + $0x260] sm:$0xff]
      %v2301 = vld [vmem:[#allocation2 + $0x268] sm:$0xff]
      %v2302 = vld [vmem:[#allocation2 + $0x270] sm:$0xff]
      %v2303 = vld [vmem:[#allocation2 + $0x278] sm:$0xff]
      %v2304 = vld [vmem:[#allocation2 + $0x280] sm:$0xff]
      %v2305 = vld [vmem:[#allocation2 + $0x288] sm:$0xff]
      %v2306 = vld [vmem:[#allocation2 + $0x290] sm:$0xff]
      %v2307 = vld [vmem:[#allocation2 + $0x298] sm:$0xff]
      %v2308 = vld [vmem:[#allocation2 + $0x2a0] sm:$0xff]
      %v2309 = vld [vmem:[#allocation2 + $0x2a8] sm:$0xff]
      %v2310 = vld [vmem:[#allocation2 + $0x2b0] sm:$0xff]
      %v2311 = vld [vmem:[#allocation2 + $0x2b8] sm:$0xff]
      %v2312 = vld [vmem:[#allocation2 + $0x2c0] sm:$0xff]
      %v2313 = vld [vmem:[#allocation2 + $0x2c8] sm:$0xff]
      %v2314 = vld [vmem:[#allocation2 + $0x2d0] sm:$0xff]
      %v2315 = vld [vmem:[#allocation2 + $0x2d8] sm:$0xff]
      %v2316 = vld [vmem:[#allocation2 + $0x2e0] sm:$0xff]
      %v2317 = vld [vmem:[#allocation2 + $0x2e8] sm:$0xff]
      %v2318 = vld [vmem:[#allocation2 + $0x2f0] sm:$0xff]
      %v2319 = vld [vmem:[#allocation2 + $0x2f8] sm:$0xff]
      %v2320 = vld [vmem:[#allocation2 + $0x300] sm:$0xff]
      %v2321 = vld [vmem:[#allocation2 + $0x308] sm:$0xff]
      %v2322 = vld [vmem:[#allocation2 + $0x310] sm:$0xff]
      %v2323 = vld [vmem:[#allocation2 + $0x318] sm:$0xff]
      %v2324 = vld [vmem:[#allocation2 + $0x320] sm:$0xff]
      %v2325 = vld [vmem:[#allocation2 + $0x328] sm:$0xff]
      %v2326 = vld [vmem:[#allocation2 + $0x330] sm:$0xff]
      %v2327 = vld [vmem:[#allocation2 + $0x338] sm:$0xff]
      %v2328 = vld [vmem:[#allocation2 + $0x340] sm:$0xff]
      %v2329 = vld [vmem:[#allocation2 + $0x348] sm:$0xff]
      %v2330 = vld [vmem:[#allocation2 + $0x350] sm:$0xff]
      %v2331 = vld [vmem:[#allocation2 + $0x358] sm:$0xff]
      %v2332 = vld [vmem:[#allocation2 + $0x360] sm:$0xff]
      %v2333 = vld [vmem:[#allocation2 + $0x368] sm:$0xff]
      %v2334 = vld [vmem:[#allocation2 + $0x370] sm:$0xff]
      %v2335 = vld [vmem:[#allocation2 + $0x378] sm:$0xff]
      %v2336 = vld [vmem:[%s435 + $0x10] sm:$0xf]
      %v2337 = vld [vmem:[%s435 + $0x14] sm:$0xf]
      %v2338 = vld [vmem:[%s435 + $0x18] sm:$0xf]
      %v2339 = vld [vmem:[%s435 + $0x1c] sm:$0xf]
      %v2340 = vld [vmem:[%s435 + $0x20] sm:$0xf]
      %v2341 = vld [vmem:[%s435 + $0x24] sm:$0xf]
      %v2342 = vld [vmem:[%s435 + $0x28] sm:$0xf]
      %v2343 = vld [vmem:[%s435 + $0x2c] sm:$0xf]
      %v2344 = vld [vmem:[%s435 + $0x30] sm:$0xf]
      %v2345 = vld [vmem:[%s435 + $0x34] sm:$0xf]
      %v2346 = vld [vmem:[%s435 + $0x38] sm:$0xf]
      %v2347 = vld [vmem:[%s435 + $0x3c] sm:$0xf]
      %v2348 = vld [vmem:[%s435 + $0x40] sm:$0xf]
      %v2349 = vld [vmem:[%s435 + $0x44] sm:$0xf]
      %v2350 = vld [vmem:[%s435 + $0x48] sm:$0xf]
      %v2351 = vld [vmem:[%s435 + $0x4c] sm:$0xf]
      %v2352 = vld [vmem:[%s435 + $0x50] sm:$0xf]
      %v2353 = vld [vmem:[%s435 + $0x54] sm:$0xf]
      %v2354 = vld [vmem:[%s435 + $0x58] sm:$0xf]
      %v2355 = vld [vmem:[%s435 + $0x5c] sm:$0xf]
      %v2356 = vld [vmem:[%s435 + $0x60] sm:$0xf]
      %v2357 = vld [vmem:[%s435 + $0x64] sm:$0xf]
      %v2358 = vld [vmem:[%s435 + $0x68] sm:$0xf]
      %v2359 = vld [vmem:[%s435 + $0x6c] sm:$0xf]
      %v2360 = vld [vmem:[%s435 + $0x70] sm:$0xf]
      %v2361 = vld [vmem:[%s435 + $0x74] sm:$0xf]
      %v2362 = vld [vmem:[%s435 + $0x78] sm:$0xf]
      %v2363 = vld [vmem:[%s435 + $0x7c] sm:$0xf]
      %v2364 = vld [vmem:[%s435 + $0x80] sm:$0xf]
      %v2365 = vld [vmem:[%s435 + $0x84] sm:$0xf]
      %v2366 = vld [vmem:[%s435 + $0x88] sm:$0xf]
      %v2367 = vld [vmem:[%s435 + $0x8c] sm:$0xf]
      %v2368 = vld [vmem:[%s435 + $0x90] sm:$0xf]
      %v2369 = vld [vmem:[%s435 + $0x94] sm:$0xf]
      %v2370 = vld [vmem:[%s435 + $0x98] sm:$0xf]
      %v2371 = vld [vmem:[%s435 + $0x9c] sm:$0xf]
      %v2372 = vld [vmem:[%s435 + $0xa0] sm:$0xf]
      %v2373 = vld [vmem:[%s435 + $0xa4] sm:$0xf]
      %v2374 = vld [vmem:[%s435 + $0xa8] sm:$0xf]
      %v2375 = vld [vmem:[%s435 + $0xac] sm:$0xf]
      %v2376 = vld [vmem:[%s435 + $0xb0] sm:$0xf]
      %v2377 = vld [vmem:[%s435 + $0xb4] sm:$0xf]
      %v2378 = vld [vmem:[%s435 + $0xb8] sm:$0xf]
      %v2379 = vld [vmem:[%s435 + $0xbc] sm:$0xf]
      %v2380 = vld [vmem:[%s435 + $0xc0] sm:$0xf]
      %v2381 = vld [vmem:[%s435 + $0xc4] sm:$0xf]
      %v2382 = vld [vmem:[%s435 + $0xc8] sm:$0xf]
      %v2383 = vld [vmem:[%s435 + $0xcc] sm:$0xf]
      %v2384 = vld [vmem:[%s435 + $0xd0] sm:$0xf]
      %v2385 = vld [vmem:[%s435 + $0xd4] sm:$0xf]
      %v2386 = vld [vmem:[%s435 + $0xd8] sm:$0xf]
      %v2387 = vld [vmem:[%s435 + $0xdc] sm:$0xf]
      %v2388 = vld [vmem:[%s435 + $0xe0] sm:$0xf]
      %v2389 = vld [vmem:[%s435 + $0xe4] sm:$0xf]
      %v2390 = vld [vmem:[%s435 + $0xe8] sm:$0xf]
      %v2391 = vld [vmem:[%s435 + $0xec] sm:$0xf]
      %s2392 = scalar_lea.vmem %s1, 192
      %v2393 = vld [vmem:[%s2392] sm:$0xff]
      %v2394 = vld [vmem:[%s2392 + $0x8] sm:$0xff]
      %v2395 = vld [vmem:[%s2392 + $0x10] sm:$0xff]
      %v2396 = vld [vmem:[%s2392 + $0x18] sm:$0xff]
      %v2397 = vld [vmem:[%s2392 + $0x20] sm:$0xff]
      %v2398 = vld [vmem:[%s2392 + $0x28] sm:$0xff]
      %v2399 = vld [vmem:[%s2392 + $0x30] sm:$0xff]
      %v2400 = vld [vmem:[%s2392 + $0x38] sm:$0xff]
      %v2401 = vld [vmem:[%s2392 + $0x40] sm:$0xff]
      %v2402 = vld [vmem:[%s2392 + $0x48] sm:$0xff]
      %v2403 = vld [vmem:[%s2392 + $0x50] sm:$0xff]
      %v2404 = vld [vmem:[%s2392 + $0x58] sm:$0xff]
      %v2461 = vunpack.c.l.b16 %v2336
      %v2462 = vunpack.c.l.b16 %v2337
      %v2463 = vunpack.c.l.b16 %v2338
      %v2464 = vunpack.c.l.b16 %v2339
      %v2465 = vunpack.c.l.b16 %v2340
      %v2466 = vunpack.c.l.b16 %v2341
      %v2467 = vunpack.c.l.b16 %v2342
      %v2468 = vunpack.c.l.b16 %v2343
      %v2469 = vunpack.c.l.b16 %v2344
      %v2470 = vunpack.c.l.b16 %v2345
      %v2471 = vunpack.c.l.b16 %v2346
      %v2472 = vunpack.c.l.b16 %v2347
      %v2473 = vunpack.c.l.b16 %v2348
      %v2474 = vunpack.c.l.b16 %v2349
      %v2475 = vunpack.c.l.b16 %v2350
      %v2476 = vunpack.c.l.b16 %v2351
      %v2477 = vunpack.c.l.b16 %v2352
      %v2478 = vunpack.c.l.b16 %v2353
      %v2479 = vunpack.c.l.b16 %v2354
      %v2480 = vunpack.c.l.b16 %v2355
      %v2481 = vunpack.c.l.b16 %v2356
      %v2482 = vunpack.c.l.b16 %v2357
      %v2483 = vunpack.c.l.b16 %v2358
      %v2484 = vunpack.c.l.b16 %v2359
      %v2485 = vunpack.c.l.b16 %v2360
      %v2486 = vunpack.c.l.b16 %v2361
      %v2487 = vunpack.c.l.b16 %v2362
      %v2488 = vunpack.c.l.b16 %v2363
      %v2489 = vunpack.c.l.b16 %v2364
      %v2490 = vunpack.c.l.b16 %v2365
      %v2491 = vunpack.c.l.b16 %v2366
      %v2492 = vunpack.c.l.b16 %v2367
      %v2493 = vunpack.c.l.b16 %v2368
      %v2494 = vunpack.c.l.b16 %v2369
      %v2495 = vunpack.c.l.b16 %v2370
      %v2496 = vunpack.c.l.b16 %v2371
      %v2497 = vunpack.c.l.b16 %v2372
      %v2498 = vunpack.c.l.b16 %v2373
      %v2499 = vunpack.c.l.b16 %v2374
      %v2500 = vunpack.c.l.b16 %v2375
      %v2501 = vunpack.c.l.b16 %v2376
      %v2502 = vunpack.c.l.b16 %v2377
      %v2503 = vunpack.c.l.b16 %v2378
      %v2504 = vunpack.c.l.b16 %v2379
      %v2505 = vunpack.c.l.b16 %v2380
      %v2506 = vunpack.c.l.b16 %v2381
      %v2507 = vunpack.c.l.b16 %v2382
      %v2508 = vunpack.c.l.b16 %v2383
      %v2509 = vunpack.c.l.b16 %v2384
      %v2510 = vunpack.c.l.b16 %v2385
      %v2511 = vunpack.c.l.b16 %v2386
      %v2512 = vunpack.c.l.b16 %v2387
      %v2513 = vunpack.c.l.b16 %v2388
      %v2514 = vunpack.c.l.b16 %v2389
      %v2515 = vunpack.c.l.b16 %v2390
      %v2516 = vunpack.c.l.b16 %v2391
      %v2517 = vpack.c.b16 %v2462, %v2461
      %v2518 = vpack.c.b16 %v2464, %v2463
      %v2519 = vpack.c.b16 %v2466, %v2465
      %v2520 = vpack.c.b16 %v2468, %v2467
      %v2521 = vpack.c.b16 %v2470, %v2469
      %v2522 = vpack.c.b16 %v2472, %v2471
      %v2523 = vpack.c.b16 %v2474, %v2473
      %v2524 = vpack.c.b16 %v2476, %v2475
      %v2525 = vpack.c.b16 %v2478, %v2477
      %v2526 = vpack.c.b16 %v2480, %v2479
      %v2527 = vpack.c.b16 %v2482, %v2481
      %v2528 = vpack.c.b16 %v2484, %v2483
      %v2529 = vpack.c.b16 %v2486, %v2485
      %v2530 = vpack.c.b16 %v2488, %v2487
      %v2531 = vpack.c.b16 %v2490, %v2489
      %v2532 = vpack.c.b16 %v2492, %v2491
      %v2533 = vpack.c.b16 %v2494, %v2493
      %v2534 = vpack.c.b16 %v2496, %v2495
      %v2535 = vpack.c.b16 %v2498, %v2497
      %v2536 = vpack.c.b16 %v2500, %v2499
      %v2537 = vpack.c.b16 %v2502, %v2501
      %v2538 = vpack.c.b16 %v2504, %v2503
      %v2539 = vpack.c.b16 %v2506, %v2505
      %v2540 = vpack.c.b16 %v2508, %v2507
      %v2541 = vpack.c.b16 %v2510, %v2509
      %v2542 = vpack.c.b16 %v2512, %v2511
      %v2543 = vpack.c.b16 %v2514, %v2513
      %v2544 = vpack.c.b16 %v2516, %v2515
      %v2557 = vunpack.c.l.b16 %v2393
      %v2558 = vunpack.c.h.b16 %v2393
      %v2559 = vunpack.c.l.b16 %v2394
      %v2560 = vunpack.c.h.b16 %v2394
      %v2561 = vunpack.c.l.b16 %v2395
      %v2562 = vunpack.c.h.b16 %v2395
      %v2563 = vunpack.c.l.b16 %v2396
      %v2564 = vunpack.c.h.b16 %v2396
      %v2565 = vunpack.c.l.b16 %v2397
      %v2566 = vunpack.c.h.b16 %v2397
      %v2567 = vunpack.c.l.b16 %v2398
      %v2568 = vunpack.c.h.b16 %v2398
      %v2569 = vunpack.c.l.b16 %v2399
      %v2570 = vunpack.c.h.b16 %v2399
      %v2571 = vunpack.c.l.b16 %v2400
      %v2572 = vunpack.c.h.b16 %v2400
      %v2573 = vunpack.c.l.b16 %v2401
      %v2574 = vunpack.c.h.b16 %v2401
      %v2575 = vunpack.c.l.b16 %v2402
      %v2576 = vunpack.c.h.b16 %v2402
      %v2577 = vunpack.c.l.b16 %v2403
      %v2578 = vunpack.c.h.b16 %v2403
      %v2579 = vunpack.c.l.b16 %v2404
      %v2580 = vunpack.c.h.b16 %v2404
      %v2581 = vpack.c.b16 %v2559, %v2557
      %v2582 = vpack.c.b16 %v2560, %v2558
      %v2583 = vpack.c.b16 %v2563, %v2561
      %v2584 = vpack.c.b16 %v2564, %v2562
      %v2585 = vpack.c.b16 %v2567, %v2565
      %v2586 = vpack.c.b16 %v2568, %v2566
      %v2587 = vpack.c.b16 %v2571, %v2569
      %v2588 = vpack.c.b16 %v2572, %v2570
      %v2589 = vpack.c.b16 %v2575, %v2573
      %v2590 = vpack.c.b16 %v2576, %v2574
      %v2591 = vpack.c.b16 %v2579, %v2577
      %v2592 = vpack.c.b16 %v2580, %v2578
      %v2606 = vsel %vm711, %v2517, 0
      %v2609 = vsel %vm711, %v2518, 0
      %v2612 = vsel %vm711, %v2519, 0
      %v2615 = vsel %vm711, %v2520, 0
      %v2618 = vsel %vm711, %v2521, 0
      %v2621 = vsel %vm711, %v2522, 0
      %v2624 = vsel %vm711, %v2523, 0
      %v2627 = vsel %vm711, %v2524, 0
      %v2630 = vsel %vm711, %v2525, 0
      %v2633 = vsel %vm711, %v2526, 0
      %v2636 = vsel %vm711, %v2527, 0
      %v2639 = vsel %vm711, %v2528, 0
      %v2642 = vsel %vm711, %v2529, 0
      %v2645 = vsel %vm711, %v2530, 0
      %v2648 = vsel %vm711, %v2531, 0
      %v2651 = vsel %vm711, %v2532, 0
      %v2654 = vsel %vm711, %v2533, 0
      %v2657 = vsel %vm711, %v2534, 0
      %v2660 = vsel %vm711, %v2535, 0
      %v2663 = vsel %vm711, %v2536, 0
      %v2666 = vsel %vm711, %v2537, 0
      %v2669 = vsel %vm711, %v2538, 0
      %v2672 = vsel %vm711, %v2539, 0
      %v2675 = vsel %vm711, %v2540, 0
      %v2678 = vsel %vm711, %v2541, 0
      %v2681 = vsel %vm711, %v2542, 0
      %v2684 = vsel %vm711, %v2543, 0
      %v2687 = vsel %vm711, %v2544, 0
      %2689 = vmatprep.subr.bf16.mxu0 %v2582
      %2690 = vmatpush1.bf16.msra.mxu0 %v2581
      %2691 = vmatprep.subr.bf16.mxu0 %v2584
      %2692 = vmatpush1.bf16.msra.mxu0 %v2583
      %2693 = vmatprep.subr.bf16.mxu0 %v2586
      %2694 = vmatpush1.bf16.msra.mxu0 %v2585
      %2695 = vmatprep.subr.bf16.mxu0 %v2588
      %2696 = vmatpush1.bf16.msra.mxu0 %v2587
      %2697 = vmatprep.subr.bf16.mxu0 %v2590
      %2698 = vmatpush1.bf16.msra.mxu0 %v2589
      %2699 = vmatprep.subr.bf16.mxu0 %v2592
      %2700 = vmatpush1.bf16.msra.mxu0 %v2591
      %2701 = vmatprep.subr.bf16.mxu0 0
      %2702 = vmatpush1.bf16.msra.mxu0 0
      %2703 = vmatprep.subr.bf16.mxu0 0
      %2704 = vmatpush1.bf16.msra.mxu0 0
      %2705 = vmatprep.subr.bf16.mxu0 0
      %2706 = vmatpush1.bf16.msra.mxu0 0
      %2707 = vmatprep.subr.bf16.mxu0 0
      %2708 = vmatpush1.bf16.msra.mxu0 0
      %2709 = vmatprep.subr.bf16.mxu0 0
      %2710 = vmatpush1.bf16.msra.mxu0 0
      %2711 = vmatprep.subr.bf16.mxu0 0
      %2712 = vmatpush1.bf16.msra.mxu0 0
      %2713 = vmatprep.subr.bf16.mxu0 0
      %2714 = vmatpush1.bf16.msra.mxu0 0
      %2715 = vmatprep.subr.bf16.mxu0 0
      %2716 = vmatpush1.bf16.msra.mxu0 0
      %2717 = vmatprep.subr.bf16.mxu0 0
      %2718 = vmatpush1.bf16.msra.mxu0 0
      %2719 = vmatprep.subr.bf16.mxu0 0
      %2720 = vmatpush1.bf16.msra.mxu0 0
      %2721 = vmatprep.mubr.bf16.mxu0 0
      %2722 = vmatmul.mubr.bf16.gmra.mrb[0].mxu0 %v2606
      %v2723 = vpop.f32.mrb[0].mxu0
      %v2724 = vadd.f32 0.0, %v2723
      %v2725 = vpop.f32.mrb[0].mxu0
      %v2726 = vadd.f32 0.0, %v2725
      %v2727 = vpop.f32.mrb[0].mxu0
      %v2728 = vadd.f32 0.0, %v2727
      %v2729 = vpop.f32.mrb[0].mxu0
      %v2730 = vadd.f32 0.0, %v2729
      %2731 = vmatprep.mubr.bf16.mxu0 0
      %2732 = vmatmul.mubr.bf16.gmra.mrb[0].mxu0 %v2609
      %v2733 = vpop.f32.mrb[0].mxu0
      %v2734 = vadd.f32 0.0, %v2733
      %v2735 = vpop.f32.mrb[0].mxu0
      %v2736 = vadd.f32 0.0, %v2735
      %v2737 = vpop.f32.mrb[0].mxu0
      %v2738 = vadd.f32 0.0, %v2737
      %v2739 = vpop.f32.mrb[0].mxu0
      %v2740 = vadd.f32 0.0, %v2739
      %2741 = vmatprep.mubr.bf16.mxu0 0
      %2742 = vmatmul.mubr.bf16.gmra.mrb[0].mxu0 %v2612
      %v2743 = vpop.f32.mrb[0].mxu0
      %v2744 = vadd.f32 0.0, %v2743
      %v2745 = vpop.f32.mrb[0].mxu0
      %v2746 = vadd.f32 0.0, %v2745
      %v2747 = vpop.f32.mrb[0].mxu0
      %v2748 = vadd.f32 0.0, %v2747
      %v2749 = vpop.f32.mrb[0].mxu0
      %v2750 = vadd.f32 0.0, %v2749
      %2751 = vmatprep.mubr.bf16.mxu0 0
      %2752 = vmatmul.mubr.bf16.gmra.mrb[0].mxu0 %v2615
      %v2753 = vpop.f32.mrb[0].mxu0
      %v2754 = vadd.f32 0.0, %v2753
      %v2755 = vpop.f32.mrb[0].mxu0
      %v2756 = vadd.f32 0.0, %v2755
      %v2757 = vpop.f32.mrb[0].mxu0
      %v2758 = vadd.f32 0.0, %v2757
      %v2759 = vpop.f32.mrb[0].mxu0
      %v2760 = vadd.f32 0.0, %v2759
      %2761 = vmatprep.mubr.bf16.mxu0 0
      %2762 = vmatmul.mubr.bf16.gmra.mrb[0].mxu0 %v2618
      %v2763 = vpop.f32.mrb[0].mxu0
      %v2764 = vadd.f32 0.0, %v2763
      %v2765 = vpop.f32.mrb[0].mxu0
      %v2766 = vadd.f32 0.0, %v2765
      %v2767 = vpop.f32.mrb[0].mxu0
      %v2768 = vadd.f32 0.0, %v2767
      %v2769 = vpop.f32.mrb[0].mxu0
      %v2770 = vadd.f32 0.0, %v2769
      %2771 = vmatprep.mubr.bf16.mxu0 0
      %2772 = vmatmul.mubr.bf16.gmra.mrb[0].mxu0 %v2621
      %v2773 = vpop.f32.mrb[0].mxu0
      %v2774 = vadd.f32 0.0, %v2773
      %v2775 = vpop.f32.mrb[0].mxu0
      %v2776 = vadd.f32 0.0, %v2775
      %v2777 = vpop.f32.mrb[0].mxu0
      %v2778 = vadd.f32 0.0, %v2777
      %v2779 = vpop.f32.mrb[0].mxu0
      %v2780 = vadd.f32 0.0, %v2779
      %2781 = vmatprep.mubr.bf16.mxu0 0
      %2782 = vmatmul.mubr.bf16.gmra.mrb[0].mxu0 %v2624
      %v2783 = vpop.f32.mrb[0].mxu0
      %v2784 = vadd.f32 0.0, %v2783
      %v2785 = vpop.f32.mrb[0].mxu0
      %v2786 = vadd.f32 0.0, %v2785
      %v2787 = vpop.f32.mrb[0].mxu0
      %v2788 = vadd.f32 0.0, %v2787
      %v2789 = vpop.f32.mrb[0].mxu0
      %v2790 = vadd.f32 0.0, %v2789
      %2791 = vmatprep.mubr.bf16.mxu0 0
      %2792 = vmatmul.mubr.bf16.gmra.mrb[0].mxu0 %v2627
      %v2793 = vpop.f32.mrb[0].mxu0
      %v2794 = vadd.f32 0.0, %v2793
      %v2795 = vpop.f32.mrb[0].mxu0
      %v2796 = vadd.f32 0.0, %v2795
      %v2797 = vpop.f32.mrb[0].mxu0
      %v2798 = vadd.f32 0.0, %v2797
      %v2799 = vpop.f32.mrb[0].mxu0
      %v2800 = vadd.f32 0.0, %v2799
      %2801 = vmatprep.mubr.bf16.mxu0 0
      %2802 = vmatmul.mubr.bf16.gmra.mrb[0].mxu0 %v2630
      %v2803 = vpop.f32.mrb[0].mxu0
      %v2804 = vadd.f32 0.0, %v2803
      %v2805 = vpop.f32.mrb[0].mxu0
      %v2806 = vadd.f32 0.0, %v2805
      %v2807 = vpop.f32.mrb[0].mxu0
      %v2808 = vadd.f32 0.0, %v2807
      %v2809 = vpop.f32.mrb[0].mxu0
      %v2810 = vadd.f32 0.0, %v2809
      %2811 = vmatprep.mubr.bf16.mxu0 0
      %2812 = vmatmul.mubr.bf16.gmra.mrb[0].mxu0 %v2633
      %v2813 = vpop.f32.mrb[0].mxu0
      %v2814 = vadd.f32 0.0, %v2813
      %v2815 = vpop.f32.mrb[0].mxu0
      %v2816 = vadd.f32 0.0, %v2815
      %v2817 = vpop.f32.mrb[0].mxu0
      %v2818 = vadd.f32 0.0, %v2817
      %v2819 = vpop.f32.mrb[0].mxu0
      %v2820 = vadd.f32 0.0, %v2819
      %2821 = vmatprep.mubr.bf16.mxu0 0
      %2822 = vmatmul.mubr.bf16.gmra.mrb[0].mxu0 %v2636
      %v2823 = vpop.f32.mrb[0].mxu0
      %v2824 = vadd.f32 0.0, %v2823
      %v2825 = vpop.f32.mrb[0].mxu0
      %v2826 = vadd.f32 0.0, %v2825
      %v2827 = vpop.f32.mrb[0].mxu0
      %v2828 = vadd.f32 0.0, %v2827
      %v2829 = vpop.f32.mrb[0].mxu0
      %v2830 = vadd.f32 0.0, %v2829
      %2831 = vmatprep.mubr.bf16.mxu0 0
      %2832 = vmatmul.mubr.bf16.gmra.mrb[0].mxu0 %v2639
      %v2833 = vpop.f32.mrb[0].mxu0
      %v2834 = vadd.f32 0.0, %v2833
      %v2835 = vpop.f32.mrb[0].mxu0
      %v2836 = vadd.f32 0.0, %v2835
      %v2837 = vpop.f32.mrb[0].mxu0
      %v2838 = vadd.f32 0.0, %v2837
      %v2839 = vpop.f32.mrb[0].mxu0
      %v2840 = vadd.f32 0.0, %v2839
      %2841 = vmatprep.mubr.bf16.mxu0 0
      %2842 = vmatmul.mubr.bf16.gmra.mrb[0].mxu0 %v2642
      %v2843 = vpop.f32.mrb[0].mxu0
      %v2844 = vadd.f32 0.0, %v2843
      %v2845 = vpop.f32.mrb[0].mxu0
      %v2846 = vadd.f32 0.0, %v2845
      %v2847 = vpop.f32.mrb[0].mxu0
      %v2848 = vadd.f32 0.0, %v2847
      %v2849 = vpop.f32.mrb[0].mxu0
      %v2850 = vadd.f32 0.0, %v2849
      %2851 = vmatprep.mubr.bf16.mxu0 0
      %2852 = vmatmul.mubr.bf16.gmra.mrb[0].mxu0 %v2645
      %v2853 = vpop.f32.mrb[0].mxu0
      %v2854 = vadd.f32 0.0, %v2853
      %v2855 = vpop.f32.mrb[0].mxu0
      %v2856 = vadd.f32 0.0, %v2855
      %v2857 = vpop.f32.mrb[0].mxu0
      %v2858 = vadd.f32 0.0, %v2857
      %v2859 = vpop.f32.mrb[0].mxu0
      %v2860 = vadd.f32 0.0, %v2859
      %2861 = vmatprep.mubr.bf16.mxu0 0
      %2862 = vmatmul.mubr.bf16.gmra.mrb[0].mxu0 %v2648
      %v2863 = vpop.f32.mrb[0].mxu0
      %v2864 = vadd.f32 0.0, %v2863
      %v2865 = vpop.f32.mrb[0].mxu0
      %v2866 = vadd.f32 0.0, %v2865
      %v2867 = vpop.f32.mrb[0].mxu0
      %v2868 = vadd.f32 0.0, %v2867
      %v2869 = vpop.f32.mrb[0].mxu0
      %v2870 = vadd.f32 0.0, %v2869
      %2871 = vmatprep.mubr.bf16.mxu0 0
      %2872 = vmatmul.mubr.bf16.gmra.mrb[0].mxu0 %v2651
      %v2873 = vpop.f32.mrb[0].mxu0
      %v2874 = vadd.f32 0.0, %v2873
      %v2875 = vpop.f32.mrb[0].mxu0
      %v2876 = vadd.f32 0.0, %v2875
      %v2877 = vpop.f32.mrb[0].mxu0
      %v2878 = vadd.f32 0.0, %v2877
      %v2879 = vpop.f32.mrb[0].mxu0
      %v2880 = vadd.f32 0.0, %v2879
      %2881 = vmatprep.mubr.bf16.mxu0 0
      %2882 = vmatmul.mubr.bf16.gmra.mrb[0].mxu0 %v2654
      %v2883 = vpop.f32.mrb[0].mxu0
      %v2884 = vadd.f32 0.0, %v2883
      %v2885 = vpop.f32.mrb[0].mxu0
      %v2886 = vadd.f32 0.0, %v2885
      %v2887 = vpop.f32.mrb[0].mxu0
      %v2888 = vadd.f32 0.0, %v2887
      %v2889 = vpop.f32.mrb[0].mxu0
      %v2890 = vadd.f32 0.0, %v2889
      %2891 = vmatprep.mubr.bf16.mxu0 0
      %2892 = vmatmul.mubr.bf16.gmra.mrb[0].mxu0 %v2657
      %v2893 = vpop.f32.mrb[0].mxu0
      %v2894 = vadd.f32 0.0, %v2893
      %v2895 = vpop.f32.mrb[0].mxu0
      %v2896 = vadd.f32 0.0, %v2895
      %v2897 = vpop.f32.mrb[0].mxu0
      %v2898 = vadd.f32 0.0, %v2897
      %v2899 = vpop.f32.mrb[0].mxu0
      %v2900 = vadd.f32 0.0, %v2899
      %2901 = vmatprep.mubr.bf16.mxu0 0
      %2902 = vmatmul.mubr.bf16.gmra.mrb[0].mxu0 %v2660
      %v2903 = vpop.f32.mrb[0].mxu0
      %v2904 = vadd.f32 0.0, %v2903
      %v2905 = vpop.f32.mrb[0].mxu0
      %v2906 = vadd.f32 0.0, %v2905
      %v2907 = vpop.f32.mrb[0].mxu0
      %v2908 = vadd.f32 0.0, %v2907
      %v2909 = vpop.f32.mrb[0].mxu0
      %v2910 = vadd.f32 0.0, %v2909
      %2911 = vmatprep.mubr.bf16.mxu0 0
      %2912 = vmatmul.mubr.bf16.gmra.mrb[0].mxu0 %v2663
      %v2913 = vpop.f32.mrb[0].mxu0
      %v2914 = vadd.f32 0.0, %v2913
      %v2915 = vpop.f32.mrb[0].mxu0
      %v2916 = vadd.f32 0.0, %v2915
      %v2917 = vpop.f32.mrb[0].mxu0
      %v2918 = vadd.f32 0.0, %v2917
      %v2919 = vpop.f32.mrb[0].mxu0
      %v2920 = vadd.f32 0.0, %v2919
      %2921 = vmatprep.mubr.bf16.mxu0 0
      %2922 = vmatmul.mubr.bf16.gmra.mrb[0].mxu0 %v2666
      %v2923 = vpop.f32.mrb[0].mxu0
      %v2924 = vadd.f32 0.0, %v2923
      %v2925 = vpop.f32.mrb[0].mxu0
      %v2926 = vadd.f32 0.0, %v2925
      %v2927 = vpop.f32.mrb[0].mxu0
      %v2928 = vadd.f32 0.0, %v2927
      %v2929 = vpop.f32.mrb[0].mxu0
      %v2930 = vadd.f32 0.0, %v2929
      %2931 = vmatprep.mubr.bf16.mxu0 0
      %2932 = vmatmul.mubr.bf16.gmra.mrb[0].mxu0 %v2669
      %v2933 = vpop.f32.mrb[0].mxu0
      %v2934 = vadd.f32 0.0, %v2933
      %v2935 = vpop.f32.mrb[0].mxu0
      %v2936 = vadd.f32 0.0, %v2935
      %v2937 = vpop.f32.mrb[0].mxu0
      %v2938 = vadd.f32 0.0, %v2937
      %v2939 = vpop.f32.mrb[0].mxu0
      %v2940 = vadd.f32 0.0, %v2939
      %2941 = vmatprep.mubr.bf16.mxu0 0
      %2942 = vmatmul.mubr.bf16.gmra.mrb[0].mxu0 %v2672
      %v2943 = vpop.f32.mrb[0].mxu0
      %v2944 = vadd.f32 0.0, %v2943
      %v2945 = vpop.f32.mrb[0].mxu0
      %v2946 = vadd.f32 0.0, %v2945
      %v2947 = vpop.f32.mrb[0].mxu0
      %v2948 = vadd.f32 0.0, %v2947
      %v2949 = vpop.f32.mrb[0].mxu0
      %v2950 = vadd.f32 0.0, %v2949
      %2951 = vmatprep.mubr.bf16.mxu0 0
      %2952 = vmatmul.mubr.bf16.gmra.mrb[0].mxu0 %v2675
      %v2953 = vpop.f32.mrb[0].mxu0
      %v2954 = vadd.f32 0.0, %v2953
      %v2955 = vpop.f32.mrb[0].mxu0
      %v2956 = vadd.f32 0.0, %v2955
      %v2957 = vpop.f32.mrb[0].mxu0
      %v2958 = vadd.f32 0.0, %v2957
      %v2959 = vpop.f32.mrb[0].mxu0
      %v2960 = vadd.f32 0.0, %v2959
      %2961 = vmatprep.mubr.bf16.mxu0 0
      %2962 = vmatmul.mubr.bf16.gmra.mrb[0].mxu0 %v2678
      %v2963 = vpop.f32.mrb[0].mxu0
      %v2964 = vadd.f32 0.0, %v2963
      %v2965 = vpop.f32.mrb[0].mxu0
      %v2966 = vadd.f32 0.0, %v2965
      %v2967 = vpop.f32.mrb[0].mxu0
      %v2968 = vadd.f32 0.0, %v2967
      %v2969 = vpop.f32.mrb[0].mxu0
      %v2970 = vadd.f32 0.0, %v2969
      %2971 = vmatprep.mubr.bf16.mxu0 0
      %2972 = vmatmul.mubr.bf16.gmra.mrb[0].mxu0 %v2681
      %v2973 = vpop.f32.mrb[0].mxu0
      %v2974 = vadd.f32 0.0, %v2973
      %v2975 = vpop.f32.mrb[0].mxu0
      %v2976 = vadd.f32 0.0, %v2975
      %v2977 = vpop.f32.mrb[0].mxu0
      %v2978 = vadd.f32 0.0, %v2977
      %v2979 = vpop.f32.mrb[0].mxu0
      %v2980 = vadd.f32 0.0, %v2979
      %2981 = vmatprep.mubr.bf16.mxu0 0
      %2982 = vmatmul.mubr.bf16.gmra.mrb[0].mxu0 %v2684
      %v2983 = vpop.f32.mrb[0].mxu0
      %v2984 = vadd.f32 0.0, %v2983
      %v2985 = vpop.f32.mrb[0].mxu0
      %v2986 = vadd.f32 0.0, %v2985
      %v2987 = vpop.f32.mrb[0].mxu0
      %v2988 = vadd.f32 0.0, %v2987
      %v2989 = vpop.f32.mrb[0].mxu0
      %v2990 = vadd.f32 0.0, %v2989
      %2991 = vmatprep.mubr.bf16.mxu0 0
      %2992 = vmatmul.mubr.bf16.gmra.mrb[0].mxu0 %v2687
      %v2993 = vpop.f32.mrb[0].mxu0
      %v2994 = vadd.f32 0.0, %v2993
      %v2995 = vpop.f32.mrb[0].mxu0
      %v2996 = vadd.f32 0.0, %v2995
      %v2997 = vpop.f32.mrb[0].mxu0
      %v2998 = vadd.f32 0.0, %v2997
      %v2999 = vpop.f32.mrb[0].mxu0
      %v3000 = vadd.f32 0.0, %v2999
      %3001 = vdwg.mxu0
      %v3002 = vadd.f32 %v2224, %v2724
      %v3003 = vadd.f32 %v2225, %v2726
      %v3004 = vadd.f32 %v2226, %v2728
      %v3005 = vadd.f32 %v2227, %v2730
      %v3006 = vadd.f32 %v2228, %v2734
      %v3007 = vadd.f32 %v2229, %v2736
      %v3008 = vadd.f32 %v2230, %v2738
      %v3009 = vadd.f32 %v2231, %v2740
      %v3010 = vadd.f32 %v2232, %v2744
      %v3011 = vadd.f32 %v2233, %v2746
      %v3012 = vadd.f32 %v2234, %v2748
      %v3013 = vadd.f32 %v2235, %v2750
      %v3014 = vadd.f32 %v2236, %v2754
      %v3015 = vadd.f32 %v2237, %v2756
      %v3016 = vadd.f32 %v2238, %v2758
      %v3017 = vadd.f32 %v2239, %v2760
      %v3018 = vadd.f32 %v2240, %v2764
      %v3019 = vadd.f32 %v2241, %v2766
      %v3020 = vadd.f32 %v2242, %v2768
      %v3021 = vadd.f32 %v2243, %v2770
      %v3022 = vadd.f32 %v2244, %v2774
      %v3023 = vadd.f32 %v2245, %v2776
      %v3024 = vadd.f32 %v2246, %v2778
      %v3025 = vadd.f32 %v2247, %v2780
      %v3026 = vadd.f32 %v2248, %v2784
      %v3027 = vadd.f32 %v2249, %v2786
      %v3028 = vadd.f32 %v2250, %v2788
      %v3029 = vadd.f32 %v2251, %v2790
      %v3030 = vadd.f32 %v2252, %v2794
      %v3031 = vadd.f32 %v2253, %v2796
      %v3032 = vadd.f32 %v2254, %v2798
      %v3033 = vadd.f32 %v2255, %v2800
      %v3034 = vadd.f32 %v2256, %v2804
      %v3035 = vadd.f32 %v2257, %v2806
      %v3036 = vadd.f32 %v2258, %v2808
      %v3037 = vadd.f32 %v2259, %v2810
      %v3038 = vadd.f32 %v2260, %v2814
      %v3039 = vadd.f32 %v2261, %v2816
      %v3040 = vadd.f32 %v2262, %v2818
      %v3041 = vadd.f32 %v2263, %v2820
      %v3042 = vadd.f32 %v2264, %v2824
      %v3043 = vadd.f32 %v2265, %v2826
      %v3044 = vadd.f32 %v2266, %v2828
      %v3045 = vadd.f32 %v2267, %v2830
      %v3046 = vadd.f32 %v2268, %v2834
      %v3047 = vadd.f32 %v2269, %v2836
      %v3048 = vadd.f32 %v2270, %v2838
      %v3049 = vadd.f32 %v2271, %v2840
      %v3050 = vadd.f32 %v2272, %v2844
      %v3051 = vadd.f32 %v2273, %v2846
      %v3052 = vadd.f32 %v2274, %v2848
      %v3053 = vadd.f32 %v2275, %v2850
      %v3054 = vadd.f32 %v2276, %v2854
      %v3055 = vadd.f32 %v2277, %v2856
      %v3056 = vadd.f32 %v2278, %v2858
      %v3057 = vadd.f32 %v2279, %v2860
      %v3058 = vadd.f32 %v2280, %v2864
      %v3059 = vadd.f32 %v2281, %v2866
      %v3060 = vadd.f32 %v2282, %v2868
      %v3061 = vadd.f32 %v2283, %v2870
      %v3062 = vadd.f32 %v2284, %v2874
      %v3063 = vadd.f32 %v2285, %v2876
      %v3064 = vadd.f32 %v2286, %v2878
      %v3065 = vadd.f32 %v2287, %v2880
      %v3066 = vadd.f32 %v2288, %v2884
      %v3067 = vadd.f32 %v2289, %v2886
      %v3068 = vadd.f32 %v2290, %v2888
      %v3069 = vadd.f32 %v2291, %v2890
      %v3070 = vadd.f32 %v2292, %v2894
      %v3071 = vadd.f32 %v2293, %v2896
      %v3072 = vadd.f32 %v2294, %v2898
      %v3073 = vadd.f32 %v2295, %v2900
      %v3074 = vadd.f32 %v2296, %v2904
      %v3075 = vadd.f32 %v2297, %v2906
      %v3076 = vadd.f32 %v2298, %v2908
      %v3077 = vadd.f32 %v2299, %v2910
      %v3078 = vadd.f32 %v2300, %v2914
      %v3079 = vadd.f32 %v2301, %v2916
      %v3080 = vadd.f32 %v2302, %v2918
      %v3081 = vadd.f32 %v2303, %v2920
      %v3082 = vadd.f32 %v2304, %v2924
      %v3083 = vadd.f32 %v2305, %v2926
      %v3084 = vadd.f32 %v2306, %v2928
      %v3085 = vadd.f32 %v2307, %v2930
      %v3086 = vadd.f32 %v2308, %v2934
      %v3087 = vadd.f32 %v2309, %v2936
      %v3088 = vadd.f32 %v2310, %v2938
      %v3089 = vadd.f32 %v2311, %v2940
      %v3090 = vadd.f32 %v2312, %v2944
      %v3091 = vadd.f32 %v2313, %v2946
      %v3092 = vadd.f32 %v2314, %v2948
      %v3093 = vadd.f32 %v2315, %v2950
      %v3094 = vadd.f32 %v2316, %v2954
      %v3095 = vadd.f32 %v2317, %v2956
      %v3096 = vadd.f32 %v2318, %v2958
      %v3097 = vadd.f32 %v2319, %v2960
      %v3098 = vadd.f32 %v2320, %v2964
      %v3099 = vadd.f32 %v2321, %v2966
      %v3100 = vadd.f32 %v2322, %v2968
      %v3101 = vadd.f32 %v2323, %v2970
      %v3102 = vadd.f32 %v2324, %v2974
      %v3103 = vadd.f32 %v2325, %v2976
      %v3104 = vadd.f32 %v2326, %v2978
      %v3105 = vadd.f32 %v2327, %v2980
      %v3106 = vadd.f32 %v2328, %v2984
      %v3107 = vadd.f32 %v2329, %v2986
      %v3108 = vadd.f32 %v2330, %v2988
      %v3109 = vadd.f32 %v2331, %v2990
      %v3110 = vadd.f32 %v2332, %v2994
      %v3111 = vadd.f32 %v2333, %v2996
      %v3112 = vadd.f32 %v2334, %v2998
      %v3113 = vadd.f32 %v2335, %v3000
      %3114 = vst [vmem:[#allocation2] sm:$0xff] %v3002
      %3115 = vst.msk [vmem:[#allocation2 + $0x8] sm:$0xff] %vm1110, %v3003
      %3116 = vst [vmem:[#allocation2 + $0x10] sm:$0xff] %v3004
      %3117 = vst.msk [vmem:[#allocation2 + $0x18] sm:$0xff] %vm1110, %v3005
      %3118 = vst [vmem:[#allocation2 + $0x20] sm:$0xff] %v3006
      %3119 = vst.msk [vmem:[#allocation2 + $0x28] sm:$0xff] %vm1110, %v3007
      %3120 = vst [vmem:[#allocation2 + $0x30] sm:$0xff] %v3008
      %3121 = vst.msk [vmem:[#allocation2 + $0x38] sm:$0xff] %vm1110, %v3009
      %3122 = vst [vmem:[#allocation2 + $0x40] sm:$0xff] %v3010
      %3123 = vst.msk [vmem:[#allocation2 + $0x48] sm:$0xff] %vm1110, %v3011
      %3124 = vst [vmem:[#allocation2 + $0x50] sm:$0xff] %v3012
      %3125 = vst.msk [vmem:[#allocation2 + $0x58] sm:$0xff] %vm1110, %v3013
      %3126 = vst [vmem:[#allocation2 + $0x60] sm:$0xff] %v3014
      %3127 = vst.msk [vmem:[#allocation2 + $0x68] sm:$0xff] %vm1110, %v3015
      %3128 = vst [vmem:[#allocation2 + $0x70] sm:$0xff] %v3016
      %3129 = vst.msk [vmem:[#allocation2 + $0x78] sm:$0xff] %vm1110, %v3017
      %3130 = vst [vmem:[#allocation2 + $0x80] sm:$0xff] %v3018
      %3131 = vst.msk [vmem:[#allocation2 + $0x88] sm:$0xff] %vm1110, %v3019
      %3132 = vst [vmem:[#allocation2 + $0x90] sm:$0xff] %v3020
      %3133 = vst.msk [vmem:[#allocation2 + $0x98] sm:$0xff] %vm1110, %v3021
      %3134 = vst [vmem:[#allocation2 + $0xa0] sm:$0xff] %v3022
      %3135 = vst.msk [vmem:[#allocation2 + $0xa8] sm:$0xff] %vm1110, %v3023
      %3136 = vst [vmem:[#allocation2 + $0xb0] sm:$0xff] %v3024
      %3137 = vst.msk [vmem:[#allocation2 + $0xb8] sm:$0xff] %vm1110, %v3025
      %3138 = vst [vmem:[#allocation2 + $0xc0] sm:$0xff] %v3026
      %3139 = vst.msk [vmem:[#allocation2 + $0xc8] sm:$0xff] %vm1110, %v3027
      %3140 = vst [vmem:[#allocation2 + $0xd0] sm:$0xff] %v3028
      %3141 = vst.msk [vmem:[#allocation2 + $0xd8] sm:$0xff] %vm1110, %v3029
      %3142 = vst [vmem:[#allocation2 + $0xe0] sm:$0xff] %v3030
      %3143 = vst.msk [vmem:[#allocation2 + $0xe8] sm:$0xff] %vm1110, %v3031
      %3144 = vst [vmem:[#allocation2 + $0xf0] sm:$0xff] %v3032
      %3145 = vst.msk [vmem:[#allocation2 + $0xf8] sm:$0xff] %vm1110, %v3033
      %3146 = vst [vmem:[#allocation2 + $0x100] sm:$0xff] %v3034
      %3147 = vst.msk [vmem:[#allocation2 + $0x108] sm:$0xff] %vm1110, %v3035
      %3148 = vst [vmem:[#allocation2 + $0x110] sm:$0xff] %v3036
      %3149 = vst.msk [vmem:[#allocation2 + $0x118] sm:$0xff] %vm1110, %v3037
      %3150 = vst [vmem:[#allocation2 + $0x120] sm:$0xff] %v3038
      %3151 = vst.msk [vmem:[#allocation2 + $0x128] sm:$0xff] %vm1110, %v3039
      %3152 = vst [vmem:[#allocation2 + $0x130] sm:$0xff] %v3040
      %3153 = vst.msk [vmem:[#allocation2 + $0x138] sm:$0xff] %vm1110, %v3041
      %3154 = vst [vmem:[#allocation2 + $0x140] sm:$0xff] %v3042
      %3155 = vst.msk [vmem:[#allocation2 + $0x148] sm:$0xff] %vm1110, %v3043
      %3156 = vst [vmem:[#allocation2 + $0x150] sm:$0xff] %v3044
      %3157 = vst.msk [vmem:[#allocation2 + $0x158] sm:$0xff] %vm1110, %v3045
      %3158 = vst [vmem:[#allocation2 + $0x160] sm:$0xff] %v3046
      %3159 = vst.msk [vmem:[#allocation2 + $0x168] sm:$0xff] %vm1110, %v3047
      %3160 = vst [vmem:[#allocation2 + $0x170] sm:$0xff] %v3048
      %3161 = vst.msk [vmem:[#allocation2 + $0x178] sm:$0xff] %vm1110, %v3049
      %3162 = vst [vmem:[#allocation2 + $0x180] sm:$0xff] %v3050
      %3163 = vst.msk [vmem:[#allocation2 + $0x188] sm:$0xff] %vm1110, %v3051
      %3164 = vst [vmem:[#allocation2 + $0x190] sm:$0xff] %v3052
      %3165 = vst.msk [vmem:[#allocation2 + $0x198] sm:$0xff] %vm1110, %v3053
      %3166 = vst [vmem:[#allocation2 + $0x1a0] sm:$0xff] %v3054
      %3167 = vst.msk [vmem:[#allocation2 + $0x1a8] sm:$0xff] %vm1110, %v3055
      %3168 = vst [vmem:[#allocation2 + $0x1b0] sm:$0xff] %v3056
      %3169 = vst.msk [vmem:[#allocation2 + $0x1b8] sm:$0xff] %vm1110, %v3057
      %3170 = vst [vmem:[#allocation2 + $0x1c0] sm:$0xff] %v3058
      %3171 = vst.msk [vmem:[#allocation2 + $0x1c8] sm:$0xff] %vm1110, %v3059
      %3172 = vst [vmem:[#allocation2 + $0x1d0] sm:$0xff] %v3060
      %3173 = vst.msk [vmem:[#allocation2 + $0x1d8] sm:$0xff] %vm1110, %v3061
      %3174 = vst [vmem:[#allocation2 + $0x1e0] sm:$0xff] %v3062
      %3175 = vst.msk [vmem:[#allocation2 + $0x1e8] sm:$0xff] %vm1110, %v3063
      %3176 = vst [vmem:[#allocation2 + $0x1f0] sm:$0xff] %v3064
      %3177 = vst.msk [vmem:[#allocation2 + $0x1f8] sm:$0xff] %vm1110, %v3065
      %3178 = vst [vmem:[#allocation2 + $0x200] sm:$0xff] %v3066
      %3179 = vst.msk [vmem:[#allocation2 + $0x208] sm:$0xff] %vm1110, %v3067
      %3180 = vst [vmem:[#allocation2 + $0x210] sm:$0xff] %v3068
      %3181 = vst.msk [vmem:[#allocation2 + $0x218] sm:$0xff] %vm1110, %v3069
      %3182 = vst [vmem:[#allocation2 + $0x220] sm:$0xff] %v3070
      %3183 = vst.msk [vmem:[#allocation2 + $0x228] sm:$0xff] %vm1110, %v3071
      %3184 = vst [vmem:[#allocation2 + $0x230] sm:$0xff] %v3072
      %3185 = vst.msk [vmem:[#allocation2 + $0x238] sm:$0xff] %vm1110, %v3073
      %3186 = vst [vmem:[#allocation2 + $0x240] sm:$0xff] %v3074
      %3187 = vst.msk [vmem:[#allocation2 + $0x248] sm:$0xff] %vm1110, %v3075
      %3188 = vst [vmem:[#allocation2 + $0x250] sm:$0xff] %v3076
      %3189 = vst.msk [vmem:[#allocation2 + $0x258] sm:$0xff] %vm1110, %v3077
      %3190 = vst [vmem:[#allocation2 + $0x260] sm:$0xff] %v3078
      %3191 = vst.msk [vmem:[#allocation2 + $0x268] sm:$0xff] %vm1110, %v3079
      %3192 = vst [vmem:[#allocation2 + $0x270] sm:$0xff] %v3080
      %3193 = vst.msk [vmem:[#allocation2 + $0x278] sm:$0xff] %vm1110, %v3081
      %3194 = vst [vmem:[#allocation2 + $0x280] sm:$0xff] %v3082
      %3195 = vst.msk [vmem:[#allocation2 + $0x288] sm:$0xff] %vm1110, %v3083
      %3196 = vst [vmem:[#allocation2 + $0x290] sm:$0xff] %v3084
      %3197 = vst.msk [vmem:[#allocation2 + $0x298] sm:$0xff] %vm1110, %v3085
      %3198 = vst [vmem:[#allocation2 + $0x2a0] sm:$0xff] %v3086
      %3199 = vst.msk [vmem:[#allocation2 + $0x2a8] sm:$0xff] %vm1110, %v3087
      %3200 = vst [vmem:[#allocation2 + $0x2b0] sm:$0xff] %v3088
      %3201 = vst.msk [vmem:[#allocation2 + $0x2b8] sm:$0xff] %vm1110, %v3089
      %3202 = vst [vmem:[#allocation2 + $0x2c0] sm:$0xff] %v3090
      %3203 = vst.msk [vmem:[#allocation2 + $0x2c8] sm:$0xff] %vm1110, %v3091
      %3204 = vst [vmem:[#allocation2 + $0x2d0] sm:$0xff] %v3092
      %3205 = vst.msk [vmem:[#allocation2 + $0x2d8] sm:$0xff] %vm1110, %v3093
      %3206 = vst [vmem:[#allocation2 + $0x2e0] sm:$0xff] %v3094
      %3207 = vst.msk [vmem:[#allocation2 + $0x2e8] sm:$0xff] %vm1110, %v3095
      %3208 = vst [vmem:[#allocation2 + $0x2f0] sm:$0xff] %v3096
      %3209 = vst.msk [vmem:[#allocation2 + $0x2f8] sm:$0xff] %vm1110, %v3097
      %3210 = vst [vmem:[#allocation2 + $0x300] sm:$0xff] %v3098
      %3211 = vst.msk [vmem:[#allocation2 + $0x308] sm:$0xff] %vm1110, %v3099
      %3212 = vst [vmem:[#allocation2 + $0x310] sm:$0xff] %v3100
      %3213 = vst.msk [vmem:[#allocation2 + $0x318] sm:$0xff] %vm1110, %v3101
      %3214 = vst [vmem:[#allocation2 + $0x320] sm:$0xff] %v3102
      %3215 = vst.msk [vmem:[#allocation2 + $0x328] sm:$0xff] %vm1110, %v3103
      %3216 = vst [vmem:[#allocation2 + $0x330] sm:$0xff] %v3104
      %3217 = vst.msk [vmem:[#allocation2 + $0x338] sm:$0xff] %vm1110, %v3105
      %3218 = vst [vmem:[#allocation2 + $0x340] sm:$0xff] %v3106
      %3219 = vst.msk [vmem:[#allocation2 + $0x348] sm:$0xff] %vm1110, %v3107
      %3220 = vst [vmem:[#allocation2 + $0x350] sm:$0xff] %v3108
      %3221 = vst.msk [vmem:[#allocation2 + $0x358] sm:$0xff] %vm1110, %v3109
      %3222 = vst [vmem:[#allocation2 + $0x360] sm:$0xff] %v3110
      %3223 = vst.msk [vmem:[#allocation2 + $0x368] sm:$0xff] %vm1110, %v3111
      %3224 = vst [vmem:[#allocation2 + $0x370] sm:$0xff] %v3112
      %3225 = vst.msk [vmem:[#allocation2 + $0x378] sm:$0xff] %vm1110, %v3113
      %v3226 = vld [vmem:[#allocation2] sm:$0xff]
      %v3227 = vld [vmem:[#allocation2 + $0x8] sm:$0xff]
      %v3228 = vld [vmem:[#allocation2 + $0x10] sm:$0xff]
      %v3229 = vld [vmem:[#allocation2 + $0x18] sm:$0xff]
      %v3230 = vld [vmem:[#allocation2 + $0x20] sm:$0xff]
      %v3231 = vld [vmem:[#allocation2 + $0x28] sm:$0xff]
      %v3232 = vld [vmem:[#allocation2 + $0x30] sm:$0xff]
      %v3233 = vld [vmem:[#allocation2 + $0x38] sm:$0xff]
      %v3234 = vld [vmem:[#allocation2 + $0x40] sm:$0xff]
      %v3235 = vld [vmem:[#allocation2 + $0x48] sm:$0xff]
      %v3236 = vld [vmem:[#allocation2 + $0x50] sm:$0xff]
      %v3237 = vld [vmem:[#allocation2 + $0x58] sm:$0xff]
      %v3238 = vld [vmem:[#allocation2 + $0x60] sm:$0xff]
      %v3239 = vld [vmem:[#allocation2 + $0x68] sm:$0xff]
      %v3240 = vld [vmem:[#allocation2 + $0x70] sm:$0xff]
      %v3241 = vld [vmem:[#allocation2 + $0x78] sm:$0xff]
      %v3242 = vld [vmem:[#allocation2 + $0x80] sm:$0xff]
      %v3243 = vld [vmem:[#allocation2 + $0x88] sm:$0xff]
      %v3244 = vld [vmem:[#allocation2 + $0x90] sm:$0xff]
      %v3245 = vld [vmem:[#allocation2 + $0x98] sm:$0xff]
      %v3246 = vld [vmem:[#allocation2 + $0xa0] sm:$0xff]
      %v3247 = vld [vmem:[#allocation2 + $0xa8] sm:$0xff]
      %v3248 = vld [vmem:[#allocation2 + $0xb0] sm:$0xff]
      %v3249 = vld [vmem:[#allocation2 + $0xb8] sm:$0xff]
      %v3250 = vld [vmem:[#allocation2 + $0xc0] sm:$0xff]
      %v3251 = vld [vmem:[#allocation2 + $0xc8] sm:$0xff]
      %v3252 = vld [vmem:[#allocation2 + $0xd0] sm:$0xff]
      %v3253 = vld [vmem:[#allocation2 + $0xd8] sm:$0xff]
      %v3254 = vld [vmem:[#allocation2 + $0xe0] sm:$0xff]
      %v3255 = vld [vmem:[#allocation2 + $0xe8] sm:$0xff]
      %v3256 = vld [vmem:[#allocation2 + $0xf0] sm:$0xff]
      %v3257 = vld [vmem:[#allocation2 + $0xf8] sm:$0xff]
      %v3258 = vld [vmem:[#allocation2 + $0x100] sm:$0xff]
      %v3259 = vld [vmem:[#allocation2 + $0x108] sm:$0xff]
      %v3260 = vld [vmem:[#allocation2 + $0x110] sm:$0xff]
      %v3261 = vld [vmem:[#allocation2 + $0x118] sm:$0xff]
      %v3262 = vld [vmem:[#allocation2 + $0x120] sm:$0xff]
      %v3263 = vld [vmem:[#allocation2 + $0x128] sm:$0xff]
      %v3264 = vld [vmem:[#allocation2 + $0x130] sm:$0xff]
      %v3265 = vld [vmem:[#allocation2 + $0x138] sm:$0xff]
      %v3266 = vld [vmem:[#allocation2 + $0x140] sm:$0xff]
      %v3267 = vld [vmem:[#allocation2 + $0x148] sm:$0xff]
      %v3268 = vld [vmem:[#allocation2 + $0x150] sm:$0xff]
      %v3269 = vld [vmem:[#allocation2 + $0x158] sm:$0xff]
      %v3270 = vld [vmem:[#allocation2 + $0x160] sm:$0xff]
      %v3271 = vld [vmem:[#allocation2 + $0x168] sm:$0xff]
      %v3272 = vld [vmem:[#allocation2 + $0x170] sm:$0xff]
      %v3273 = vld [vmem:[#allocation2 + $0x178] sm:$0xff]
      %v3274 = vld [vmem:[#allocation2 + $0x180] sm:$0xff]
      %v3275 = vld [vmem:[#allocation2 + $0x188] sm:$0xff]
      %v3276 = vld [vmem:[#allocation2 + $0x190] sm:$0xff]
      %v3277 = vld [vmem:[#allocation2 + $0x198] sm:$0xff]
      %v3278 = vld [vmem:[#allocation2 + $0x1a0] sm:$0xff]
      %v3279 = vld [vmem:[#allocation2 + $0x1a8] sm:$0xff]
      %v3280 = vld [vmem:[#allocation2 + $0x1b0] sm:$0xff]
      %v3281 = vld [vmem:[#allocation2 + $0x1b8] sm:$0xff]
      %v3282 = vld [vmem:[#allocation2 + $0x1c0] sm:$0xff]
      %v3283 = vld [vmem:[#allocation2 + $0x1c8] sm:$0xff]
      %v3284 = vld [vmem:[#allocation2 + $0x1d0] sm:$0xff]
      %v3285 = vld [vmem:[#allocation2 + $0x1d8] sm:$0xff]
      %v3286 = vld [vmem:[#allocation2 + $0x1e0] sm:$0xff]
      %v3287 = vld [vmem:[#allocation2 + $0x1e8] sm:$0xff]
      %v3288 = vld [vmem:[#allocation2 + $0x1f0] sm:$0xff]
      %v3289 = vld [vmem:[#allocation2 + $0x1f8] sm:$0xff]
      %v3290 = vld [vmem:[#allocation2 + $0x200] sm:$0xff]
      %v3291 = vld [vmem:[#allocation2 + $0x208] sm:$0xff]
      %v3292 = vld [vmem:[#allocation2 + $0x210] sm:$0xff]
      %v3293 = vld [vmem:[#allocation2 + $0x218] sm:$0xff]
      %v3294 = vld [vmem:[#allocation2 + $0x220] sm:$0xff]
      %v3295 = vld [vmem:[#allocation2 + $0x228] sm:$0xff]
      %v3296 = vld [vmem:[#allocation2 + $0x230] sm:$0xff]
      %v3297 = vld [vmem:[#allocation2 + $0x238] sm:$0xff]
      %v3298 = vld [vmem:[#allocation2 + $0x240] sm:$0xff]
      %v3299 = vld [vmem:[#allocation2 + $0x248] sm:$0xff]
      %v3300 = vld [vmem:[#allocation2 + $0x250] sm:$0xff]
      %v3301 = vld [vmem:[#allocation2 + $0x258] sm:$0xff]
      %v3302 = vld [vmem:[#allocation2 + $0x260] sm:$0xff]
      %v3303 = vld [vmem:[#allocation2 + $0x268] sm:$0xff]
      %v3304 = vld [vmem:[#allocation2 + $0x270] sm:$0xff]
      %v3305 = vld [vmem:[#allocation2 + $0x278] sm:$0xff]
      %v3306 = vld [vmem:[#allocation2 + $0x280] sm:$0xff]
      %v3307 = vld [vmem:[#allocation2 + $0x288] sm:$0xff]
      %v3308 = vld [vmem:[#allocation2 + $0x290] sm:$0xff]
      %v3309 = vld [vmem:[#allocation2 + $0x298] sm:$0xff]
      %v3310 = vld [vmem:[#allocation2 + $0x2a0] sm:$0xff]
      %v3311 = vld [vmem:[#allocation2 + $0x2a8] sm:$0xff]
      %v3312 = vld [vmem:[#allocation2 + $0x2b0] sm:$0xff]
      %v3313 = vld [vmem:[#allocation2 + $0x2b8] sm:$0xff]
      %v3314 = vld [vmem:[#allocation2 + $0x2c0] sm:$0xff]
      %v3315 = vld [vmem:[#allocation2 + $0x2c8] sm:$0xff]
      %v3316 = vld [vmem:[#allocation2 + $0x2d0] sm:$0xff]
      %v3317 = vld [vmem:[#allocation2 + $0x2d8] sm:$0xff]
      %v3318 = vld [vmem:[#allocation2 + $0x2e0] sm:$0xff]
      %v3319 = vld [vmem:[#allocation2 + $0x2e8] sm:$0xff]
      %v3320 = vld [vmem:[#allocation2 + $0x2f0] sm:$0xff]
      %v3321 = vld [vmem:[#allocation2 + $0x2f8] sm:$0xff]
      %v3322 = vld [vmem:[#allocation2 + $0x300] sm:$0xff]
      %v3323 = vld [vmem:[#allocation2 + $0x308] sm:$0xff]
      %v3324 = vld [vmem:[#allocation2 + $0x310] sm:$0xff]
      %v3325 = vld [vmem:[#allocation2 + $0x318] sm:$0xff]
      %v3326 = vld [vmem:[#allocation2 + $0x320] sm:$0xff]
      %v3327 = vld [vmem:[#allocation2 + $0x328] sm:$0xff]
      %v3328 = vld [vmem:[#allocation2 + $0x330] sm:$0xff]
      %v3329 = vld [vmem:[#allocation2 + $0x338] sm:$0xff]
      %v3330 = vld [vmem:[#allocation2 + $0x340] sm:$0xff]
      %v3331 = vld [vmem:[#allocation2 + $0x348] sm:$0xff]
      %v3332 = vld [vmem:[#allocation2 + $0x350] sm:$0xff]
      %v3333 = vld [vmem:[#allocation2 + $0x358] sm:$0xff]
      %v3334 = vld [vmem:[#allocation2 + $0x360] sm:$0xff]
      %v3335 = vld [vmem:[#allocation2 + $0x368] sm:$0xff]
      %v3336 = vld [vmem:[#allocation2 + $0x370] sm:$0xff]
      %v3337 = vld [vmem:[#allocation2 + $0x378] sm:$0xff]
      %v3338 = vld [vmem:[%s435 + $0x18] sm:$0xf]
      %v3339 = vld [vmem:[%s435 + $0x1c] sm:$0xf]
      %v3340 = vld [vmem:[%s435 + $0x20] sm:$0xf]
      %v3341 = vld [vmem:[%s435 + $0x24] sm:$0xf]
      %v3342 = vld [vmem:[%s435 + $0x28] sm:$0xf]
      %v3343 = vld [vmem:[%s435 + $0x2c] sm:$0xf]
      %v3344 = vld [vmem:[%s435 + $0x30] sm:$0xf]
      %v3345 = vld [vmem:[%s435 + $0x34] sm:$0xf]
      %v3346 = vld [vmem:[%s435 + $0x38] sm:$0xf]
      %v3347 = vld [vmem:[%s435 + $0x3c] sm:$0xf]
      %v3348 = vld [vmem:[%s435 + $0x40] sm:$0xf]
      %v3349 = vld [vmem:[%s435 + $0x44] sm:$0xf]
      %v3350 = vld [vmem:[%s435 + $0x48] sm:$0xf]
      %v3351 = vld [vmem:[%s435 + $0x4c] sm:$0xf]
      %v3352 = vld [vmem:[%s435 + $0x50] sm:$0xf]
      %v3353 = vld [vmem:[%s435 + $0x54] sm:$0xf]
      %v3354 = vld [vmem:[%s435 + $0x58] sm:$0xf]
      %v3355 = vld [vmem:[%s435 + $0x5c] sm:$0xf]
      %v3356 = vld [vmem:[%s435 + $0x60] sm:$0xf]
      %v3357 = vld [vmem:[%s435 + $0x64] sm:$0xf]
      %v3358 = vld [vmem:[%s435 + $0x68] sm:$0xf]
      %v3359 = vld [vmem:[%s435 + $0x6c] sm:$0xf]
      %v3360 = vld [vmem:[%s435 + $0x70] sm:$0xf]
      %v3361 = vld [vmem:[%s435 + $0x74] sm:$0xf]
      %v3362 = vld [vmem:[%s435 + $0x78] sm:$0xf]
      %v3363 = vld [vmem:[%s435 + $0x7c] sm:$0xf]
      %v3364 = vld [vmem:[%s435 + $0x80] sm:$0xf]
      %v3365 = vld [vmem:[%s435 + $0x84] sm:$0xf]
      %v3366 = vld [vmem:[%s435 + $0x88] sm:$0xf]
      %v3367 = vld [vmem:[%s435 + $0x8c] sm:$0xf]
      %v3368 = vld [vmem:[%s435 + $0x90] sm:$0xf]
      %v3369 = vld [vmem:[%s435 + $0x94] sm:$0xf]
      %v3370 = vld [vmem:[%s435 + $0x98] sm:$0xf]
      %v3371 = vld [vmem:[%s435 + $0x9c] sm:$0xf]
      %v3372 = vld [vmem:[%s435 + $0xa0] sm:$0xf]
      %v3373 = vld [vmem:[%s435 + $0xa4] sm:$0xf]
      %v3374 = vld [vmem:[%s435 + $0xa8] sm:$0xf]
      %v3375 = vld [vmem:[%s435 + $0xac] sm:$0xf]
      %v3376 = vld [vmem:[%s435 + $0xb0] sm:$0xf]
      %v3377 = vld [vmem:[%s435 + $0xb4] sm:$0xf]
      %v3378 = vld [vmem:[%s435 + $0xb8] sm:$0xf]
      %v3379 = vld [vmem:[%s435 + $0xbc] sm:$0xf]
      %v3380 = vld [vmem:[%s435 + $0xc0] sm:$0xf]
      %v3381 = vld [vmem:[%s435 + $0xc4] sm:$0xf]
      %v3382 = vld [vmem:[%s435 + $0xc8] sm:$0xf]
      %v3383 = vld [vmem:[%s435 + $0xcc] sm:$0xf]
      %v3384 = vld [vmem:[%s435 + $0xd0] sm:$0xf]
      %v3385 = vld [vmem:[%s435 + $0xd4] sm:$0xf]
      %v3386 = vld [vmem:[%s435 + $0xd8] sm:$0xf]
      %v3387 = vld [vmem:[%s435 + $0xdc] sm:$0xf]
      %v3388 = vld [vmem:[%s435 + $0xe0] sm:$0xf]
      %v3389 = vld [vmem:[%s435 + $0xe4] sm:$0xf]
      %v3390 = vld [vmem:[%s435 + $0xe8] sm:$0xf]
      %v3391 = vld [vmem:[%s435 + $0xec] sm:$0xf]
      %v3392 = vld [vmem:[%s435 + $0xf0] sm:$0xf]
      %v3393 = vld [vmem:[%s435 + $0xf4] sm:$0xf]
      %s3394 = scalar_lea.vmem %s1, 288
      %v3395 = vld [vmem:[%s3394] sm:$0xff]
      %v3396 = vld [vmem:[%s3394 + $0x8] sm:$0xff]
      %v3397 = vld [vmem:[%s3394 + $0x10] sm:$0xff]
      %v3398 = vld [vmem:[%s3394 + $0x18] sm:$0xff]
      %v3399 = vld [vmem:[%s3394 + $0x20] sm:$0xff]
      %v3400 = vld [vmem:[%s3394 + $0x28] sm:$0xff]
      %v3401 = vld [vmem:[%s3394 + $0x30] sm:$0xff]
      %v3402 = vld [vmem:[%s3394 + $0x38] sm:$0xff]
      %v3403 = vld [vmem:[%s3394 + $0x40] sm:$0xff]
      %v3404 = vld [vmem:[%s3394 + $0x48] sm:$0xff]
      %v3405 = vld [vmem:[%s3394 + $0x50] sm:$0xff]
      %v3406 = vld [vmem:[%s3394 + $0x58] sm:$0xff]
      %v3463 = vunpack.c.l.b16 %v3338
      %v3464 = vunpack.c.l.b16 %v3339
      %v3465 = vunpack.c.l.b16 %v3340
      %v3466 = vunpack.c.l.b16 %v3341
      %v3467 = vunpack.c.l.b16 %v3342
      %v3468 = vunpack.c.l.b16 %v3343
      %v3469 = vunpack.c.l.b16 %v3344
      %v3470 = vunpack.c.l.b16 %v3345
      %v3471 = vunpack.c.l.b16 %v3346
      %v3472 = vunpack.c.l.b16 %v3347
      %v3473 = vunpack.c.l.b16 %v3348
      %v3474 = vunpack.c.l.b16 %v3349
      %v3475 = vunpack.c.l.b16 %v3350
      %v3476 = vunpack.c.l.b16 %v3351
      %v3477 = vunpack.c.l.b16 %v3352
      %v3478 = vunpack.c.l.b16 %v3353
      %v3479 = vunpack.c.l.b16 %v3354
      %v3480 = vunpack.c.l.b16 %v3355
      %v3481 = vunpack.c.l.b16 %v3356
      %v3482 = vunpack.c.l.b16 %v3357
      %v3483 = vunpack.c.l.b16 %v3358
      %v3484 = vunpack.c.l.b16 %v3359
      %v3485 = vunpack.c.l.b16 %v3360
      %v3486 = vunpack.c.l.b16 %v3361
      %v3487 = vunpack.c.l.b16 %v3362
      %v3488 = vunpack.c.l.b16 %v3363
      %v3489 = vunpack.c.l.b16 %v3364
      %v3490 = vunpack.c.l.b16 %v3365
      %v3491 = vunpack.c.l.b16 %v3366
      %v3492 = vunpack.c.l.b16 %v3367
      %v3493 = vunpack.c.l.b16 %v3368
      %v3494 = vunpack.c.l.b16 %v3369
      %v3495 = vunpack.c.l.b16 %v3370
      %v3496 = vunpack.c.l.b16 %v3371
      %v3497 = vunpack.c.l.b16 %v3372
      %v3498 = vunpack.c.l.b16 %v3373
      %v3499 = vunpack.c.l.b16 %v3374
      %v3500 = vunpack.c.l.b16 %v3375
      %v3501 = vunpack.c.l.b16 %v3376
      %v3502 = vunpack.c.l.b16 %v3377
      %v3503 = vunpack.c.l.b16 %v3378
      %v3504 = vunpack.c.l.b16 %v3379
      %v3505 = vunpack.c.l.b16 %v3380
      %v3506 = vunpack.c.l.b16 %v3381
      %v3507 = vunpack.c.l.b16 %v3382
      %v3508 = vunpack.c.l.b16 %v3383
      %v3509 = vunpack.c.l.b16 %v3384
      %v3510 = vunpack.c.l.b16 %v3385
      %v3511 = vunpack.c.l.b16 %v3386
      %v3512 = vunpack.c.l.b16 %v3387
      %v3513 = vunpack.c.l.b16 %v3388
      %v3514 = vunpack.c.l.b16 %v3389
      %v3515 = vunpack.c.l.b16 %v3390
      %v3516 = vunpack.c.l.b16 %v3391
      %v3517 = vunpack.c.l.b16 %v3392
      %v3518 = vunpack.c.l.b16 %v3393
      %v3519 = vpack.c.b16 %v3464, %v3463
      %v3520 = vpack.c.b16 %v3466, %v3465
      %v3521 = vpack.c.b16 %v3468, %v3467
      %v3522 = vpack.c.b16 %v3470, %v3469
      %v3523 = vpack.c.b16 %v3472, %v3471
      %v3524 = vpack.c.b16 %v3474, %v3473
      %v3525 = vpack.c.b16 %v3476, %v3475
      %v3526 = vpack.c.b16 %v3478, %v3477
      %v3527 = vpack.c.b16 %v3480, %v3479
      %v3528 = vpack.c.b16 %v3482, %v3481
      %v3529 = vpack.c.b16 %v3484, %v3483
      %v3530 = vpack.c.b16 %v3486, %v3485
      %v3531 = vpack.c.b16 %v3488, %v3487
      %v3532 = vpack.c.b16 %v3490, %v3489
      %v3533 = vpack.c.b16 %v3492, %v3491
      %v3534 = vpack.c.b16 %v3494, %v3493
      %v3535 = vpack.c.b16 %v3496, %v3495
      %v3536 = vpack.c.b16 %v3498, %v3497
      %v3537 = vpack.c.b16 %v3500, %v3499
      %v3538 = vpack.c.b16 %v3502, %v3501
      %v3539 = vpack.c.b16 %v3504, %v3503
      %v3540 = vpack.c.b16 %v3506, %v3505
      %v3541 = vpack.c.b16 %v3508, %v3507
      %v3542 = vpack.c.b16 %v3510, %v3509
      %v3543 = vpack.c.b16 %v3512, %v3511
      %v3544 = vpack.c.b16 %v3514, %v3513
      %v3545 = vpack.c.b16 %v3516, %v3515
      %v3546 = vpack.c.b16 %v3518, %v3517
      %v3559 = vunpack.c.l.b16 %v3395
      %v3560 = vunpack.c.h.b16 %v3395
      %v3561 = vunpack.c.l.b16 %v3396
      %v3562 = vunpack.c.h.b16 %v3396
      %v3563 = vunpack.c.l.b16 %v3397
      %v3564 = vunpack.c.h.b16 %v3397
      %v3565 = vunpack.c.l.b16 %v3398
      %v3566 = vunpack.c.h.b16 %v3398
      %v3567 = vunpack.c.l.b16 %v3399
      %v3568 = vunpack.c.h.b16 %v3399
      %v3569 = vunpack.c.l.b16 %v3400
      %v3570 = vunpack.c.h.b16 %v3400
      %v3571 = vunpack.c.l.b16 %v3401
      %v3572 = vunpack.c.h.b16 %v3401
      %v3573 = vunpack.c.l.b16 %v3402
      %v3574 = vunpack.c.h.b16 %v3402
      %v3575 = vunpack.c.l.b16 %v3403
      %v3576 = vunpack.c.h.b16 %v3403
      %v3577 = vunpack.c.l.b16 %v3404
      %v3578 = vunpack.c.h.b16 %v3404
      %v3579 = vunpack.c.l.b16 %v3405
      %v3580 = vunpack.c.h.b16 %v3405
      %v3581 = vunpack.c.l.b16 %v3406
      %v3582 = vunpack.c.h.b16 %v3406
      %v3583 = vpack.c.b16 %v3561, %v3559
      %v3584 = vpack.c.b16 %v3562, %v3560
      %v3585 = vpack.c.b16 %v3565, %v3563
      %v3586 = vpack.c.b16 %v3566, %v3564
      %v3587 = vpack.c.b16 %v3569, %v3567
      %v3588 = vpack.c.b16 %v3570, %v3568
      %v3589 = vpack.c.b16 %v3573, %v3571
      %v3590 = vpack.c.b16 %v3574, %v3572
      %v3591 = vpack.c.b16 %v3577, %v3575
      %v3592 = vpack.c.b16 %v3578, %v3576
      %v3593 = vpack.c.b16 %v3581, %v3579
      %v3594 = vpack.c.b16 %v3582, %v3580
      %v3608 = vsel %vm711, %v3519, 0
      %v3611 = vsel %vm711, %v3520, 0
      %v3614 = vsel %vm711, %v3521, 0
      %v3617 = vsel %vm711, %v3522, 0
      %v3620 = vsel %vm711, %v3523, 0
      %v3623 = vsel %vm711, %v3524, 0
      %v3626 = vsel %vm711, %v3525, 0
      %v3629 = vsel %vm711, %v3526, 0
      %v3632 = vsel %vm711, %v3527, 0
      %v3635 = vsel %vm711, %v3528, 0
      %v3638 = vsel %vm711, %v3529, 0
      %v3641 = vsel %vm711, %v3530, 0
      %v3644 = vsel %vm711, %v3531, 0
      %v3647 = vsel %vm711, %v3532, 0
      %v3650 = vsel %vm711, %v3533, 0
      %v3653 = vsel %vm711, %v3534, 0
      %v3656 = vsel %vm711, %v3535, 0
      %v3659 = vsel %vm711, %v3536, 0
      %v3662 = vsel %vm711, %v3537, 0
      %v3665 = vsel %vm711, %v3538, 0
      %v3668 = vsel %vm711, %v3539, 0
      %v3671 = vsel %vm711, %v3540, 0
      %v3674 = vsel %vm711, %v3541, 0
      %v3677 = vsel %vm711, %v3542, 0
      %v3680 = vsel %vm711, %v3543, 0
      %v3683 = vsel %vm711, %v3544, 0
      %v3686 = vsel %vm711, %v3545, 0
      %v3689 = vsel %vm711, %v3546, 0
      %3691 = vmatprep.subr.bf16.mxu0 %v3584
      %3692 = vmatpush1.bf16.msra.mxu0 %v3583
      %3693 = vmatprep.subr.bf16.mxu0 %v3586
      %3694 = vmatpush1.bf16.msra.mxu0 %v3585
      %3695 = vmatprep.subr.bf16.mxu0 %v3588
      %3696 = vmatpush1.bf16.msra.mxu0 %v3587
      %3697 = vmatprep.subr.bf16.mxu0 %v3590
      %3698 = vmatpush1.bf16.msra.mxu0 %v3589
      %3699 = vmatprep.subr.bf16.mxu0 %v3592
      %3700 = vmatpush1.bf16.msra.mxu0 %v3591
      %3701 = vmatprep.subr.bf16.mxu0 %v3594
      %3702 = vmatpush1.bf16.msra.mxu0 %v3593
      %3703 = vmatprep.subr.bf16.mxu0 0
      %3704 = vmatpush1.bf16.msra.mxu0 0
      %3705 = vmatprep.subr.bf16.mxu0 0
      %3706 = vmatpush1.bf16.msra.mxu0 0
      %3707 = vmatprep.subr.bf16.mxu0 0
      %3708 = vmatpush1.bf16.msra.mxu0 0
      %3709 = vmatprep.subr.bf16.mxu0 0
      %3710 = vmatpush1.bf16.msra.mxu0 0
      %3711 = vmatprep.subr.bf16.mxu0 0
      %3712 = vmatpush1.bf16.msra.mxu0 0
      %3713 = vmatprep.subr.bf16.mxu0 0
      %3714 = vmatpush1.bf16.msra.mxu0 0
      %3715 = vmatprep.subr.bf16.mxu0 0
      %3716 = vmatpush1.bf16.msra.mxu0 0
      %3717 = vmatprep.subr.bf16.mxu0 0
      %3718 = vmatpush1.bf16.msra.mxu0 0
      %3719 = vmatprep.subr.bf16.mxu0 0
      %3720 = vmatpush1.bf16.msra.mxu0 0
      %3721 = vmatprep.subr.bf16.mxu0 0
      %3722 = vmatpush1.bf16.msra.mxu0 0
      %3723 = vmatprep.mubr.bf16.mxu0 0
      %3724 = vmatmul.mubr.bf16.gmra.mrb[0].mxu0 %v3608
      %v3725 = vpop.f32.mrb[0].mxu0
      %v3726 = vadd.f32 0.0, %v3725
      %v3727 = vpop.f32.mrb[0].mxu0
      %v3728 = vadd.f32 0.0, %v3727
      %v3729 = vpop.f32.mrb[0].mxu0
      %v3730 = vadd.f32 0.0, %v3729
      %v3731 = vpop.f32.mrb[0].mxu0
      %v3732 = vadd.f32 0.0, %v3731
      %3733 = vmatprep.mubr.bf16.mxu0 0
      %3734 = vmatmul.mubr.bf16.gmra.mrb[0].mxu0 %v3611
      %v3735 = vpop.f32.mrb[0].mxu0
      %v3736 = vadd.f32 0.0, %v3735
      %v3737 = vpop.f32.mrb[0].mxu0
      %v3738 = vadd.f32 0.0, %v3737
      %v3739 = vpop.f32.mrb[0].mxu0
      %v3740 = vadd.f32 0.0, %v3739
      %v3741 = vpop.f32.mrb[0].mxu0
      %v3742 = vadd.f32 0.0, %v3741
      %3743 = vmatprep.mubr.bf16.mxu0 0
      %3744 = vmatmul.mubr.bf16.gmra.mrb[0].mxu0 %v3614
      %v3745 = vpop.f32.mrb[0].mxu0
      %v3746 = vadd.f32 0.0, %v3745
      %v3747 = vpop.f32.mrb[0].mxu0
      %v3748 = vadd.f32 0.0, %v3747
      %v3749 = vpop.f32.mrb[0].mxu0
      %v3750 = vadd.f32 0.0, %v3749
      %v3751 = vpop.f32.mrb[0].mxu0
      %v3752 = vadd.f32 0.0, %v3751
      %3753 = vmatprep.mubr.bf16.mxu0 0
      %3754 = vmatmul.mubr.bf16.gmra.mrb[0].mxu0 %v3617
      %v3755 = vpop.f32.mrb[0].mxu0
      %v3756 = vadd.f32 0.0, %v3755
      %v3757 = vpop.f32.mrb[0].mxu0
      %v3758 = vadd.f32 0.0, %v3757
      %v3759 = vpop.f32.mrb[0].mxu0
      %v3760 = vadd.f32 0.0, %v3759
      %v3761 = vpop.f32.mrb[0].mxu0
      %v3762 = vadd.f32 0.0, %v3761
      %3763 = vmatprep.mubr.bf16.mxu0 0
      %3764 = vmatmul.mubr.bf16.gmra.mrb[0].mxu0 %v3620
      %v3765 = vpop.f32.mrb[0].mxu0
      %v3766 = vadd.f32 0.0, %v3765
      %v3767 = vpop.f32.mrb[0].mxu0
      %v3768 = vadd.f32 0.0, %v3767
      %v3769 = vpop.f32.mrb[0].mxu0
      %v3770 = vadd.f32 0.0, %v3769
      %v3771 = vpop.f32.mrb[0].mxu0
      %v3772 = vadd.f32 0.0, %v3771
      %3773 = vmatprep.mubr.bf16.mxu0 0
      %3774 = vmatmul.mubr.bf16.gmra.mrb[0].mxu0 %v3623
      %v3775 = vpop.f32.mrb[0].mxu0
      %v3776 = vadd.f32 0.0, %v3775
      %v3777 = vpop.f32.mrb[0].mxu0
      %v3778 = vadd.f32 0.0, %v3777
      %v3779 = vpop.f32.mrb[0].mxu0
      %v3780 = vadd.f32 0.0, %v3779
      %v3781 = vpop.f32.mrb[0].mxu0
      %v3782 = vadd.f32 0.0, %v3781
      %3783 = vmatprep.mubr.bf16.mxu0 0
      %3784 = vmatmul.mubr.bf16.gmra.mrb[0].mxu0 %v3626
      %v3785 = vpop.f32.mrb[0].mxu0
      %v3786 = vadd.f32 0.0, %v3785
      %v3787 = vpop.f32.mrb[0].mxu0
      %v3788 = vadd.f32 0.0, %v3787
      %v3789 = vpop.f32.mrb[0].mxu0
      %v3790 = vadd.f32 0.0, %v3789
      %v3791 = vpop.f32.mrb[0].mxu0
      %v3792 = vadd.f32 0.0, %v3791
      %3793 = vmatprep.mubr.bf16.mxu0 0
      %3794 = vmatmul.mubr.bf16.gmra.mrb[0].mxu0 %v3629
      %v3795 = vpop.f32.mrb[0].mxu0
      %v3796 = vadd.f32 0.0, %v3795
      %v3797 = vpop.f32.mrb[0].mxu0
      %v3798 = vadd.f32 0.0, %v3797
      %v3799 = vpop.f32.mrb[0].mxu0
      %v3800 = vadd.f32 0.0, %v3799
      %v3801 = vpop.f32.mrb[0].mxu0
      %v3802 = vadd.f32 0.0, %v3801
      %3803 = vmatprep.mubr.bf16.mxu0 0
      %3804 = vmatmul.mubr.bf16.gmra.mrb[0].mxu0 %v3632
      %v3805 = vpop.f32.mrb[0].mxu0
      %v3806 = vadd.f32 0.0, %v3805
      %v3807 = vpop.f32.mrb[0].mxu0
      %v3808 = vadd.f32 0.0, %v3807
      %v3809 = vpop.f32.mrb[0].mxu0
      %v3810 = vadd.f32 0.0, %v3809
      %v3811 = vpop.f32.mrb[0].mxu0
      %v3812 = vadd.f32 0.0, %v3811
      %3813 = vmatprep.mubr.bf16.mxu0 0
      %3814 = vmatmul.mubr.bf16.gmra.mrb[0].mxu0 %v3635
      %v3815 = vpop.f32.mrb[0].mxu0
      %v3816 = vadd.f32 0.0, %v3815
      %v3817 = vpop.f32.mrb[0].mxu0
      %v3818 = vadd.f32 0.0, %v3817
      %v3819 = vpop.f32.mrb[0].mxu0
      %v3820 = vadd.f32 0.0, %v3819
      %v3821 = vpop.f32.mrb[0].mxu0
      %v3822 = vadd.f32 0.0, %v3821
      %3823 = vmatprep.mubr.bf16.mxu0 0
      %3824 = vmatmul.mubr.bf16.gmra.mrb[0].mxu0 %v3638
      %v3825 = vpop.f32.mrb[0].mxu0
      %v3826 = vadd.f32 0.0, %v3825
      %v3827 = vpop.f32.mrb[0].mxu0
      %v3828 = vadd.f32 0.0, %v3827
      %v3829 = vpop.f32.mrb[0].mxu0
      %v3830 = vadd.f32 0.0, %v3829
      %v3831 = vpop.f32.mrb[0].mxu0
      %v3832 = vadd.f32 0.0, %v3831
      %3833 = vmatprep.mubr.bf16.mxu0 0
      %3834 = vmatmul.mubr.bf16.gmra.mrb[0].mxu0 %v3641
      %v3835 = vpop.f32.mrb[0].mxu0
      %v3836 = vadd.f32 0.0, %v3835
      %v3837 = vpop.f32.mrb[0].mxu0
      %v3838 = vadd.f32 0.0, %v3837
      %v3839 = vpop.f32.mrb[0].mxu0
      %v3840 = vadd.f32 0.0, %v3839
      %v3841 = vpop.f32.mrb[0].mxu0
      %v3842 = vadd.f32 0.0, %v3841
      %3843 = vmatprep.mubr.bf16.mxu0 0
      %3844 = vmatmul.mubr.bf16.gmra.mrb[0].mxu0 %v3644
      %v3845 = vpop.f32.mrb[0].mxu0
      %v3846 = vadd.f32 0.0, %v3845
      %v3847 = vpop.f32.mrb[0].mxu0
      %v3848 = vadd.f32 0.0, %v3847
      %v3849 = vpop.f32.mrb[0].mxu0
      %v3850 = vadd.f32 0.0, %v3849
      %v3851 = vpop.f32.mrb[0].mxu0
      %v3852 = vadd.f32 0.0, %v3851
      %3853 = vmatprep.mubr.bf16.mxu0 0
      %3854 = vmatmul.mubr.bf16.gmra.mrb[0].mxu0 %v3647
      %v3855 = vpop.f32.mrb[0].mxu0
      %v3856 = vadd.f32 0.0, %v3855
      %v3857 = vpop.f32.mrb[0].mxu0
      %v3858 = vadd.f32 0.0, %v3857
      %v3859 = vpop.f32.mrb[0].mxu0
      %v3860 = vadd.f32 0.0, %v3859
      %v3861 = vpop.f32.mrb[0].mxu0
      %v3862 = vadd.f32 0.0, %v3861
      %3863 = vmatprep.mubr.bf16.mxu0 0
      %3864 = vmatmul.mubr.bf16.gmra.mrb[0].mxu0 %v3650
      %v3865 = vpop.f32.mrb[0].mxu0
      %v3866 = vadd.f32 0.0, %v3865
      %v3867 = vpop.f32.mrb[0].mxu0
      %v3868 = vadd.f32 0.0, %v3867
      %v3869 = vpop.f32.mrb[0].mxu0
      %v3870 = vadd.f32 0.0, %v3869
      %v3871 = vpop.f32.mrb[0].mxu0
      %v3872 = vadd.f32 0.0, %v3871
      %3873 = vmatprep.mubr.bf16.mxu0 0
      %3874 = vmatmul.mubr.bf16.gmra.mrb[0].mxu0 %v3653
      %v3875 = vpop.f32.mrb[0].mxu0
      %v3876 = vadd.f32 0.0, %v3875
      %v3877 = vpop.f32.mrb[0].mxu0
      %v3878 = vadd.f32 0.0, %v3877
      %v3879 = vpop.f32.mrb[0].mxu0
      %v3880 = vadd.f32 0.0, %v3879
      %v3881 = vpop.f32.mrb[0].mxu0
      %v3882 = vadd.f32 0.0, %v3881
      %3883 = vmatprep.mubr.bf16.mxu0 0
      %3884 = vmatmul.mubr.bf16.gmra.mrb[0].mxu0 %v3656
      %v3885 = vpop.f32.mrb[0].mxu0
      %v3886 = vadd.f32 0.0, %v3885
      %v3887 = vpop.f32.mrb[0].mxu0
      %v3888 = vadd.f32 0.0, %v3887
      %v3889 = vpop.f32.mrb[0].mxu0
      %v3890 = vadd.f32 0.0, %v3889
      %v3891 = vpop.f32.mrb[0].mxu0
      %v3892 = vadd.f32 0.0, %v3891
      %3893 = vmatprep.mubr.bf16.mxu0 0
      %3894 = vmatmul.mubr.bf16.gmra.mrb[0].mxu0 %v3659
      %v3895 = vpop.f32.mrb[0].mxu0
      %v3896 = vadd.f32 0.0, %v3895
      %v3897 = vpop.f32.mrb[0].mxu0
      %v3898 = vadd.f32 0.0, %v3897
      %v3899 = vpop.f32.mrb[0].mxu0
      %v3900 = vadd.f32 0.0, %v3899
      %v3901 = vpop.f32.mrb[0].mxu0
      %v3902 = vadd.f32 0.0, %v3901
      %3903 = vmatprep.mubr.bf16.mxu0 0
      %3904 = vmatmul.mubr.bf16.gmra.mrb[0].mxu0 %v3662
      %v3905 = vpop.f32.mrb[0].mxu0
      %v3906 = vadd.f32 0.0, %v3905
      %v3907 = vpop.f32.mrb[0].mxu0
      %v3908 = vadd.f32 0.0, %v3907
      %v3909 = vpop.f32.mrb[0].mxu0
      %v3910 = vadd.f32 0.0, %v3909
      %v3911 = vpop.f32.mrb[0].mxu0
      %v3912 = vadd.f32 0.0, %v3911
      %3913 = vmatprep.mubr.bf16.mxu0 0
      %3914 = vmatmul.mubr.bf16.gmra.mrb[0].mxu0 %v3665
      %v3915 = vpop.f32.mrb[0].mxu0
      %v3916 = vadd.f32 0.0, %v3915
      %v3917 = vpop.f32.mrb[0].mxu0
      %v3918 = vadd.f32 0.0, %v3917
      %v3919 = vpop.f32.mrb[0].mxu0
      %v3920 = vadd.f32 0.0, %v3919
      %v3921 = vpop.f32.mrb[0].mxu0
      %v3922 = vadd.f32 0.0, %v3921
      %3923 = vmatprep.mubr.bf16.mxu0 0
      %3924 = vmatmul.mubr.bf16.gmra.mrb[0].mxu0 %v3668
      %v3925 = vpop.f32.mrb[0].mxu0
      %v3926 = vadd.f32 0.0, %v3925
      %v3927 = vpop.f32.mrb[0].mxu0
      %v3928 = vadd.f32 0.0, %v3927
      %v3929 = vpop.f32.mrb[0].mxu0
      %v3930 = vadd.f32 0.0, %v3929
      %v3931 = vpop.f32.mrb[0].mxu0
      %v3932 = vadd.f32 0.0, %v3931
      %3933 = vmatprep.mubr.bf16.mxu0 0
      %3934 = vmatmul.mubr.bf16.gmra.mrb[0].mxu0 %v3671
      %v3935 = vpop.f32.mrb[0].mxu0
      %v3936 = vadd.f32 0.0, %v3935
      %v3937 = vpop.f32.mrb[0].mxu0
      %v3938 = vadd.f32 0.0, %v3937
      %v3939 = vpop.f32.mrb[0].mxu0
      %v3940 = vadd.f32 0.0, %v3939
      %v3941 = vpop.f32.mrb[0].mxu0
      %v3942 = vadd.f32 0.0, %v3941
      %3943 = vmatprep.mubr.bf16.mxu0 0
      %3944 = vmatmul.mubr.bf16.gmra.mrb[0].mxu0 %v3674
      %v3945 = vpop.f32.mrb[0].mxu0
      %v3946 = vadd.f32 0.0, %v3945
      %v3947 = vpop.f32.mrb[0].mxu0
      %v3948 = vadd.f32 0.0, %v3947
      %v3949 = vpop.f32.mrb[0].mxu0
      %v3950 = vadd.f32 0.0, %v3949
      %v3951 = vpop.f32.mrb[0].mxu0
      %v3952 = vadd.f32 0.0, %v3951
      %3953 = vmatprep.mubr.bf16.mxu0 0
      %3954 = vmatmul.mubr.bf16.gmra.mrb[0].mxu0 %v3677
      %v3955 = vpop.f32.mrb[0].mxu0
      %v3956 = vadd.f32 0.0, %v3955
      %v3957 = vpop.f32.mrb[0].mxu0
      %v3958 = vadd.f32 0.0, %v3957
      %v3959 = vpop.f32.mrb[0].mxu0
      %v3960 = vadd.f32 0.0, %v3959
      %v3961 = vpop.f32.mrb[0].mxu0
      %v3962 = vadd.f32 0.0, %v3961
      %3963 = vmatprep.mubr.bf16.mxu0 0
      %3964 = vmatmul.mubr.bf16.gmra.mrb[0].mxu0 %v3680
      %v3965 = vpop.f32.mrb[0].mxu0
      %v3966 = vadd.f32 0.0, %v3965
      %v3967 = vpop.f32.mrb[0].mxu0
      %v3968 = vadd.f32 0.0, %v3967
      %v3969 = vpop.f32.mrb[0].mxu0
      %v3970 = vadd.f32 0.0, %v3969
      %v3971 = vpop.f32.mrb[0].mxu0
      %v3972 = vadd.f32 0.0, %v3971
      %3973 = vmatprep.mubr.bf16.mxu0 0
      %3974 = vmatmul.mubr.bf16.gmra.mrb[0].mxu0 %v3683
      %v3975 = vpop.f32.mrb[0].mxu0
      %v3976 = vadd.f32 0.0, %v3975
      %v3977 = vpop.f32.mrb[0].mxu0
      %v3978 = vadd.f32 0.0, %v3977
      %v3979 = vpop.f32.mrb[0].mxu0
      %v3980 = vadd.f32 0.0, %v3979
      %v3981 = vpop.f32.mrb[0].mxu0
      %v3982 = vadd.f32 0.0, %v3981
      %3983 = vmatprep.mubr.bf16.mxu0 0
      %3984 = vmatmul.mubr.bf16.gmra.mrb[0].mxu0 %v3686
      %v3985 = vpop.f32.mrb[0].mxu0
      %v3986 = vadd.f32 0.0, %v3985
      %v3987 = vpop.f32.mrb[0].mxu0
      %v3988 = vadd.f32 0.0, %v3987
      %v3989 = vpop.f32.mrb[0].mxu0
      %v3990 = vadd.f32 0.0, %v3989
      %v3991 = vpop.f32.mrb[0].mxu0
      %v3992 = vadd.f32 0.0, %v3991
      %3993 = vmatprep.mubr.bf16.mxu0 0
      %3994 = vmatmul.mubr.bf16.gmra.mrb[0].mxu0 %v3689
      %v3995 = vpop.f32.mrb[0].mxu0
      %v3996 = vadd.f32 0.0, %v3995
      %v3997 = vpop.f32.mrb[0].mxu0
      %v3998 = vadd.f32 0.0, %v3997
      %v3999 = vpop.f32.mrb[0].mxu0
      %v4000 = vadd.f32 0.0, %v3999
      %v4001 = vpop.f32.mrb[0].mxu0
      %v4002 = vadd.f32 0.0, %v4001
      %4003 = vdwg.mxu0
      %v4004 = vadd.f32 %v3226, %v3726
      %v4005 = vadd.f32 %v3227, %v3728
      %v4006 = vadd.f32 %v3228, %v3730
      %v4007 = vadd.f32 %v3229, %v3732
      %v4008 = vadd.f32 %v3230, %v3736
      %v4009 = vadd.f32 %v3231, %v3738
      %v4010 = vadd.f32 %v3232, %v3740
      %v4011 = vadd.f32 %v3233, %v3742
      %v4012 = vadd.f32 %v3234, %v3746
      %v4013 = vadd.f32 %v3235, %v3748
      %v4014 = vadd.f32 %v3236, %v3750
      %v4015 = vadd.f32 %v3237, %v3752
      %v4016 = vadd.f32 %v3238, %v3756
      %v4017 = vadd.f32 %v3239, %v3758
      %v4018 = vadd.f32 %v3240, %v3760
      %v4019 = vadd.f32 %v3241, %v3762
      %v4020 = vadd.f32 %v3242, %v3766
      %v4021 = vadd.f32 %v3243, %v3768
      %v4022 = vadd.f32 %v3244, %v3770
      %v4023 = vadd.f32 %v3245, %v3772
      %v4024 = vadd.f32 %v3246, %v3776
      %v4025 = vadd.f32 %v3247, %v3778
      %v4026 = vadd.f32 %v3248, %v3780
      %v4027 = vadd.f32 %v3249, %v3782
      %v4028 = vadd.f32 %v3250, %v3786
      %v4029 = vadd.f32 %v3251, %v3788
      %v4030 = vadd.f32 %v3252, %v3790
      %v4031 = vadd.f32 %v3253, %v3792
      %v4032 = vadd.f32 %v3254, %v3796
      %v4033 = vadd.f32 %v3255, %v3798
      %v4034 = vadd.f32 %v3256, %v3800
      %v4035 = vadd.f32 %v3257, %v3802
      %v4036 = vadd.f32 %v3258, %v3806
      %v4037 = vadd.f32 %v3259, %v3808
      %v4038 = vadd.f32 %v3260, %v3810
      %v4039 = vadd.f32 %v3261, %v3812
      %v4040 = vadd.f32 %v3262, %v3816
      %v4041 = vadd.f32 %v3263, %v3818
      %v4042 = vadd.f32 %v3264, %v3820
      %v4043 = vadd.f32 %v3265, %v3822
      %v4044 = vadd.f32 %v3266, %v3826
      %v4045 = vadd.f32 %v3267, %v3828
      %v4046 = vadd.f32 %v3268, %v3830
      %v4047 = vadd.f32 %v3269, %v3832
      %v4048 = vadd.f32 %v3270, %v3836
      %v4049 = vadd.f32 %v3271, %v3838
      %v4050 = vadd.f32 %v3272, %v3840
      %v4051 = vadd.f32 %v3273, %v3842
      %v4052 = vadd.f32 %v3274, %v3846
      %v4053 = vadd.f32 %v3275, %v3848
      %v4054 = vadd.f32 %v3276, %v3850
      %v4055 = vadd.f32 %v3277, %v3852
      %v4056 = vadd.f32 %v3278, %v3856
      %v4057 = vadd.f32 %v3279, %v3858
      %v4058 = vadd.f32 %v3280, %v3860
      %v4059 = vadd.f32 %v3281, %v3862
      %v4060 = vadd.f32 %v3282, %v3866
      %v4061 = vadd.f32 %v3283, %v3868
      %v4062 = vadd.f32 %v3284, %v3870
      %v4063 = vadd.f32 %v3285, %v3872
      %v4064 = vadd.f32 %v3286, %v3876
      %v4065 = vadd.f32 %v3287, %v3878
      %v4066 = vadd.f32 %v3288, %v3880
      %v4067 = vadd.f32 %v3289, %v3882
      %v4068 = vadd.f32 %v3290, %v3886
      %v4069 = vadd.f32 %v3291, %v3888
      %v4070 = vadd.f32 %v3292, %v3890
      %v4071 = vadd.f32 %v3293, %v3892
      %v4072 = vadd.f32 %v3294, %v3896
      %v4073 = vadd.f32 %v3295, %v3898
      %v4074 = vadd.f32 %v3296, %v3900
      %v4075 = vadd.f32 %v3297, %v3902
      %v4076 = vadd.f32 %v3298, %v3906
      %v4077 = vadd.f32 %v3299, %v3908
      %v4078 = vadd.f32 %v3300, %v3910
      %v4079 = vadd.f32 %v3301, %v3912
      %v4080 = vadd.f32 %v3302, %v3916
      %v4081 = vadd.f32 %v3303, %v3918
      %v4082 = vadd.f32 %v3304, %v3920
      %v4083 = vadd.f32 %v3305, %v3922
      %v4084 = vadd.f32 %v3306, %v3926
      %v4085 = vadd.f32 %v3307, %v3928
      %v4086 = vadd.f32 %v3308, %v3930
      %v4087 = vadd.f32 %v3309, %v3932
      %v4088 = vadd.f32 %v3310, %v3936
      %v4089 = vadd.f32 %v3311, %v3938
      %v4090 = vadd.f32 %v3312, %v3940
      %v4091 = vadd.f32 %v3313, %v3942
      %v4092 = vadd.f32 %v3314, %v3946
      %v4093 = vadd.f32 %v3315, %v3948
      %v4094 = vadd.f32 %v3316, %v3950
      %v4095 = vadd.f32 %v3317, %v3952
      %v4096 = vadd.f32 %v3318, %v3956
      %v4097 = vadd.f32 %v3319, %v3958
      %v4098 = vadd.f32 %v3320, %v3960
      %v4099 = vadd.f32 %v3321, %v3962
      %v4100 = vadd.f32 %v3322, %v3966
      %v4101 = vadd.f32 %v3323, %v3968
      %v4102 = vadd.f32 %v3324, %v3970
      %v4103 = vadd.f32 %v3325, %v3972
      %v4104 = vadd.f32 %v3326, %v3976
      %v4105 = vadd.f32 %v3327, %v3978
      %v4106 = vadd.f32 %v3328, %v3980
      %v4107 = vadd.f32 %v3329, %v3982
      %v4108 = vadd.f32 %v3330, %v3986
      %v4109 = vadd.f32 %v3331, %v3988
      %v4110 = vadd.f32 %v3332, %v3990
      %v4111 = vadd.f32 %v3333, %v3992
      %v4112 = vadd.f32 %v3334, %v3996
      %v4113 = vadd.f32 %v3335, %v3998
      %v4114 = vadd.f32 %v3336, %v4000
      %v4115 = vadd.f32 %v3337, %v4002
      %4116 = vst [vmem:[#allocation2] sm:$0xff] %v4004
      %4117 = vst.msk [vmem:[#allocation2 + $0x8] sm:$0xff] %vm1110, %v4005
      %4118 = vst [vmem:[#allocation2 + $0x10] sm:$0xff] %v4006
      %4119 = vst.msk [vmem:[#allocation2 + $0x18] sm:$0xff] %vm1110, %v4007
      %4120 = vst [vmem:[#allocation2 + $0x20] sm:$0xff] %v4008
      %4121 = vst.msk [vmem:[#allocation2 + $0x28] sm:$0xff] %vm1110, %v4009
      %4122 = vst [vmem:[#allocation2 + $0x30] sm:$0xff] %v4010
      %4123 = vst.msk [vmem:[#allocation2 + $0x38] sm:$0xff] %vm1110, %v4011
      %4124 = vst [vmem:[#allocation2 + $0x40] sm:$0xff] %v4012
      %4125 = vst.msk [vmem:[#allocation2 + $0x48] sm:$0xff] %vm1110, %v4013
      %4126 = vst [vmem:[#allocation2 + $0x50] sm:$0xff] %v4014
      %4127 = vst.msk [vmem:[#allocation2 + $0x58] sm:$0xff] %vm1110, %v4015
      %4128 = vst [vmem:[#allocation2 + $0x60] sm:$0xff] %v4016
      %4129 = vst.msk [vmem:[#allocation2 + $0x68] sm:$0xff] %vm1110, %v4017
      %4130 = vst [vmem:[#allocation2 + $0x70] sm:$0xff] %v4018
      %4131 = vst.msk [vmem:[#allocation2 + $0x78] sm:$0xff] %vm1110, %v4019
      %4132 = vst [vmem:[#allocation2 + $0x80] sm:$0xff] %v4020
      %4133 = vst.msk [vmem:[#allocation2 + $0x88] sm:$0xff] %vm1110, %v4021
      %4134 = vst [vmem:[#allocation2 + $0x90] sm:$0xff] %v4022
      %4135 = vst.msk [vmem:[#allocation2 + $0x98] sm:$0xff] %vm1110, %v4023
      %4136 = vst [vmem:[#allocation2 + $0xa0] sm:$0xff] %v4024
      %4137 = vst.msk [vmem:[#allocation2 + $0xa8] sm:$0xff] %vm1110, %v4025
      %4138 = vst [vmem:[#allocation2 + $0xb0] sm:$0xff] %v4026
      %4139 = vst.msk [vmem:[#allocation2 + $0xb8] sm:$0xff] %vm1110, %v4027
      %4140 = vst [vmem:[#allocation2 + $0xc0] sm:$0xff] %v4028
      %4141 = vst.msk [vmem:[#allocation2 + $0xc8] sm:$0xff] %vm1110, %v4029
      %4142 = vst [vmem:[#allocation2 + $0xd0] sm:$0xff] %v4030
      %4143 = vst.msk [vmem:[#allocation2 + $0xd8] sm:$0xff] %vm1110, %v4031
      %4144 = vst [vmem:[#allocation2 + $0xe0] sm:$0xff] %v4032
      %4145 = vst.msk [vmem:[#allocation2 + $0xe8] sm:$0xff] %vm1110, %v4033
      %4146 = vst [vmem:[#allocation2 + $0xf0] sm:$0xff] %v4034
      %4147 = vst.msk [vmem:[#allocation2 + $0xf8] sm:$0xff] %vm1110, %v4035
      %4148 = vst [vmem:[#allocation2 + $0x100] sm:$0xff] %v4036
      %4149 = vst.msk [vmem:[#allocation2 + $0x108] sm:$0xff] %vm1110, %v4037
      %4150 = vst [vmem:[#allocation2 + $0x110] sm:$0xff] %v4038
      %4151 = vst.msk [vmem:[#allocation2 + $0x118] sm:$0xff] %vm1110, %v4039
      %4152 = vst [vmem:[#allocation2 + $0x120] sm:$0xff] %v4040
      %4153 = vst.msk [vmem:[#allocation2 + $0x128] sm:$0xff] %vm1110, %v4041
      %4154 = vst [vmem:[#allocation2 + $0x130] sm:$0xff] %v4042
      %4155 = vst.msk [vmem:[#allocation2 + $0x138] sm:$0xff] %vm1110, %v4043
      %4156 = vst [vmem:[#allocation2 + $0x140] sm:$0xff] %v4044
      %4157 = vst.msk [vmem:[#allocation2 + $0x148] sm:$0xff] %vm1110, %v4045
      %4158 = vst [vmem:[#allocation2 + $0x150] sm:$0xff] %v4046
      %4159 = vst.msk [vmem:[#allocation2 + $0x158] sm:$0xff] %vm1110, %v4047
      %4160 = vst [vmem:[#allocation2 + $0x160] sm:$0xff] %v4048
      %4161 = vst.msk [vmem:[#allocation2 + $0x168] sm:$0xff] %vm1110, %v4049
      %4162 = vst [vmem:[#allocation2 + $0x170] sm:$0xff] %v4050
      %4163 = vst.msk [vmem:[#allocation2 + $0x178] sm:$0xff] %vm1110, %v4051
      %4164 = vst [vmem:[#allocation2 + $0x180] sm:$0xff] %v4052
      %4165 = vst.msk [vmem:[#allocation2 + $0x188] sm:$0xff] %vm1110, %v4053
      %4166 = vst [vmem:[#allocation2 + $0x190] sm:$0xff] %v4054
      %4167 = vst.msk [vmem:[#allocation2 + $0x198] sm:$0xff] %vm1110, %v4055
      %4168 = vst [vmem:[#allocation2 + $0x1a0] sm:$0xff] %v4056
      %4169 = vst.msk [vmem:[#allocation2 + $0x1a8] sm:$0xff] %vm1110, %v4057
      %4170 = vst [vmem:[#allocation2 + $0x1b0] sm:$0xff] %v4058
      %4171 = vst.msk [vmem:[#allocation2 + $0x1b8] sm:$0xff] %vm1110, %v4059
      %4172 = vst [vmem:[#allocation2 + $0x1c0] sm:$0xff] %v4060
      %4173 = vst.msk [vmem:[#allocation2 + $0x1c8] sm:$0xff] %vm1110, %v4061
      %4174 = vst [vmem:[#allocation2 + $0x1d0] sm:$0xff] %v4062
      %4175 = vst.msk [vmem:[#allocation2 + $0x1d8] sm:$0xff] %vm1110, %v4063
      %4176 = vst [vmem:[#allocation2 + $0x1e0] sm:$0xff] %v4064
      %4177 = vst.msk [vmem:[#allocation2 + $0x1e8] sm:$0xff] %vm1110, %v4065
      %4178 = vst [vmem:[#allocation2 + $0x1f0] sm:$0xff] %v4066
      %4179 = vst.msk [vmem:[#allocation2 + $0x1f8] sm:$0xff] %vm1110, %v4067
      %4180 = vst [vmem:[#allocation2 + $0x200] sm:$0xff] %v4068
      %4181 = vst.msk [vmem:[#allocation2 + $0x208] sm:$0xff] %vm1110, %v4069
      %4182 = vst [vmem:[#allocation2 + $0x210] sm:$0xff] %v4070
      %4183 = vst.msk [vmem:[#allocation2 + $0x218] sm:$0xff] %vm1110, %v4071
      %4184 = vst [vmem:[#allocation2 + $0x220] sm:$0xff] %v4072
      %4185 = vst.msk [vmem:[#allocation2 + $0x228] sm:$0xff] %vm1110, %v4073
      %4186 = vst [vmem:[#allocation2 + $0x230] sm:$0xff] %v4074
      %4187 = vst.msk [vmem:[#allocation2 + $0x238] sm:$0xff] %vm1110, %v4075
      %4188 = vst [vmem:[#allocation2 + $0x240] sm:$0xff] %v4076
      %4189 = vst.msk [vmem:[#allocation2 + $0x248] sm:$0xff] %vm1110, %v4077
      %4190 = vst [vmem:[#allocation2 + $0x250] sm:$0xff] %v4078
      %4191 = vst.msk [vmem:[#allocation2 + $0x258] sm:$0xff] %vm1110, %v4079
      %4192 = vst [vmem:[#allocation2 + $0x260] sm:$0xff] %v4080
      %4193 = vst.msk [vmem:[#allocation2 + $0x268] sm:$0xff] %vm1110, %v4081
      %4194 = vst [vmem:[#allocation2 + $0x270] sm:$0xff] %v4082
      %4195 = vst.msk [vmem:[#allocation2 + $0x278] sm:$0xff] %vm1110, %v4083
      %4196 = vst [vmem:[#allocation2 + $0x280] sm:$0xff] %v4084
      %4197 = vst.msk [vmem:[#allocation2 + $0x288] sm:$0xff] %vm1110, %v4085
      %4198 = vst [vmem:[#allocation2 + $0x290] sm:$0xff] %v4086
      %4199 = vst.msk [vmem:[#allocation2 + $0x298] sm:$0xff] %vm1110, %v4087
      %4200 = vst [vmem:[#allocation2 + $0x2a0] sm:$0xff] %v4088
      %4201 = vst.msk [vmem:[#allocation2 + $0x2a8] sm:$0xff] %vm1110, %v4089
      %4202 = vst [vmem:[#allocation2 + $0x2b0] sm:$0xff] %v4090
      %4203 = vst.msk [vmem:[#allocation2 + $0x2b8] sm:$0xff] %vm1110, %v4091
      %4204 = vst [vmem:[#allocation2 + $0x2c0] sm:$0xff] %v4092
      %4205 = vst.msk [vmem:[#allocation2 + $0x2c8] sm:$0xff] %vm1110, %v4093
      %4206 = vst [vmem:[#allocation2 + $0x2d0] sm:$0xff] %v4094
      %4207 = vst.msk [vmem:[#allocation2 + $0x2d8] sm:$0xff] %vm1110, %v4095
      %4208 = vst [vmem:[#allocation2 + $0x2e0] sm:$0xff] %v4096
      %4209 = vst.msk [vmem:[#allocation2 + $0x2e8] sm:$0xff] %vm1110, %v4097
      %4210 = vst [vmem:[#allocation2 + $0x2f0] sm:$0xff] %v4098
      %4211 = vst.msk [vmem:[#allocation2 + $0x2f8] sm:$0xff] %vm1110, %v4099
      %4212 = vst [vmem:[#allocation2 + $0x300] sm:$0xff] %v4100
      %4213 = vst.msk [vmem:[#allocation2 + $0x308] sm:$0xff] %vm1110, %v4101
      %4214 = vst [vmem:[#allocation2 + $0x310] sm:$0xff] %v4102
      %4215 = vst.msk [vmem:[#allocation2 + $0x318] sm:$0xff] %vm1110, %v4103
      %4216 = vst [vmem:[#allocation2 + $0x320] sm:$0xff] %v4104
      %4217 = vst.msk [vmem:[#allocation2 + $0x328] sm:$0xff] %vm1110, %v4105
      %4218 = vst [vmem:[#allocation2 + $0x330] sm:$0xff] %v4106
      %4219 = vst.msk [vmem:[#allocation2 + $0x338] sm:$0xff] %vm1110, %v4107
      %4220 = vst [vmem:[#allocation2 + $0x340] sm:$0xff] %v4108
      %4221 = vst.msk [vmem:[#allocation2 + $0x348] sm:$0xff] %vm1110, %v4109
      %4222 = vst [vmem:[#allocation2 + $0x350] sm:$0xff] %v4110
      %4223 = vst.msk [vmem:[#allocation2 + $0x358] sm:$0xff] %vm1110, %v4111
      %4224 = vst [vmem:[#allocation2 + $0x360] sm:$0xff] %v4112
      %4225 = vst.msk [vmem:[#allocation2 + $0x368] sm:$0xff] %vm1110, %v4113
      %4226 = vst [vmem:[#allocation2 + $0x370] sm:$0xff] %v4114
      %4227 = vst.msk [vmem:[#allocation2 + $0x378] sm:$0xff] %vm1110, %v4115
      %v4228 = vld [vmem:[#allocation2] sm:$0xff]
      %v4229 = vld [vmem:[#allocation2 + $0x8] sm:$0xff]
      %v4230 = vld [vmem:[#allocation2 + $0x10] sm:$0xff]
      %v4231 = vld [vmem:[#allocation2 + $0x18] sm:$0xff]
      %v4232 = vld [vmem:[#allocation2 + $0x20] sm:$0xff]
      %v4233 = vld [vmem:[#allocation2 + $0x28] sm:$0xff]
      %v4234 = vld [vmem:[#allocation2 + $0x30] sm:$0xff]
      %v4235 = vld [vmem:[#allocation2 + $0x38] sm:$0xff]
      %v4236 = vld [vmem:[#allocation2 + $0x40] sm:$0xff]
      %v4237 = vld [vmem:[#allocation2 + $0x48] sm:$0xff]
      %v4238 = vld [vmem:[#allocation2 + $0x50] sm:$0xff]
      %v4239 = vld [vmem:[#allocation2 + $0x58] sm:$0xff]
      %v4240 = vld [vmem:[#allocation2 + $0x60] sm:$0xff]
      %v4241 = vld [vmem:[#allocation2 + $0x68] sm:$0xff]
      %v4242 = vld [vmem:[#allocation2 + $0x70] sm:$0xff]
      %v4243 = vld [vmem:[#allocation2 + $0x78] sm:$0xff]
      %v4244 = vld [vmem:[#allocation2 + $0x80] sm:$0xff]
      %v4245 = vld [vmem:[#allocation2 + $0x88] sm:$0xff]
      %v4246 = vld [vmem:[#allocation2 + $0x90] sm:$0xff]
      %v4247 = vld [vmem:[#allocation2 + $0x98] sm:$0xff]
      %v4248 = vld [vmem:[#allocation2 + $0xa0] sm:$0xff]
      %v4249 = vld [vmem:[#allocation2 + $0xa8] sm:$0xff]
      %v4250 = vld [vmem:[#allocation2 + $0xb0] sm:$0xff]
      %v4251 = vld [vmem:[#allocation2 + $0xb8] sm:$0xff]
      %v4252 = vld [vmem:[#allocation2 + $0xc0] sm:$0xff]
      %v4253 = vld [vmem:[#allocation2 + $0xc8] sm:$0xff]
      %v4254 = vld [vmem:[#allocation2 + $0xd0] sm:$0xff]
      %v4255 = vld [vmem:[#allocation2 + $0xd8] sm:$0xff]
      %v4256 = vld [vmem:[#allocation2 + $0xe0] sm:$0xff]
      %v4257 = vld [vmem:[#allocation2 + $0xe8] sm:$0xff]
      %v4258 = vld [vmem:[#allocation2 + $0xf0] sm:$0xff]
      %v4259 = vld [vmem:[#allocation2 + $0xf8] sm:$0xff]
      %v4260 = vld [vmem:[#allocation2 + $0x100] sm:$0xff]
      %v4261 = vld [vmem:[#allocation2 + $0x108] sm:$0xff]
      %v4262 = vld [vmem:[#allocation2 + $0x110] sm:$0xff]
      %v4263 = vld [vmem:[#allocation2 + $0x118] sm:$0xff]
      %v4264 = vld [vmem:[#allocation2 + $0x120] sm:$0xff]
      %v4265 = vld [vmem:[#allocation2 + $0x128] sm:$0xff]
      %v4266 = vld [vmem:[#allocation2 + $0x130] sm:$0xff]
      %v4267 = vld [vmem:[#allocation2 + $0x138] sm:$0xff]
      %v4268 = vld [vmem:[#allocation2 + $0x140] sm:$0xff]
      %v4269 = vld [vmem:[#allocation2 + $0x148] sm:$0xff]
      %v4270 = vld [vmem:[#allocation2 + $0x150] sm:$0xff]
      %v4271 = vld [vmem:[#allocation2 + $0x158] sm:$0xff]
      %v4272 = vld [vmem:[#allocation2 + $0x160] sm:$0xff]
      %v4273 = vld [vmem:[#allocation2 + $0x168] sm:$0xff]
      %v4274 = vld [vmem:[#allocation2 + $0x170] sm:$0xff]
      %v4275 = vld [vmem:[#allocation2 + $0x178] sm:$0xff]
      %v4276 = vld [vmem:[#allocation2 + $0x180] sm:$0xff]
      %v4277 = vld [vmem:[#allocation2 + $0x188] sm:$0xff]
      %v4278 = vld [vmem:[#allocation2 + $0x190] sm:$0xff]
      %v4279 = vld [vmem:[#allocation2 + $0x198] sm:$0xff]
      %v4280 = vld [vmem:[#allocation2 + $0x1a0] sm:$0xff]
      %v4281 = vld [vmem:[#allocation2 + $0x1a8] sm:$0xff]
      %v4282 = vld [vmem:[#allocation2 + $0x1b0] sm:$0xff]
      %v4283 = vld [vmem:[#allocation2 + $0x1b8] sm:$0xff]
      %v4284 = vld [vmem:[#allocation2 + $0x1c0] sm:$0xff]
      %v4285 = vld [vmem:[#allocation2 + $0x1c8] sm:$0xff]
      %v4286 = vld [vmem:[#allocation2 + $0x1d0] sm:$0xff]
      %v4287 = vld [vmem:[#allocation2 + $0x1d8] sm:$0xff]
      %v4288 = vld [vmem:[#allocation2 + $0x1e0] sm:$0xff]
      %v4289 = vld [vmem:[#allocation2 + $0x1e8] sm:$0xff]
      %v4290 = vld [vmem:[#allocation2 + $0x1f0] sm:$0xff]
      %v4291 = vld [vmem:[#allocation2 + $0x1f8] sm:$0xff]
      %v4292 = vld [vmem:[#allocation2 + $0x200] sm:$0xff]
      %v4293 = vld [vmem:[#allocation2 + $0x208] sm:$0xff]
      %v4294 = vld [vmem:[#allocation2 + $0x210] sm:$0xff]
      %v4295 = vld [vmem:[#allocation2 + $0x218] sm:$0xff]
      %v4296 = vld [vmem:[#allocation2 + $0x220] sm:$0xff]
      %v4297 = vld [vmem:[#allocation2 + $0x228] sm:$0xff]
      %v4298 = vld [vmem:[#allocation2 + $0x230] sm:$0xff]
      %v4299 = vld [vmem:[#allocation2 + $0x238] sm:$0xff]
      %v4300 = vld [vmem:[#allocation2 + $0x240] sm:$0xff]
      %v4301 = vld [vmem:[#allocation2 + $0x248] sm:$0xff]
      %v4302 = vld [vmem:[#allocation2 + $0x250] sm:$0xff]
      %v4303 = vld [vmem:[#allocation2 + $0x258] sm:$0xff]
      %v4304 = vld [vmem:[#allocation2 + $0x260] sm:$0xff]
      %v4305 = vld [vmem:[#allocation2 + $0x268] sm:$0xff]
      %v4306 = vld [vmem:[#allocation2 + $0x270] sm:$0xff]
      %v4307 = vld [vmem:[#allocation2 + $0x278] sm:$0xff]
      %v4308 = vld [vmem:[#allocation2 + $0x280] sm:$0xff]
      %v4309 = vld [vmem:[#allocation2 + $0x288] sm:$0xff]
      %v4310 = vld [vmem:[#allocation2 + $0x290] sm:$0xff]
      %v4311 = vld [vmem:[#allocation2 + $0x298] sm:$0xff]
      %v4312 = vld [vmem:[#allocation2 + $0x2a0] sm:$0xff]
      %v4313 = vld [vmem:[#allocation2 + $0x2a8] sm:$0xff]
      %v4314 = vld [vmem:[#allocation2 + $0x2b0] sm:$0xff]
      %v4315 = vld [vmem:[#allocation2 + $0x2b8] sm:$0xff]
      %v4316 = vld [vmem:[#allocation2 + $0x2c0] sm:$0xff]
      %v4317 = vld [vmem:[#allocation2 + $0x2c8] sm:$0xff]
      %v4318 = vld [vmem:[#allocation2 + $0x2d0] sm:$0xff]
      %v4319 = vld [vmem:[#allocation2 + $0x2d8] sm:$0xff]
      %v4320 = vld [vmem:[#allocation2 + $0x2e0] sm:$0xff]
      %v4321 = vld [vmem:[#allocation2 + $0x2e8] sm:$0xff]
      %v4322 = vld [vmem:[#allocation2 + $0x2f0] sm:$0xff]
      %v4323 = vld [vmem:[#allocation2 + $0x2f8] sm:$0xff]
      %v4324 = vld [vmem:[#allocation2 + $0x300] sm:$0xff]
      %v4325 = vld [vmem:[#allocation2 + $0x308] sm:$0xff]
      %v4326 = vld [vmem:[#allocation2 + $0x310] sm:$0xff]
      %v4327 = vld [vmem:[#allocation2 + $0x318] sm:$0xff]
      %v4328 = vld [vmem:[#allocation2 + $0x320] sm:$0xff]
      %v4329 = vld [vmem:[#allocation2 + $0x328] sm:$0xff]
      %v4330 = vld [vmem:[#allocation2 + $0x330] sm:$0xff]
      %v4331 = vld [vmem:[#allocation2 + $0x338] sm:$0xff]
      %v4332 = vld [vmem:[#allocation2 + $0x340] sm:$0xff]
      %v4333 = vld [vmem:[#allocation2 + $0x348] sm:$0xff]
      %v4334 = vld [vmem:[#allocation2 + $0x350] sm:$0xff]
      %v4335 = vld [vmem:[#allocation2 + $0x358] sm:$0xff]
      %v4336 = vld [vmem:[#allocation2 + $0x360] sm:$0xff]
      %v4337 = vld [vmem:[#allocation2 + $0x368] sm:$0xff]
      %v4338 = vld [vmem:[#allocation2 + $0x370] sm:$0xff]
      %v4339 = vld [vmem:[#allocation2 + $0x378] sm:$0xff]
      %v4340 = vld [vmem:[%s435 + $0x20] sm:$0xf]
      %v4341 = vld [vmem:[%s435 + $0x24] sm:$0xf]
      %v4342 = vld [vmem:[%s435 + $0x28] sm:$0xf]
      %v4343 = vld [vmem:[%s435 + $0x2c] sm:$0xf]
      %v4344 = vld [vmem:[%s435 + $0x30] sm:$0xf]
      %v4345 = vld [vmem:[%s435 + $0x34] sm:$0xf]
      %v4346 = vld [vmem:[%s435 + $0x38] sm:$0xf]
      %v4347 = vld [vmem:[%s435 + $0x3c] sm:$0xf]
      %v4348 = vld [vmem:[%s435 + $0x40] sm:$0xf]
      %v4349 = vld [vmem:[%s435 + $0x44] sm:$0xf]
      %v4350 = vld [vmem:[%s435 + $0x48] sm:$0xf]
      %v4351 = vld [vmem:[%s435 + $0x4c] sm:$0xf]
      %v4352 = vld [vmem:[%s435 + $0x50] sm:$0xf]
      %v4353 = vld [vmem:[%s435 + $0x54] sm:$0xf]
      %v4354 = vld [vmem:[%s435 + $0x58] sm:$0xf]
      %v4355 = vld [vmem:[%s435 + $0x5c] sm:$0xf]
      %v4356 = vld [vmem:[%s435 + $0x60] sm:$0xf]
      %v4357 = vld [vmem:[%s435 + $0x64] sm:$0xf]
      %v4358 = vld [vmem:[%s435 + $0x68] sm:$0xf]
      %v4359 = vld [vmem:[%s435 + $0x6c] sm:$0xf]
      %v4360 = vld [vmem:[%s435 + $0x70] sm:$0xf]
      %v4361 = vld [vmem:[%s435 + $0x74] sm:$0xf]
      %v4362 = vld [vmem:[%s435 + $0x78] sm:$0xf]
      %v4363 = vld [vmem:[%s435 + $0x7c] sm:$0xf]
      %v4364 = vld [vmem:[%s435 + $0x80] sm:$0xf]
      %v4365 = vld [vmem:[%s435 + $0x84] sm:$0xf]
      %v4366 = vld [vmem:[%s435 + $0x88] sm:$0xf]
      %v4367 = vld [vmem:[%s435 + $0x8c] sm:$0xf]
      %v4368 = vld [vmem:[%s435 + $0x90] sm:$0xf]
      %v4369 = vld [vmem:[%s435 + $0x94] sm:$0xf]
      %v4370 = vld [vmem:[%s435 + $0x98] sm:$0xf]
      %v4371 = vld [vmem:[%s435 + $0x9c] sm:$0xf]
      %v4372 = vld [vmem:[%s435 + $0xa0] sm:$0xf]
      %v4373 = vld [vmem:[%s435 + $0xa4] sm:$0xf]
      %v4374 = vld [vmem:[%s435 + $0xa8] sm:$0xf]
      %v4375 = vld [vmem:[%s435 + $0xac] sm:$0xf]
      %v4376 = vld [vmem:[%s435 + $0xb0] sm:$0xf]
      %v4377 = vld [vmem:[%s435 + $0xb4] sm:$0xf]
      %v4378 = vld [vmem:[%s435 + $0xb8] sm:$0xf]
      %v4379 = vld [vmem:[%s435 + $0xbc] sm:$0xf]
      %v4380 = vld [vmem:[%s435 + $0xc0] sm:$0xf]
      %v4381 = vld [vmem:[%s435 + $0xc4] sm:$0xf]
      %v4382 = vld [vmem:[%s435 + $0xc8] sm:$0xf]
      %v4383 = vld [vmem:[%s435 + $0xcc] sm:$0xf]
      %v4384 = vld [vmem:[%s435 + $0xd0] sm:$0xf]
      %v4385 = vld [vmem:[%s435 + $0xd4] sm:$0xf]
      %v4386 = vld [vmem:[%s435 + $0xd8] sm:$0xf]
      %v4387 = vld [vmem:[%s435 + $0xdc] sm:$0xf]
      %v4388 = vld [vmem:[%s435 + $0xe0] sm:$0xf]
      %v4389 = vld [vmem:[%s435 + $0xe4] sm:$0xf]
      %v4390 = vld [vmem:[%s435 + $0xe8] sm:$0xf]
      %v4391 = vld [vmem:[%s435 + $0xec] sm:$0xf]
      %v4392 = vld [vmem:[%s435 + $0xf0] sm:$0xf]
      %v4393 = vld [vmem:[%s435 + $0xf4] sm:$0xf]
      %v4394 = vld [vmem:[%s435 + $0xf8] sm:$0xf]
      %v4395 = vld [vmem:[%s435 + $0xfc] sm:$0xf]
      %s4396 = scalar_lea.vmem %s1, 384
      %v4397 = vld [vmem:[%s4396] sm:$0xff]
      %v4398 = vld [vmem:[%s4396 + $0x8] sm:$0xff]
      %v4399 = vld [vmem:[%s4396 + $0x10] sm:$0xff]
      %v4400 = vld [vmem:[%s4396 + $0x18] sm:$0xff]
      %v4401 = vld [vmem:[%s4396 + $0x20] sm:$0xff]
      %v4402 = vld [vmem:[%s4396 + $0x28] sm:$0xff]
      %v4403 = vld [vmem:[%s4396 + $0x30] sm:$0xff]
      %v4404 = vld [vmem:[%s4396 + $0x38] sm:$0xff]
      %v4405 = vld [vmem:[%s4396 + $0x40] sm:$0xff]
      %v4406 = vld [vmem:[%s4396 + $0x48] sm:$0xff]
      %v4407 = vld [vmem:[%s4396 + $0x50] sm:$0xff]
      %v4408 = vld [vmem:[%s4396 + $0x58] sm:$0xff]
      %v4465 = vunpack.c.l.b16 %v4340
      %v4466 = vunpack.c.l.b16 %v4341
      %v4467 = vunpack.c.l.b16 %v4342
      %v4468 = vunpack.c.l.b16 %v4343
      %v4469 = vunpack.c.l.b16 %v4344
      %v4470 = vunpack.c.l.b16 %v4345
      %v4471 = vunpack.c.l.b16 %v4346
      %v4472 = vunpack.c.l.b16 %v4347
      %v4473 = vunpack.c.l.b16 %v4348
      %v4474 = vunpack.c.l.b16 %v4349
      %v4475 = vunpack.c.l.b16 %v4350
      %v4476 = vunpack.c.l.b16 %v4351
      %v4477 = vunpack.c.l.b16 %v4352
      %v4478 = vunpack.c.l.b16 %v4353
      %v4479 = vunpack.c.l.b16 %v4354
      %v4480 = vunpack.c.l.b16 %v4355
      %v4481 = vunpack.c.l.b16 %v4356
      %v4482 = vunpack.c.l.b16 %v4357
      %v4483 = vunpack.c.l.b16 %v4358
      %v4484 = vunpack.c.l.b16 %v4359
      %v4485 = vunpack.c.l.b16 %v4360
      %v4486 = vunpack.c.l.b16 %v4361
      %v4487 = vunpack.c.l.b16 %v4362
      %v4488 = vunpack.c.l.b16 %v4363
      %v4489 = vunpack.c.l.b16 %v4364
      %v4490 = vunpack.c.l.b16 %v4365
      %v4491 = vunpack.c.l.b16 %v4366
      %v4492 = vunpack.c.l.b16 %v4367
      %v4493 = vunpack.c.l.b16 %v4368
      %v4494 = vunpack.c.l.b16 %v4369
      %v4495 = vunpack.c.l.b16 %v4370
      %v4496 = vunpack.c.l.b16 %v4371
      %v4497 = vunpack.c.l.b16 %v4372
      %v4498 = vunpack.c.l.b16 %v4373
      %v4499 = vunpack.c.l.b16 %v4374
      %v4500 = vunpack.c.l.b16 %v4375
      %v4501 = vunpack.c.l.b16 %v4376
      %v4502 = vunpack.c.l.b16 %v4377
      %v4503 = vunpack.c.l.b16 %v4378
      %v4504 = vunpack.c.l.b16 %v4379
      %v4505 = vunpack.c.l.b16 %v4380
      %v4506 = vunpack.c.l.b16 %v4381
      %v4507 = vunpack.c.l.b16 %v4382
      %v4508 = vunpack.c.l.b16 %v4383
      %v4509 = vunpack.c.l.b16 %v4384
      %v4510 = vunpack.c.l.b16 %v4385
      %v4511 = vunpack.c.l.b16 %v4386
      %v4512 = vunpack.c.l.b16 %v4387
      %v4513 = vunpack.c.l.b16 %v4388
      %v4514 = vunpack.c.l.b16 %v4389
      %v4515 = vunpack.c.l.b16 %v4390
      %v4516 = vunpack.c.l.b16 %v4391
      %v4517 = vunpack.c.l.b16 %v4392
      %v4518 = vunpack.c.l.b16 %v4393
      %v4519 = vunpack.c.l.b16 %v4394
      %v4520 = vunpack.c.l.b16 %v4395
      %v4521 = vpack.c.b16 %v4466, %v4465
      %v4522 = vpack.c.b16 %v4468, %v4467
      %v4523 = vpack.c.b16 %v4470, %v4469
      %v4524 = vpack.c.b16 %v4472, %v4471
      %v4525 = vpack.c.b16 %v4474, %v4473
      %v4526 = vpack.c.b16 %v4476, %v4475
      %v4527 = vpack.c.b16 %v4478, %v4477
      %v4528 = vpack.c.b16 %v4480, %v4479
      %v4529 = vpack.c.b16 %v4482, %v4481
      %v4530 = vpack.c.b16 %v4484, %v4483
      %v4531 = vpack.c.b16 %v4486, %v4485
      %v4532 = vpack.c.b16 %v4488, %v4487
      %v4533 = vpack.c.b16 %v4490, %v4489
      %v4534 = vpack.c.b16 %v4492, %v4491
      %v4535 = vpack.c.b16 %v4494, %v4493
      %v4536 = vpack.c.b16 %v4496, %v4495
      %v4537 = vpack.c.b16 %v4498, %v4497
      %v4538 = vpack.c.b16 %v4500, %v4499
      %v4539 = vpack.c.b16 %v4502, %v4501
      %v4540 = vpack.c.b16 %v4504, %v4503
      %v4541 = vpack.c.b16 %v4506, %v4505
      %v4542 = vpack.c.b16 %v4508, %v4507
      %v4543 = vpack.c.b16 %v4510, %v4509
      %v4544 = vpack.c.b16 %v4512, %v4511
      %v4545 = vpack.c.b16 %v4514, %v4513
      %v4546 = vpack.c.b16 %v4516, %v4515
      %v4547 = vpack.c.b16 %v4518, %v4517
      %v4548 = vpack.c.b16 %v4520, %v4519
      %v4561 = vunpack.c.l.b16 %v4397
      %v4562 = vunpack.c.h.b16 %v4397
      %v4563 = vunpack.c.l.b16 %v4398
      %v4564 = vunpack.c.h.b16 %v4398
      %v4565 = vunpack.c.l.b16 %v4399
      %v4566 = vunpack.c.h.b16 %v4399
      %v4567 = vunpack.c.l.b16 %v4400
      %v4568 = vunpack.c.h.b16 %v4400
      %v4569 = vunpack.c.l.b16 %v4401
      %v4570 = vunpack.c.h.b16 %v4401
      %v4571 = vunpack.c.l.b16 %v4402
      %v4572 = vunpack.c.h.b16 %v4402
      %v4573 = vunpack.c.l.b16 %v4403
      %v4574 = vunpack.c.h.b16 %v4403
      %v4575 = vunpack.c.l.b16 %v4404
      %v4576 = vunpack.c.h.b16 %v4404
      %v4577 = vunpack.c.l.b16 %v4405
      %v4578 = vunpack.c.h.b16 %v4405
      %v4579 = vunpack.c.l.b16 %v4406
      %v4580 = vunpack.c.h.b16 %v4406
      %v4581 = vunpack.c.l.b16 %v4407
      %v4582 = vunpack.c.h.b16 %v4407
      %v4583 = vunpack.c.l.b16 %v4408
      %v4584 = vunpack.c.h.b16 %v4408
      %v4585 = vpack.c.b16 %v4563, %v4561
      %v4586 = vpack.c.b16 %v4564, %v4562
      %v4587 = vpack.c.b16 %v4567, %v4565
      %v4588 = vpack.c.b16 %v4568, %v4566
      %v4589 = vpack.c.b16 %v4571, %v4569
      %v4590 = vpack.c.b16 %v4572, %v4570
      %v4591 = vpack.c.b16 %v4575, %v4573
      %v4592 = vpack.c.b16 %v4576, %v4574
      %v4593 = vpack.c.b16 %v4579, %v4577
      %v4594 = vpack.c.b16 %v4580, %v4578
      %v4595 = vpack.c.b16 %v4583, %v4581
      %v4596 = vpack.c.b16 %v4584, %v4582
      %v4610 = vsel %vm711, %v4521, 0
      %v4613 = vsel %vm711, %v4522, 0
      %v4616 = vsel %vm711, %v4523, 0
      %v4619 = vsel %vm711, %v4524, 0
      %v4622 = vsel %vm711, %v4525, 0
      %v4625 = vsel %vm711, %v4526, 0
      %v4628 = vsel %vm711, %v4527, 0
      %v4631 = vsel %vm711, %v4528, 0
      %v4634 = vsel %vm711, %v4529, 0
      %v4637 = vsel %vm711, %v4530, 0
      %v4640 = vsel %vm711, %v4531, 0
      %v4643 = vsel %vm711, %v4532, 0
      %v4646 = vsel %vm711, %v4533, 0
      %v4649 = vsel %vm711, %v4534, 0
      %v4652 = vsel %vm711, %v4535, 0
      %v4655 = vsel %vm711, %v4536, 0
      %v4658 = vsel %vm711, %v4537, 0
      %v4661 = vsel %vm711, %v4538, 0
      %v4664 = vsel %vm711, %v4539, 0
      %v4667 = vsel %vm711, %v4540, 0
      %v4670 = vsel %vm711, %v4541, 0
      %v4673 = vsel %vm711, %v4542, 0
      %v4676 = vsel %vm711, %v4543, 0
      %v4679 = vsel %vm711, %v4544, 0
      %v4682 = vsel %vm711, %v4545, 0
      %v4685 = vsel %vm711, %v4546, 0
      %v4688 = vsel %vm711, %v4547, 0
      %v4691 = vsel %vm711, %v4548, 0
      %4693 = vmatprep.subr.bf16.mxu0 %v4586
      %4694 = vmatpush1.bf16.msra.mxu0 %v4585
      %4695 = vmatprep.subr.bf16.mxu0 %v4588
      %4696 = vmatpush1.bf16.msra.mxu0 %v4587
      %4697 = vmatprep.subr.bf16.mxu0 %v4590
      %4698 = vmatpush1.bf16.msra.mxu0 %v4589
      %4699 = vmatprep.subr.bf16.mxu0 %v4592
      %4700 = vmatpush1.bf16.msra.mxu0 %v4591
      %4701 = vmatprep.subr.bf16.mxu0 %v4594
      %4702 = vmatpush1.bf16.msra.mxu0 %v4593
      %4703 = vmatprep.subr.bf16.mxu0 %v4596
      %4704 = vmatpush1.bf16.msra.mxu0 %v4595
      %4705 = vmatprep.subr.bf16.mxu0 0
      %4706 = vmatpush1.bf16.msra.mxu0 0
      %4707 = vmatprep.subr.bf16.mxu0 0
      %4708 = vmatpush1.bf16.msra.mxu0 0
      %4709 = vmatprep.subr.bf16.mxu0 0
      %4710 = vmatpush1.bf16.msra.mxu0 0
      %4711 = vmatprep.subr.bf16.mxu0 0
      %4712 = vmatpush1.bf16.msra.mxu0 0
      %4713 = vmatprep.subr.bf16.mxu0 0
      %4714 = vmatpush1.bf16.msra.mxu0 0
      %4715 = vmatprep.subr.bf16.mxu0 0
      %4716 = vmatpush1.bf16.msra.mxu0 0
      %4717 = vmatprep.subr.bf16.mxu0 0
      %4718 = vmatpush1.bf16.msra.mxu0 0
      %4719 = vmatprep.subr.bf16.mxu0 0
      %4720 = vmatpush1.bf16.msra.mxu0 0
      %4721 = vmatprep.subr.bf16.mxu0 0
      %4722 = vmatpush1.bf16.msra.mxu0 0
      %4723 = vmatprep.subr.bf16.mxu0 0
      %4724 = vmatpush1.bf16.msra.mxu0 0
      %4725 = vmatprep.mubr.bf16.mxu0 0
      %4726 = vmatmul.mubr.bf16.gmra.mrb[0].mxu0 %v4610
      %v4727 = vpop.f32.mrb[0].mxu0
      %v4728 = vadd.f32 0.0, %v4727
      %v4729 = vpop.f32.mrb[0].mxu0
      %v4730 = vadd.f32 0.0, %v4729
      %v4731 = vpop.f32.mrb[0].mxu0
      %v4732 = vadd.f32 0.0, %v4731
      %v4733 = vpop.f32.mrb[0].mxu0
      %v4734 = vadd.f32 0.0, %v4733
      %4735 = vmatprep.mubr.bf16.mxu0 0
      %4736 = vmatmul.mubr.bf16.gmra.mrb[0].mxu0 %v4613
      %v4737 = vpop.f32.mrb[0].mxu0
      %v4738 = vadd.f32 0.0, %v4737
      %v4739 = vpop.f32.mrb[0].mxu0
      %v4740 = vadd.f32 0.0, %v4739
      %v4741 = vpop.f32.mrb[0].mxu0
      %v4742 = vadd.f32 0.0, %v4741
      %v4743 = vpop.f32.mrb[0].mxu0
      %v4744 = vadd.f32 0.0, %v4743
      %4745 = vmatprep.mubr.bf16.mxu0 0
      %4746 = vmatmul.mubr.bf16.gmra.mrb[0].mxu0 %v4616
      %v4747 = vpop.f32.mrb[0].mxu0
      %v4748 = vadd.f32 0.0, %v4747
      %v4749 = vpop.f32.mrb[0].mxu0
      %v4750 = vadd.f32 0.0, %v4749
      %v4751 = vpop.f32.mrb[0].mxu0
      %v4752 = vadd.f32 0.0, %v4751
      %v4753 = vpop.f32.mrb[0].mxu0
      %v4754 = vadd.f32 0.0, %v4753
      %4755 = vmatprep.mubr.bf16.mxu0 0
      %4756 = vmatmul.mubr.bf16.gmra.mrb[0].mxu0 %v4619
      %v4757 = vpop.f32.mrb[0].mxu0
      %v4758 = vadd.f32 0.0, %v4757
      %v4759 = vpop.f32.mrb[0].mxu0
      %v4760 = vadd.f32 0.0, %v4759
      %v4761 = vpop.f32.mrb[0].mxu0
      %v4762 = vadd.f32 0.0, %v4761
      %v4763 = vpop.f32.mrb[0].mxu0
      %v4764 = vadd.f32 0.0, %v4763
      %4765 = vmatprep.mubr.bf16.mxu0 0
      %4766 = vmatmul.mubr.bf16.gmra.mrb[0].mxu0 %v4622
      %v4767 = vpop.f32.mrb[0].mxu0
      %v4768 = vadd.f32 0.0, %v4767
      %v4769 = vpop.f32.mrb[0].mxu0
      %v4770 = vadd.f32 0.0, %v4769
      %v4771 = vpop.f32.mrb[0].mxu0
      %v4772 = vadd.f32 0.0, %v4771
      %v4773 = vpop.f32.mrb[0].mxu0
      %v4774 = vadd.f32 0.0, %v4773
      %4775 = vmatprep.mubr.bf16.mxu0 0
      %4776 = vmatmul.mubr.bf16.gmra.mrb[0].mxu0 %v4625
      %v4777 = vpop.f32.mrb[0].mxu0
      %v4778 = vadd.f32 0.0, %v4777
      %v4779 = vpop.f32.mrb[0].mxu0
      %v4780 = vadd.f32 0.0, %v4779
      %v4781 = vpop.f32.mrb[0].mxu0
      %v4782 = vadd.f32 0.0, %v4781
      %v4783 = vpop.f32.mrb[0].mxu0
      %v4784 = vadd.f32 0.0, %v4783
      %4785 = vmatprep.mubr.bf16.mxu0 0
      %4786 = vmatmul.mubr.bf16.gmra.mrb[0].mxu0 %v4628
      %v4787 = vpop.f32.mrb[0].mxu0
      %v4788 = vadd.f32 0.0, %v4787
      %v4789 = vpop.f32.mrb[0].mxu0
      %v4790 = vadd.f32 0.0, %v4789
      %v4791 = vpop.f32.mrb[0].mxu0
      %v4792 = vadd.f32 0.0, %v4791
      %v4793 = vpop.f32.mrb[0].mxu0
      %v4794 = vadd.f32 0.0, %v4793
      %4795 = vmatprep.mubr.bf16.mxu0 0
      %4796 = vmatmul.mubr.bf16.gmra.mrb[0].mxu0 %v4631
      %v4797 = vpop.f32.mrb[0].mxu0
      %v4798 = vadd.f32 0.0, %v4797
      %v4799 = vpop.f32.mrb[0].mxu0
      %v4800 = vadd.f32 0.0, %v4799
      %v4801 = vpop.f32.mrb[0].mxu0
      %v4802 = vadd.f32 0.0, %v4801
      %v4803 = vpop.f32.mrb[0].mxu0
      %v4804 = vadd.f32 0.0, %v4803
      %4805 = vmatprep.mubr.bf16.mxu0 0
      %4806 = vmatmul.mubr.bf16.gmra.mrb[0].mxu0 %v4634
      %v4807 = vpop.f32.mrb[0].mxu0
      %v4808 = vadd.f32 0.0, %v4807
      %v4809 = vpop.f32.mrb[0].mxu0
      %v4810 = vadd.f32 0.0, %v4809
      %v4811 = vpop.f32.mrb[0].mxu0
      %v4812 = vadd.f32 0.0, %v4811
      %v4813 = vpop.f32.mrb[0].mxu0
      %v4814 = vadd.f32 0.0, %v4813
      %4815 = vmatprep.mubr.bf16.mxu0 0
      %4816 = vmatmul.mubr.bf16.gmra.mrb[0].mxu0 %v4637
      %v4817 = vpop.f32.mrb[0].mxu0
      %v4818 = vadd.f32 0.0, %v4817
      %v4819 = vpop.f32.mrb[0].mxu0
      %v4820 = vadd.f32 0.0, %v4819
      %v4821 = vpop.f32.mrb[0].mxu0
      %v4822 = vadd.f32 0.0, %v4821
      %v4823 = vpop.f32.mrb[0].mxu0
      %v4824 = vadd.f32 0.0, %v4823
      %4825 = vmatprep.mubr.bf16.mxu0 0
      %4826 = vmatmul.mubr.bf16.gmra.mrb[0].mxu0 %v4640
      %v4827 = vpop.f32.mrb[0].mxu0
      %v4828 = vadd.f32 0.0, %v4827
      %v4829 = vpop.f32.mrb[0].mxu0
      %v4830 = vadd.f32 0.0, %v4829
      %v4831 = vpop.f32.mrb[0].mxu0
      %v4832 = vadd.f32 0.0, %v4831
      %v4833 = vpop.f32.mrb[0].mxu0
      %v4834 = vadd.f32 0.0, %v4833
      %4835 = vmatprep.mubr.bf16.mxu0 0
      %4836 = vmatmul.mubr.bf16.gmra.mrb[0].mxu0 %v4643
      %v4837 = vpop.f32.mrb[0].mxu0
      %v4838 = vadd.f32 0.0, %v4837
      %v4839 = vpop.f32.mrb[0].mxu0
      %v4840 = vadd.f32 0.0, %v4839
      %v4841 = vpop.f32.mrb[0].mxu0
      %v4842 = vadd.f32 0.0, %v4841
      %v4843 = vpop.f32.mrb[0].mxu0
      %v4844 = vadd.f32 0.0, %v4843
      %4845 = vmatprep.mubr.bf16.mxu0 0
      %4846 = vmatmul.mubr.bf16.gmra.mrb[0].mxu0 %v4646
      %v4847 = vpop.f32.mrb[0].mxu0
      %v4848 = vadd.f32 0.0, %v4847
      %v4849 = vpop.f32.mrb[0].mxu0
      %v4850 = vadd.f32 0.0, %v4849
      %v4851 = vpop.f32.mrb[0].mxu0
      %v4852 = vadd.f32 0.0, %v4851
      %v4853 = vpop.f32.mrb[0].mxu0
      %v4854 = vadd.f32 0.0, %v4853
      %4855 = vmatprep.mubr.bf16.mxu0 0
      %4856 = vmatmul.mubr.bf16.gmra.mrb[0].mxu0 %v4649
      %v4857 = vpop.f32.mrb[0].mxu0
      %v4858 = vadd.f32 0.0, %v4857
      %v4859 = vpop.f32.mrb[0].mxu0
      %v4860 = vadd.f32 0.0, %v4859
      %v4861 = vpop.f32.mrb[0].mxu0
      %v4862 = vadd.f32 0.0, %v4861
      %v4863 = vpop.f32.mrb[0].mxu0
      %v4864 = vadd.f32 0.0, %v4863
      %4865 = vmatprep.mubr.bf16.mxu0 0
      %4866 = vmatmul.mubr.bf16.gmra.mrb[0].mxu0 %v4652
      %v4867 = vpop.f32.mrb[0].mxu0
      %v4868 = vadd.f32 0.0, %v4867
      %v4869 = vpop.f32.mrb[0].mxu0
      %v4870 = vadd.f32 0.0, %v4869
      %v4871 = vpop.f32.mrb[0].mxu0
      %v4872 = vadd.f32 0.0, %v4871
      %v4873 = vpop.f32.mrb[0].mxu0
      %v4874 = vadd.f32 0.0, %v4873
      %4875 = vmatprep.mubr.bf16.mxu0 0
      %4876 = vmatmul.mubr.bf16.gmra.mrb[0].mxu0 %v4655
      %v4877 = vpop.f32.mrb[0].mxu0
      %v4878 = vadd.f32 0.0, %v4877
      %v4879 = vpop.f32.mrb[0].mxu0
      %v4880 = vadd.f32 0.0, %v4879
      %v4881 = vpop.f32.mrb[0].mxu0
      %v4882 = vadd.f32 0.0, %v4881
      %v4883 = vpop.f32.mrb[0].mxu0
      %v4884 = vadd.f32 0.0, %v4883
      %4885 = vmatprep.mubr.bf16.mxu0 0
      %4886 = vmatmul.mubr.bf16.gmra.mrb[0].mxu0 %v4658
      %v4887 = vpop.f32.mrb[0].mxu0
      %v4888 = vadd.f32 0.0, %v4887
      %v4889 = vpop.f32.mrb[0].mxu0
      %v4890 = vadd.f32 0.0, %v4889
      %v4891 = vpop.f32.mrb[0].mxu0
      %v4892 = vadd.f32 0.0, %v4891
      %v4893 = vpop.f32.mrb[0].mxu0
      %v4894 = vadd.f32 0.0, %v4893
      %4895 = vmatprep.mubr.bf16.mxu0 0
      %4896 = vmatmul.mubr.bf16.gmra.mrb[0].mxu0 %v4661
      %v4897 = vpop.f32.mrb[0].mxu0
      %v4898 = vadd.f32 0.0, %v4897
      %v4899 = vpop.f32.mrb[0].mxu0
      %v4900 = vadd.f32 0.0, %v4899
      %v4901 = vpop.f32.mrb[0].mxu0
      %v4902 = vadd.f32 0.0, %v4901
      %v4903 = vpop.f32.mrb[0].mxu0
      %v4904 = vadd.f32 0.0, %v4903
      %4905 = vmatprep.mubr.bf16.mxu0 0
      %4906 = vmatmul.mubr.bf16.gmra.mrb[0].mxu0 %v4664
      %v4907 = vpop.f32.mrb[0].mxu0
      %v4908 = vadd.f32 0.0, %v4907
      %v4909 = vpop.f32.mrb[0].mxu0
      %v4910 = vadd.f32 0.0, %v4909
      %v4911 = vpop.f32.mrb[0].mxu0
      %v4912 = vadd.f32 0.0, %v4911
      %v4913 = vpop.f32.mrb[0].mxu0
      %v4914 = vadd.f32 0.0, %v4913
      %4915 = vmatprep.mubr.bf16.mxu0 0
      %4916 = vmatmul.mubr.bf16.gmra.mrb[0].mxu0 %v4667
      %v4917 = vpop.f32.mrb[0].mxu0
      %v4918 = vadd.f32 0.0, %v4917
      %v4919 = vpop.f32.mrb[0].mxu0
      %v4920 = vadd.f32 0.0, %v4919
      %v4921 = vpop.f32.mrb[0].mxu0
      %v4922 = vadd.f32 0.0, %v4921
      %v4923 = vpop.f32.mrb[0].mxu0
      %v4924 = vadd.f32 0.0, %v4923
      %4925 = vmatprep.mubr.bf16.mxu0 0
      %4926 = vmatmul.mubr.bf16.gmra.mrb[0].mxu0 %v4670
      %v4927 = vpop.f32.mrb[0].mxu0
      %v4928 = vadd.f32 0.0, %v4927
      %v4929 = vpop.f32.mrb[0].mxu0
      %v4930 = vadd.f32 0.0, %v4929
      %v4931 = vpop.f32.mrb[0].mxu0
      %v4932 = vadd.f32 0.0, %v4931
      %v4933 = vpop.f32.mrb[0].mxu0
      %v4934 = vadd.f32 0.0, %v4933
      %4935 = vmatprep.mubr.bf16.mxu0 0
      %4936 = vmatmul.mubr.bf16.gmra.mrb[0].mxu0 %v4673
      %v4937 = vpop.f32.mrb[0].mxu0
      %v4938 = vadd.f32 0.0, %v4937
      %v4939 = vpop.f32.mrb[0].mxu0
      %v4940 = vadd.f32 0.0, %v4939
      %v4941 = vpop.f32.mrb[0].mxu0
      %v4942 = vadd.f32 0.0, %v4941
      %v4943 = vpop.f32.mrb[0].mxu0
      %v4944 = vadd.f32 0.0, %v4943
      %4945 = vmatprep.mubr.bf16.mxu0 0
      %4946 = vmatmul.mubr.bf16.gmra.mrb[0].mxu0 %v4676
      %v4947 = vpop.f32.mrb[0].mxu0
      %v4948 = vadd.f32 0.0, %v4947
      %v4949 = vpop.f32.mrb[0].mxu0
      %v4950 = vadd.f32 0.0, %v4949
      %v4951 = vpop.f32.mrb[0].mxu0
      %v4952 = vadd.f32 0.0, %v4951
      %v4953 = vpop.f32.mrb[0].mxu0
      %v4954 = vadd.f32 0.0, %v4953
      %4955 = vmatprep.mubr.bf16.mxu0 0
      %4956 = vmatmul.mubr.bf16.gmra.mrb[0].mxu0 %v4679
      %v4957 = vpop.f32.mrb[0].mxu0
      %v4958 = vadd.f32 0.0, %v4957
      %v4959 = vpop.f32.mrb[0].mxu0
      %v4960 = vadd.f32 0.0, %v4959
      %v4961 = vpop.f32.mrb[0].mxu0
      %v4962 = vadd.f32 0.0, %v4961
      %v4963 = vpop.f32.mrb[0].mxu0
      %v4964 = vadd.f32 0.0, %v4963
      %4965 = vmatprep.mubr.bf16.mxu0 0
      %4966 = vmatmul.mubr.bf16.gmra.mrb[0].mxu0 %v4682
      %v4967 = vpop.f32.mrb[0].mxu0
      %v4968 = vadd.f32 0.0, %v4967
      %v4969 = vpop.f32.mrb[0].mxu0
      %v4970 = vadd.f32 0.0, %v4969
      %v4971 = vpop.f32.mrb[0].mxu0
      %v4972 = vadd.f32 0.0, %v4971
      %v4973 = vpop.f32.mrb[0].mxu0
      %v4974 = vadd.f32 0.0, %v4973
      %4975 = vmatprep.mubr.bf16.mxu0 0
      %4976 = vmatmul.mubr.bf16.gmra.mrb[0].mxu0 %v4685
      %v4977 = vpop.f32.mrb[0].mxu0
      %v4978 = vadd.f32 0.0, %v4977
      %v4979 = vpop.f32.mrb[0].mxu0
      %v4980 = vadd.f32 0.0, %v4979
      %v4981 = vpop.f32.mrb[0].mxu0
      %v4982 = vadd.f32 0.0, %v4981
      %v4983 = vpop.f32.mrb[0].mxu0
      %v4984 = vadd.f32 0.0, %v4983
      %4985 = vmatprep.mubr.bf16.mxu0 0
      %4986 = vmatmul.mubr.bf16.gmra.mrb[0].mxu0 %v4688
      %v4987 = vpop.f32.mrb[0].mxu0
      %v4988 = vadd.f32 0.0, %v4987
      %v4989 = vpop.f32.mrb[0].mxu0
      %v4990 = vadd.f32 0.0, %v4989
      %v4991 = vpop.f32.mrb[0].mxu0
      %v4992 = vadd.f32 0.0, %v4991
      %v4993 = vpop.f32.mrb[0].mxu0
      %v4994 = vadd.f32 0.0, %v4993
      %4995 = vmatprep.mubr.bf16.mxu0 0
      %4996 = vmatmul.mubr.bf16.gmra.mrb[0].mxu0 %v4691
      %v4997 = vpop.f32.mrb[0].mxu0
      %v4998 = vadd.f32 0.0, %v4997
      %v4999 = vpop.f32.mrb[0].mxu0
      %v5000 = vadd.f32 0.0, %v4999
      %v5001 = vpop.f32.mrb[0].mxu0
      %v5002 = vadd.f32 0.0, %v5001
      %v5003 = vpop.f32.mrb[0].mxu0
      %v5004 = vadd.f32 0.0, %v5003
      %5005 = vdwg.mxu0
      %v5006 = vadd.f32 %v4228, %v4728
      %v5007 = vadd.f32 %v4229, %v4730
      %v5008 = vadd.f32 %v4230, %v4732
      %v5009 = vadd.f32 %v4231, %v4734
      %v5010 = vadd.f32 %v4232, %v4738
      %v5011 = vadd.f32 %v4233, %v4740
      %v5012 = vadd.f32 %v4234, %v4742
      %v5013 = vadd.f32 %v4235, %v4744
      %v5014 = vadd.f32 %v4236, %v4748
      %v5015 = vadd.f32 %v4237, %v4750
      %v5016 = vadd.f32 %v4238, %v4752
      %v5017 = vadd.f32 %v4239, %v4754
      %v5018 = vadd.f32 %v4240, %v4758
      %v5019 = vadd.f32 %v4241, %v4760
      %v5020 = vadd.f32 %v4242, %v4762
      %v5021 = vadd.f32 %v4243, %v4764
      %v5022 = vadd.f32 %v4244, %v4768
      %v5023 = vadd.f32 %v4245, %v4770
      %v5024 = vadd.f32 %v4246, %v4772
      %v5025 = vadd.f32 %v4247, %v4774
      %v5026 = vadd.f32 %v4248, %v4778
      %v5027 = vadd.f32 %v4249, %v4780
      %v5028 = vadd.f32 %v4250, %v4782
      %v5029 = vadd.f32 %v4251, %v4784
      %v5030 = vadd.f32 %v4252, %v4788
      %v5031 = vadd.f32 %v4253, %v4790
      %v5032 = vadd.f32 %v4254, %v4792
      %v5033 = vadd.f32 %v4255, %v4794
      %v5034 = vadd.f32 %v4256, %v4798
      %v5035 = vadd.f32 %v4257, %v4800
      %v5036 = vadd.f32 %v4258, %v4802
      %v5037 = vadd.f32 %v4259, %v4804
      %v5038 = vadd.f32 %v4260, %v4808
      %v5039 = vadd.f32 %v4261, %v4810
      %v5040 = vadd.f32 %v4262, %v4812
      %v5041 = vadd.f32 %v4263, %v4814
      %v5042 = vadd.f32 %v4264, %v4818
      %v5043 = vadd.f32 %v4265, %v4820
      %v5044 = vadd.f32 %v4266, %v4822
      %v5045 = vadd.f32 %v4267, %v4824
      %v5046 = vadd.f32 %v4268, %v4828
      %v5047 = vadd.f32 %v4269, %v4830
      %v5048 = vadd.f32 %v4270, %v4832
      %v5049 = vadd.f32 %v4271, %v4834
      %v5050 = vadd.f32 %v4272, %v4838
      %v5051 = vadd.f32 %v4273, %v4840
      %v5052 = vadd.f32 %v4274, %v4842
      %v5053 = vadd.f32 %v4275, %v4844
      %v5054 = vadd.f32 %v4276, %v4848
      %v5055 = vadd.f32 %v4277, %v4850
      %v5056 = vadd.f32 %v4278, %v4852
      %v5057 = vadd.f32 %v4279, %v4854
      %v5058 = vadd.f32 %v4280, %v4858
      %v5059 = vadd.f32 %v4281, %v4860
      %v5060 = vadd.f32 %v4282, %v4862
      %v5061 = vadd.f32 %v4283, %v4864
      %v5062 = vadd.f32 %v4284, %v4868
      %v5063 = vadd.f32 %v4285, %v4870
      %v5064 = vadd.f32 %v4286, %v4872
      %v5065 = vadd.f32 %v4287, %v4874
      %v5066 = vadd.f32 %v4288, %v4878
      %v5067 = vadd.f32 %v4289, %v4880
      %v5068 = vadd.f32 %v4290, %v4882
      %v5069 = vadd.f32 %v4291, %v4884
      %v5070 = vadd.f32 %v4292, %v4888
      %v5071 = vadd.f32 %v4293, %v4890
      %v5072 = vadd.f32 %v4294, %v4892
      %v5073 = vadd.f32 %v4295, %v4894
      %v5074 = vadd.f32 %v4296, %v4898
      %v5075 = vadd.f32 %v4297, %v4900
      %v5076 = vadd.f32 %v4298, %v4902
      %v5077 = vadd.f32 %v4299, %v4904
      %v5078 = vadd.f32 %v4300, %v4908
      %v5079 = vadd.f32 %v4301, %v4910
      %v5080 = vadd.f32 %v4302, %v4912
      %v5081 = vadd.f32 %v4303, %v4914
      %v5082 = vadd.f32 %v4304, %v4918
      %v5083 = vadd.f32 %v4305, %v4920
      %v5084 = vadd.f32 %v4306, %v4922
      %v5085 = vadd.f32 %v4307, %v4924
      %v5086 = vadd.f32 %v4308, %v4928
      %v5087 = vadd.f32 %v4309, %v4930
      %v5088 = vadd.f32 %v4310, %v4932
      %v5089 = vadd.f32 %v4311, %v4934
      %v5090 = vadd.f32 %v4312, %v4938
      %v5091 = vadd.f32 %v4313, %v4940
      %v5092 = vadd.f32 %v4314, %v4942
      %v5093 = vadd.f32 %v4315, %v4944
      %v5094 = vadd.f32 %v4316, %v4948
      %v5095 = vadd.f32 %v4317, %v4950
      %v5096 = vadd.f32 %v4318, %v4952
      %v5097 = vadd.f32 %v4319, %v4954
      %v5098 = vadd.f32 %v4320, %v4958
      %v5099 = vadd.f32 %v4321, %v4960
      %v5100 = vadd.f32 %v4322, %v4962
      %v5101 = vadd.f32 %v4323, %v4964
      %v5102 = vadd.f32 %v4324, %v4968
      %v5103 = vadd.f32 %v4325, %v4970
      %v5104 = vadd.f32 %v4326, %v4972
      %v5105 = vadd.f32 %v4327, %v4974
      %v5106 = vadd.f32 %v4328, %v4978
      %v5107 = vadd.f32 %v4329, %v4980
      %v5108 = vadd.f32 %v4330, %v4982
      %v5109 = vadd.f32 %v4331, %v4984
      %v5110 = vadd.f32 %v4332, %v4988
      %v5111 = vadd.f32 %v4333, %v4990
      %v5112 = vadd.f32 %v4334, %v4992
      %v5113 = vadd.f32 %v4335, %v4994
      %v5114 = vadd.f32 %v4336, %v4998
      %v5115 = vadd.f32 %v4337, %v5000
      %v5116 = vadd.f32 %v4338, %v5002
      %v5117 = vadd.f32 %v4339, %v5004
      %5118 = vst [vmem:[#allocation2] sm:$0xff] %v5006
      %5119 = vst.msk [vmem:[#allocation2 + $0x8] sm:$0xff] %vm1110, %v5007
      %5120 = vst [vmem:[#allocation2 + $0x10] sm:$0xff] %v5008
      %5121 = vst.msk [vmem:[#allocation2 + $0x18] sm:$0xff] %vm1110, %v5009
      %5122 = vst [vmem:[#allocation2 + $0x20] sm:$0xff] %v5010
      %5123 = vst.msk [vmem:[#allocation2 + $0x28] sm:$0xff] %vm1110, %v5011
      %5124 = vst [vmem:[#allocation2 + $0x30] sm:$0xff] %v5012
      %5125 = vst.msk [vmem:[#allocation2 + $0x38] sm:$0xff] %vm1110, %v5013
      %5126 = vst [vmem:[#allocation2 + $0x40] sm:$0xff] %v5014
      %5127 = vst.msk [vmem:[#allocation2 + $0x48] sm:$0xff] %vm1110, %v5015
      %5128 = vst [vmem:[#allocation2 + $0x50] sm:$0xff] %v5016
      %5129 = vst.msk [vmem:[#allocation2 + $0x58] sm:$0xff] %vm1110, %v5017
      %5130 = vst [vmem:[#allocation2 + $0x60] sm:$0xff] %v5018
      %5131 = vst.msk [vmem:[#allocation2 + $0x68] sm:$0xff] %vm1110, %v5019
      %5132 = vst [vmem:[#allocation2 + $0x70] sm:$0xff] %v5020
      %5133 = vst.msk [vmem:[#allocation2 + $0x78] sm:$0xff] %vm1110, %v5021
      %5134 = vst [vmem:[#allocation2 + $0x80] sm:$0xff] %v5022
      %5135 = vst.msk [vmem:[#allocation2 + $0x88] sm:$0xff] %vm1110, %v5023
      %5136 = vst [vmem:[#allocation2 + $0x90] sm:$0xff] %v5024
      %5137 = vst.msk [vmem:[#allocation2 + $0x98] sm:$0xff] %vm1110, %v5025
      %5138 = vst [vmem:[#allocation2 + $0xa0] sm:$0xff] %v5026
      %5139 = vst.msk [vmem:[#allocation2 + $0xa8] sm:$0xff] %vm1110, %v5027
      %5140 = vst [vmem:[#allocation2 + $0xb0] sm:$0xff] %v5028
      %5141 = vst.msk [vmem:[#allocation2 + $0xb8] sm:$0xff] %vm1110, %v5029
      %5142 = vst [vmem:[#allocation2 + $0xc0] sm:$0xff] %v5030
      %5143 = vst.msk [vmem:[#allocation2 + $0xc8] sm:$0xff] %vm1110, %v5031
      %5144 = vst [vmem:[#allocation2 + $0xd0] sm:$0xff] %v5032
      %5145 = vst.msk [vmem:[#allocation2 + $0xd8] sm:$0xff] %vm1110, %v5033
      %5146 = vst [vmem:[#allocation2 + $0xe0] sm:$0xff] %v5034
      %5147 = vst.msk [vmem:[#allocation2 + $0xe8] sm:$0xff] %vm1110, %v5035
      %5148 = vst [vmem:[#allocation2 + $0xf0] sm:$0xff] %v5036
      %5149 = vst.msk [vmem:[#allocation2 + $0xf8] sm:$0xff] %vm1110, %v5037
      %5150 = vst [vmem:[#allocation2 + $0x100] sm:$0xff] %v5038
      %5151 = vst.msk [vmem:[#allocation2 + $0x108] sm:$0xff] %vm1110, %v5039
      %5152 = vst [vmem:[#allocation2 + $0x110] sm:$0xff] %v5040
      %5153 = vst.msk [vmem:[#allocation2 + $0x118] sm:$0xff] %vm1110, %v5041
      %5154 = vst [vmem:[#allocation2 + $0x120] sm:$0xff] %v5042
      %5155 = vst.msk [vmem:[#allocation2 + $0x128] sm:$0xff] %vm1110, %v5043
      %5156 = vst [vmem:[#allocation2 + $0x130] sm:$0xff] %v5044
      %5157 = vst.msk [vmem:[#allocation2 + $0x138] sm:$0xff] %vm1110, %v5045
      %5158 = vst [vmem:[#allocation2 + $0x140] sm:$0xff] %v5046
      %5159 = vst.msk [vmem:[#allocation2 + $0x148] sm:$0xff] %vm1110, %v5047
      %5160 = vst [vmem:[#allocation2 + $0x150] sm:$0xff] %v5048
      %5161 = vst.msk [vmem:[#allocation2 + $0x158] sm:$0xff] %vm1110, %v5049
      %5162 = vst [vmem:[#allocation2 + $0x160] sm:$0xff] %v5050
      %5163 = vst.msk [vmem:[#allocation2 + $0x168] sm:$0xff] %vm1110, %v5051
      %5164 = vst [vmem:[#allocation2 + $0x170] sm:$0xff] %v5052
      %5165 = vst.msk [vmem:[#allocation2 + $0x178] sm:$0xff] %vm1110, %v5053
      %5166 = vst [vmem:[#allocation2 + $0x180] sm:$0xff] %v5054
      %5167 = vst.msk [vmem:[#allocation2 + $0x188] sm:$0xff] %vm1110, %v5055
      %5168 = vst [vmem:[#allocation2 + $0x190] sm:$0xff] %v5056
      %5169 = vst.msk [vmem:[#allocation2 + $0x198] sm:$0xff] %vm1110, %v5057
      %5170 = vst [vmem:[#allocation2 + $0x1a0] sm:$0xff] %v5058
      %5171 = vst.msk [vmem:[#allocation2 + $0x1a8] sm:$0xff] %vm1110, %v5059
      %5172 = vst [vmem:[#allocation2 + $0x1b0] sm:$0xff] %v5060
      %5173 = vst.msk [vmem:[#allocation2 + $0x1b8] sm:$0xff] %vm1110, %v5061
      %5174 = vst [vmem:[#allocation2 + $0x1c0] sm:$0xff] %v5062
      %5175 = vst.msk [vmem:[#allocation2 + $0x1c8] sm:$0xff] %vm1110, %v5063
      %5176 = vst [vmem:[#allocation2 + $0x1d0] sm:$0xff] %v5064
      %5177 = vst.msk [vmem:[#allocation2 + $0x1d8] sm:$0xff] %vm1110, %v5065
      %5178 = vst [vmem:[#allocation2 + $0x1e0] sm:$0xff] %v5066
      %5179 = vst.msk [vmem:[#allocation2 + $0x1e8] sm:$0xff] %vm1110, %v5067
      %5180 = vst [vmem:[#allocation2 + $0x1f0] sm:$0xff] %v5068
      %5181 = vst.msk [vmem:[#allocation2 + $0x1f8] sm:$0xff] %vm1110, %v5069
      %5182 = vst [vmem:[#allocation2 + $0x200] sm:$0xff] %v5070
      %5183 = vst.msk [vmem:[#allocation2 + $0x208] sm:$0xff] %vm1110, %v5071
      %5184 = vst [vmem:[#allocation2 + $0x210] sm:$0xff] %v5072
      %5185 = vst.msk [vmem:[#allocation2 + $0x218] sm:$0xff] %vm1110, %v5073
      %5186 = vst [vmem:[#allocation2 + $0x220] sm:$0xff] %v5074
      %5187 = vst.msk [vmem:[#allocation2 + $0x228] sm:$0xff] %vm1110, %v5075
      %5188 = vst [vmem:[#allocation2 + $0x230] sm:$0xff] %v5076
      %5189 = vst.msk [vmem:[#allocation2 + $0x238] sm:$0xff] %vm1110, %v5077
      %5190 = vst [vmem:[#allocation2 + $0x240] sm:$0xff] %v5078
      %5191 = vst.msk [vmem:[#allocation2 + $0x248] sm:$0xff] %vm1110, %v5079
      %5192 = vst [vmem:[#allocation2 + $0x250] sm:$0xff] %v5080
      %5193 = vst.msk [vmem:[#allocation2 + $0x258] sm:$0xff] %vm1110, %v5081
      %5194 = vst [vmem:[#allocation2 + $0x260] sm:$0xff] %v5082
      %5195 = vst.msk [vmem:[#allocation2 + $0x268] sm:$0xff] %vm1110, %v5083
      %5196 = vst [vmem:[#allocation2 + $0x270] sm:$0xff] %v5084
      %5197 = vst.msk [vmem:[#allocation2 + $0x278] sm:$0xff] %vm1110, %v5085
      %5198 = vst [vmem:[#allocation2 + $0x280] sm:$0xff] %v5086
      %5199 = vst.msk [vmem:[#allocation2 + $0x288] sm:$0xff] %vm1110, %v5087
      %5200 = vst [vmem:[#allocation2 + $0x290] sm:$0xff] %v5088
      %5201 = vst.msk [vmem:[#allocation2 + $0x298] sm:$0xff] %vm1110, %v5089
      %5202 = vst [vmem:[#allocation2 + $0x2a0] sm:$0xff] %v5090
      %5203 = vst.msk [vmem:[#allocation2 + $0x2a8] sm:$0xff] %vm1110, %v5091
      %5204 = vst [vmem:[#allocation2 + $0x2b0] sm:$0xff] %v5092
      %5205 = vst.msk [vmem:[#allocation2 + $0x2b8] sm:$0xff] %vm1110, %v5093
      %5206 = vst [vmem:[#allocation2 + $0x2c0] sm:$0xff] %v5094
      %5207 = vst.msk [vmem:[#allocation2 + $0x2c8] sm:$0xff] %vm1110, %v5095
      %5208 = vst [vmem:[#allocation2 + $0x2d0] sm:$0xff] %v5096
      %5209 = vst.msk [vmem:[#allocation2 + $0x2d8] sm:$0xff] %vm1110, %v5097
      %5210 = vst [vmem:[#allocation2 + $0x2e0] sm:$0xff] %v5098
      %5211 = vst.msk [vmem:[#allocation2 + $0x2e8] sm:$0xff] %vm1110, %v5099
      %5212 = vst [vmem:[#allocation2 + $0x2f0] sm:$0xff] %v5100
      %5213 = vst.msk [vmem:[#allocation2 + $0x2f8] sm:$0xff] %vm1110, %v5101
      %5214 = vst [vmem:[#allocation2 + $0x300] sm:$0xff] %v5102
      %5215 = vst.msk [vmem:[#allocation2 + $0x308] sm:$0xff] %vm1110, %v5103
      %5216 = vst [vmem:[#allocation2 + $0x310] sm:$0xff] %v5104
      %5217 = vst.msk [vmem:[#allocation2 + $0x318] sm:$0xff] %vm1110, %v5105
      %5218 = vst [vmem:[#allocation2 + $0x320] sm:$0xff] %v5106
      %5219 = vst.msk [vmem:[#allocation2 + $0x328] sm:$0xff] %vm1110, %v5107
      %5220 = vst [vmem:[#allocation2 + $0x330] sm:$0xff] %v5108
      %5221 = vst.msk [vmem:[#allocation2 + $0x338] sm:$0xff] %vm1110, %v5109
      %5222 = vst [vmem:[#allocation2 + $0x340] sm:$0xff] %v5110
      %5223 = vst.msk [vmem:[#allocation2 + $0x348] sm:$0xff] %vm1110, %v5111
      %5224 = vst [vmem:[#allocation2 + $0x350] sm:$0xff] %v5112
      %5225 = vst.msk [vmem:[#allocation2 + $0x358] sm:$0xff] %vm1110, %v5113
      %5226 = vst [vmem:[#allocation2 + $0x360] sm:$0xff] %v5114
      %5227 = vst.msk [vmem:[#allocation2 + $0x368] sm:$0xff] %vm1110, %v5115
      %5228 = vst [vmem:[#allocation2 + $0x370] sm:$0xff] %v5116
      %5229 = vst.msk [vmem:[#allocation2 + $0x378] sm:$0xff] %vm1110, %v5117
      %v5230 = vld [vmem:[#allocation2] sm:$0xff]
      %v5231 = vld [vmem:[#allocation2 + $0x8] sm:$0xff]
      %v5232 = vld [vmem:[#allocation2 + $0x10] sm:$0xff]
      %v5233 = vld [vmem:[#allocation2 + $0x18] sm:$0xff]
      %v5234 = vld [vmem:[#allocation2 + $0x20] sm:$0xff]
      %v5235 = vld [vmem:[#allocation2 + $0x28] sm:$0xff]
      %v5236 = vld [vmem:[#allocation2 + $0x30] sm:$0xff]
      %v5237 = vld [vmem:[#allocation2 + $0x38] sm:$0xff]
      %v5238 = vmax.f32 %v5230, %v5234
      %v5239 = vmax.f32 %v5231, %v5235
      %v5240 = vmax.f32 %v5232, %v5236
      %v5241 = vmax.f32 %v5233, %v5237
      %5242 = vst [vmem:[#allocation3] sm:$0xff] %v5238
      %5243 = vst.msk [vmem:[#allocation3 + $0x8] sm:$0xff] %vm1110, %v5239
      %5244 = vst [vmem:[#allocation3 + $0x10] sm:$0xff] %v5240
      %5245 = vst.msk [vmem:[#allocation3 + $0x18] sm:$0xff] %vm1110, %v5241
      %v5246 = vld [vmem:[#allocation2 + $0x40] sm:$0xff]
      %v5247 = vld [vmem:[#allocation2 + $0x48] sm:$0xff]
      %v5248 = vld [vmem:[#allocation2 + $0x50] sm:$0xff]
      %v5249 = vld [vmem:[#allocation2 + $0x58] sm:$0xff]
      %v5250 = vld [vmem:[#allocation2 + $0x60] sm:$0xff]
      %v5251 = vld [vmem:[#allocation2 + $0x68] sm:$0xff]
      %v5252 = vld [vmem:[#allocation2 + $0x70] sm:$0xff]
      %v5253 = vld [vmem:[#allocation2 + $0x78] sm:$0xff]
      %v5254 = vmax.f32 %v5246, %v5250
      %v5255 = vmax.f32 %v5247, %v5251
      %v5256 = vmax.f32 %v5248, %v5252
      %v5257 = vmax.f32 %v5249, %v5253
      %5258 = vst [vmem:[#allocation3 + $0x20] sm:$0xff] %v5254
      %5259 = vst.msk [vmem:[#allocation3 + $0x28] sm:$0xff] %vm1110, %v5255
      %5260 = vst [vmem:[#allocation3 + $0x30] sm:$0xff] %v5256
      %5261 = vst.msk [vmem:[#allocation3 + $0x38] sm:$0xff] %vm1110, %v5257
      %v5262 = vld [vmem:[#allocation2 + $0x80] sm:$0xff]
      %v5263 = vld [vmem:[#allocation2 + $0x88] sm:$0xff]
      %v5264 = vld [vmem:[#allocation2 + $0x90] sm:$0xff]
      %v5265 = vld [vmem:[#allocation2 + $0x98] sm:$0xff]
      %v5266 = vld [vmem:[#allocation2 + $0xa0] sm:$0xff]
      %v5267 = vld [vmem:[#allocation2 + $0xa8] sm:$0xff]
      %v5268 = vld [vmem:[#allocation2 + $0xb0] sm:$0xff]
      %v5269 = vld [vmem:[#allocation2 + $0xb8] sm:$0xff]
      %v5270 = vmax.f32 %v5262, %v5266
      %v5271 = vmax.f32 %v5263, %v5267
      %v5272 = vmax.f32 %v5264, %v5268
      %v5273 = vmax.f32 %v5265, %v5269
      %5274 = vst [vmem:[#allocation3 + $0x40] sm:$0xff] %v5270
      %5275 = vst.msk [vmem:[#allocation3 + $0x48] sm:$0xff] %vm1110, %v5271
      %5276 = vst [vmem:[#allocation3 + $0x50] sm:$0xff] %v5272
      %5277 = vst.msk [vmem:[#allocation3 + $0x58] sm:$0xff] %vm1110, %v5273
      %v5278 = vld [vmem:[#allocation2 + $0xc0] sm:$0xff]
      %v5279 = vld [vmem:[#allocation2 + $0xc8] sm:$0xff]
      %v5280 = vld [vmem:[#allocation2 + $0xd0] sm:$0xff]
      %v5281 = vld [vmem:[#allocation2 + $0xd8] sm:$0xff]
      %v5282 = vld [vmem:[#allocation2 + $0xe0] sm:$0xff]
      %v5283 = vld [vmem:[#allocation2 + $0xe8] sm:$0xff]
      %v5284 = vld [vmem:[#allocation2 + $0xf0] sm:$0xff]
      %v5285 = vld [vmem:[#allocation2 + $0xf8] sm:$0xff]
      %v5286 = vmax.f32 %v5278, %v5282
      %v5287 = vmax.f32 %v5279, %v5283
      %v5288 = vmax.f32 %v5280, %v5284
      %v5289 = vmax.f32 %v5281, %v5285
      %5290 = vst [vmem:[#allocation3 + $0x60] sm:$0xff] %v5286
      %5291 = vst.msk [vmem:[#allocation3 + $0x68] sm:$0xff] %vm1110, %v5287
      %5292 = vst [vmem:[#allocation3 + $0x70] sm:$0xff] %v5288
      %5293 = vst.msk [vmem:[#allocation3 + $0x78] sm:$0xff] %vm1110, %v5289
      %v5294 = vld [vmem:[#allocation2 + $0x100] sm:$0xff]
      %v5295 = vld [vmem:[#allocation2 + $0x108] sm:$0xff]
      %v5296 = vld [vmem:[#allocation2 + $0x110] sm:$0xff]
      %v5297 = vld [vmem:[#allocation2 + $0x118] sm:$0xff]
      %v5298 = vld [vmem:[#allocation2 + $0x120] sm:$0xff]
      %v5299 = vld [vmem:[#allocation2 + $0x128] sm:$0xff]
      %v5300 = vld [vmem:[#allocation2 + $0x130] sm:$0xff]
      %v5301 = vld [vmem:[#allocation2 + $0x138] sm:$0xff]
      %v5302 = vmax.f32 %v5294, %v5298
      %v5303 = vmax.f32 %v5295, %v5299
      %v5304 = vmax.f32 %v5296, %v5300
      %v5305 = vmax.f32 %v5297, %v5301
      %5306 = vst [vmem:[#allocation3 + $0x80] sm:$0xff] %v5302
      %5307 = vst.msk [vmem:[#allocation3 + $0x88] sm:$0xff] %vm1110, %v5303
      %5308 = vst [vmem:[#allocation3 + $0x90] sm:$0xff] %v5304
      %5309 = vst.msk [vmem:[#allocation3 + $0x98] sm:$0xff] %vm1110, %v5305
      %v5310 = vld [vmem:[#allocation2 + $0x140] sm:$0xff]
      %v5311 = vld [vmem:[#allocation2 + $0x148] sm:$0xff]
      %v5312 = vld [vmem:[#allocation2 + $0x150] sm:$0xff]
      %v5313 = vld [vmem:[#allocation2 + $0x158] sm:$0xff]
      %v5314 = vld [vmem:[#allocation2 + $0x160] sm:$0xff]
      %v5315 = vld [vmem:[#allocation2 + $0x168] sm:$0xff]
      %v5316 = vld [vmem:[#allocation2 + $0x170] sm:$0xff]
      %v5317 = vld [vmem:[#allocation2 + $0x178] sm:$0xff]
      %v5318 = vmax.f32 %v5310, %v5314
      %v5319 = vmax.f32 %v5311, %v5315
      %v5320 = vmax.f32 %v5312, %v5316
      %v5321 = vmax.f32 %v5313, %v5317
      %5322 = vst [vmem:[#allocation3 + $0xa0] sm:$0xff] %v5318
      %5323 = vst.msk [vmem:[#allocation3 + $0xa8] sm:$0xff] %vm1110, %v5319
      %5324 = vst [vmem:[#allocation3 + $0xb0] sm:$0xff] %v5320
      %5325 = vst.msk [vmem:[#allocation3 + $0xb8] sm:$0xff] %vm1110, %v5321
      %v5326 = vld [vmem:[#allocation2 + $0x180] sm:$0xff]
      %v5327 = vld [vmem:[#allocation2 + $0x188] sm:$0xff]
      %v5328 = vld [vmem:[#allocation2 + $0x190] sm:$0xff]
      %v5329 = vld [vmem:[#allocation2 + $0x198] sm:$0xff]
      %v5330 = vld [vmem:[#allocation2 + $0x1a0] sm:$0xff]
      %v5331 = vld [vmem:[#allocation2 + $0x1a8] sm:$0xff]
      %v5332 = vld [vmem:[#allocation2 + $0x1b0] sm:$0xff]
      %v5333 = vld [vmem:[#allocation2 + $0x1b8] sm:$0xff]
      %v5334 = vmax.f32 %v5326, %v5330
      %v5335 = vmax.f32 %v5327, %v5331
      %v5336 = vmax.f32 %v5328, %v5332
      %v5337 = vmax.f32 %v5329, %v5333
      %5338 = vst [vmem:[#allocation3 + $0xc0] sm:$0xff] %v5334
      %5339 = vst.msk [vmem:[#allocation3 + $0xc8] sm:$0xff] %vm1110, %v5335
      %5340 = vst [vmem:[#allocation3 + $0xd0] sm:$0xff] %v5336
      %5341 = vst.msk [vmem:[#allocation3 + $0xd8] sm:$0xff] %vm1110, %v5337
      %v5342 = vld [vmem:[#allocation2 + $0x1c0] sm:$0xff]
      %v5343 = vld [vmem:[#allocation2 + $0x1c8] sm:$0xff]
      %v5344 = vld [vmem:[#allocation2 + $0x1d0] sm:$0xff]
      %v5345 = vld [vmem:[#allocation2 + $0x1d8] sm:$0xff]
      %v5346 = vld [vmem:[#allocation2 + $0x1e0] sm:$0xff]
      %v5347 = vld [vmem:[#allocation2 + $0x1e8] sm:$0xff]
      %v5348 = vld [vmem:[#allocation2 + $0x1f0] sm:$0xff]
      %v5349 = vld [vmem:[#allocation2 + $0x1f8] sm:$0xff]
      %v5350 = vmax.f32 %v5342, %v5346
      %v5351 = vmax.f32 %v5343, %v5347
      %v5352 = vmax.f32 %v5344, %v5348
      %v5353 = vmax.f32 %v5345, %v5349
      %5354 = vst [vmem:[#allocation3 + $0xe0] sm:$0xff] %v5350
      %5355 = vst.msk [vmem:[#allocation3 + $0xe8] sm:$0xff] %vm1110, %v5351
      %5356 = vst [vmem:[#allocation3 + $0xf0] sm:$0xff] %v5352
      %5357 = vst.msk [vmem:[#allocation3 + $0xf8] sm:$0xff] %vm1110, %v5353
      %v5358 = vld [vmem:[#allocation2 + $0x200] sm:$0xff]
      %v5359 = vld [vmem:[#allocation2 + $0x208] sm:$0xff]
      %v5360 = vld [vmem:[#allocation2 + $0x210] sm:$0xff]
      %v5361 = vld [vmem:[#allocation2 + $0x218] sm:$0xff]
      %v5362 = vld [vmem:[#allocation2 + $0x220] sm:$0xff]
      %v5363 = vld [vmem:[#allocation2 + $0x228] sm:$0xff]
      %v5364 = vld [vmem:[#allocation2 + $0x230] sm:$0xff]
      %v5365 = vld [vmem:[#allocation2 + $0x238] sm:$0xff]
      %v5366 = vmax.f32 %v5358, %v5362
      %v5367 = vmax.f32 %v5359, %v5363
      %v5368 = vmax.f32 %v5360, %v5364
      %v5369 = vmax.f32 %v5361, %v5365
      %5370 = vst [vmem:[#allocation3 + $0x100] sm:$0xff] %v5366
      %5371 = vst.msk [vmem:[#allocation3 + $0x108] sm:$0xff] %vm1110, %v5367
      %5372 = vst [vmem:[#allocation3 + $0x110] sm:$0xff] %v5368
      %5373 = vst.msk [vmem:[#allocation3 + $0x118] sm:$0xff] %vm1110, %v5369
      %v5374 = vld [vmem:[#allocation2 + $0x240] sm:$0xff]
      %v5375 = vld [vmem:[#allocation2 + $0x248] sm:$0xff]
      %v5376 = vld [vmem:[#allocation2 + $0x250] sm:$0xff]
      %v5377 = vld [vmem:[#allocation2 + $0x258] sm:$0xff]
      %v5378 = vld [vmem:[#allocation2 + $0x260] sm:$0xff]
      %v5379 = vld [vmem:[#allocation2 + $0x268] sm:$0xff]
      %v5380 = vld [vmem:[#allocation2 + $0x270] sm:$0xff]
      %v5381 = vld [vmem:[#allocation2 + $0x278] sm:$0xff]
      %v5382 = vmax.f32 %v5374, %v5378
      %v5383 = vmax.f32 %v5375, %v5379
      %v5384 = vmax.f32 %v5376, %v5380
      %v5385 = vmax.f32 %v5377, %v5381
      %5386 = vst [vmem:[#allocation3 + $0x120] sm:$0xff] %v5382
      %5387 = vst.msk [vmem:[#allocation3 + $0x128] sm:$0xff] %vm1110, %v5383
      %5388 = vst [vmem:[#allocation3 + $0x130] sm:$0xff] %v5384
      %5389 = vst.msk [vmem:[#allocation3 + $0x138] sm:$0xff] %vm1110, %v5385
      %v5390 = vld [vmem:[#allocation2 + $0x280] sm:$0xff]
      %v5391 = vld [vmem:[#allocation2 + $0x288] sm:$0xff]
      %v5392 = vld [vmem:[#allocation2 + $0x290] sm:$0xff]
      %v5393 = vld [vmem:[#allocation2 + $0x298] sm:$0xff]
      %v5394 = vld [vmem:[#allocation2 + $0x2a0] sm:$0xff]
      %v5395 = vld [vmem:[#allocation2 + $0x2a8] sm:$0xff]
      %v5396 = vld [vmem:[#allocation2 + $0x2b0] sm:$0xff]
      %v5397 = vld [vmem:[#allocation2 + $0x2b8] sm:$0xff]
      %v5398 = vmax.f32 %v5390, %v5394
      %v5399 = vmax.f32 %v5391, %v5395
      %v5400 = vmax.f32 %v5392, %v5396
      %v5401 = vmax.f32 %v5393, %v5397
      %5402 = vst [vmem:[#allocation3 + $0x140] sm:$0xff] %v5398
      %5403 = vst.msk [vmem:[#allocation3 + $0x148] sm:$0xff] %vm1110, %v5399
      %5404 = vst [vmem:[#allocation3 + $0x150] sm:$0xff] %v5400
      %5405 = vst.msk [vmem:[#allocation3 + $0x158] sm:$0xff] %vm1110, %v5401
      %v5406 = vld [vmem:[#allocation2 + $0x2c0] sm:$0xff]
      %v5407 = vld [vmem:[#allocation2 + $0x2c8] sm:$0xff]
      %v5408 = vld [vmem:[#allocation2 + $0x2d0] sm:$0xff]
      %v5409 = vld [vmem:[#allocation2 + $0x2d8] sm:$0xff]
      %v5410 = vld [vmem:[#allocation2 + $0x2e0] sm:$0xff]
      %v5411 = vld [vmem:[#allocation2 + $0x2e8] sm:$0xff]
      %v5412 = vld [vmem:[#allocation2 + $0x2f0] sm:$0xff]
      %v5413 = vld [vmem:[#allocation2 + $0x2f8] sm:$0xff]
      %v5414 = vmax.f32 %v5406, %v5410
      %v5415 = vmax.f32 %v5407, %v5411
      %v5416 = vmax.f32 %v5408, %v5412
      %v5417 = vmax.f32 %v5409, %v5413
      %5418 = vst [vmem:[#allocation3 + $0x160] sm:$0xff] %v5414
      %5419 = vst.msk [vmem:[#allocation3 + $0x168] sm:$0xff] %vm1110, %v5415
      %5420 = vst [vmem:[#allocation3 + $0x170] sm:$0xff] %v5416
      %5421 = vst.msk [vmem:[#allocation3 + $0x178] sm:$0xff] %vm1110, %v5417
      %v5422 = vld [vmem:[#allocation2 + $0x300] sm:$0xff]
      %v5423 = vld [vmem:[#allocation2 + $0x308] sm:$0xff]
      %v5424 = vld [vmem:[#allocation2 + $0x310] sm:$0xff]
      %v5425 = vld [vmem:[#allocation2 + $0x318] sm:$0xff]
      %v5426 = vld [vmem:[#allocation2 + $0x320] sm:$0xff]
      %v5427 = vld [vmem:[#allocation2 + $0x328] sm:$0xff]
      %v5428 = vld [vmem:[#allocation2 + $0x330] sm:$0xff]
      %v5429 = vld [vmem:[#allocation2 + $0x338] sm:$0xff]
      %v5430 = vmax.f32 %v5422, %v5426
      %v5431 = vmax.f32 %v5423, %v5427
      %v5432 = vmax.f32 %v5424, %v5428
      %v5433 = vmax.f32 %v5425, %v5429
      %5434 = vst [vmem:[#allocation3 + $0x180] sm:$0xff] %v5430
      %5435 = vst.msk [vmem:[#allocation3 + $0x188] sm:$0xff] %vm1110, %v5431
      %5436 = vst [vmem:[#allocation3 + $0x190] sm:$0xff] %v5432
      %5437 = vst.msk [vmem:[#allocation3 + $0x198] sm:$0xff] %vm1110, %v5433
      %v5438 = vld [vmem:[#allocation2 + $0x340] sm:$0xff]
      %v5439 = vld [vmem:[#allocation2 + $0x348] sm:$0xff]
      %v5440 = vld [vmem:[#allocation2 + $0x350] sm:$0xff]
      %v5441 = vld [vmem:[#allocation2 + $0x358] sm:$0xff]
      %v5442 = vld [vmem:[#allocation2 + $0x360] sm:$0xff]
      %v5443 = vld [vmem:[#allocation2 + $0x368] sm:$0xff]
      %v5444 = vld [vmem:[#allocation2 + $0x370] sm:$0xff]
      %v5445 = vld [vmem:[#allocation2 + $0x378] sm:$0xff]
      %v5446 = vmax.f32 %v5438, %v5442
      %v5447 = vmax.f32 %v5439, %v5443
      %v5448 = vmax.f32 %v5440, %v5444
      %v5449 = vmax.f32 %v5441, %v5445
      %5450 = vst [vmem:[#allocation3 + $0x1a0] sm:$0xff] %v5446
      %5451 = vst.msk [vmem:[#allocation3 + $0x1a8] sm:$0xff] %vm1110, %v5447
      %5452 = vst [vmem:[#allocation3 + $0x1b0] sm:$0xff] %v5448
      %5453 = vst.msk [vmem:[#allocation3 + $0x1b8] sm:$0xff] %vm1110, %v5449
      %v5454 = vld [vmem:[#allocation3] sm:$0xff]
      %v5455 = vld [vmem:[#allocation3 + $0x8] sm:$0xff]
      %v5456 = vld [vmem:[#allocation3 + $0x10] sm:$0xff]
      %v5457 = vld [vmem:[#allocation3 + $0x18] sm:$0xff]
      %v5458 = vld [vmem:[#allocation3 + $0x20] sm:$0xff]
      %v5459 = vld [vmem:[#allocation3 + $0x28] sm:$0xff]
      %v5460 = vld [vmem:[#allocation3 + $0x30] sm:$0xff]
      %v5461 = vld [vmem:[#allocation3 + $0x38] sm:$0xff]
      %v5462 = vld [vmem:[#allocation3 + $0x40] sm:$0xff]
      %v5463 = vld [vmem:[#allocation3 + $0x48] sm:$0xff]
      %v5464 = vld [vmem:[#allocation3 + $0x50] sm:$0xff]
      %v5465 = vld [vmem:[#allocation3 + $0x58] sm:$0xff]
      %v5466 = vld [vmem:[#allocation3 + $0x60] sm:$0xff]
      %v5467 = vld [vmem:[#allocation3 + $0x68] sm:$0xff]
      %v5468 = vld [vmem:[#allocation3 + $0x70] sm:$0xff]
      %v5469 = vld [vmem:[#allocation3 + $0x78] sm:$0xff]
      %v5470 = vld [vmem:[#allocation3 + $0x80] sm:$0xff]
      %v5471 = vld [vmem:[#allocation3 + $0x88] sm:$0xff]
      %v5472 = vld [vmem:[#allocation3 + $0x90] sm:$0xff]
      %v5473 = vld [vmem:[#allocation3 + $0x98] sm:$0xff]
      %v5474 = vld [vmem:[#allocation3 + $0xa0] sm:$0xff]
      %v5475 = vld [vmem:[#allocation3 + $0xa8] sm:$0xff]
      %v5476 = vld [vmem:[#allocation3 + $0xb0] sm:$0xff]
      %v5477 = vld [vmem:[#allocation3 + $0xb8] sm:$0xff]
      %v5478 = vld [vmem:[#allocation3 + $0xc0] sm:$0xff]
      %v5479 = vld [vmem:[#allocation3 + $0xc8] sm:$0xff]
      %v5480 = vld [vmem:[#allocation3 + $0xd0] sm:$0xff]
      %v5481 = vld [vmem:[#allocation3 + $0xd8] sm:$0xff]
      %v5482 = vld [vmem:[#allocation3 + $0xe0] sm:$0xff]
      %v5483 = vld [vmem:[#allocation3 + $0xe8] sm:$0xff]
      %v5484 = vld [vmem:[#allocation3 + $0xf0] sm:$0xff]
      %v5485 = vld [vmem:[#allocation3 + $0xf8] sm:$0xff]
      %v5486 = vld [vmem:[#allocation3 + $0x100] sm:$0xff]
      %v5487 = vld [vmem:[#allocation3 + $0x108] sm:$0xff]
      %v5488 = vld [vmem:[#allocation3 + $0x110] sm:$0xff]
      %v5489 = vld [vmem:[#allocation3 + $0x118] sm:$0xff]
      %v5490 = vld [vmem:[#allocation3 + $0x120] sm:$0xff]
      %v5491 = vld [vmem:[#allocation3 + $0x128] sm:$0xff]
      %v5492 = vld [vmem:[#allocation3 + $0x130] sm:$0xff]
      %v5493 = vld [vmem:[#allocation3 + $0x138] sm:$0xff]
      %v5494 = vld [vmem:[#allocation3 + $0x140] sm:$0xff]
      %v5495 = vld [vmem:[#allocation3 + $0x148] sm:$0xff]
      %v5496 = vld [vmem:[#allocation3 + $0x150] sm:$0xff]
      %v5497 = vld [vmem:[#allocation3 + $0x158] sm:$0xff]
      %v5498 = vld [vmem:[#allocation3 + $0x160] sm:$0xff]
      %v5499 = vld [vmem:[#allocation3 + $0x168] sm:$0xff]
      %v5500 = vld [vmem:[#allocation3 + $0x170] sm:$0xff]
      %v5501 = vld [vmem:[#allocation3 + $0x178] sm:$0xff]
      %v5502 = vld [vmem:[#allocation3 + $0x180] sm:$0xff]
      %v5503 = vld [vmem:[#allocation3 + $0x188] sm:$0xff]
      %v5504 = vld [vmem:[#allocation3 + $0x190] sm:$0xff]
      %v5505 = vld [vmem:[#allocation3 + $0x198] sm:$0xff]
      %v5506 = vld [vmem:[#allocation3 + $0x1a0] sm:$0xff]
      %v5507 = vld [vmem:[#allocation3 + $0x1a8] sm:$0xff]
      %v5508 = vld [vmem:[#allocation3 + $0x1b0] sm:$0xff]
      %v5509 = vld [vmem:[#allocation3 + $0x1b8] sm:$0xff]
      %5566 = vrot.lane.b32.xlu0 %v5454, 122
      %v5567 = vpop.permute.xlu0 %5566
      %5568 = vrot.lane.b32.xlu0 %v5455, 122
      %v5569 = vpop.permute.xlu0 %5568
      %5570 = vrot.lane.b32.xlu0 %v5456, 122
      %v5571 = vpop.permute.xlu0 %5570
      %5572 = vrot.lane.b32.xlu0 %v5457, 122
      %v5573 = vpop.permute.xlu0 %5572
      %5574 = vrot.lane.b32.xlu0 %v5458, 122
      %v5575 = vpop.permute.xlu0 %5574
      %5576 = vrot.lane.b32.xlu0 %v5459, 122
      %v5577 = vpop.permute.xlu0 %5576
      %5578 = vrot.lane.b32.xlu0 %v5460, 122
      %v5579 = vpop.permute.xlu0 %5578
      %5580 = vrot.lane.b32.xlu0 %v5461, 122
      %v5581 = vpop.permute.xlu0 %5580
      %5582 = vrot.lane.b32.xlu0 %v5462, 122
      %v5583 = vpop.permute.xlu0 %5582
      %5584 = vrot.lane.b32.xlu0 %v5463, 122
      %v5585 = vpop.permute.xlu0 %5584
      %5586 = vrot.lane.b32.xlu0 %v5464, 122
      %v5587 = vpop.permute.xlu0 %5586
      %5588 = vrot.lane.b32.xlu0 %v5465, 122
      %v5589 = vpop.permute.xlu0 %5588
      %5590 = vrot.lane.b32.xlu0 %v5466, 122
      %v5591 = vpop.permute.xlu0 %5590
      %5592 = vrot.lane.b32.xlu0 %v5467, 122
      %v5593 = vpop.permute.xlu0 %5592
      %5594 = vrot.lane.b32.xlu0 %v5468, 122
      %v5595 = vpop.permute.xlu0 %5594
      %5596 = vrot.lane.b32.xlu0 %v5469, 122
      %v5597 = vpop.permute.xlu0 %5596
      %5598 = vrot.lane.b32.xlu0 %v5470, 122
      %v5599 = vpop.permute.xlu0 %5598
      %5600 = vrot.lane.b32.xlu0 %v5471, 122
      %v5601 = vpop.permute.xlu0 %5600
      %5602 = vrot.lane.b32.xlu0 %v5472, 122
      %v5603 = vpop.permute.xlu0 %5602
      %5604 = vrot.lane.b32.xlu0 %v5473, 122
      %v5605 = vpop.permute.xlu0 %5604
      %5606 = vrot.lane.b32.xlu0 %v5474, 122
      %v5607 = vpop.permute.xlu0 %5606
      %5608 = vrot.lane.b32.xlu0 %v5475, 122
      %v5609 = vpop.permute.xlu0 %5608
      %5610 = vrot.lane.b32.xlu0 %v5476, 122
      %v5611 = vpop.permute.xlu0 %5610
      %5612 = vrot.lane.b32.xlu0 %v5477, 122
      %v5613 = vpop.permute.xlu0 %5612
      %5614 = vrot.lane.b32.xlu0 %v5478, 122
      %v5615 = vpop.permute.xlu0 %5614
      %5616 = vrot.lane.b32.xlu0 %v5479, 122
      %v5617 = vpop.permute.xlu0 %5616
      %5618 = vrot.lane.b32.xlu0 %v5480, 122
      %v5619 = vpop.permute.xlu0 %5618
      %5620 = vrot.lane.b32.xlu0 %v5481, 122
      %v5621 = vpop.permute.xlu0 %5620
      %5622 = vrot.lane.b32.xlu0 %v5482, 122
      %v5623 = vpop.permute.xlu0 %5622
      %5624 = vrot.lane.b32.xlu0 %v5483, 122
      %v5625 = vpop.permute.xlu0 %5624
      %5626 = vrot.lane.b32.xlu0 %v5484, 122
      %v5627 = vpop.permute.xlu0 %5626
      %5628 = vrot.lane.b32.xlu0 %v5485, 122
      %v5629 = vpop.permute.xlu0 %5628
      %5630 = vrot.lane.b32.xlu0 %v5486, 122
      %v5631 = vpop.permute.xlu0 %5630
      %5632 = vrot.lane.b32.xlu0 %v5487, 122
      %v5633 = vpop.permute.xlu0 %5632
      %5634 = vrot.lane.b32.xlu0 %v5488, 122
      %v5635 = vpop.permute.xlu0 %5634
      %5636 = vrot.lane.b32.xlu0 %v5489, 122
      %v5637 = vpop.permute.xlu0 %5636
      %5638 = vrot.lane.b32.xlu0 %v5490, 122
      %v5639 = vpop.permute.xlu0 %5638
      %5640 = vrot.lane.b32.xlu0 %v5491, 122
      %v5641 = vpop.permute.xlu0 %5640
      %5642 = vrot.lane.b32.xlu0 %v5492, 122
      %v5643 = vpop.permute.xlu0 %5642
      %5644 = vrot.lane.b32.xlu0 %v5493, 122
      %v5645 = vpop.permute.xlu0 %5644
      %5646 = vrot.lane.b32.xlu0 %v5494, 122
      %v5647 = vpop.permute.xlu0 %5646
      %5648 = vrot.lane.b32.xlu0 %v5495, 122
      %v5649 = vpop.permute.xlu0 %5648
      %5650 = vrot.lane.b32.xlu0 %v5496, 122
      %v5651 = vpop.permute.xlu0 %5650
      %5652 = vrot.lane.b32.xlu0 %v5497, 122
      %v5653 = vpop.permute.xlu0 %5652
      %5654 = vrot.lane.b32.xlu0 %v5498, 122
      %v5655 = vpop.permute.xlu0 %5654
      %5656 = vrot.lane.b32.xlu0 %v5499, 122
      %v5657 = vpop.permute.xlu0 %5656
      %5658 = vrot.lane.b32.xlu0 %v5500, 122
      %v5659 = vpop.permute.xlu0 %5658
      %5660 = vrot.lane.b32.xlu0 %v5501, 122
      %v5661 = vpop.permute.xlu0 %5660
      %5662 = vrot.lane.b32.xlu0 %v5502, 122
      %v5663 = vpop.permute.xlu0 %5662
      %5664 = vrot.lane.b32.xlu0 %v5503, 122
      %v5665 = vpop.permute.xlu0 %5664
      %5666 = vrot.lane.b32.xlu0 %v5504, 122
      %v5667 = vpop.permute.xlu0 %5666
      %5668 = vrot.lane.b32.xlu0 %v5505, 122
      %v5669 = vpop.permute.xlu0 %5668
      %5670 = vrot.lane.b32.xlu0 %v5506, 122
      %v5671 = vpop.permute.xlu0 %5670
      %5672 = vrot.lane.b32.xlu0 %v5507, 122
      %v5673 = vpop.permute.xlu0 %5672
      %5674 = vrot.lane.b32.xlu0 %v5508, 122
      %v5675 = vpop.permute.xlu0 %5674
      %5676 = vrot.lane.b32.xlu0 %v5509, 122
      %v5677 = vpop.permute.xlu0 %5676
      %vm5678 = vcmask 998400
      %v5679 = vsel %vm5678, %v5567, %v5569
      %v5680 = vsel %vm5678, %v5571, %v5573
      %v5681 = vsel %vm5678, %v5575, %v5577
      %v5682 = vsel %vm5678, %v5579, %v5581
      %v5683 = vsel %vm5678, %v5583, %v5585
      %v5684 = vsel %vm5678, %v5587, %v5589
      %v5685 = vsel %vm5678, %v5591, %v5593
      %v5686 = vsel %vm5678, %v5595, %v5597
      %v5687 = vsel %vm5678, %v5599, %v5601
      %v5688 = vsel %vm5678, %v5603, %v5605
      %v5689 = vsel %vm5678, %v5607, %v5609
      %v5690 = vsel %vm5678, %v5611, %v5613
      %v5691 = vsel %vm5678, %v5615, %v5617
      %v5692 = vsel %vm5678, %v5619, %v5621
      %v5693 = vsel %vm5678, %v5623, %v5625
      %v5694 = vsel %vm5678, %v5627, %v5629
      %v5695 = vsel %vm5678, %v5631, %v5633
      %v5696 = vsel %vm5678, %v5635, %v5637
      %v5697 = vsel %vm5678, %v5639, %v5641
      %v5698 = vsel %vm5678, %v5643, %v5645
      %v5699 = vsel %vm5678, %v5647, %v5649
      %v5700 = vsel %vm5678, %v5651, %v5653
      %v5701 = vsel %vm5678, %v5655, %v5657
      %v5702 = vsel %vm5678, %v5659, %v5661
      %v5703 = vsel %vm5678, %v5663, %v5665
      %v5704 = vsel %vm5678, %v5667, %v5669
      %v5705 = vsel %vm5678, %v5671, %v5673
      %v5706 = vsel %vm5678, %v5675, %v5677
      %v5763 = vmax.f32 %v5454, %v5679
      %v5764 = vmax.f32 %v5455, %v5569
      %v5765 = vmax.f32 %v5456, %v5680
      %v5766 = vmax.f32 %v5457, %v5573
      %v5767 = vmax.f32 %v5458, %v5681
      %v5768 = vmax.f32 %v5459, %v5577
      %v5769 = vmax.f32 %v5460, %v5682
      %v5770 = vmax.f32 %v5461, %v5581
      %v5771 = vmax.f32 %v5462, %v5683
      %v5772 = vmax.f32 %v5463, %v5585
      %v5773 = vmax.f32 %v5464, %v5684
      %v5774 = vmax.f32 %v5465, %v5589
      %v5775 = vmax.f32 %v5466, %v5685
      %v5776 = vmax.f32 %v5467, %v5593
      %v5777 = vmax.f32 %v5468, %v5686
      %v5778 = vmax.f32 %v5469, %v5597
      %v5779 = vmax.f32 %v5470, %v5687
      %v5780 = vmax.f32 %v5471, %v5601
      %v5781 = vmax.f32 %v5472, %v5688
      %v5782 = vmax.f32 %v5473, %v5605
      %v5783 = vmax.f32 %v5474, %v5689
      %v5784 = vmax.f32 %v5475, %v5609
      %v5785 = vmax.f32 %v5476, %v5690
      %v5786 = vmax.f32 %v5477, %v5613
      %v5787 = vmax.f32 %v5478, %v5691
      %v5788 = vmax.f32 %v5479, %v5617
      %v5789 = vmax.f32 %v5480, %v5692
      %v5790 = vmax.f32 %v5481, %v5621
      %v5791 = vmax.f32 %v5482, %v5693
      %v5792 = vmax.f32 %v5483, %v5625
      %v5793 = vmax.f32 %v5484, %v5694
      %v5794 = vmax.f32 %v5485, %v5629
      %v5795 = vmax.f32 %v5486, %v5695
      %v5796 = vmax.f32 %v5487, %v5633
      %v5797 = vmax.f32 %v5488, %v5696
      %v5798 = vmax.f32 %v5489, %v5637
      %v5799 = vmax.f32 %v5490, %v5697
      %v5800 = vmax.f32 %v5491, %v5641
      %v5801 = vmax.f32 %v5492, %v5698
      %v5802 = vmax.f32 %v5493, %v5645
      %v5803 = vmax.f32 %v5494, %v5699
      %v5804 = vmax.f32 %v5495, %v5649
      %v5805 = vmax.f32 %v5496, %v5700
      %v5806 = vmax.f32 %v5497, %v5653
      %v5807 = vmax.f32 %v5498, %v5701
      %v5808 = vmax.f32 %v5499, %v5657
      %v5809 = vmax.f32 %v5500, %v5702
      %v5810 = vmax.f32 %v5501, %v5661
      %v5811 = vmax.f32 %v5502, %v5703
      %v5812 = vmax.f32 %v5503, %v5665
      %v5813 = vmax.f32 %v5504, %v5704
      %v5814 = vmax.f32 %v5505, %v5669
      %v5815 = vmax.f32 %v5506, %v5705
      %v5816 = vmax.f32 %v5507, %v5673
      %v5817 = vmax.f32 %v5508, %v5706
      %v5818 = vmax.f32 %v5509, %v5677
      %v5819 = vpack.c.bf16 %v5765, %v5763
      %v5820 = vpack.c.bf16 %v5766, %v5764
      %v5821 = vpack.c.bf16 %v5769, %v5767
      %v5822 = vpack.c.bf16 %v5770, %v5768
      %v5823 = vpack.c.bf16 %v5773, %v5771
      %v5824 = vpack.c.bf16 %v5774, %v5772
      %v5825 = vpack.c.bf16 %v5777, %v5775
      %v5826 = vpack.c.bf16 %v5778, %v5776
      %v5827 = vpack.c.bf16 %v5781, %v5779
      %v5828 = vpack.c.bf16 %v5782, %v5780
      %v5829 = vpack.c.bf16 %v5785, %v5783
      %v5830 = vpack.c.bf16 %v5786, %v5784
      %v5831 = vpack.c.bf16 %v5789, %v5787
      %v5832 = vpack.c.bf16 %v5790, %v5788
      %v5833 = vpack.c.bf16 %v5793, %v5791
      %v5834 = vpack.c.bf16 %v5794, %v5792
      %v5835 = vpack.c.bf16 %v5797, %v5795
      %v5836 = vpack.c.bf16 %v5798, %v5796
      %v5837 = vpack.c.bf16 %v5801, %v5799
      %v5838 = vpack.c.bf16 %v5802, %v5800
      %v5839 = vpack.c.bf16 %v5805, %v5803
      %v5840 = vpack.c.bf16 %v5806, %v5804
      %v5841 = vpack.c.bf16 %v5809, %v5807
      %v5842 = vpack.c.bf16 %v5810, %v5808
      %v5843 = vpack.c.bf16 %v5813, %v5811
      %v5844 = vpack.c.bf16 %v5814, %v5812
      %v5845 = vpack.c.bf16 %v5817, %v5815
      %v5846 = vpack.c.bf16 %v5818, %v5816
      %v5847 = vld [vmem:[%s2] sm:$0xf]
      %v5848 = vld [vmem:[%s2 + $0x4] sm:$0xf]
      %v5849 = vld [vmem:[%s2 + $0x8] sm:$0xf]
      %v5850 = vld [vmem:[%s2 + $0xc] sm:$0xf]
      %v5851 = vld [vmem:[%s2 + $0x10] sm:$0xf]
      %v5852 = vld [vmem:[%s2 + $0x14] sm:$0xf]
      %v5853 = vld [vmem:[%s2 + $0x18] sm:$0xf]
      %v5854 = vld [vmem:[%s2 + $0x1c] sm:$0xf]
      %v5855 = vld [vmem:[%s2 + $0x20] sm:$0xf]
      %v5856 = vld [vmem:[%s2 + $0x24] sm:$0xf]
      %v5857 = vld [vmem:[%s2 + $0x28] sm:$0xf]
      %v5858 = vld [vmem:[%s2 + $0x2c] sm:$0xf]
      %v5859 = vld [vmem:[%s2 + $0x30] sm:$0xf]
      %v5860 = vld [vmem:[%s2 + $0x34] sm:$0xf]
      %v5861 = vld [vmem:[%s2 + $0x38] sm:$0xf]
      %v5862 = vld [vmem:[%s2 + $0x3c] sm:$0xf]
      %v5863 = vld [vmem:[%s2 + $0x40] sm:$0xf]
      %v5864 = vld [vmem:[%s2 + $0x44] sm:$0xf]
      %v5865 = vld [vmem:[%s2 + $0x48] sm:$0xf]
      %v5866 = vld [vmem:[%s2 + $0x4c] sm:$0xf]
      %v5867 = vld [vmem:[%s2 + $0x50] sm:$0x1]
      %v5868 = vld [vmem:[%s3] sm:$0x1]
      %v5870 = vlaneseq
      %v5871 = vshrl.u32 %v5870, 7
      %v5872 = vsub.s32 0, %v5871
      %v5873 = vrot.slane %v5868, %v5872
      %v5896 = vunpack.c.l.b16 %v5847
      %v5897 = vunpack.c.l.b16 %v5848
      %v5898 = vunpack.c.l.b16 %v5849
      %v5899 = vunpack.c.l.b16 %v5850
      %v5900 = vunpack.c.l.b16 %v5851
      %v5901 = vunpack.c.l.b16 %v5852
      %v5902 = vunpack.c.l.b16 %v5853
      %v5903 = vunpack.c.l.b16 %v5854
      %v5904 = vunpack.c.l.b16 %v5855
      %v5905 = vunpack.c.l.b16 %v5856
      %v5906 = vunpack.c.l.b16 %v5857
      %v5907 = vunpack.c.l.b16 %v5858
      %v5908 = vunpack.c.l.b16 %v5859
      %v5909 = vunpack.c.l.b16 %v5860
      %v5910 = vunpack.c.l.b16 %v5861
      %v5911 = vunpack.c.l.b16 %v5862
      %v5912 = vunpack.c.l.b16 %v5863
      %v5913 = vunpack.c.l.b16 %v5864
      %v5914 = vunpack.c.l.b16 %v5865
      %v5915 = vunpack.c.l.b16 %v5866
      %v5916 = vunpack.c.l.b16 %v5867
      %v5917 = vpack.c.b16 %v5897, %v5896
      %v5918 = vpack.c.b16 %v5899, %v5898
      %v5919 = vpack.c.b16 %v5901, %v5900
      %v5920 = vpack.c.b16 %v5903, %v5902
      %v5921 = vpack.c.b16 %v5905, %v5904
      %v5922 = vpack.c.b16 %v5907, %v5906
      %v5923 = vpack.c.b16 %v5909, %v5908
      %v5924 = vpack.c.b16 %v5911, %v5910
      %v5925 = vpack.c.b16 %v5913, %v5912
      %v5926 = vpack.c.b16 %v5915, %v5914
      %v5927 = vpack.c.b16 %v5916, %v5916
      %vm5938 = vcmask 277504
      %v5940 = vsel %vm5938, %v5820, 0
      %v5943 = vsel %vm5938, %v5822, 0
      %v5946 = vsel %vm5938, %v5824, 0
      %v5949 = vsel %vm5938, %v5826, 0
      %v5952 = vsel %vm5938, %v5828, 0
      %v5955 = vsel %vm5938, %v5830, 0
      %v5958 = vsel %vm5938, %v5832, 0
      %v5961 = vsel %vm5938, %v5834, 0
      %v5964 = vsel %vm5938, %v5836, 0
      %v5967 = vsel %vm5938, %v5838, 0
      %v5970 = vsel %vm5938, %v5840, 0
      %v5973 = vsel %vm5938, %v5842, 0
      %v5976 = vsel %vm5938, %v5844, 0
      %v5979 = vsel %vm5938, %v5846, 0
      %vm5981 = vcmask 1040384
      %v5983 = vsel %vm5981, %v5927, 0
      %5985 = vmatprep.subr.bf16.mxu0 0
      %5986 = vmatpush1.bf16.msra.mxu0 %v5917
      %5987 = vmatprep.subr.bf16.mxu0 0
      %5988 = vmatpush1.bf16.msra.mxu0 %v5918
      %5989 = vmatprep.subr.bf16.mxu0 0
      %5990 = vmatpush1.bf16.msra.mxu0 %v5919
      %5991 = vmatprep.subr.bf16.mxu0 0
      %5992 = vmatpush1.bf16.msra.mxu0 %v5920
      %5993 = vmatprep.subr.bf16.mxu0 0
      %5994 = vmatpush1.bf16.msra.mxu0 %v5921
      %5995 = vmatprep.subr.bf16.mxu0 0
      %5996 = vmatpush1.bf16.msra.mxu0 %v5922
      %5997 = vmatprep.subr.bf16.mxu0 0
      %5998 = vmatpush1.bf16.msra.mxu0 %v5923
      %5999 = vmatprep.subr.bf16.mxu0 0
      %6000 = vmatpush1.bf16.msra.mxu0 %v5924
      %6001 = vmatprep.subr.bf16.mxu0 0
      %6002 = vmatpush1.bf16.msra.mxu0 %v5925
      %6003 = vmatprep.subr.bf16.mxu0 0
      %6004 = vmatpush1.bf16.msra.mxu0 %v5926
      %6005 = vmatprep.subr.bf16.mxu0 0
      %6006 = vmatpush1.bf16.msra.mxu0 %v5983
      %6007 = vmatprep.subr.bf16.mxu0 0
      %6008 = vmatpush1.bf16.msra.mxu0 0
      %6009 = vmatprep.subr.bf16.mxu0 0
      %6010 = vmatpush1.bf16.msra.mxu0 0
      %6011 = vmatprep.subr.bf16.mxu0 0
      %6012 = vmatpush1.bf16.msra.mxu0 0
      %6013 = vmatprep.subr.bf16.mxu0 0
      %6014 = vmatpush1.bf16.msra.mxu0 0
      %6015 = vmatprep.subr.bf16.mxu0 0
      %6016 = vmatpush1.bf16.msra.mxu0 0
      %6017 = vmatprep.mubr.bf16.mxu0 %v5940
      %6018 = vmatmul.mubr.bf16.gmra.mrb[0].mxu0 %v5819
      %v6019 = vpop.f32.mrb[0].mxu0
      %v6020 = vadd.f32 %v5873, %v6019
      %v6021 = vpop.f32.mrb[0].mxu0
      %v6022 = vpop.f32.mrb[0].mxu0
      %v6023 = vadd.f32 %v5873, %v6022
      %v6024 = vpop.f32.mrb[0].mxu0
      %6025 = vmatprep.mubr.bf16.mxu0 %v5943
      %6026 = vmatmul.mubr.bf16.gmra.mrb[0].mxu0 %v5821
      %v6027 = vpop.f32.mrb[0].mxu0
      %v6028 = vadd.f32 %v5873, %v6027
      %v6029 = vpop.f32.mrb[0].mxu0
      %v6030 = vpop.f32.mrb[0].mxu0
      %v6031 = vadd.f32 %v5873, %v6030
      %v6032 = vpop.f32.mrb[0].mxu0
      %6033 = vmatprep.mubr.bf16.mxu0 %v5946
      %6034 = vmatmul.mubr.bf16.gmra.mrb[0].mxu0 %v5823
      %v6035 = vpop.f32.mrb[0].mxu0
      %v6036 = vadd.f32 %v5873, %v6035
      %v6037 = vpop.f32.mrb[0].mxu0
      %v6038 = vpop.f32.mrb[0].mxu0
      %v6039 = vadd.f32 %v5873, %v6038
      %v6040 = vpop.f32.mrb[0].mxu0
      %6041 = vmatprep.mubr.bf16.mxu0 %v5949
      %6042 = vmatmul.mubr.bf16.gmra.mrb[0].mxu0 %v5825
      %v6043 = vpop.f32.mrb[0].mxu0
      %v6044 = vadd.f32 %v5873, %v6043
      %v6045 = vpop.f32.mrb[0].mxu0
      %v6046 = vpop.f32.mrb[0].mxu0
      %v6047 = vadd.f32 %v5873, %v6046
      %v6048 = vpop.f32.mrb[0].mxu0
      %6049 = vmatprep.mubr.bf16.mxu0 %v5952
      %6050 = vmatmul.mubr.bf16.gmra.mrb[0].mxu0 %v5827
      %v6051 = vpop.f32.mrb[0].mxu0
      %v6052 = vadd.f32 %v5873, %v6051
      %v6053 = vpop.f32.mrb[0].mxu0
      %v6054 = vpop.f32.mrb[0].mxu0
      %v6055 = vadd.f32 %v5873, %v6054
      %v6056 = vpop.f32.mrb[0].mxu0
      %6057 = vmatprep.mubr.bf16.mxu0 %v5955
      %6058 = vmatmul.mubr.bf16.gmra.mrb[0].mxu0 %v5829
      %v6059 = vpop.f32.mrb[0].mxu0
      %v6060 = vadd.f32 %v5873, %v6059
      %v6061 = vpop.f32.mrb[0].mxu0
      %v6062 = vpop.f32.mrb[0].mxu0
      %v6063 = vadd.f32 %v5873, %v6062
      %v6064 = vpop.f32.mrb[0].mxu0
      %6065 = vmatprep.mubr.bf16.mxu0 %v5958
      %6066 = vmatmul.mubr.bf16.gmra.mrb[0].mxu0 %v5831
      %v6067 = vpop.f32.mrb[0].mxu0
      %v6068 = vadd.f32 %v5873, %v6067
      %v6069 = vpop.f32.mrb[0].mxu0
      %v6070 = vpop.f32.mrb[0].mxu0
      %v6071 = vadd.f32 %v5873, %v6070
      %v6072 = vpop.f32.mrb[0].mxu0
      %6073 = vmatprep.mubr.bf16.mxu0 %v5961
      %6074 = vmatmul.mubr.bf16.gmra.mrb[0].mxu0 %v5833
      %v6075 = vpop.f32.mrb[0].mxu0
      %v6076 = vadd.f32 %v5873, %v6075
      %v6077 = vpop.f32.mrb[0].mxu0
      %v6078 = vpop.f32.mrb[0].mxu0
      %v6079 = vadd.f32 %v5873, %v6078
      %v6080 = vpop.f32.mrb[0].mxu0
      %6081 = vmatprep.mubr.bf16.mxu0 %v5964
      %6082 = vmatmul.mubr.bf16.gmra.mrb[0].mxu0 %v5835
      %v6083 = vpop.f32.mrb[0].mxu0
      %v6084 = vadd.f32 %v5873, %v6083
      %v6085 = vpop.f32.mrb[0].mxu0
      %v6086 = vpop.f32.mrb[0].mxu0
      %v6087 = vadd.f32 %v5873, %v6086
      %v6088 = vpop.f32.mrb[0].mxu0
      %6089 = vmatprep.mubr.bf16.mxu0 %v5967
      %6090 = vmatmul.mubr.bf16.gmra.mrb[0].mxu0 %v5837
      %v6091 = vpop.f32.mrb[0].mxu0
      %v6092 = vadd.f32 %v5873, %v6091
      %v6093 = vpop.f32.mrb[0].mxu0
      %v6094 = vpop.f32.mrb[0].mxu0
      %v6095 = vadd.f32 %v5873, %v6094
      %v6096 = vpop.f32.mrb[0].mxu0
      %6097 = vmatprep.mubr.bf16.mxu0 %v5970
      %6098 = vmatmul.mubr.bf16.gmra.mrb[0].mxu0 %v5839
      %v6099 = vpop.f32.mrb[0].mxu0
      %v6100 = vadd.f32 %v5873, %v6099
      %v6101 = vpop.f32.mrb[0].mxu0
      %v6102 = vpop.f32.mrb[0].mxu0
      %v6103 = vadd.f32 %v5873, %v6102
      %v6104 = vpop.f32.mrb[0].mxu0
      %6105 = vmatprep.mubr.bf16.mxu0 %v5973
      %6106 = vmatmul.mubr.bf16.gmra.mrb[0].mxu0 %v5841
      %v6107 = vpop.f32.mrb[0].mxu0
      %v6108 = vadd.f32 %v5873, %v6107
      %v6109 = vpop.f32.mrb[0].mxu0
      %v6110 = vpop.f32.mrb[0].mxu0
      %v6111 = vadd.f32 %v5873, %v6110
      %v6112 = vpop.f32.mrb[0].mxu0
      %6113 = vmatprep.mubr.bf16.mxu0 %v5976
      %6114 = vmatmul.mubr.bf16.gmra.mrb[0].mxu0 %v5843
      %v6115 = vpop.f32.mrb[0].mxu0
      %v6116 = vadd.f32 %v5873, %v6115
      %v6117 = vpop.f32.mrb[0].mxu0
      %v6118 = vpop.f32.mrb[0].mxu0
      %v6119 = vadd.f32 %v5873, %v6118
      %v6120 = vpop.f32.mrb[0].mxu0
      %6121 = vmatprep.mubr.bf16.mxu0 %v5979
      %6122 = vmatmul.mubr.bf16.gmra.mrb[0].mxu0 %v5845
      %v6123 = vpop.f32.mrb[0].mxu0
      %v6124 = vadd.f32 %v5873, %v6123
      %v6125 = vpop.f32.mrb[0].mxu0
      %v6126 = vpop.f32.mrb[0].mxu0
      %v6127 = vadd.f32 %v5873, %v6126
      %v6128 = vpop.f32.mrb[0].mxu0
      %6129 = vdwg.mxu0
      %v6130 = vmax.f32 %v6020, 0.0
      %v6131 = vmax.f32 %v6023, 0.0
      %v6132 = vmax.f32 %v6028, 0.0
      %v6133 = vmax.f32 %v6031, 0.0
      %v6134 = vmax.f32 %v6036, 0.0
      %v6135 = vmax.f32 %v6039, 0.0
      %v6136 = vmax.f32 %v6044, 0.0
      %v6137 = vmax.f32 %v6047, 0.0
      %v6138 = vmax.f32 %v6052, 0.0
      %v6139 = vmax.f32 %v6055, 0.0
      %v6140 = vmax.f32 %v6060, 0.0
      %v6141 = vmax.f32 %v6063, 0.0
      %v6142 = vmax.f32 %v6068, 0.0
      %v6143 = vmax.f32 %v6071, 0.0
      %v6144 = vmax.f32 %v6076, 0.0
      %v6145 = vmax.f32 %v6079, 0.0
      %v6146 = vmax.f32 %v6084, 0.0
      %v6147 = vmax.f32 %v6087, 0.0
      %v6148 = vmax.f32 %v6092, 0.0
      %v6149 = vmax.f32 %v6095, 0.0
      %v6150 = vmax.f32 %v6100, 0.0
      %v6151 = vmax.f32 %v6103, 0.0
      %v6152 = vmax.f32 %v6108, 0.0
      %v6153 = vmax.f32 %v6111, 0.0
      %v6154 = vmax.f32 %v6116, 0.0
      %v6155 = vmax.f32 %v6119, 0.0
      %v6156 = vmax.f32 %v6124, 0.0
      %v6157 = vmax.f32 %v6127, 0.0
      %v6158 = vpack.c.bf16 %v6131, %v6130
      %v6159 = vpack.c.bf16 %v6133, %v6132
      %v6160 = vpack.c.bf16 %v6135, %v6134
      %v6161 = vpack.c.bf16 %v6137, %v6136
      %v6162 = vpack.c.bf16 %v6139, %v6138
      %v6163 = vpack.c.bf16 %v6141, %v6140
      %v6164 = vpack.c.bf16 %v6143, %v6142
      %v6165 = vpack.c.bf16 %v6145, %v6144
      %v6166 = vpack.c.bf16 %v6147, %v6146
      %v6167 = vpack.c.bf16 %v6149, %v6148
      %v6168 = vpack.c.bf16 %v6151, %v6150
      %v6169 = vpack.c.bf16 %v6153, %v6152
      %v6170 = vpack.c.bf16 %v6155, %v6154
      %v6171 = vpack.c.bf16 %v6157, %v6156
      %vm6172 = vcmask 687104
      %6173 = vst.msk [vmem:[#allocation4] sm:$0xff] %vm6172, %v6158
      %6174 = vst.msk [vmem:[#allocation4 + $0x8] sm:$0xff] %vm6172, %v6159
      %6175 = vst.msk [vmem:[#allocation4 + $0x10] sm:$0xff] %vm6172, %v6160
      %6176 = vst.msk [vmem:[#allocation4 + $0x18] sm:$0xff] %vm6172, %v6161
      %6177 = vst.msk [vmem:[#allocation4 + $0x20] sm:$0xff] %vm6172, %v6162
      %6178 = vst.msk [vmem:[#allocation4 + $0x28] sm:$0xff] %vm6172, %v6163
      %6179 = vst.msk [vmem:[#allocation4 + $0x30] sm:$0xff] %vm6172, %v6164
      %6180 = vst.msk [vmem:[#allocation4 + $0x38] sm:$0xff] %vm6172, %v6165
      %6181 = vst.msk [vmem:[#allocation4 + $0x40] sm:$0xff] %vm6172, %v6166
      %6182 = vst.msk [vmem:[#allocation4 + $0x48] sm:$0xff] %vm6172, %v6167
      %6183 = vst.msk [vmem:[#allocation4 + $0x50] sm:$0xff] %vm6172, %v6168
      %6184 = vst.msk [vmem:[#allocation4 + $0x58] sm:$0xff] %vm6172, %v6169
      %6185 = vst.msk [vmem:[#allocation4 + $0x60] sm:$0xff] %vm6172, %v6170
      %6186 = vst.msk [vmem:[#allocation4 + $0x68] sm:$0xff] %vm6172, %v6171
      %v6187 = vld [vmem:[#allocation4] sm:$0xff]
      %v6188 = vld [vmem:[#allocation4 + $0x8] sm:$0xff]
      %v6189 = vld [vmem:[#allocation4 + $0x10] sm:$0xff]
      %v6190 = vld [vmem:[#allocation4 + $0x18] sm:$0xff]
      %v6191 = vld [vmem:[#allocation4 + $0x20] sm:$0xff]
      %v6192 = vld [vmem:[#allocation4 + $0x28] sm:$0xff]
      %v6193 = vld [vmem:[#allocation4 + $0x30] sm:$0xff]
      %v6194 = vld [vmem:[#allocation4 + $0x38] sm:$0xff]
      %v6195 = vld [vmem:[#allocation4 + $0x40] sm:$0xff]
      %v6196 = vld [vmem:[#allocation4 + $0x48] sm:$0xff]
      %v6197 = vld [vmem:[%s4] sm:$0xff]
      %v6198 = vld [vmem:[%s4 + $0x8] sm:$0xff]
      %v6199 = vld [vmem:[%s4 + $0x10] sm:$0xff]
      %v6200 = vld [vmem:[%s4 + $0x18] sm:$0xff]
      %v6201 = vld [vmem:[%s4 + $0x20] sm:$0xff]
      %v6202 = vld [vmem:[%s4 + $0x28] sm:$0xff]
      %v6203 = vld [vmem:[%s4 + $0x30] sm:$0xff]
      %v6204 = vld [vmem:[%s4 + $0x38] sm:$0xff]
      %v6205 = vld [vmem:[%s4 + $0x40] sm:$0xff]
      %v6206 = vld [vmem:[%s4 + $0x48] sm:$0xff]
      %v6207 = vld [vmem:[%s4 + $0x50] sm:$0x33]
      %v6219 = vunpack.c.l.b16 %v6197
      %v6220 = vunpack.c.h.b16 %v6197
      %v6221 = vunpack.c.l.b16 %v6198
      %v6222 = vunpack.c.h.b16 %v6198
      %v6223 = vunpack.c.l.b16 %v6199
      %v6224 = vunpack.c.h.b16 %v6199
      %v6225 = vunpack.c.l.b16 %v6200
      %v6226 = vunpack.c.h.b16 %v6200
      %v6227 = vunpack.c.l.b16 %v6201
      %v6228 = vunpack.c.h.b16 %v6201
      %v6229 = vunpack.c.l.b16 %v6202
      %v6230 = vunpack.c.h.b16 %v6202
      %v6231 = vunpack.c.l.b16 %v6203
      %v6232 = vunpack.c.h.b16 %v6203
      %v6233 = vunpack.c.l.b16 %v6204
      %v6234 = vunpack.c.h.b16 %v6204
      %v6235 = vunpack.c.l.b16 %v6205
      %v6236 = vunpack.c.h.b16 %v6205
      %v6237 = vunpack.c.l.b16 %v6206
      %v6238 = vunpack.c.h.b16 %v6206
      %v6239 = vunpack.c.l.b16 %v6207
      %v6240 = vunpack.c.h.b16 %v6207
      %v6241 = vpack.c.b16 %v6221, %v6219
      %v6242 = vpack.c.b16 %v6222, %v6220
      %v6243 = vpack.c.b16 %v6225, %v6223
      %v6244 = vpack.c.b16 %v6226, %v6224
      %v6245 = vpack.c.b16 %v6229, %v6227
      %v6246 = vpack.c.b16 %v6230, %v6228
      %v6247 = vpack.c.b16 %v6233, %v6231
      %v6248 = vpack.c.b16 %v6234, %v6232
      %v6249 = vpack.c.b16 %v6237, %v6235
      %v6250 = vpack.c.b16 %v6238, %v6236
      %v6251 = vpack.c.b16 %v6239, %v6239
      %v6252 = vpack.c.b16 %v6240, %v6240
      %v6264 = vsel %vm6172, %v6187, 0
      %v6267 = vsel %vm6172, %v6188, 0
      %v6270 = vsel %vm6172, %v6189, 0
      %v6273 = vsel %vm6172, %v6190, 0
      %v6276 = vsel %vm6172, %v6191, 0
      %v6279 = vsel %vm6172, %v6192, 0
      %v6282 = vsel %vm6172, %v6193, 0
      %v6285 = vsel %vm6172, %v6194, 0
      %v6288 = vsel %vm6172, %v6195, 0
      %v6291 = vsel %vm6172, %v6196, 0
      %vm6293 = vcmask 1041408
      %v6295 = vsel %vm6293, %v6251, 0
      %v6298 = vsel %vm6293, %v6252, 0
      %6300 = vmatprep.subr.bf16.mxu0 %v6242
      %6301 = vmatpush1.bf16.msra.mxu0 %v6241
      %6302 = vmatprep.subr.bf16.mxu0 %v6244
      %6303 = vmatpush1.bf16.msra.mxu0 %v6243
      %6304 = vmatprep.subr.bf16.mxu0 %v6246
      %6305 = vmatpush1.bf16.msra.mxu0 %v6245
      %6306 = vmatprep.subr.bf16.mxu0 %v6248
      %6307 = vmatpush1.bf16.msra.mxu0 %v6247
      %6308 = vmatprep.subr.bf16.mxu0 %v6250
      %6309 = vmatpush1.bf16.msra.mxu0 %v6249
      %6310 = vmatprep.subr.bf16.mxu0 %v6298
      %6311 = vmatpush1.bf16.msra.mxu0 %v6295
      %6312 = vmatprep.subr.bf16.mxu0 0
      %6313 = vmatpush1.bf16.msra.mxu0 0
      %6314 = vmatprep.subr.bf16.mxu0 0
      %6315 = vmatpush1.bf16.msra.mxu0 0
      %6316 = vmatprep.subr.bf16.mxu0 0
      %6317 = vmatpush1.bf16.msra.mxu0 0
      %6318 = vmatprep.subr.bf16.mxu0 0
      %6319 = vmatpush1.bf16.msra.mxu0 0
      %6320 = vmatprep.subr.bf16.mxu0 0
      %6321 = vmatpush1.bf16.msra.mxu0 0
      %6322 = vmatprep.subr.bf16.mxu0 0
      %6323 = vmatpush1.bf16.msra.mxu0 0
      %6324 = vmatprep.subr.bf16.mxu0 0
      %6325 = vmatpush1.bf16.msra.mxu0 0
      %6326 = vmatprep.subr.bf16.mxu0 0
      %6327 = vmatpush1.bf16.msra.mxu0 0
      %6328 = vmatprep.subr.bf16.mxu0 0
      %6329 = vmatpush1.bf16.msra.mxu0 0
      %6330 = vmatprep.subr.bf16.mxu0 0
      %6331 = vmatpush1.bf16.msra.mxu0 0
      %6332 = vmatprep.mubr.bf16.mxu0 0
      %6333 = vmatmul.mubr.bf16.gmra.mrb[0].mxu0 %v6264
      %v6334 = vpop.f32.mrb[0].mxu0
      %v6335 = vadd.f32 0.0, %v6334
      %v6336 = vpop.f32.mrb[0].mxu0
      %v6337 = vadd.f32 0.0, %v6336
      %v6338 = vpop.f32.mrb[0].mxu0
      %v6339 = vadd.f32 0.0, %v6338
      %v6340 = vpop.f32.mrb[0].mxu0
      %v6341 = vadd.f32 0.0, %v6340
      %6342 = vmatprep.mubr.bf16.mxu0 0
      %6343 = vmatmul.mubr.bf16.gmra.mrb[0].mxu0 %v6267
      %v6344 = vpop.f32.mrb[0].mxu0
      %v6345 = vadd.f32 0.0, %v6344
      %v6346 = vpop.f32.mrb[0].mxu0
      %v6347 = vadd.f32 0.0, %v6346
      %v6348 = vpop.f32.mrb[0].mxu0
      %v6349 = vadd.f32 0.0, %v6348
      %v6350 = vpop.f32.mrb[0].mxu0
      %v6351 = vadd.f32 0.0, %v6350
      %6352 = vmatprep.mubr.bf16.mxu0 0
      %6353 = vmatmul.mubr.bf16.gmra.mrb[0].mxu0 %v6270
      %v6354 = vpop.f32.mrb[0].mxu0
      %v6355 = vadd.f32 0.0, %v6354
      %v6356 = vpop.f32.mrb[0].mxu0
      %v6357 = vadd.f32 0.0, %v6356
      %v6358 = vpop.f32.mrb[0].mxu0
      %v6359 = vadd.f32 0.0, %v6358
      %v6360 = vpop.f32.mrb[0].mxu0
      %v6361 = vadd.f32 0.0, %v6360
      %6362 = vmatprep.mubr.bf16.mxu0 0
      %6363 = vmatmul.mubr.bf16.gmra.mrb[0].mxu0 %v6273
      %v6364 = vpop.f32.mrb[0].mxu0
      %v6365 = vadd.f32 0.0, %v6364
      %v6366 = vpop.f32.mrb[0].mxu0
      %v6367 = vadd.f32 0.0, %v6366
      %v6368 = vpop.f32.mrb[0].mxu0
      %v6369 = vadd.f32 0.0, %v6368
      %v6370 = vpop.f32.mrb[0].mxu0
      %v6371 = vadd.f32 0.0, %v6370
      %6372 = vmatprep.mubr.bf16.mxu0 0
      %6373 = vmatmul.mubr.bf16.gmra.mrb[0].mxu0 %v6276
      %v6374 = vpop.f32.mrb[0].mxu0
      %v6375 = vadd.f32 0.0, %v6374
      %v6376 = vpop.f32.mrb[0].mxu0
      %v6377 = vadd.f32 0.0, %v6376
      %v6378 = vpop.f32.mrb[0].mxu0
      %v6379 = vadd.f32 0.0, %v6378
      %v6380 = vpop.f32.mrb[0].mxu0
      %v6381 = vadd.f32 0.0, %v6380
      %6382 = vmatprep.mubr.bf16.mxu0 0
      %6383 = vmatmul.mubr.bf16.gmra.mrb[0].mxu0 %v6279
      %v6384 = vpop.f32.mrb[0].mxu0
      %v6385 = vadd.f32 0.0, %v6384
      %v6386 = vpop.f32.mrb[0].mxu0
      %v6387 = vadd.f32 0.0, %v6386
      %v6388 = vpop.f32.mrb[0].mxu0
      %v6389 = vadd.f32 0.0, %v6388
      %v6390 = vpop.f32.mrb[0].mxu0
      %v6391 = vadd.f32 0.0, %v6390
      %6392 = vmatprep.mubr.bf16.mxu0 0
      %6393 = vmatmul.mubr.bf16.gmra.mrb[0].mxu0 %v6282
      %v6394 = vpop.f32.mrb[0].mxu0
      %v6395 = vadd.f32 0.0, %v6394
      %v6396 = vpop.f32.mrb[0].mxu0
      %v6397 = vadd.f32 0.0, %v6396
      %v6398 = vpop.f32.mrb[0].mxu0
      %v6399 = vadd.f32 0.0, %v6398
      %v6400 = vpop.f32.mrb[0].mxu0
      %v6401 = vadd.f32 0.0, %v6400
      %6402 = vmatprep.mubr.bf16.mxu0 0
      %6403 = vmatmul.mubr.bf16.gmra.mrb[0].mxu0 %v6285
      %v6404 = vpop.f32.mrb[0].mxu0
      %v6405 = vadd.f32 0.0, %v6404
      %v6406 = vpop.f32.mrb[0].mxu0
      %v6407 = vadd.f32 0.0, %v6406
      %v6408 = vpop.f32.mrb[0].mxu0
      %v6409 = vadd.f32 0.0, %v6408
      %v6410 = vpop.f32.mrb[0].mxu0
      %v6411 = vadd.f32 0.0, %v6410
      %6412 = vmatprep.mubr.bf16.mxu0 0
      %6413 = vmatmul.mubr.bf16.gmra.mrb[0].mxu0 %v6288
      %v6414 = vpop.f32.mrb[0].mxu0
      %v6415 = vadd.f32 0.0, %v6414
      %v6416 = vpop.f32.mrb[0].mxu0
      %v6417 = vadd.f32 0.0, %v6416
      %v6418 = vpop.f32.mrb[0].mxu0
      %v6419 = vadd.f32 0.0, %v6418
      %v6420 = vpop.f32.mrb[0].mxu0
      %v6421 = vadd.f32 0.0, %v6420
      %6422 = vmatprep.mubr.bf16.mxu0 0
      %6423 = vmatmul.mubr.bf16.gmra.mrb[0].mxu0 %v6291
      %v6424 = vpop.f32.mrb[0].mxu0
      %v6425 = vadd.f32 0.0, %v6424
      %v6426 = vpop.f32.mrb[0].mxu0
      %v6427 = vadd.f32 0.0, %v6426
      %v6428 = vpop.f32.mrb[0].mxu0
      %v6429 = vadd.f32 0.0, %v6428
      %v6430 = vpop.f32.mrb[0].mxu0
      %v6431 = vadd.f32 0.0, %v6430
      %6432 = vdwg.mxu0
      %6433 = vst [vmem:[#allocation5] sm:$0xff] %v6335
      %vm6434 = vcmask 261120
      %6435 = vst.msk [vmem:[#allocation5 + $0x8] sm:$0xff] %vm6434, %v6337
      %6436 = vst [vmem:[#allocation5 + $0x10] sm:$0xff] %v6339
      %6437 = vst.msk [vmem:[#allocation5 + $0x18] sm:$0xff] %vm6434, %v6341
      %6438 = vst [vmem:[#allocation5 + $0x20] sm:$0xff] %v6345
      %6439 = vst.msk [vmem:[#allocation5 + $0x28] sm:$0xff] %vm6434, %v6347
      %6440 = vst [vmem:[#allocation5 + $0x30] sm:$0xff] %v6349
      %6441 = vst.msk [vmem:[#allocation5 + $0x38] sm:$0xff] %vm6434, %v6351
      %6442 = vst [vmem:[#allocation5 + $0x40] sm:$0xff] %v6355
      %6443 = vst.msk [vmem:[#allocation5 + $0x48] sm:$0xff] %vm6434, %v6357
      %6444 = vst [vmem:[#allocation5 + $0x50] sm:$0xff] %v6359
      %6445 = vst.msk [vmem:[#allocation5 + $0x58] sm:$0xff] %vm6434, %v6361
      %6446 = vst [vmem:[#allocation5 + $0x60] sm:$0xff] %v6365
      %6447 = vst.msk [vmem:[#allocation5 + $0x68] sm:$0xff] %vm6434, %v6367
      %6448 = vst [vmem:[#allocation5 + $0x70] sm:$0xff] %v6369
      %6449 = vst.msk [vmem:[#allocation5 + $0x78] sm:$0xff] %vm6434, %v6371
      %6450 = vst [vmem:[#allocation5 + $0x80] sm:$0xff] %v6375
      %6451 = vst.msk [vmem:[#allocation5 + $0x88] sm:$0xff] %vm6434, %v6377
      %6452 = vst [vmem:[#allocation5 + $0x90] sm:$0xff] %v6379
      %6453 = vst.msk [vmem:[#allocation5 + $0x98] sm:$0xff] %vm6434, %v6381
      %6454 = vst [vmem:[#allocation5 + $0xa0] sm:$0xff] %v6385
      %6455 = vst.msk [vmem:[#allocation5 + $0xa8] sm:$0xff] %vm6434, %v6387
      %6456 = vst [vmem:[#allocation5 + $0xb0] sm:$0xff] %v6389
      %6457 = vst.msk [vmem:[#allocation5 + $0xb8] sm:$0xff] %vm6434, %v6391
      %6458 = vst [vmem:[#allocation5 + $0xc0] sm:$0xff] %v6395
      %6459 = vst.msk [vmem:[#allocation5 + $0xc8] sm:$0xff] %vm6434, %v6397
      %6460 = vst [vmem:[#allocation5 + $0xd0] sm:$0xff] %v6399
      %6461 = vst.msk [vmem:[#allocation5 + $0xd8] sm:$0xff] %vm6434, %v6401
      %6462 = vst [vmem:[#allocation5 + $0xe0] sm:$0xff] %v6405
      %6463 = vst.msk [vmem:[#allocation5 + $0xe8] sm:$0xff] %vm6434, %v6407
      %6464 = vst [vmem:[#allocation5 + $0xf0] sm:$0xff] %v6409
      %6465 = vst.msk [vmem:[#allocation5 + $0xf8] sm:$0xff] %vm6434, %v6411
      %6466 = vst [vmem:[#allocation5 + $0x100] sm:$0xff] %v6415
      %6467 = vst.msk [vmem:[#allocation5 + $0x108] sm:$0xff] %vm6434, %v6417
      %6468 = vst [vmem:[#allocation5 + $0x110] sm:$0xff] %v6419
      %6469 = vst.msk [vmem:[#allocation5 + $0x118] sm:$0xff] %vm6434, %v6421
      %6470 = vst [vmem:[#allocation5 + $0x120] sm:$0xff] %v6425
      %6471 = vst.msk [vmem:[#allocation5 + $0x128] sm:$0xff] %vm6434, %v6427
      %6472 = vst [vmem:[#allocation5 + $0x130] sm:$0xff] %v6429
      %6473 = vst.msk [vmem:[#allocation5 + $0x138] sm:$0xff] %vm6434, %v6431
      %v6474 = vld [vmem:[#allocation5] sm:$0xff]
      %v6475 = vld [vmem:[#allocation5 + $0x8] sm:$0xff]
      %v6476 = vld [vmem:[#allocation5 + $0x10] sm:$0xff]
      %v6477 = vld [vmem:[#allocation5 + $0x18] sm:$0xff]
      %v6478 = vld [vmem:[#allocation5 + $0x20] sm:$0xff]
      %v6479 = vld [vmem:[#allocation5 + $0x28] sm:$0xff]
      %v6480 = vld [vmem:[#allocation5 + $0x30] sm:$0xff]
      %v6481 = vld [vmem:[#allocation5 + $0x38] sm:$0xff]
      %v6482 = vld [vmem:[#allocation5 + $0x40] sm:$0xff]
      %v6483 = vld [vmem:[#allocation5 + $0x48] sm:$0xff]
      %v6484 = vld [vmem:[#allocation5 + $0x50] sm:$0xff]
      %v6485 = vld [vmem:[#allocation5 + $0x58] sm:$0xff]
      %v6486 = vld [vmem:[#allocation5 + $0x60] sm:$0xff]
      %v6487 = vld [vmem:[#allocation5 + $0x68] sm:$0xff]
      %v6488 = vld [vmem:[#allocation5 + $0x70] sm:$0xff]
      %v6489 = vld [vmem:[#allocation5 + $0x78] sm:$0xff]
      %v6490 = vld [vmem:[#allocation5 + $0x80] sm:$0xff]
      %v6491 = vld [vmem:[#allocation5 + $0x88] sm:$0xff]
      %v6492 = vld [vmem:[#allocation5 + $0x90] sm:$0xff]
      %v6493 = vld [vmem:[#allocation5 + $0x98] sm:$0xff]
      %v6494 = vld [vmem:[#allocation5 + $0xa0] sm:$0xff]
      %v6495 = vld [vmem:[#allocation5 + $0xa8] sm:$0xff]
      %v6496 = vld [vmem:[#allocation5 + $0xb0] sm:$0xff]
      %v6497 = vld [vmem:[#allocation5 + $0xb8] sm:$0xff]
      %v6498 = vld [vmem:[#allocation5 + $0xc0] sm:$0xff]
      %v6499 = vld [vmem:[#allocation5 + $0xc8] sm:$0xff]
      %v6500 = vld [vmem:[#allocation5 + $0xd0] sm:$0xff]
      %v6501 = vld [vmem:[#allocation5 + $0xd8] sm:$0xff]
      %v6502 = vld [vmem:[#allocation5 + $0xe0] sm:$0xff]
      %v6503 = vld [vmem:[#allocation5 + $0xe8] sm:$0xff]
      %v6504 = vld [vmem:[#allocation5 + $0xf0] sm:$0xff]
      %v6505 = vld [vmem:[#allocation5 + $0xf8] sm:$0xff]
      %v6506 = vld [vmem:[#allocation5 + $0x100] sm:$0xff]
      %v6507 = vld [vmem:[#allocation5 + $0x108] sm:$0xff]
      %v6508 = vld [vmem:[#allocation5 + $0x110] sm:$0xff]
      %v6509 = vld [vmem:[#allocation5 + $0x118] sm:$0xff]
      %v6510 = vld [vmem:[#allocation5 + $0x120] sm:$0xff]
      %v6511 = vld [vmem:[#allocation5 + $0x128] sm:$0xff]
      %v6512 = vld [vmem:[#allocation5 + $0x130] sm:$0xff]
      %v6513 = vld [vmem:[#allocation5 + $0x138] sm:$0xff]
      %v6514 = vld [vmem:[#allocation4 + $0x8] sm:$0xff]
      %v6515 = vld [vmem:[#allocation4 + $0x10] sm:$0xff]
      %v6516 = vld [vmem:[#allocation4 + $0x18] sm:$0xff]
      %v6517 = vld [vmem:[#allocation4 + $0x20] sm:$0xff]
      %v6518 = vld [vmem:[#allocation4 + $0x28] sm:$0xff]
      %v6519 = vld [vmem:[#allocation4 + $0x30] sm:$0xff]
      %v6520 = vld [vmem:[#allocation4 + $0x38] sm:$0xff]
      %v6521 = vld [vmem:[#allocation4 + $0x40] sm:$0xff]
      %v6522 = vld [vmem:[#allocation4 + $0x48] sm:$0xff]
      %v6523 = vld [vmem:[#allocation4 + $0x50] sm:$0xff]
      %s6524 = scalar_lea.vmem %s4, 88
      %v6525 = vld [vmem:[%s6524] sm:$0xff]
      %v6526 = vld [vmem:[%s6524 + $0x8] sm:$0xff]
      %v6527 = vld [vmem:[%s6524 + $0x10] sm:$0xff]
      %v6528 = vld [vmem:[%s6524 + $0x18] sm:$0xff]
      %v6529 = vld [vmem:[%s6524 + $0x20] sm:$0xff]
      %v6530 = vld [vmem:[%s6524 + $0x28] sm:$0xff]
      %v6531 = vld [vmem:[%s6524 + $0x30] sm:$0xff]
      %v6532 = vld [vmem:[%s6524 + $0x38] sm:$0xff]
      %v6533 = vld [vmem:[%s6524 + $0x40] sm:$0xff]
      %v6534 = vld [vmem:[%s6524 + $0x48] sm:$0xff]
      %v6535 = vld [vmem:[%s6524 + $0x50] sm:$0x33]
      %v6547 = vunpack.c.l.b16 %v6525
      %v6548 = vunpack.c.h.b16 %v6525
      %v6549 = vunpack.c.l.b16 %v6526
      %v6550 = vunpack.c.h.b16 %v6526
      %v6551 = vunpack.c.l.b16 %v6527
      %v6552 = vunpack.c.h.b16 %v6527
      %v6553 = vunpack.c.l.b16 %v6528
      %v6554 = vunpack.c.h.b16 %v6528
      %v6555 = vunpack.c.l.b16 %v6529
      %v6556 = vunpack.c.h.b16 %v6529
      %v6557 = vunpack.c.l.b16 %v6530
      %v6558 = vunpack.c.h.b16 %v6530
      %v6559 = vunpack.c.l.b16 %v6531
      %v6560 = vunpack.c.h.b16 %v6531
      %v6561 = vunpack.c.l.b16 %v6532
      %v6562 = vunpack.c.h.b16 %v6532
      %v6563 = vunpack.c.l.b16 %v6533
      %v6564 = vunpack.c.h.b16 %v6533
      %v6565 = vunpack.c.l.b16 %v6534
      %v6566 = vunpack.c.h.b16 %v6534
      %v6567 = vunpack.c.l.b16 %v6535
      %v6568 = vunpack.c.h.b16 %v6535
      %v6569 = vpack.c.b16 %v6549, %v6547
      %v6570 = vpack.c.b16 %v6550, %v6548
      %v6571 = vpack.c.b16 %v6553, %v6551
      %v6572 = vpack.c.b16 %v6554, %v6552
      %v6573 = vpack.c.b16 %v6557, %v6555
      %v6574 = vpack.c.b16 %v6558, %v6556
      %v6575 = vpack.c.b16 %v6561, %v6559
      %v6576 = vpack.c.b16 %v6562, %v6560
      %v6577 = vpack.c.b16 %v6565, %v6563
      %v6578 = vpack.c.b16 %v6566, %v6564
      %v6579 = vpack.c.b16 %v6567, %v6567
      %v6580 = vpack.c.b16 %v6568, %v6568
      %v6592 = vsel %vm6172, %v6514, 0
      %v6595 = vsel %vm6172, %v6515, 0
      %v6598 = vsel %vm6172, %v6516, 0
      %v6601 = vsel %vm6172, %v6517, 0
      %v6604 = vsel %vm6172, %v6518, 0
      %v6607 = vsel %vm6172, %v6519, 0
      %v6610 = vsel %vm6172, %v6520, 0
      %v6613 = vsel %vm6172, %v6521, 0
      %v6616 = vsel %vm6172, %v6522, 0
      %v6619 = vsel %vm6172, %v6523, 0
      %v6622 = vsel %vm6293, %v6579, 0
      %v6625 = vsel %vm6293, %v6580, 0
      %6627 = vmatprep.subr.bf16.mxu0 %v6570
      %6628 = vmatpush1.bf16.msra.mxu0 %v6569
      %6629 = vmatprep.subr.bf16.mxu0 %v6572
      %6630 = vmatpush1.bf16.msra.mxu0 %v6571
      %6631 = vmatprep.subr.bf16.mxu0 %v6574
      %6632 = vmatpush1.bf16.msra.mxu0 %v6573
      %6633 = vmatprep.subr.bf16.mxu0 %v6576
      %6634 = vmatpush1.bf16.msra.mxu0 %v6575
      %6635 = vmatprep.subr.bf16.mxu0 %v6578
      %6636 = vmatpush1.bf16.msra.mxu0 %v6577
      %6637 = vmatprep.subr.bf16.mxu0 %v6625
      %6638 = vmatpush1.bf16.msra.mxu0 %v6622
      %6639 = vmatprep.subr.bf16.mxu0 0
      %6640 = vmatpush1.bf16.msra.mxu0 0
      %6641 = vmatprep.subr.bf16.mxu0 0
      %6642 = vmatpush1.bf16.msra.mxu0 0
      %6643 = vmatprep.subr.bf16.mxu0 0
      %6644 = vmatpush1.bf16.msra.mxu0 0
      %6645 = vmatprep.subr.bf16.mxu0 0
      %6646 = vmatpush1.bf16.msra.mxu0 0
      %6647 = vmatprep.subr.bf16.mxu0 0
      %6648 = vmatpush1.bf16.msra.mxu0 0
      %6649 = vmatprep.subr.bf16.mxu0 0
      %6650 = vmatpush1.bf16.msra.mxu0 0
      %6651 = vmatprep.subr.bf16.mxu0 0
      %6652 = vmatpush1.bf16.msra.mxu0 0
      %6653 = vmatprep.subr.bf16.mxu0 0
      %6654 = vmatpush1.bf16.msra.mxu0 0
      %6655 = vmatprep.subr.bf16.mxu0 0
      %6656 = vmatpush1.bf16.msra.mxu0 0
      %6657 = vmatprep.subr.bf16.mxu0 0
      %6658 = vmatpush1.bf16.msra.mxu0 0
      %6659 = vmatprep.mubr.bf16.mxu0 0
      %6660 = vmatmul.mubr.bf16.gmra.mrb[0].mxu0 %v6592
      %v6661 = vpop.f32.mrb[0].mxu0
      %v6662 = vadd.f32 0.0, %v6661
      %v6663 = vpop.f32.mrb[0].mxu0
      %v6664 = vadd.f32 0.0, %v6663
      %v6665 = vpop.f32.mrb[0].mxu0
      %v6666 = vadd.f32 0.0, %v6665
      %v6667 = vpop.f32.mrb[0].mxu0
      %v6668 = vadd.f32 0.0, %v6667
      %6669 = vmatprep.mubr.bf16.mxu0 0
      %6670 = vmatmul.mubr.bf16.gmra.mrb[0].mxu0 %v6595
      %v6671 = vpop.f32.mrb[0].mxu0
      %v6672 = vadd.f32 0.0, %v6671
      %v6673 = vpop.f32.mrb[0].mxu0
      %v6674 = vadd.f32 0.0, %v6673
      %v6675 = vpop.f32.mrb[0].mxu0
      %v6676 = vadd.f32 0.0, %v6675
      %v6677 = vpop.f32.mrb[0].mxu0
      %v6678 = vadd.f32 0.0, %v6677
      %6679 = vmatprep.mubr.bf16.mxu0 0
      %6680 = vmatmul.mubr.bf16.gmra.mrb[0].mxu0 %v6598
      %v6681 = vpop.f32.mrb[0].mxu0
      %v6682 = vadd.f32 0.0, %v6681
      %v6683 = vpop.f32.mrb[0].mxu0
      %v6684 = vadd.f32 0.0, %v6683
      %v6685 = vpop.f32.mrb[0].mxu0
      %v6686 = vadd.f32 0.0, %v6685
      %v6687 = vpop.f32.mrb[0].mxu0
      %v6688 = vadd.f32 0.0, %v6687
      %6689 = vmatprep.mubr.bf16.mxu0 0
      %6690 = vmatmul.mubr.bf16.gmra.mrb[0].mxu0 %v6601
      %v6691 = vpop.f32.mrb[0].mxu0
      %v6692 = vadd.f32 0.0, %v6691
      %v6693 = vpop.f32.mrb[0].mxu0
      %v6694 = vadd.f32 0.0, %v6693
      %v6695 = vpop.f32.mrb[0].mxu0
      %v6696 = vadd.f32 0.0, %v6695
      %v6697 = vpop.f32.mrb[0].mxu0
      %v6698 = vadd.f32 0.0, %v6697
      %6699 = vmatprep.mubr.bf16.mxu0 0
      %6700 = vmatmul.mubr.bf16.gmra.mrb[0].mxu0 %v6604
      %v6701 = vpop.f32.mrb[0].mxu0
      %v6702 = vadd.f32 0.0, %v6701
      %v6703 = vpop.f32.mrb[0].mxu0
      %v6704 = vadd.f32 0.0, %v6703
      %v6705 = vpop.f32.mrb[0].mxu0
      %v6706 = vadd.f32 0.0, %v6705
      %v6707 = vpop.f32.mrb[0].mxu0
      %v6708 = vadd.f32 0.0, %v6707
      %6709 = vmatprep.mubr.bf16.mxu0 0
      %6710 = vmatmul.mubr.bf16.gmra.mrb[0].mxu0 %v6607
      %v6711 = vpop.f32.mrb[0].mxu0
      %v6712 = vadd.f32 0.0, %v6711
      %v6713 = vpop.f32.mrb[0].mxu0
      %v6714 = vadd.f32 0.0, %v6713
      %v6715 = vpop.f32.mrb[0].mxu0
      %v6716 = vadd.f32 0.0, %v6715
      %v6717 = vpop.f32.mrb[0].mxu0
      %v6718 = vadd.f32 0.0, %v6717
      %6719 = vmatprep.mubr.bf16.mxu0 0
      %6720 = vmatmul.mubr.bf16.gmra.mrb[0].mxu0 %v6610
      %v6721 = vpop.f32.mrb[0].mxu0
      %v6722 = vadd.f32 0.0, %v6721
      %v6723 = vpop.f32.mrb[0].mxu0
      %v6724 = vadd.f32 0.0, %v6723
      %v6725 = vpop.f32.mrb[0].mxu0
      %v6726 = vadd.f32 0.0, %v6725
      %v6727 = vpop.f32.mrb[0].mxu0
      %v6728 = vadd.f32 0.0, %v6727
      %6729 = vmatprep.mubr.bf16.mxu0 0
      %6730 = vmatmul.mubr.bf16.gmra.mrb[0].mxu0 %v6613
      %v6731 = vpop.f32.mrb[0].mxu0
      %v6732 = vadd.f32 0.0, %v6731
      %v6733 = vpop.f32.mrb[0].mxu0
      %v6734 = vadd.f32 0.0, %v6733
      %v6735 = vpop.f32.mrb[0].mxu0
      %v6736 = vadd.f32 0.0, %v6735
      %v6737 = vpop.f32.mrb[0].mxu0
      %v6738 = vadd.f32 0.0, %v6737
      %6739 = vmatprep.mubr.bf16.mxu0 0
      %6740 = vmatmul.mubr.bf16.gmra.mrb[0].mxu0 %v6616
      %v6741 = vpop.f32.mrb[0].mxu0
      %v6742 = vadd.f32 0.0, %v6741
      %v6743 = vpop.f32.mrb[0].mxu0
      %v6744 = vadd.f32 0.0, %v6743
      %v6745 = vpop.f32.mrb[0].mxu0
      %v6746 = vadd.f32 0.0, %v6745
      %v6747 = vpop.f32.mrb[0].mxu0
      %v6748 = vadd.f32 0.0, %v6747
      %6749 = vmatprep.mubr.bf16.mxu0 0
      %6750 = vmatmul.mubr.bf16.gmra.mrb[0].mxu0 %v6619
      %v6751 = vpop.f32.mrb[0].mxu0
      %v6752 = vadd.f32 0.0, %v6751
      %v6753 = vpop.f32.mrb[0].mxu0
      %v6754 = vadd.f32 0.0, %v6753
      %v6755 = vpop.f32.mrb[0].mxu0
      %v6756 = vadd.f32 0.0, %v6755
      %v6757 = vpop.f32.mrb[0].mxu0
      %v6758 = vadd.f32 0.0, %v6757
      %6759 = vdwg.mxu0
      %v6760 = vadd.f32 %v6474, %v6662
      %v6761 = vadd.f32 %v6475, %v6664
      %v6762 = vadd.f32 %v6476, %v6666
      %v6763 = vadd.f32 %v6477, %v6668
      %v6764 = vadd.f32 %v6478, %v6672
      %v6765 = vadd.f32 %v6479, %v6674
      %v6766 = vadd.f32 %v6480, %v6676
      %v6767 = vadd.f32 %v6481, %v6678
      %v6768 = vadd.f32 %v6482, %v6682
      %v6769 = vadd.f32 %v6483, %v6684
      %v6770 = vadd.f32 %v6484, %v6686
      %v6771 = vadd.f32 %v6485, %v6688
      %v6772 = vadd.f32 %v6486, %v6692
      %v6773 = vadd.f32 %v6487, %v6694
      %v6774 = vadd.f32 %v6488, %v6696
      %v6775 = vadd.f32 %v6489, %v6698
      %v6776 = vadd.f32 %v6490, %v6702
      %v6777 = vadd.f32 %v6491, %v6704
      %v6778 = vadd.f32 %v6492, %v6706
      %v6779 = vadd.f32 %v6493, %v6708
      %v6780 = vadd.f32 %v6494, %v6712
      %v6781 = vadd.f32 %v6495, %v6714
      %v6782 = vadd.f32 %v6496, %v6716
      %v6783 = vadd.f32 %v6497, %v6718
      %v6784 = vadd.f32 %v6498, %v6722
      %v6785 = vadd.f32 %v6499, %v6724
      %v6786 = vadd.f32 %v6500, %v6726
      %v6787 = vadd.f32 %v6501, %v6728
      %v6788 = vadd.f32 %v6502, %v6732
      %v6789 = vadd.f32 %v6503, %v6734
      %v6790 = vadd.f32 %v6504, %v6736
      %v6791 = vadd.f32 %v6505, %v6738
      %v6792 = vadd.f32 %v6506, %v6742
      %v6793 = vadd.f32 %v6507, %v6744
      %v6794 = vadd.f32 %v6508, %v6746
      %v6795 = vadd.f32 %v6509, %v6748
      %v6796 = vadd.f32 %v6510, %v6752
      %v6797 = vadd.f32 %v6511, %v6754
      %v6798 = vadd.f32 %v6512, %v6756
      %v6799 = vadd.f32 %v6513, %v6758
      %6800 = vst [vmem:[#allocation5] sm:$0xff] %v6760
      %6801 = vst.msk [vmem:[#allocation5 + $0x8] sm:$0xff] %vm6434, %v6761
      %6802 = vst [vmem:[#allocation5 + $0x10] sm:$0xff] %v6762
      %6803 = vst.msk [vmem:[#allocation5 + $0x18] sm:$0xff] %vm6434, %v6763
      %6804 = vst [vmem:[#allocation5 + $0x20] sm:$0xff] %v6764
      %6805 = vst.msk [vmem:[#allocation5 + $0x28] sm:$0xff] %vm6434, %v6765
      %6806 = vst [vmem:[#allocation5 + $0x30] sm:$0xff] %v6766
      %6807 = vst.msk [vmem:[#allocation5 + $0x38] sm:$0xff] %vm6434, %v6767
      %6808 = vst [vmem:[#allocation5 + $0x40] sm:$0xff] %v6768
      %6809 = vst.msk [vmem:[#allocation5 + $0x48] sm:$0xff] %vm6434, %v6769
      %6810 = vst [vmem:[#allocation5 + $0x50] sm:$0xff] %v6770
      %6811 = vst.msk [vmem:[#allocation5 + $0x58] sm:$0xff] %vm6434, %v6771
      %6812 = vst [vmem:[#allocation5 + $0x60] sm:$0xff] %v6772
      %6813 = vst.msk [vmem:[#allocation5 + $0x68] sm:$0xff] %vm6434, %v6773
      %6814 = vst [vmem:[#allocation5 + $0x70] sm:$0xff] %v6774
      %6815 = vst.msk [vmem:[#allocation5 + $0x78] sm:$0xff] %vm6434, %v6775
      %6816 = vst [vmem:[#allocation5 + $0x80] sm:$0xff] %v6776
      %6817 = vst.msk [vmem:[#allocation5 + $0x88] sm:$0xff] %vm6434, %v6777
      %6818 = vst [vmem:[#allocation5 + $0x90] sm:$0xff] %v6778
      %6819 = vst.msk [vmem:[#allocation5 + $0x98] sm:$0xff] %vm6434, %v6779
      %6820 = vst [vmem:[#allocation5 + $0xa0] sm:$0xff] %v6780
      %6821 = vst.msk [vmem:[#allocation5 + $0xa8] sm:$0xff] %vm6434, %v6781
      %6822 = vst [vmem:[#allocation5 + $0xb0] sm:$0xff] %v6782
      %6823 = vst.msk [vmem:[#allocation5 + $0xb8] sm:$0xff] %vm6434, %v6783
      %6824 = vst [vmem:[#allocation5 + $0xc0] sm:$0xff] %v6784
      %6825 = vst.msk [vmem:[#allocation5 + $0xc8] sm:$0xff] %vm6434, %v6785
      %6826 = vst [vmem:[#allocation5 + $0xd0] sm:$0xff] %v6786
      %6827 = vst.msk [vmem:[#allocation5 + $0xd8] sm:$0xff] %vm6434, %v6787
      %6828 = vst [vmem:[#allocation5 + $0xe0] sm:$0xff] %v6788
      %6829 = vst.msk [vmem:[#allocation5 + $0xe8] sm:$0xff] %vm6434, %v6789
      %6830 = vst [vmem:[#allocation5 + $0xf0] sm:$0xff] %v6790
      %6831 = vst.msk [vmem:[#allocation5 + $0xf8] sm:$0xff] %vm6434, %v6791
      %6832 = vst [vmem:[#allocation5 + $0x100] sm:$0xff] %v6792
      %6833 = vst.msk [vmem:[#allocation5 + $0x108] sm:$0xff] %vm6434, %v6793
      %6834 = vst [vmem:[#allocation5 + $0x110] sm:$0xff] %v6794
      %6835 = vst.msk [vmem:[#allocation5 + $0x118] sm:$0xff] %vm6434, %v6795
      %6836 = vst [vmem:[#allocation5 + $0x120] sm:$0xff] %v6796
      %6837 = vst.msk [vmem:[#allocation5 + $0x128] sm:$0xff] %vm6434, %v6797
      %6838 = vst [vmem:[#allocation5 + $0x130] sm:$0xff] %v6798
      %6839 = vst.msk [vmem:[#allocation5 + $0x138] sm:$0xff] %vm6434, %v6799
      %v6840 = vld [vmem:[#allocation5] sm:$0xff]
      %v6841 = vld [vmem:[#allocation5 + $0x8] sm:$0xff]
      %v6842 = vld [vmem:[#allocation5 + $0x10] sm:$0xff]
      %v6843 = vld [vmem:[#allocation5 + $0x18] sm:$0xff]
      %v6844 = vld [vmem:[#allocation5 + $0x20] sm:$0xff]
      %v6845 = vld [vmem:[#allocation5 + $0x28] sm:$0xff]
      %v6846 = vld [vmem:[#allocation5 + $0x30] sm:$0xff]
      %v6847 = vld [vmem:[#allocation5 + $0x38] sm:$0xff]
      %v6848 = vld [vmem:[#allocation5 + $0x40] sm:$0xff]
      %v6849 = vld [vmem:[#allocation5 + $0x48] sm:$0xff]
      %v6850 = vld [vmem:[#allocation5 + $0x50] sm:$0xff]
      %v6851 = vld [vmem:[#allocation5 + $0x58] sm:$0xff]
      %v6852 = vld [vmem:[#allocation5 + $0x60] sm:$0xff]
      %v6853 = vld [vmem:[#allocation5 + $0x68] sm:$0xff]
      %v6854 = vld [vmem:[#allocation5 + $0x70] sm:$0xff]
      %v6855 = vld [vmem:[#allocation5 + $0x78] sm:$0xff]
      %v6856 = vld [vmem:[#allocation5 + $0x80] sm:$0xff]
      %v6857 = vld [vmem:[#allocation5 + $0x88] sm:$0xff]
      %v6858 = vld [vmem:[#allocation5 + $0x90] sm:$0xff]
      %v6859 = vld [vmem:[#allocation5 + $0x98] sm:$0xff]
      %v6860 = vld [vmem:[#allocation5 + $0xa0] sm:$0xff]
      %v6861 = vld [vmem:[#allocation5 + $0xa8] sm:$0xff]
      %v6862 = vld [vmem:[#allocation5 + $0xb0] sm:$0xff]
      %v6863 = vld [vmem:[#allocation5 + $0xb8] sm:$0xff]
      %v6864 = vld [vmem:[#allocation5 + $0xc0] sm:$0xff]
      %v6865 = vld [vmem:[#allocation5 + $0xc8] sm:$0xff]
      %v6866 = vld [vmem:[#allocation5 + $0xd0] sm:$0xff]
      %v6867 = vld [vmem:[#allocation5 + $0xd8] sm:$0xff]
      %v6868 = vld [vmem:[#allocation5 + $0xe0] sm:$0xff]
      %v6869 = vld [vmem:[#allocation5 + $0xe8] sm:$0xff]
      %v6870 = vld [vmem:[#allocation5 + $0xf0] sm:$0xff]
      %v6871 = vld [vmem:[#allocation5 + $0xf8] sm:$0xff]
      %v6872 = vld [vmem:[#allocation5 + $0x100] sm:$0xff]
      %v6873 = vld [vmem:[#allocation5 + $0x108] sm:$0xff]
      %v6874 = vld [vmem:[#allocation5 + $0x110] sm:$0xff]
      %v6875 = vld [vmem:[#allocation5 + $0x118] sm:$0xff]
      %v6876 = vld [vmem:[#allocation5 + $0x120] sm:$0xff]
      %v6877 = vld [vmem:[#allocation5 + $0x128] sm:$0xff]
      %v6878 = vld [vmem:[#allocation5 + $0x130] sm:$0xff]
      %v6879 = vld [vmem:[#allocation5 + $0x138] sm:$0xff]
      %v6880 = vld [vmem:[#allocation4 + $0x10] sm:$0xff]
      %v6881 = vld [vmem:[#allocation4 + $0x18] sm:$0xff]
      %v6882 = vld [vmem:[#allocation4 + $0x20] sm:$0xff]
      %v6883 = vld [vmem:[#allocation4 + $0x28] sm:$0xff]
      %v6884 = vld [vmem:[#allocation4 + $0x30] sm:$0xff]
      %v6885 = vld [vmem:[#allocation4 + $0x38] sm:$0xff]
      %v6886 = vld [vmem:[#allocation4 + $0x40] sm:$0xff]
      %v6887 = vld [vmem:[#allocation4 + $0x48] sm:$0xff]
      %v6888 = vld [vmem:[#allocation4 + $0x50] sm:$0xff]
      %v6889 = vld [vmem:[#allocation4 + $0x58] sm:$0xff]
      %s6890 = scalar_lea.vmem %s4, 176
      %v6891 = vld [vmem:[%s6890] sm:$0xff]
      %v6892 = vld [vmem:[%s6890 + $0x8] sm:$0xff]
      %v6893 = vld [vmem:[%s6890 + $0x10] sm:$0xff]
      %v6894 = vld [vmem:[%s6890 + $0x18] sm:$0xff]
      %v6895 = vld [vmem:[%s6890 + $0x20] sm:$0xff]
      %v6896 = vld [vmem:[%s6890 + $0x28] sm:$0xff]
      %v6897 = vld [vmem:[%s6890 + $0x30] sm:$0xff]
      %v6898 = vld [vmem:[%s6890 + $0x38] sm:$0xff]
      %v6899 = vld [vmem:[%s6890 + $0x40] sm:$0xff]
      %v6900 = vld [vmem:[%s6890 + $0x48] sm:$0xff]
      %v6901 = vld [vmem:[%s6890 + $0x50] sm:$0x33]
      %v6913 = vunpack.c.l.b16 %v6891
      %v6914 = vunpack.c.h.b16 %v6891
      %v6915 = vunpack.c.l.b16 %v6892
      %v6916 = vunpack.c.h.b16 %v6892
      %v6917 = vunpack.c.l.b16 %v6893
      %v6918 = vunpack.c.h.b16 %v6893
      %v6919 = vunpack.c.l.b16 %v6894
      %v6920 = vunpack.c.h.b16 %v6894
      %v6921 = vunpack.c.l.b16 %v6895
      %v6922 = vunpack.c.h.b16 %v6895
      %v6923 = vunpack.c.l.b16 %v6896
      %v6924 = vunpack.c.h.b16 %v6896
      %v6925 = vunpack.c.l.b16 %v6897
      %v6926 = vunpack.c.h.b16 %v6897
      %v6927 = vunpack.c.l.b16 %v6898
      %v6928 = vunpack.c.h.b16 %v6898
      %v6929 = vunpack.c.l.b16 %v6899
      %v6930 = vunpack.c.h.b16 %v6899
      %v6931 = vunpack.c.l.b16 %v6900
      %v6932 = vunpack.c.h.b16 %v6900
      %v6933 = vunpack.c.l.b16 %v6901
      %v6934 = vunpack.c.h.b16 %v6901
      %v6935 = vpack.c.b16 %v6915, %v6913
      %v6936 = vpack.c.b16 %v6916, %v6914
      %v6937 = vpack.c.b16 %v6919, %v6917
      %v6938 = vpack.c.b16 %v6920, %v6918
      %v6939 = vpack.c.b16 %v6923, %v6921
      %v6940 = vpack.c.b16 %v6924, %v6922
      %v6941 = vpack.c.b16 %v6927, %v6925
      %v6942 = vpack.c.b16 %v6928, %v6926
      %v6943 = vpack.c.b16 %v6931, %v6929
      %v6944 = vpack.c.b16 %v6932, %v6930
      %v6945 = vpack.c.b16 %v6933, %v6933
      %v6946 = vpack.c.b16 %v6934, %v6934
      %v6958 = vsel %vm6172, %v6880, 0
      %v6961 = vsel %vm6172, %v6881, 0
      %v6964 = vsel %vm6172, %v6882, 0
      %v6967 = vsel %vm6172, %v6883, 0
      %v6970 = vsel %vm6172, %v6884, 0
      %v6973 = vsel %vm6172, %v6885, 0
      %v6976 = vsel %vm6172, %v6886, 0
      %v6979 = vsel %vm6172, %v6887, 0
      %v6982 = vsel %vm6172, %v6888, 0
      %v6985 = vsel %vm6172, %v6889, 0
      %v6988 = vsel %vm6293, %v6945, 0
      %v6991 = vsel %vm6293, %v6946, 0
      %6993 = vmatprep.subr.bf16.mxu0 %v6936
      %6994 = vmatpush1.bf16.msra.mxu0 %v6935
      %6995 = vmatprep.subr.bf16.mxu0 %v6938
      %6996 = vmatpush1.bf16.msra.mxu0 %v6937
      %6997 = vmatprep.subr.bf16.mxu0 %v6940
      %6998 = vmatpush1.bf16.msra.mxu0 %v6939
      %6999 = vmatprep.subr.bf16.mxu0 %v6942
      %7000 = vmatpush1.bf16.msra.mxu0 %v6941
      %7001 = vmatprep.subr.bf16.mxu0 %v6944
      %7002 = vmatpush1.bf16.msra.mxu0 %v6943
      %7003 = vmatprep.subr.bf16.mxu0 %v6991
      %7004 = vmatpush1.bf16.msra.mxu0 %v6988
      %7005 = vmatprep.subr.bf16.mxu0 0
      %7006 = vmatpush1.bf16.msra.mxu0 0
      %7007 = vmatprep.subr.bf16.mxu0 0
      %7008 = vmatpush1.bf16.msra.mxu0 0
      %7009 = vmatprep.subr.bf16.mxu0 0
      %7010 = vmatpush1.bf16.msra.mxu0 0
      %7011 = vmatprep.subr.bf16.mxu0 0
      %7012 = vmatpush1.bf16.msra.mxu0 0
      %7013 = vmatprep.subr.bf16.mxu0 0
      %7014 = vmatpush1.bf16.msra.mxu0 0
      %7015 = vmatprep.subr.bf16.mxu0 0
      %7016 = vmatpush1.bf16.msra.mxu0 0
      %7017 = vmatprep.subr.bf16.mxu0 0
      %7018 = vmatpush1.bf16.msra.mxu0 0
      %7019 = vmatprep.subr.bf16.mxu0 0
      %7020 = vmatpush1.bf16.msra.mxu0 0
      %7021 = vmatprep.subr.bf16.mxu0 0
      %7022 = vmatpush1.bf16.msra.mxu0 0
      %7023 = vmatprep.subr.bf16.mxu0 0
      %7024 = vmatpush1.bf16.msra.mxu0 0
      %7025 = vmatprep.mubr.bf16.mxu0 0
      %7026 = vmatmul.mubr.bf16.gmra.mrb[0].mxu0 %v6958
      %v7027 = vpop.f32.mrb[0].mxu0
      %v7028 = vadd.f32 0.0, %v7027
      %v7029 = vpop.f32.mrb[0].mxu0
      %v7030 = vadd.f32 0.0, %v7029
      %v7031 = vpop.f32.mrb[0].mxu0
      %v7032 = vadd.f32 0.0, %v7031
      %v7033 = vpop.f32.mrb[0].mxu0
      %v7034 = vadd.f32 0.0, %v7033
      %7035 = vmatprep.mubr.bf16.mxu0 0
      %7036 = vmatmul.mubr.bf16.gmra.mrb[0].mxu0 %v6961
      %v7037 = vpop.f32.mrb[0].mxu0
      %v7038 = vadd.f32 0.0, %v7037
      %v7039 = vpop.f32.mrb[0].mxu0
      %v7040 = vadd.f32 0.0, %v7039
      %v7041 = vpop.f32.mrb[0].mxu0
      %v7042 = vadd.f32 0.0, %v7041
      %v7043 = vpop.f32.mrb[0].mxu0
      %v7044 = vadd.f32 0.0, %v7043
      %7045 = vmatprep.mubr.bf16.mxu0 0
      %7046 = vmatmul.mubr.bf16.gmra.mrb[0].mxu0 %v6964
      %v7047 = vpop.f32.mrb[0].mxu0
      %v7048 = vadd.f32 0.0, %v7047
      %v7049 = vpop.f32.mrb[0].mxu0
      %v7050 = vadd.f32 0.0, %v7049
      %v7051 = vpop.f32.mrb[0].mxu0
      %v7052 = vadd.f32 0.0, %v7051
      %v7053 = vpop.f32.mrb[0].mxu0
      %v7054 = vadd.f32 0.0, %v7053
      %7055 = vmatprep.mubr.bf16.mxu0 0
      %7056 = vmatmul.mubr.bf16.gmra.mrb[0].mxu0 %v6967
      %v7057 = vpop.f32.mrb[0].mxu0
      %v7058 = vadd.f32 0.0, %v7057
      %v7059 = vpop.f32.mrb[0].mxu0
      %v7060 = vadd.f32 0.0, %v7059
      %v7061 = vpop.f32.mrb[0].mxu0
      %v7062 = vadd.f32 0.0, %v7061
      %v7063 = vpop.f32.mrb[0].mxu0
      %v7064 = vadd.f32 0.0, %v7063
      %7065 = vmatprep.mubr.bf16.mxu0 0
      %7066 = vmatmul.mubr.bf16.gmra.mrb[0].mxu0 %v6970
      %v7067 = vpop.f32.mrb[0].mxu0
      %v7068 = vadd.f32 0.0, %v7067
      %v7069 = vpop.f32.mrb[0].mxu0
      %v7070 = vadd.f32 0.0, %v7069
      %v7071 = vpop.f32.mrb[0].mxu0
      %v7072 = vadd.f32 0.0, %v7071
      %v7073 = vpop.f32.mrb[0].mxu0
      %v7074 = vadd.f32 0.0, %v7073
      %7075 = vmatprep.mubr.bf16.mxu0 0
      %7076 = vmatmul.mubr.bf16.gmra.mrb[0].mxu0 %v6973
      %v7077 = vpop.f32.mrb[0].mxu0
      %v7078 = vadd.f32 0.0, %v7077
      %v7079 = vpop.f32.mrb[0].mxu0
      %v7080 = vadd.f32 0.0, %v7079
      %v7081 = vpop.f32.mrb[0].mxu0
      %v7082 = vadd.f32 0.0, %v7081
      %v7083 = vpop.f32.mrb[0].mxu0
      %v7084 = vadd.f32 0.0, %v7083
      %7085 = vmatprep.mubr.bf16.mxu0 0
      %7086 = vmatmul.mubr.bf16.gmra.mrb[0].mxu0 %v6976
      %v7087 = vpop.f32.mrb[0].mxu0
      %v7088 = vadd.f32 0.0, %v7087
      %v7089 = vpop.f32.mrb[0].mxu0
      %v7090 = vadd.f32 0.0, %v7089
      %v7091 = vpop.f32.mrb[0].mxu0
      %v7092 = vadd.f32 0.0, %v7091
      %v7093 = vpop.f32.mrb[0].mxu0
      %v7094 = vadd.f32 0.0, %v7093
      %7095 = vmatprep.mubr.bf16.mxu0 0
      %7096 = vmatmul.mubr.bf16.gmra.mrb[0].mxu0 %v6979
      %v7097 = vpop.f32.mrb[0].mxu0
      %v7098 = vadd.f32 0.0, %v7097
      %v7099 = vpop.f32.mrb[0].mxu0
      %v7100 = vadd.f32 0.0, %v7099
      %v7101 = vpop.f32.mrb[0].mxu0
      %v7102 = vadd.f32 0.0, %v7101
      %v7103 = vpop.f32.mrb[0].mxu0
      %v7104 = vadd.f32 0.0, %v7103
      %7105 = vmatprep.mubr.bf16.mxu0 0
      %7106 = vmatmul.mubr.bf16.gmra.mrb[0].mxu0 %v6982
      %v7107 = vpop.f32.mrb[0].mxu0
      %v7108 = vadd.f32 0.0, %v7107
      %v7109 = vpop.f32.mrb[0].mxu0
      %v7110 = vadd.f32 0.0, %v7109
      %v7111 = vpop.f32.mrb[0].mxu0
      %v7112 = vadd.f32 0.0, %v7111
      %v7113 = vpop.f32.mrb[0].mxu0
      %v7114 = vadd.f32 0.0, %v7113
      %7115 = vmatprep.mubr.bf16.mxu0 0
      %7116 = vmatmul.mubr.bf16.gmra.mrb[0].mxu0 %v6985
      %v7117 = vpop.f32.mrb[0].mxu0
      %v7118 = vadd.f32 0.0, %v7117
      %v7119 = vpop.f32.mrb[0].mxu0
      %v7120 = vadd.f32 0.0, %v7119
      %v7121 = vpop.f32.mrb[0].mxu0
      %v7122 = vadd.f32 0.0, %v7121
      %v7123 = vpop.f32.mrb[0].mxu0
      %v7124 = vadd.f32 0.0, %v7123
      %7125 = vdwg.mxu0
      %v7126 = vadd.f32 %v6840, %v7028
      %v7127 = vadd.f32 %v6841, %v7030
      %v7128 = vadd.f32 %v6842, %v7032
      %v7129 = vadd.f32 %v6843, %v7034
      %v7130 = vadd.f32 %v6844, %v7038
      %v7131 = vadd.f32 %v6845, %v7040
      %v7132 = vadd.f32 %v6846, %v7042
      %v7133 = vadd.f32 %v6847, %v7044
      %v7134 = vadd.f32 %v6848, %v7048
      %v7135 = vadd.f32 %v6849, %v7050
      %v7136 = vadd.f32 %v6850, %v7052
      %v7137 = vadd.f32 %v6851, %v7054
      %v7138 = vadd.f32 %v6852, %v7058
      %v7139 = vadd.f32 %v6853, %v7060
      %v7140 = vadd.f32 %v6854, %v7062
      %v7141 = vadd.f32 %v6855, %v7064
      %v7142 = vadd.f32 %v6856, %v7068
      %v7143 = vadd.f32 %v6857, %v7070
      %v7144 = vadd.f32 %v6858, %v7072
      %v7145 = vadd.f32 %v6859, %v7074
      %v7146 = vadd.f32 %v6860, %v7078
      %v7147 = vadd.f32 %v6861, %v7080
      %v7148 = vadd.f32 %v6862, %v7082
      %v7149 = vadd.f32 %v6863, %v7084
      %v7150 = vadd.f32 %v6864, %v7088
      %v7151 = vadd.f32 %v6865, %v7090
      %v7152 = vadd.f32 %v6866, %v7092
      %v7153 = vadd.f32 %v6867, %v7094
      %v7154 = vadd.f32 %v6868, %v7098
      %v7155 = vadd.f32 %v6869, %v7100
      %v7156 = vadd.f32 %v6870, %v7102
      %v7157 = vadd.f32 %v6871, %v7104
      %v7158 = vadd.f32 %v6872, %v7108
      %v7159 = vadd.f32 %v6873, %v7110
      %v7160 = vadd.f32 %v6874, %v7112
      %v7161 = vadd.f32 %v6875, %v7114
      %v7162 = vadd.f32 %v6876, %v7118
      %v7163 = vadd.f32 %v6877, %v7120
      %v7164 = vadd.f32 %v6878, %v7122
      %v7165 = vadd.f32 %v6879, %v7124
      %7166 = vst [vmem:[#allocation5] sm:$0xff] %v7126
      %7167 = vst.msk [vmem:[#allocation5 + $0x8] sm:$0xff] %vm6434, %v7127
      %7168 = vst [vmem:[#allocation5 + $0x10] sm:$0xff] %v7128
      %7169 = vst.msk [vmem:[#allocation5 + $0x18] sm:$0xff] %vm6434, %v7129
      %7170 = vst [vmem:[#allocation5 + $0x20] sm:$0xff] %v7130
      %7171 = vst.msk [vmem:[#allocation5 + $0x28] sm:$0xff] %vm6434, %v7131
      %7172 = vst [vmem:[#allocation5 + $0x30] sm:$0xff] %v7132
      %7173 = vst.msk [vmem:[#allocation5 + $0x38] sm:$0xff] %vm6434, %v7133
      %7174 = vst [vmem:[#allocation5 + $0x40] sm:$0xff] %v7134
      %7175 = vst.msk [vmem:[#allocation5 + $0x48] sm:$0xff] %vm6434, %v7135
      %7176 = vst [vmem:[#allocation5 + $0x50] sm:$0xff] %v7136
      %7177 = vst.msk [vmem:[#allocation5 + $0x58] sm:$0xff] %vm6434, %v7137
      %7178 = vst [vmem:[#allocation5 + $0x60] sm:$0xff] %v7138
      %7179 = vst.msk [vmem:[#allocation5 + $0x68] sm:$0xff] %vm6434, %v7139
      %7180 = vst [vmem:[#allocation5 + $0x70] sm:$0xff] %v7140
      %7181 = vst.msk [vmem:[#allocation5 + $0x78] sm:$0xff] %vm6434, %v7141
      %7182 = vst [vmem:[#allocation5 + $0x80] sm:$0xff] %v7142
      %7183 = vst.msk [vmem:[#allocation5 + $0x88] sm:$0xff] %vm6434, %v7143
      %7184 = vst [vmem:[#allocation5 + $0x90] sm:$0xff] %v7144
      %7185 = vst.msk [vmem:[#allocation5 + $0x98] sm:$0xff] %vm6434, %v7145
      %7186 = vst [vmem:[#allocation5 + $0xa0] sm:$0xff] %v7146
      %7187 = vst.msk [vmem:[#allocation5 + $0xa8] sm:$0xff] %vm6434, %v7147
      %7188 = vst [vmem:[#allocation5 + $0xb0] sm:$0xff] %v7148
      %7189 = vst.msk [vmem:[#allocation5 + $0xb8] sm:$0xff] %vm6434, %v7149
      %7190 = vst [vmem:[#allocation5 + $0xc0] sm:$0xff] %v7150
      %7191 = vst.msk [vmem:[#allocation5 + $0xc8] sm:$0xff] %vm6434, %v7151
      %7192 = vst [vmem:[#allocation5 + $0xd0] sm:$0xff] %v7152
      %7193 = vst.msk [vmem:[#allocation5 + $0xd8] sm:$0xff] %vm6434, %v7153
      %7194 = vst [vmem:[#allocation5 + $0xe0] sm:$0xff] %v7154
      %7195 = vst.msk [vmem:[#allocation5 + $0xe8] sm:$0xff] %vm6434, %v7155
      %7196 = vst [vmem:[#allocation5 + $0xf0] sm:$0xff] %v7156
      %7197 = vst.msk [vmem:[#allocation5 + $0xf8] sm:$0xff] %vm6434, %v7157
      %7198 = vst [vmem:[#allocation5 + $0x100] sm:$0xff] %v7158
      %7199 = vst.msk [vmem:[#allocation5 + $0x108] sm:$0xff] %vm6434, %v7159
      %7200 = vst [vmem:[#allocation5 + $0x110] sm:$0xff] %v7160
      %7201 = vst.msk [vmem:[#allocation5 + $0x118] sm:$0xff] %vm6434, %v7161
      %7202 = vst [vmem:[#allocation5 + $0x120] sm:$0xff] %v7162
      %7203 = vst.msk [vmem:[#allocation5 + $0x128] sm:$0xff] %vm6434, %v7163
      %7204 = vst [vmem:[#allocation5 + $0x130] sm:$0xff] %v7164
      %7205 = vst.msk [vmem:[#allocation5 + $0x138] sm:$0xff] %vm6434, %v7165
      %v7206 = vld [vmem:[#allocation5] sm:$0xff]
      %v7207 = vld [vmem:[#allocation5 + $0x8] sm:$0xff]
      %v7208 = vld [vmem:[#allocation5 + $0x10] sm:$0xff]
      %v7209 = vld [vmem:[#allocation5 + $0x18] sm:$0xff]
      %v7210 = vld [vmem:[#allocation5 + $0x20] sm:$0xff]
      %v7211 = vld [vmem:[#allocation5 + $0x28] sm:$0xff]
      %v7212 = vld [vmem:[#allocation5 + $0x30] sm:$0xff]
      %v7213 = vld [vmem:[#allocation5 + $0x38] sm:$0xff]
      %v7214 = vld [vmem:[#allocation5 + $0x40] sm:$0xff]
      %v7215 = vld [vmem:[#allocation5 + $0x48] sm:$0xff]
      %v7216 = vld [vmem:[#allocation5 + $0x50] sm:$0xff]
      %v7217 = vld [vmem:[#allocation5 + $0x58] sm:$0xff]
      %v7218 = vld [vmem:[#allocation5 + $0x60] sm:$0xff]
      %v7219 = vld [vmem:[#allocation5 + $0x68] sm:$0xff]
      %v7220 = vld [vmem:[#allocation5 + $0x70] sm:$0xff]
      %v7221 = vld [vmem:[#allocation5 + $0x78] sm:$0xff]
      %v7222 = vld [vmem:[#allocation5 + $0x80] sm:$0xff]
      %v7223 = vld [vmem:[#allocation5 + $0x88] sm:$0xff]
      %v7224 = vld [vmem:[#allocation5 + $0x90] sm:$0xff]
      %v7225 = vld [vmem:[#allocation5 + $0x98] sm:$0xff]
      %v7226 = vld [vmem:[#allocation5 + $0xa0] sm:$0xff]
      %v7227 = vld [vmem:[#allocation5 + $0xa8] sm:$0xff]
      %v7228 = vld [vmem:[#allocation5 + $0xb0] sm:$0xff]
      %v7229 = vld [vmem:[#allocation5 + $0xb8] sm:$0xff]
      %v7230 = vld [vmem:[#allocation5 + $0xc0] sm:$0xff]
      %v7231 = vld [vmem:[#allocation5 + $0xc8] sm:$0xff]
      %v7232 = vld [vmem:[#allocation5 + $0xd0] sm:$0xff]
      %v7233 = vld [vmem:[#allocation5 + $0xd8] sm:$0xff]
      %v7234 = vld [vmem:[#allocation5 + $0xe0] sm:$0xff]
      %v7235 = vld [vmem:[#allocation5 + $0xe8] sm:$0xff]
      %v7236 = vld [vmem:[#allocation5 + $0xf0] sm:$0xff]
      %v7237 = vld [vmem:[#allocation5 + $0xf8] sm:$0xff]
      %v7238 = vld [vmem:[#allocation5 + $0x100] sm:$0xff]
      %v7239 = vld [vmem:[#allocation5 + $0x108] sm:$0xff]
      %v7240 = vld [vmem:[#allocation5 + $0x110] sm:$0xff]
      %v7241 = vld [vmem:[#allocation5 + $0x118] sm:$0xff]
      %v7242 = vld [vmem:[#allocation5 + $0x120] sm:$0xff]
      %v7243 = vld [vmem:[#allocation5 + $0x128] sm:$0xff]
      %v7244 = vld [vmem:[#allocation5 + $0x130] sm:$0xff]
      %v7245 = vld [vmem:[#allocation5 + $0x138] sm:$0xff]
      %v7246 = vld [vmem:[#allocation4 + $0x18] sm:$0xff]
      %v7247 = vld [vmem:[#allocation4 + $0x20] sm:$0xff]
      %v7248 = vld [vmem:[#allocation4 + $0x28] sm:$0xff]
      %v7249 = vld [vmem:[#allocation4 + $0x30] sm:$0xff]
      %v7250 = vld [vmem:[#allocation4 + $0x38] sm:$0xff]
      %v7251 = vld [vmem:[#allocation4 + $0x40] sm:$0xff]
      %v7252 = vld [vmem:[#allocation4 + $0x48] sm:$0xff]
      %v7253 = vld [vmem:[#allocation4 + $0x50] sm:$0xff]
      %v7254 = vld [vmem:[#allocation4 + $0x58] sm:$0xff]
      %v7255 = vld [vmem:[#allocation4 + $0x60] sm:$0xff]
      %s7256 = scalar_lea.vmem %s4, 264
      %v7257 = vld [vmem:[%s7256] sm:$0xff]
      %v7258 = vld [vmem:[%s7256 + $0x8] sm:$0xff]
      %v7259 = vld [vmem:[%s7256 + $0x10] sm:$0xff]
      %v7260 = vld [vmem:[%s7256 + $0x18] sm:$0xff]
      %v7261 = vld [vmem:[%s7256 + $0x20] sm:$0xff]
      %v7262 = vld [vmem:[%s7256 + $0x28] sm:$0xff]
      %v7263 = vld [vmem:[%s7256 + $0x30] sm:$0xff]
      %v7264 = vld [vmem:[%s7256 + $0x38] sm:$0xff]
      %v7265 = vld [vmem:[%s7256 + $0x40] sm:$0xff]
      %v7266 = vld [vmem:[%s7256 + $0x48] sm:$0xff]
      %v7267 = vld [vmem:[%s7256 + $0x50] sm:$0x33]
      %v7279 = vunpack.c.l.b16 %v7257
      %v7280 = vunpack.c.h.b16 %v7257
      %v7281 = vunpack.c.l.b16 %v7258
      %v7282 = vunpack.c.h.b16 %v7258
      %v7283 = vunpack.c.l.b16 %v7259
      %v7284 = vunpack.c.h.b16 %v7259
      %v7285 = vunpack.c.l.b16 %v7260
      %v7286 = vunpack.c.h.b16 %v7260
      %v7287 = vunpack.c.l.b16 %v7261
      %v7288 = vunpack.c.h.b16 %v7261
      %v7289 = vunpack.c.l.b16 %v7262
      %v7290 = vunpack.c.h.b16 %v7262
      %v7291 = vunpack.c.l.b16 %v7263
      %v7292 = vunpack.c.h.b16 %v7263
      %v7293 = vunpack.c.l.b16 %v7264
      %v7294 = vunpack.c.h.b16 %v7264
      %v7295 = vunpack.c.l.b16 %v7265
      %v7296 = vunpack.c.h.b16 %v7265
      %v7297 = vunpack.c.l.b16 %v7266
      %v7298 = vunpack.c.h.b16 %v7266
      %v7299 = vunpack.c.l.b16 %v7267
      %v7300 = vunpack.c.h.b16 %v7267
      %v7301 = vpack.c.b16 %v7281, %v7279
      %v7302 = vpack.c.b16 %v7282, %v7280
      %v7303 = vpack.c.b16 %v7285, %v7283
      %v7304 = vpack.c.b16 %v7286, %v7284
      %v7305 = vpack.c.b16 %v7289, %v7287
      %v7306 = vpack.c.b16 %v7290, %v7288
      %v7307 = vpack.c.b16 %v7293, %v7291
      %v7308 = vpack.c.b16 %v7294, %v7292
      %v7309 = vpack.c.b16 %v7297, %v7295
      %v7310 = vpack.c.b16 %v7298, %v7296
      %v7311 = vpack.c.b16 %v7299, %v7299
      %v7312 = vpack.c.b16 %v7300, %v7300
      %v7324 = vsel %vm6172, %v7246, 0
      %v7327 = vsel %vm6172, %v7247, 0
      %v7330 = vsel %vm6172, %v7248, 0
      %v7333 = vsel %vm6172, %v7249, 0
      %v7336 = vsel %vm6172, %v7250, 0
      %v7339 = vsel %vm6172, %v7251, 0
      %v7342 = vsel %vm6172, %v7252, 0
      %v7345 = vsel %vm6172, %v7253, 0
      %v7348 = vsel %vm6172, %v7254, 0
      %v7351 = vsel %vm6172, %v7255, 0
      %v7354 = vsel %vm6293, %v7311, 0
      %v7357 = vsel %vm6293, %v7312, 0
      %7359 = vmatprep.subr.bf16.mxu0 %v7302
      %7360 = vmatpush1.bf16.msra.mxu0 %v7301
      %7361 = vmatprep.subr.bf16.mxu0 %v7304
      %7362 = vmatpush1.bf16.msra.mxu0 %v7303
      %7363 = vmatprep.subr.bf16.mxu0 %v7306
      %7364 = vmatpush1.bf16.msra.mxu0 %v7305
      %7365 = vmatprep.subr.bf16.mxu0 %v7308
      %7366 = vmatpush1.bf16.msra.mxu0 %v7307
      %7367 = vmatprep.subr.bf16.mxu0 %v7310
      %7368 = vmatpush1.bf16.msra.mxu0 %v7309
      %7369 = vmatprep.subr.bf16.mxu0 %v7357
      %7370 = vmatpush1.bf16.msra.mxu0 %v7354
      %7371 = vmatprep.subr.bf16.mxu0 0
      %7372 = vmatpush1.bf16.msra.mxu0 0
      %7373 = vmatprep.subr.bf16.mxu0 0
      %7374 = vmatpush1.bf16.msra.mxu0 0
      %7375 = vmatprep.subr.bf16.mxu0 0
      %7376 = vmatpush1.bf16.msra.mxu0 0
      %7377 = vmatprep.subr.bf16.mxu0 0
      %7378 = vmatpush1.bf16.msra.mxu0 0
      %7379 = vmatprep.subr.bf16.mxu0 0
      %7380 = vmatpush1.bf16.msra.mxu0 0
      %7381 = vmatprep.subr.bf16.mxu0 0
      %7382 = vmatpush1.bf16.msra.mxu0 0
      %7383 = vmatprep.subr.bf16.mxu0 0
      %7384 = vmatpush1.bf16.msra.mxu0 0
      %7385 = vmatprep.subr.bf16.mxu0 0
      %7386 = vmatpush1.bf16.msra.mxu0 0
      %7387 = vmatprep.subr.bf16.mxu0 0
      %7388 = vmatpush1.bf16.msra.mxu0 0
      %7389 = vmatprep.subr.bf16.mxu0 0
      %7390 = vmatpush1.bf16.msra.mxu0 0
      %7391 = vmatprep.mubr.bf16.mxu0 0
      %7392 = vmatmul.mubr.bf16.gmra.mrb[0].mxu0 %v7324
      %v7393 = vpop.f32.mrb[0].mxu0
      %v7394 = vadd.f32 0.0, %v7393
      %v7395 = vpop.f32.mrb[0].mxu0
      %v7396 = vadd.f32 0.0, %v7395
      %v7397 = vpop.f32.mrb[0].mxu0
      %v7398 = vadd.f32 0.0, %v7397
      %v7399 = vpop.f32.mrb[0].mxu0
      %v7400 = vadd.f32 0.0, %v7399
      %7401 = vmatprep.mubr.bf16.mxu0 0
      %7402 = vmatmul.mubr.bf16.gmra.mrb[0].mxu0 %v7327
      %v7403 = vpop.f32.mrb[0].mxu0
      %v7404 = vadd.f32 0.0, %v7403
      %v7405 = vpop.f32.mrb[0].mxu0
      %v7406 = vadd.f32 0.0, %v7405
      %v7407 = vpop.f32.mrb[0].mxu0
      %v7408 = vadd.f32 0.0, %v7407
      %v7409 = vpop.f32.mrb[0].mxu0
      %v7410 = vadd.f32 0.0, %v7409
      %7411 = vmatprep.mubr.bf16.mxu0 0
      %7412 = vmatmul.mubr.bf16.gmra.mrb[0].mxu0 %v7330
      %v7413 = vpop.f32.mrb[0].mxu0
      %v7414 = vadd.f32 0.0, %v7413
      %v7415 = vpop.f32.mrb[0].mxu0
      %v7416 = vadd.f32 0.0, %v7415
      %v7417 = vpop.f32.mrb[0].mxu0
      %v7418 = vadd.f32 0.0, %v7417
      %v7419 = vpop.f32.mrb[0].mxu0
      %v7420 = vadd.f32 0.0, %v7419
      %7421 = vmatprep.mubr.bf16.mxu0 0
      %7422 = vmatmul.mubr.bf16.gmra.mrb[0].mxu0 %v7333
      %v7423 = vpop.f32.mrb[0].mxu0
      %v7424 = vadd.f32 0.0, %v7423
      %v7425 = vpop.f32.mrb[0].mxu0
      %v7426 = vadd.f32 0.0, %v7425
      %v7427 = vpop.f32.mrb[0].mxu0
      %v7428 = vadd.f32 0.0, %v7427
      %v7429 = vpop.f32.mrb[0].mxu0
      %v7430 = vadd.f32 0.0, %v7429
      %7431 = vmatprep.mubr.bf16.mxu0 0
      %7432 = vmatmul.mubr.bf16.gmra.mrb[0].mxu0 %v7336
      %v7433 = vpop.f32.mrb[0].mxu0
      %v7434 = vadd.f32 0.0, %v7433
      %v7435 = vpop.f32.mrb[0].mxu0
      %v7436 = vadd.f32 0.0, %v7435
      %v7437 = vpop.f32.mrb[0].mxu0
      %v7438 = vadd.f32 0.0, %v7437
      %v7439 = vpop.f32.mrb[0].mxu0
      %v7440 = vadd.f32 0.0, %v7439
      %7441 = vmatprep.mubr.bf16.mxu0 0
      %7442 = vmatmul.mubr.bf16.gmra.mrb[0].mxu0 %v7339
      %v7443 = vpop.f32.mrb[0].mxu0
      %v7444 = vadd.f32 0.0, %v7443
      %v7445 = vpop.f32.mrb[0].mxu0
      %v7446 = vadd.f32 0.0, %v7445
      %v7447 = vpop.f32.mrb[0].mxu0
      %v7448 = vadd.f32 0.0, %v7447
      %v7449 = vpop.f32.mrb[0].mxu0
      %v7450 = vadd.f32 0.0, %v7449
      %7451 = vmatprep.mubr.bf16.mxu0 0
      %7452 = vmatmul.mubr.bf16.gmra.mrb[0].mxu0 %v7342
      %v7453 = vpop.f32.mrb[0].mxu0
      %v7454 = vadd.f32 0.0, %v7453
      %v7455 = vpop.f32.mrb[0].mxu0
      %v7456 = vadd.f32 0.0, %v7455
      %v7457 = vpop.f32.mrb[0].mxu0
      %v7458 = vadd.f32 0.0, %v7457
      %v7459 = vpop.f32.mrb[0].mxu0
      %v7460 = vadd.f32 0.0, %v7459
      %7461 = vmatprep.mubr.bf16.mxu0 0
      %7462 = vmatmul.mubr.bf16.gmra.mrb[0].mxu0 %v7345
      %v7463 = vpop.f32.mrb[0].mxu0
      %v7464 = vadd.f32 0.0, %v7463
      %v7465 = vpop.f32.mrb[0].mxu0
      %v7466 = vadd.f32 0.0, %v7465
      %v7467 = vpop.f32.mrb[0].mxu0
      %v7468 = vadd.f32 0.0, %v7467
      %v7469 = vpop.f32.mrb[0].mxu0
      %v7470 = vadd.f32 0.0, %v7469
      %7471 = vmatprep.mubr.bf16.mxu0 0
      %7472 = vmatmul.mubr.bf16.gmra.mrb[0].mxu0 %v7348
      %v7473 = vpop.f32.mrb[0].mxu0
      %v7474 = vadd.f32 0.0, %v7473
      %v7475 = vpop.f32.mrb[0].mxu0
      %v7476 = vadd.f32 0.0, %v7475
      %v7477 = vpop.f32.mrb[0].mxu0
      %v7478 = vadd.f32 0.0, %v7477
      %v7479 = vpop.f32.mrb[0].mxu0
      %v7480 = vadd.f32 0.0, %v7479
      %7481 = vmatprep.mubr.bf16.mxu0 0
      %7482 = vmatmul.mubr.bf16.gmra.mrb[0].mxu0 %v7351
      %v7483 = vpop.f32.mrb[0].mxu0
      %v7484 = vadd.f32 0.0, %v7483
      %v7485 = vpop.f32.mrb[0].mxu0
      %v7486 = vadd.f32 0.0, %v7485
      %v7487 = vpop.f32.mrb[0].mxu0
      %v7488 = vadd.f32 0.0, %v7487
      %v7489 = vpop.f32.mrb[0].mxu0
      %v7490 = vadd.f32 0.0, %v7489
      %7491 = vdwg.mxu0
      %v7492 = vadd.f32 %v7206, %v7394
      %v7493 = vadd.f32 %v7207, %v7396
      %v7494 = vadd.f32 %v7208, %v7398
      %v7495 = vadd.f32 %v7209, %v7400
      %v7496 = vadd.f32 %v7210, %v7404
      %v7497 = vadd.f32 %v7211, %v7406
      %v7498 = vadd.f32 %v7212, %v7408
      %v7499 = vadd.f32 %v7213, %v7410
      %v7500 = vadd.f32 %v7214, %v7414
      %v7501 = vadd.f32 %v7215, %v7416
      %v7502 = vadd.f32 %v7216, %v7418
      %v7503 = vadd.f32 %v7217, %v7420
      %v7504 = vadd.f32 %v7218, %v7424
      %v7505 = vadd.f32 %v7219, %v7426
      %v7506 = vadd.f32 %v7220, %v7428
      %v7507 = vadd.f32 %v7221, %v7430
      %v7508 = vadd.f32 %v7222, %v7434
      %v7509 = vadd.f32 %v7223, %v7436
      %v7510 = vadd.f32 %v7224, %v7438
      %v7511 = vadd.f32 %v7225, %v7440
      %v7512 = vadd.f32 %v7226, %v7444
      %v7513 = vadd.f32 %v7227, %v7446
      %v7514 = vadd.f32 %v7228, %v7448
      %v7515 = vadd.f32 %v7229, %v7450
      %v7516 = vadd.f32 %v7230, %v7454
      %v7517 = vadd.f32 %v7231, %v7456
      %v7518 = vadd.f32 %v7232, %v7458
      %v7519 = vadd.f32 %v7233, %v7460
      %v7520 = vadd.f32 %v7234, %v7464
      %v7521 = vadd.f32 %v7235, %v7466
      %v7522 = vadd.f32 %v7236, %v7468
      %v7523 = vadd.f32 %v7237, %v7470
      %v7524 = vadd.f32 %v7238, %v7474
      %v7525 = vadd.f32 %v7239, %v7476
      %v7526 = vadd.f32 %v7240, %v7478
      %v7527 = vadd.f32 %v7241, %v7480
      %v7528 = vadd.f32 %v7242, %v7484
      %v7529 = vadd.f32 %v7243, %v7486
      %v7530 = vadd.f32 %v7244, %v7488
      %v7531 = vadd.f32 %v7245, %v7490
      %7532 = vst [vmem:[#allocation5] sm:$0xff] %v7492
      %7533 = vst.msk [vmem:[#allocation5 + $0x8] sm:$0xff] %vm6434, %v7493
      %7534 = vst [vmem:[#allocation5 + $0x10] sm:$0xff] %v7494
      %7535 = vst.msk [vmem:[#allocation5 + $0x18] sm:$0xff] %vm6434, %v7495
      %7536 = vst [vmem:[#allocation5 + $0x20] sm:$0xff] %v7496
      %7537 = vst.msk [vmem:[#allocation5 + $0x28] sm:$0xff] %vm6434, %v7497
      %7538 = vst [vmem:[#allocation5 + $0x30] sm:$0xff] %v7498
      %7539 = vst.msk [vmem:[#allocation5 + $0x38] sm:$0xff] %vm6434, %v7499
      %7540 = vst [vmem:[#allocation5 + $0x40] sm:$0xff] %v7500
      %7541 = vst.msk [vmem:[#allocation5 + $0x48] sm:$0xff] %vm6434, %v7501
      %7542 = vst [vmem:[#allocation5 + $0x50] sm:$0xff] %v7502
      %7543 = vst.msk [vmem:[#allocation5 + $0x58] sm:$0xff] %vm6434, %v7503
      %7544 = vst [vmem:[#allocation5 + $0x60] sm:$0xff] %v7504
      %7545 = vst.msk [vmem:[#allocation5 + $0x68] sm:$0xff] %vm6434, %v7505
      %7546 = vst [vmem:[#allocation5 + $0x70] sm:$0xff] %v7506
      %7547 = vst.msk [vmem:[#allocation5 + $0x78] sm:$0xff] %vm6434, %v7507
      %7548 = vst [vmem:[#allocation5 + $0x80] sm:$0xff] %v7508
      %7549 = vst.msk [vmem:[#allocation5 + $0x88] sm:$0xff] %vm6434, %v7509
      %7550 = vst [vmem:[#allocation5 + $0x90] sm:$0xff] %v7510
      %7551 = vst.msk [vmem:[#allocation5 + $0x98] sm:$0xff] %vm6434, %v7511
      %7552 = vst [vmem:[#allocation5 + $0xa0] sm:$0xff] %v7512
      %7553 = vst.msk [vmem:[#allocation5 + $0xa8] sm:$0xff] %vm6434, %v7513
      %7554 = vst [vmem:[#allocation5 + $0xb0] sm:$0xff] %v7514
      %7555 = vst.msk [vmem:[#allocation5 + $0xb8] sm:$0xff] %vm6434, %v7515
      %7556 = vst [vmem:[#allocation5 + $0xc0] sm:$0xff] %v7516
      %7557 = vst.msk [vmem:[#allocation5 + $0xc8] sm:$0xff] %vm6434, %v7517
      %7558 = vst [vmem:[#allocation5 + $0xd0] sm:$0xff] %v7518
      %7559 = vst.msk [vmem:[#allocation5 + $0xd8] sm:$0xff] %vm6434, %v7519
      %7560 = vst [vmem:[#allocation5 + $0xe0] sm:$0xff] %v7520
      %7561 = vst.msk [vmem:[#allocation5 + $0xe8] sm:$0xff] %vm6434, %v7521
      %7562 = vst [vmem:[#allocation5 + $0xf0] sm:$0xff] %v7522
      %7563 = vst.msk [vmem:[#allocation5 + $0xf8] sm:$0xff] %vm6434, %v7523
      %7564 = vst [vmem:[#allocation5 + $0x100] sm:$0xff] %v7524
      %7565 = vst.msk [vmem:[#allocation5 + $0x108] sm:$0xff] %vm6434, %v7525
      %7566 = vst [vmem:[#allocation5 + $0x110] sm:$0xff] %v7526
      %7567 = vst.msk [vmem:[#allocation5 + $0x118] sm:$0xff] %vm6434, %v7527
      %7568 = vst [vmem:[#allocation5 + $0x120] sm:$0xff] %v7528
      %7569 = vst.msk [vmem:[#allocation5 + $0x128] sm:$0xff] %vm6434, %v7529
      %7570 = vst [vmem:[#allocation5 + $0x130] sm:$0xff] %v7530
      %7571 = vst.msk [vmem:[#allocation5 + $0x138] sm:$0xff] %vm6434, %v7531
      %v7572 = vld [vmem:[#allocation5] sm:$0xff]
      %v7573 = vld [vmem:[#allocation5 + $0x8] sm:$0xff]
      %v7574 = vld [vmem:[#allocation5 + $0x10] sm:$0xff]
      %v7575 = vld [vmem:[#allocation5 + $0x18] sm:$0xff]
      %v7576 = vld [vmem:[#allocation5 + $0x20] sm:$0xff]
      %v7577 = vld [vmem:[#allocation5 + $0x28] sm:$0xff]
      %v7578 = vld [vmem:[#allocation5 + $0x30] sm:$0xff]
      %v7579 = vld [vmem:[#allocation5 + $0x38] sm:$0xff]
      %v7580 = vld [vmem:[#allocation5 + $0x40] sm:$0xff]
      %v7581 = vld [vmem:[#allocation5 + $0x48] sm:$0xff]
      %v7582 = vld [vmem:[#allocation5 + $0x50] sm:$0xff]
      %v7583 = vld [vmem:[#allocation5 + $0x58] sm:$0xff]
      %v7584 = vld [vmem:[#allocation5 + $0x60] sm:$0xff]
      %v7585 = vld [vmem:[#allocation5 + $0x68] sm:$0xff]
      %v7586 = vld [vmem:[#allocation5 + $0x70] sm:$0xff]
      %v7587 = vld [vmem:[#allocation5 + $0x78] sm:$0xff]
      %v7588 = vld [vmem:[#allocation5 + $0x80] sm:$0xff]
      %v7589 = vld [vmem:[#allocation5 + $0x88] sm:$0xff]
      %v7590 = vld [vmem:[#allocation5 + $0x90] sm:$0xff]
      %v7591 = vld [vmem:[#allocation5 + $0x98] sm:$0xff]
      %v7592 = vld [vmem:[#allocation5 + $0xa0] sm:$0xff]
      %v7593 = vld [vmem:[#allocation5 + $0xa8] sm:$0xff]
      %v7594 = vld [vmem:[#allocation5 + $0xb0] sm:$0xff]
      %v7595 = vld [vmem:[#allocation5 + $0xb8] sm:$0xff]
      %v7596 = vld [vmem:[#allocation5 + $0xc0] sm:$0xff]
      %v7597 = vld [vmem:[#allocation5 + $0xc8] sm:$0xff]
      %v7598 = vld [vmem:[#allocation5 + $0xd0] sm:$0xff]
      %v7599 = vld [vmem:[#allocation5 + $0xd8] sm:$0xff]
      %v7600 = vld [vmem:[#allocation5 + $0xe0] sm:$0xff]
      %v7601 = vld [vmem:[#allocation5 + $0xe8] sm:$0xff]
      %v7602 = vld [vmem:[#allocation5 + $0xf0] sm:$0xff]
      %v7603 = vld [vmem:[#allocation5 + $0xf8] sm:$0xff]
      %v7604 = vld [vmem:[#allocation5 + $0x100] sm:$0xff]
      %v7605 = vld [vmem:[#allocation5 + $0x108] sm:$0xff]
      %v7606 = vld [vmem:[#allocation5 + $0x110] sm:$0xff]
      %v7607 = vld [vmem:[#allocation5 + $0x118] sm:$0xff]
      %v7608 = vld [vmem:[#allocation5 + $0x120] sm:$0xff]
      %v7609 = vld [vmem:[#allocation5 + $0x128] sm:$0xff]
      %v7610 = vld [vmem:[#allocation5 + $0x130] sm:$0xff]
      %v7611 = vld [vmem:[#allocation5 + $0x138] sm:$0xff]
      %v7612 = vld [vmem:[#allocation4 + $0x20] sm:$0xff]
      %v7613 = vld [vmem:[#allocation4 + $0x28] sm:$0xff]
      %v7614 = vld [vmem:[#allocation4 + $0x30] sm:$0xff]
      %v7615 = vld [vmem:[#allocation4 + $0x38] sm:$0xff]
      %v7616 = vld [vmem:[#allocation4 + $0x40] sm:$0xff]
      %v7617 = vld [vmem:[#allocation4 + $0x48] sm:$0xff]
      %v7618 = vld [vmem:[#allocation4 + $0x50] sm:$0xff]
      %v7619 = vld [vmem:[#allocation4 + $0x58] sm:$0xff]
      %v7620 = vld [vmem:[#allocation4 + $0x60] sm:$0xff]
      %v7621 = vld [vmem:[#allocation4 + $0x68] sm:$0xff]
      %s7622 = scalar_lea.vmem %s4, 352
      %v7623 = vld [vmem:[%s7622] sm:$0xff]
      %v7624 = vld [vmem:[%s7622 + $0x8] sm:$0xff]
      %v7625 = vld [vmem:[%s7622 + $0x10] sm:$0xff]
      %v7626 = vld [vmem:[%s7622 + $0x18] sm:$0xff]
      %v7627 = vld [vmem:[%s7622 + $0x20] sm:$0xff]
      %v7628 = vld [vmem:[%s7622 + $0x28] sm:$0xff]
      %v7629 = vld [vmem:[%s7622 + $0x30] sm:$0xff]
      %v7630 = vld [vmem:[%s7622 + $0x38] sm:$0xff]
      %v7631 = vld [vmem:[%s7622 + $0x40] sm:$0xff]
      %v7632 = vld [vmem:[%s7622 + $0x48] sm:$0xff]
      %v7633 = vld [vmem:[%s7622 + $0x50] sm:$0x33]
      %v7645 = vunpack.c.l.b16 %v7623
      %v7646 = vunpack.c.h.b16 %v7623
      %v7647 = vunpack.c.l.b16 %v7624
      %v7648 = vunpack.c.h.b16 %v7624
      %v7649 = vunpack.c.l.b16 %v7625
      %v7650 = vunpack.c.h.b16 %v7625
      %v7651 = vunpack.c.l.b16 %v7626
      %v7652 = vunpack.c.h.b16 %v7626
      %v7653 = vunpack.c.l.b16 %v7627
      %v7654 = vunpack.c.h.b16 %v7627
      %v7655 = vunpack.c.l.b16 %v7628
      %v7656 = vunpack.c.h.b16 %v7628
      %v7657 = vunpack.c.l.b16 %v7629
      %v7658 = vunpack.c.h.b16 %v7629
      %v7659 = vunpack.c.l.b16 %v7630
      %v7660 = vunpack.c.h.b16 %v7630
      %v7661 = vunpack.c.l.b16 %v7631
      %v7662 = vunpack.c.h.b16 %v7631
      %v7663 = vunpack.c.l.b16 %v7632
      %v7664 = vunpack.c.h.b16 %v7632
      %v7665 = vunpack.c.l.b16 %v7633
      %v7666 = vunpack.c.h.b16 %v7633
      %v7667 = vpack.c.b16 %v7647, %v7645
      %v7668 = vpack.c.b16 %v7648, %v7646
      %v7669 = vpack.c.b16 %v7651, %v7649
      %v7670 = vpack.c.b16 %v7652, %v7650
      %v7671 = vpack.c.b16 %v7655, %v7653
      %v7672 = vpack.c.b16 %v7656, %v7654
      %v7673 = vpack.c.b16 %v7659, %v7657
      %v7674 = vpack.c.b16 %v7660, %v7658
      %v7675 = vpack.c.b16 %v7663, %v7661
      %v7676 = vpack.c.b16 %v7664, %v7662
      %v7677 = vpack.c.b16 %v7665, %v7665
      %v7678 = vpack.c.b16 %v7666, %v7666
      %v7690 = vsel %vm6172, %v7612, 0
      %v7693 = vsel %vm6172, %v7613, 0
      %v7696 = vsel %vm6172, %v7614, 0
      %v7699 = vsel %vm6172, %v7615, 0
      %v7702 = vsel %vm6172, %v7616, 0
      %v7705 = vsel %vm6172, %v7617, 0
      %v7708 = vsel %vm6172, %v7618, 0
      %v7711 = vsel %vm6172, %v7619, 0
      %v7714 = vsel %vm6172, %v7620, 0
      %v7717 = vsel %vm6172, %v7621, 0
      %v7720 = vsel %vm6293, %v7677, 0
      %v7723 = vsel %vm6293, %v7678, 0
      %7725 = vmatprep.subr.bf16.mxu0 %v7668
      %7726 = vmatpush1.bf16.msra.mxu0 %v7667
      %7727 = vmatprep.subr.bf16.mxu0 %v7670
      %7728 = vmatpush1.bf16.msra.mxu0 %v7669
      %7729 = vmatprep.subr.bf16.mxu0 %v7672
      %7730 = vmatpush1.bf16.msra.mxu0 %v7671
      %7731 = vmatprep.subr.bf16.mxu0 %v7674
      %7732 = vmatpush1.bf16.msra.mxu0 %v7673
      %7733 = vmatprep.subr.bf16.mxu0 %v7676
      %7734 = vmatpush1.bf16.msra.mxu0 %v7675
      %7735 = vmatprep.subr.bf16.mxu0 %v7723
      %7736 = vmatpush1.bf16.msra.mxu0 %v7720
      %7737 = vmatprep.subr.bf16.mxu0 0
      %7738 = vmatpush1.bf16.msra.mxu0 0
      %7739 = vmatprep.subr.bf16.mxu0 0
      %7740 = vmatpush1.bf16.msra.mxu0 0
      %7741 = vmatprep.subr.bf16.mxu0 0
      %7742 = vmatpush1.bf16.msra.mxu0 0
      %7743 = vmatprep.subr.bf16.mxu0 0
      %7744 = vmatpush1.bf16.msra.mxu0 0
      %7745 = vmatprep.subr.bf16.mxu0 0
      %7746 = vmatpush1.bf16.msra.mxu0 0
      %7747 = vmatprep.subr.bf16.mxu0 0
      %7748 = vmatpush1.bf16.msra.mxu0 0
      %7749 = vmatprep.subr.bf16.mxu0 0
      %7750 = vmatpush1.bf16.msra.mxu0 0
      %7751 = vmatprep.subr.bf16.mxu0 0
      %7752 = vmatpush1.bf16.msra.mxu0 0
      %7753 = vmatprep.subr.bf16.mxu0 0
      %7754 = vmatpush1.bf16.msra.mxu0 0
      %7755 = vmatprep.subr.bf16.mxu0 0
      %7756 = vmatpush1.bf16.msra.mxu0 0
      %7757 = vmatprep.mubr.bf16.mxu0 0
      %7758 = vmatmul.mubr.bf16.gmra.mrb[0].mxu0 %v7690
      %v7759 = vpop.f32.mrb[0].mxu0
      %v7760 = vadd.f32 0.0, %v7759
      %v7761 = vpop.f32.mrb[0].mxu0
      %v7762 = vadd.f32 0.0, %v7761
      %v7763 = vpop.f32.mrb[0].mxu0
      %v7764 = vadd.f32 0.0, %v7763
      %v7765 = vpop.f32.mrb[0].mxu0
      %v7766 = vadd.f32 0.0, %v7765
      %7767 = vmatprep.mubr.bf16.mxu0 0
      %7768 = vmatmul.mubr.bf16.gmra.mrb[0].mxu0 %v7693
      %v7769 = vpop.f32.mrb[0].mxu0
      %v7770 = vadd.f32 0.0, %v7769
      %v7771 = vpop.f32.mrb[0].mxu0
      %v7772 = vadd.f32 0.0, %v7771
      %v7773 = vpop.f32.mrb[0].mxu0
      %v7774 = vadd.f32 0.0, %v7773
      %v7775 = vpop.f32.mrb[0].mxu0
      %v7776 = vadd.f32 0.0, %v7775
      %7777 = vmatprep.mubr.bf16.mxu0 0
      %7778 = vmatmul.mubr.bf16.gmra.mrb[0].mxu0 %v7696
      %v7779 = vpop.f32.mrb[0].mxu0
      %v7780 = vadd.f32 0.0, %v7779
      %v7781 = vpop.f32.mrb[0].mxu0
      %v7782 = vadd.f32 0.0, %v7781
      %v7783 = vpop.f32.mrb[0].mxu0
      %v7784 = vadd.f32 0.0, %v7783
      %v7785 = vpop.f32.mrb[0].mxu0
      %v7786 = vadd.f32 0.0, %v7785
      %7787 = vmatprep.mubr.bf16.mxu0 0
      %7788 = vmatmul.mubr.bf16.gmra.mrb[0].mxu0 %v7699
      %v7789 = vpop.f32.mrb[0].mxu0
      %v7790 = vadd.f32 0.0, %v7789
      %v7791 = vpop.f32.mrb[0].mxu0
      %v7792 = vadd.f32 0.0, %v7791
      %v7793 = vpop.f32.mrb[0].mxu0
      %v7794 = vadd.f32 0.0, %v7793
      %v7795 = vpop.f32.mrb[0].mxu0
      %v7796 = vadd.f32 0.0, %v7795
      %7797 = vmatprep.mubr.bf16.mxu0 0
      %7798 = vmatmul.mubr.bf16.gmra.mrb[0].mxu0 %v7702
      %v7799 = vpop.f32.mrb[0].mxu0
      %v7800 = vadd.f32 0.0, %v7799
      %v7801 = vpop.f32.mrb[0].mxu0
      %v7802 = vadd.f32 0.0, %v7801
      %v7803 = vpop.f32.mrb[0].mxu0
      %v7804 = vadd.f32 0.0, %v7803
      %v7805 = vpop.f32.mrb[0].mxu0
      %v7806 = vadd.f32 0.0, %v7805
      %7807 = vmatprep.mubr.bf16.mxu0 0
      %7808 = vmatmul.mubr.bf16.gmra.mrb[0].mxu0 %v7705
      %v7809 = vpop.f32.mrb[0].mxu0
      %v7810 = vadd.f32 0.0, %v7809
      %v7811 = vpop.f32.mrb[0].mxu0
      %v7812 = vadd.f32 0.0, %v7811
      %v7813 = vpop.f32.mrb[0].mxu0
      %v7814 = vadd.f32 0.0, %v7813
      %v7815 = vpop.f32.mrb[0].mxu0
      %v7816 = vadd.f32 0.0, %v7815
      %7817 = vmatprep.mubr.bf16.mxu0 0
      %7818 = vmatmul.mubr.bf16.gmra.mrb[0].mxu0 %v7708
      %v7819 = vpop.f32.mrb[0].mxu0
      %v7820 = vadd.f32 0.0, %v7819
      %v7821 = vpop.f32.mrb[0].mxu0
      %v7822 = vadd.f32 0.0, %v7821
      %v7823 = vpop.f32.mrb[0].mxu0
      %v7824 = vadd.f32 0.0, %v7823
      %v7825 = vpop.f32.mrb[0].mxu0
      %v7826 = vadd.f32 0.0, %v7825
      %7827 = vmatprep.mubr.bf16.mxu0 0
      %7828 = vmatmul.mubr.bf16.gmra.mrb[0].mxu0 %v7711
      %v7829 = vpop.f32.mrb[0].mxu0
      %v7830 = vadd.f32 0.0, %v7829
      %v7831 = vpop.f32.mrb[0].mxu0
      %v7832 = vadd.f32 0.0, %v7831
      %v7833 = vpop.f32.mrb[0].mxu0
      %v7834 = vadd.f32 0.0, %v7833
      %v7835 = vpop.f32.mrb[0].mxu0
      %v7836 = vadd.f32 0.0, %v7835
      %7837 = vmatprep.mubr.bf16.mxu0 0
      %7838 = vmatmul.mubr.bf16.gmra.mrb[0].mxu0 %v7714
      %v7839 = vpop.f32.mrb[0].mxu0
      %v7840 = vadd.f32 0.0, %v7839
      %v7841 = vpop.f32.mrb[0].mxu0
      %v7842 = vadd.f32 0.0, %v7841
      %v7843 = vpop.f32.mrb[0].mxu0
      %v7844 = vadd.f32 0.0, %v7843
      %v7845 = vpop.f32.mrb[0].mxu0
      %v7846 = vadd.f32 0.0, %v7845
      %7847 = vmatprep.mubr.bf16.mxu0 0
      %7848 = vmatmul.mubr.bf16.gmra.mrb[0].mxu0 %v7717
      %v7849 = vpop.f32.mrb[0].mxu0
      %v7850 = vadd.f32 0.0, %v7849
      %v7851 = vpop.f32.mrb[0].mxu0
      %v7852 = vadd.f32 0.0, %v7851
      %v7853 = vpop.f32.mrb[0].mxu0
      %v7854 = vadd.f32 0.0, %v7853
      %v7855 = vpop.f32.mrb[0].mxu0
      %v7856 = vadd.f32 0.0, %v7855
      %7857 = vdwg.mxu0
      %v7858 = vadd.f32 %v7572, %v7760
      %v7859 = vadd.f32 %v7573, %v7762
      %v7860 = vadd.f32 %v7574, %v7764
      %v7861 = vadd.f32 %v7575, %v7766
      %v7862 = vadd.f32 %v7576, %v7770
      %v7863 = vadd.f32 %v7577, %v7772
      %v7864 = vadd.f32 %v7578, %v7774
      %v7865 = vadd.f32 %v7579, %v7776
      %v7866 = vadd.f32 %v7580, %v7780
      %v7867 = vadd.f32 %v7581, %v7782
      %v7868 = vadd.f32 %v7582, %v7784
      %v7869 = vadd.f32 %v7583, %v7786
      %v7870 = vadd.f32 %v7584, %v7790
      %v7871 = vadd.f32 %v7585, %v7792
      %v7872 = vadd.f32 %v7586, %v7794
      %v7873 = vadd.f32 %v7587, %v7796
      %v7874 = vadd.f32 %v7588, %v7800
      %v7875 = vadd.f32 %v7589, %v7802
      %v7876 = vadd.f32 %v7590, %v7804
      %v7877 = vadd.f32 %v7591, %v7806
      %v7878 = vadd.f32 %v7592, %v7810
      %v7879 = vadd.f32 %v7593, %v7812
      %v7880 = vadd.f32 %v7594, %v7814
      %v7881 = vadd.f32 %v7595, %v7816
      %v7882 = vadd.f32 %v7596, %v7820
      %v7883 = vadd.f32 %v7597, %v7822
      %v7884 = vadd.f32 %v7598, %v7824
      %v7885 = vadd.f32 %v7599, %v7826
      %v7886 = vadd.f32 %v7600, %v7830
      %v7887 = vadd.f32 %v7601, %v7832
      %v7888 = vadd.f32 %v7602, %v7834
      %v7889 = vadd.f32 %v7603, %v7836
      %v7890 = vadd.f32 %v7604, %v7840
      %v7891 = vadd.f32 %v7605, %v7842
      %v7892 = vadd.f32 %v7606, %v7844
      %v7893 = vadd.f32 %v7607, %v7846
      %v7894 = vadd.f32 %v7608, %v7850
      %v7895 = vadd.f32 %v7609, %v7852
      %v7896 = vadd.f32 %v7610, %v7854
      %v7897 = vadd.f32 %v7611, %v7856
      %7898 = vst [vmem:[#allocation5] sm:$0xff] %v7858
      %7899 = vst.msk [vmem:[#allocation5 + $0x8] sm:$0xff] %vm6434, %v7859
      %7900 = vst [vmem:[#allocation5 + $0x10] sm:$0xff] %v7860
      %7901 = vst.msk [vmem:[#allocation5 + $0x18] sm:$0xff] %vm6434, %v7861
      %7902 = vst [vmem:[#allocation5 + $0x20] sm:$0xff] %v7862
      %7903 = vst.msk [vmem:[#allocation5 + $0x28] sm:$0xff] %vm6434, %v7863
      %7904 = vst [vmem:[#allocation5 + $0x30] sm:$0xff] %v7864
      %7905 = vst.msk [vmem:[#allocation5 + $0x38] sm:$0xff] %vm6434, %v7865
      %7906 = vst [vmem:[#allocation5 + $0x40] sm:$0xff] %v7866
      %7907 = vst.msk [vmem:[#allocation5 + $0x48] sm:$0xff] %vm6434, %v7867
      %7908 = vst [vmem:[#allocation5 + $0x50] sm:$0xff] %v7868
      %7909 = vst.msk [vmem:[#allocation5 + $0x58] sm:$0xff] %vm6434, %v7869
      %7910 = vst [vmem:[#allocation5 + $0x60] sm:$0xff] %v7870
      %7911 = vst.msk [vmem:[#allocation5 + $0x68] sm:$0xff] %vm6434, %v7871
      %7912 = vst [vmem:[#allocation5 + $0x70] sm:$0xff] %v7872
      %7913 = vst.msk [vmem:[#allocation5 + $0x78] sm:$0xff] %vm6434, %v7873
      %7914 = vst [vmem:[#allocation5 + $0x80] sm:$0xff] %v7874
      %7915 = vst.msk [vmem:[#allocation5 + $0x88] sm:$0xff] %vm6434, %v7875
      %7916 = vst [vmem:[#allocation5 + $0x90] sm:$0xff] %v7876
      %7917 = vst.msk [vmem:[#allocation5 + $0x98] sm:$0xff] %vm6434, %v7877
      %7918 = vst [vmem:[#allocation5 + $0xa0] sm:$0xff] %v7878
      %7919 = vst.msk [vmem:[#allocation5 + $0xa8] sm:$0xff] %vm6434, %v7879
      %7920 = vst [vmem:[#allocation5 + $0xb0] sm:$0xff] %v7880
      %7921 = vst.msk [vmem:[#allocation5 + $0xb8] sm:$0xff] %vm6434, %v7881
      %7922 = vst [vmem:[#allocation5 + $0xc0] sm:$0xff] %v7882
      %7923 = vst.msk [vmem:[#allocation5 + $0xc8] sm:$0xff] %vm6434, %v7883
      %7924 = vst [vmem:[#allocation5 + $0xd0] sm:$0xff] %v7884
      %7925 = vst.msk [vmem:[#allocation5 + $0xd8] sm:$0xff] %vm6434, %v7885
      %7926 = vst [vmem:[#allocation5 + $0xe0] sm:$0xff] %v7886
      %7927 = vst.msk [vmem:[#allocation5 + $0xe8] sm:$0xff] %vm6434, %v7887
      %7928 = vst [vmem:[#allocation5 + $0xf0] sm:$0xff] %v7888
      %7929 = vst.msk [vmem:[#allocation5 + $0xf8] sm:$0xff] %vm6434, %v7889
      %7930 = vst [vmem:[#allocation5 + $0x100] sm:$0xff] %v7890
      %7931 = vst.msk [vmem:[#allocation5 + $0x108] sm:$0xff] %vm6434, %v7891
      %7932 = vst [vmem:[#allocation5 + $0x110] sm:$0xff] %v7892
      %7933 = vst.msk [vmem:[#allocation5 + $0x118] sm:$0xff] %vm6434, %v7893
      %7934 = vst [vmem:[#allocation5 + $0x120] sm:$0xff] %v7894
      %7935 = vst.msk [vmem:[#allocation5 + $0x128] sm:$0xff] %vm6434, %v7895
      %7936 = vst [vmem:[#allocation5 + $0x130] sm:$0xff] %v7896
      %7937 = vst.msk [vmem:[#allocation5 + $0x138] sm:$0xff] %vm6434, %v7897
      %v7938 = vld [vmem:[#allocation5] sm:$0xff]
      %v7939 = vld [vmem:[#allocation5 + $0x8] sm:$0xff]
      %v7940 = vld [vmem:[#allocation5 + $0x10] sm:$0xff]
      %v7941 = vld [vmem:[#allocation5 + $0x18] sm:$0xff]
      %v7942 = vld [vmem:[#allocation5 + $0x20] sm:$0xff]
      %v7943 = vld [vmem:[#allocation5 + $0x28] sm:$0xff]
      %v7944 = vld [vmem:[#allocation5 + $0x30] sm:$0xff]
      %v7945 = vld [vmem:[#allocation5 + $0x38] sm:$0xff]
      %v7946 = vmax.f32 %v7938, %v7942
      %v7947 = vmax.f32 %v7939, %v7943
      %v7948 = vmax.f32 %v7940, %v7944
      %v7949 = vmax.f32 %v7941, %v7945
      %7950 = vst [vmem:[#allocation6] sm:$0xff] %v7946
      %7951 = vst.msk [vmem:[#allocation6 + $0x8] sm:$0xff] %vm6434, %v7947
      %7952 = vst [vmem:[#allocation6 + $0x10] sm:$0xff] %v7948
      %7953 = vst.msk [vmem:[#allocation6 + $0x18] sm:$0xff] %vm6434, %v7949
      %v7954 = vld [vmem:[#allocation5 + $0x40] sm:$0xff]
      %v7955 = vld [vmem:[#allocation5 + $0x48] sm:$0xff]
      %v7956 = vld [vmem:[#allocation5 + $0x50] sm:$0xff]
      %v7957 = vld [vmem:[#allocation5 + $0x58] sm:$0xff]
      %v7958 = vld [vmem:[#allocation5 + $0x60] sm:$0xff]
      %v7959 = vld [vmem:[#allocation5 + $0x68] sm:$0xff]
      %v7960 = vld [vmem:[#allocation5 + $0x70] sm:$0xff]
      %v7961 = vld [vmem:[#allocation5 + $0x78] sm:$0xff]
      %v7962 = vmax.f32 %v7954, %v7958
      %v7963 = vmax.f32 %v7955, %v7959
      %v7964 = vmax.f32 %v7956, %v7960
      %v7965 = vmax.f32 %v7957, %v7961
      %7966 = vst [vmem:[#allocation6 + $0x20] sm:$0xff] %v7962
      %7967 = vst.msk [vmem:[#allocation6 + $0x28] sm:$0xff] %vm6434, %v7963
      %7968 = vst [vmem:[#allocation6 + $0x30] sm:$0xff] %v7964
      %7969 = vst.msk [vmem:[#allocation6 + $0x38] sm:$0xff] %vm6434, %v7965
      %v7970 = vld [vmem:[#allocation5 + $0x80] sm:$0xff]
      %v7971 = vld [vmem:[#allocation5 + $0x88] sm:$0xff]
      %v7972 = vld [vmem:[#allocation5 + $0x90] sm:$0xff]
      %v7973 = vld [vmem:[#allocation5 + $0x98] sm:$0xff]
      %v7974 = vld [vmem:[#allocation5 + $0xa0] sm:$0xff]
      %v7975 = vld [vmem:[#allocation5 + $0xa8] sm:$0xff]
      %v7976 = vld [vmem:[#allocation5 + $0xb0] sm:$0xff]
      %v7977 = vld [vmem:[#allocation5 + $0xb8] sm:$0xff]
      %v7978 = vmax.f32 %v7970, %v7974
      %v7979 = vmax.f32 %v7971, %v7975
      %v7980 = vmax.f32 %v7972, %v7976
      %v7981 = vmax.f32 %v7973, %v7977
      %7982 = vst [vmem:[#allocation6 + $0x40] sm:$0xff] %v7978
      %7983 = vst.msk [vmem:[#allocation6 + $0x48] sm:$0xff] %vm6434, %v7979
      %7984 = vst [vmem:[#allocation6 + $0x50] sm:$0xff] %v7980
      %7985 = vst.msk [vmem:[#allocation6 + $0x58] sm:$0xff] %vm6434, %v7981
      %v7986 = vld [vmem:[#allocation5 + $0xc0] sm:$0xff]
      %v7987 = vld [vmem:[#allocation5 + $0xc8] sm:$0xff]
      %v7988 = vld [vmem:[#allocation5 + $0xd0] sm:$0xff]
      %v7989 = vld [vmem:[#allocation5 + $0xd8] sm:$0xff]
      %v7990 = vld [vmem:[#allocation5 + $0xe0] sm:$0xff]
      %v7991 = vld [vmem:[#allocation5 + $0xe8] sm:$0xff]
      %v7992 = vld [vmem:[#allocation5 + $0xf0] sm:$0xff]
      %v7993 = vld [vmem:[#allocation5 + $0xf8] sm:$0xff]
      %v7994 = vmax.f32 %v7986, %v7990
      %v7995 = vmax.f32 %v7987, %v7991
      %v7996 = vmax.f32 %v7988, %v7992
      %v7997 = vmax.f32 %v7989, %v7993
      %7998 = vst [vmem:[#allocation6 + $0x60] sm:$0xff] %v7994
      %7999 = vst.msk [vmem:[#allocation6 + $0x68] sm:$0xff] %vm6434, %v7995
      %8000 = vst [vmem:[#allocation6 + $0x70] sm:$0xff] %v7996
      %8001 = vst.msk [vmem:[#allocation6 + $0x78] sm:$0xff] %vm6434, %v7997
      %v8002 = vld [vmem:[#allocation5 + $0x100] sm:$0xff]
      %v8003 = vld [vmem:[#allocation5 + $0x108] sm:$0xff]
      %v8004 = vld [vmem:[#allocation5 + $0x110] sm:$0xff]
      %v8005 = vld [vmem:[#allocation5 + $0x118] sm:$0xff]
      %v8006 = vld [vmem:[#allocation5 + $0x120] sm:$0xff]
      %v8007 = vld [vmem:[#allocation5 + $0x128] sm:$0xff]
      %v8008 = vld [vmem:[#allocation5 + $0x130] sm:$0xff]
      %v8009 = vld [vmem:[#allocation5 + $0x138] sm:$0xff]
      %v8010 = vmax.f32 %v8002, %v8006
      %v8011 = vmax.f32 %v8003, %v8007
      %v8012 = vmax.f32 %v8004, %v8008
      %v8013 = vmax.f32 %v8005, %v8009
      %8014 = vst [vmem:[#allocation6 + $0x80] sm:$0xff] %v8010
      %8015 = vst.msk [vmem:[#allocation6 + $0x88] sm:$0xff] %vm6434, %v8011
      %8016 = vst [vmem:[#allocation6 + $0x90] sm:$0xff] %v8012
      %8017 = vst.msk [vmem:[#allocation6 + $0x98] sm:$0xff] %vm6434, %v8013
      %v8018 = vld [vmem:[#allocation6] sm:$0xff]
      %v8019 = vld [vmem:[#allocation6 + $0x8] sm:$0xff]
      %v8020 = vld [vmem:[#allocation6 + $0x10] sm:$0xff]
      %v8021 = vld [vmem:[#allocation6 + $0x18] sm:$0xff]
      %v8022 = vld [vmem:[#allocation6 + $0x20] sm:$0xff]
      %v8023 = vld [vmem:[#allocation6 + $0x28] sm:$0xff]
      %v8024 = vld [vmem:[#allocation6 + $0x30] sm:$0xff]
      %v8025 = vld [vmem:[#allocation6 + $0x38] sm:$0xff]
      %v8026 = vld [vmem:[#allocation6 + $0x40] sm:$0xff]
      %v8027 = vld [vmem:[#allocation6 + $0x48] sm:$0xff]
      %v8028 = vld [vmem:[#allocation6 + $0x50] sm:$0xff]
      %v8029 = vld [vmem:[#allocation6 + $0x58] sm:$0xff]
      %v8030 = vld [vmem:[#allocation6 + $0x60] sm:$0xff]
      %v8031 = vld [vmem:[#allocation6 + $0x68] sm:$0xff]
      %v8032 = vld [vmem:[#allocation6 + $0x70] sm:$0xff]
      %v8033 = vld [vmem:[#allocation6 + $0x78] sm:$0xff]
      %v8034 = vld [vmem:[#allocation6 + $0x80] sm:$0xff]
      %v8035 = vld [vmem:[#allocation6 + $0x88] sm:$0xff]
      %v8036 = vld [vmem:[#allocation6 + $0x90] sm:$0xff]
      %v8037 = vld [vmem:[#allocation6 + $0x98] sm:$0xff]
      %8058 = vrot.lane.b32.xlu0 %v8018, 112
      %v8059 = vpop.permute.xlu0 %8058
      %8060 = vrot.lane.b32.xlu0 %v8019, 112
      %v8061 = vpop.permute.xlu0 %8060
      %8062 = vrot.lane.b32.xlu0 %v8020, 112
      %v8063 = vpop.permute.xlu0 %8062
      %8064 = vrot.lane.b32.xlu0 %v8021, 112
      %v8065 = vpop.permute.xlu0 %8064
      %8066 = vrot.lane.b32.xlu0 %v8022, 112
      %v8067 = vpop.permute.xlu0 %8066
      %8068 = vrot.lane.b32.xlu0 %v8023, 112
      %v8069 = vpop.permute.xlu0 %8068
      %8070 = vrot.lane.b32.xlu0 %v8024, 112
      %v8071 = vpop.permute.xlu0 %8070
      %8072 = vrot.lane.b32.xlu0 %v8025, 112
      %v8073 = vpop.permute.xlu0 %8072
      %8074 = vrot.lane.b32.xlu0 %v8026, 112
      %v8075 = vpop.permute.xlu0 %8074
      %8076 = vrot.lane.b32.xlu0 %v8027, 112
      %v8077 = vpop.permute.xlu0 %8076
      %8078 = vrot.lane.b32.xlu0 %v8028, 112
      %v8079 = vpop.permute.xlu0 %8078
      %8080 = vrot.lane.b32.xlu0 %v8029, 112
      %v8081 = vpop.permute.xlu0 %8080
      %8082 = vrot.lane.b32.xlu0 %v8030, 112
      %v8083 = vpop.permute.xlu0 %8082
      %8084 = vrot.lane.b32.xlu0 %v8031, 112
      %v8085 = vpop.permute.xlu0 %8084
      %8086 = vrot.lane.b32.xlu0 %v8032, 112
      %v8087 = vpop.permute.xlu0 %8086
      %8088 = vrot.lane.b32.xlu0 %v8033, 112
      %v8089 = vpop.permute.xlu0 %8088
      %8090 = vrot.lane.b32.xlu0 %v8034, 112
      %v8091 = vpop.permute.xlu0 %8090
      %8092 = vrot.lane.b32.xlu0 %v8035, 112
      %v8093 = vpop.permute.xlu0 %8092
      %8094 = vrot.lane.b32.xlu0 %v8036, 112
      %v8095 = vpop.permute.xlu0 %8094
      %8096 = vrot.lane.b32.xlu0 %v8037, 112
      %v8097 = vpop.permute.xlu0 %8096
      %vm8098 = vcmask 916480
      %v8099 = vsel %vm8098, %v8059, %v8061
      %v8100 = vsel %vm8098, %v8063, %v8065
      %v8101 = vsel %vm8098, %v8067, %v8069
      %v8102 = vsel %vm8098, %v8071, %v8073
      %v8103 = vsel %vm8098, %v8075, %v8077
      %v8104 = vsel %vm8098, %v8079, %v8081
      %v8105 = vsel %vm8098, %v8083, %v8085
      %v8106 = vsel %vm8098, %v8087, %v8089
      %v8107 = vsel %vm8098, %v8091, %v8093
      %v8108 = vsel %vm8098, %v8095, %v8097
      %v8129 = vmax.f32 %v8018, %v8099
      %v8130 = vmax.f32 %v8019, %v8061
      %v8131 = vmax.f32 %v8020, %v8100
      %v8132 = vmax.f32 %v8021, %v8065
      %v8133 = vmax.f32 %v8022, %v8101
      %v8134 = vmax.f32 %v8023, %v8069
      %v8135 = vmax.f32 %v8024, %v8102
      %v8136 = vmax.f32 %v8025, %v8073
      %v8137 = vmax.f32 %v8026, %v8103
      %v8138 = vmax.f32 %v8027, %v8077
      %v8139 = vmax.f32 %v8028, %v8104
      %v8140 = vmax.f32 %v8029, %v8081
      %v8141 = vmax.f32 %v8030, %v8105
      %v8142 = vmax.f32 %v8031, %v8085
      %v8143 = vmax.f32 %v8032, %v8106
      %v8144 = vmax.f32 %v8033, %v8089
      %v8145 = vmax.f32 %v8034, %v8107
      %v8146 = vmax.f32 %v8035, %v8093
      %v8147 = vmax.f32 %v8036, %v8108
      %v8148 = vmax.f32 %v8037, %v8097
      %v8149 = vpack.c.bf16 %v8131, %v8129
      %v8150 = vpack.c.bf16 %v8132, %v8130
      %v8151 = vpack.c.bf16 %v8135, %v8133
      %v8152 = vpack.c.bf16 %v8136, %v8134
      %v8153 = vpack.c.bf16 %v8139, %v8137
      %v8154 = vpack.c.bf16 %v8140, %v8138
      %v8155 = vpack.c.bf16 %v8143, %v8141
      %v8156 = vpack.c.bf16 %v8144, %v8142
      %v8157 = vpack.c.bf16 %v8147, %v8145
      %v8158 = vpack.c.bf16 %v8148, %v8146
      %v8159 = vld [vmem:[%s5] sm:$0xf]
      %v8160 = vld [vmem:[%s5 + $0x4] sm:$0xf]
      %v8161 = vld [vmem:[%s5 + $0x8] sm:$0xf]
      %v8162 = vld [vmem:[%s5 + $0xc] sm:$0xf]
      %v8163 = vld [vmem:[%s5 + $0x10] sm:$0xf]
      %v8164 = vld [vmem:[%s5 + $0x14] sm:$0xf]
      %v8165 = vld [vmem:[%s5 + $0x18] sm:$0xf]
      %v8166 = vld [vmem:[%s5 + $0x1c] sm:$0xf]
      %v8167 = vld [vmem:[%s5 + $0x20] sm:$0xf]
      %v8168 = vld [vmem:[%s5 + $0x24] sm:$0xf]
      %v8169 = vld [vmem:[%s5 + $0x28] sm:$0xf]
      %v8170 = vld [vmem:[%s5 + $0x2c] sm:$0xf]
      %v8171 = vld [vmem:[%s5 + $0x30] sm:$0xf]
      %v8172 = vld [vmem:[%s5 + $0x34] sm:$0xf]
      %v8173 = vld [vmem:[%s5 + $0x38] sm:$0xf]
      %v8174 = vld [vmem:[%s5 + $0x3c] sm:$0xf]
      %v8175 = vld [vmem:[%s5 + $0x40] sm:$0xf]
      %v8176 = vld [vmem:[%s5 + $0x44] sm:$0xf]
      %v8177 = vld [vmem:[%s6] sm:$0x1]
      %v8179 = vlaneseq
      %v8180 = vshrl.u32 %v8179, 7
      %v8181 = vsub.s32 0, %v8180
      %v8182 = vrot.slane %v8177, %v8181
      %v8202 = vunpack.c.l.b16 %v8159
      %v8203 = vunpack.c.l.b16 %v8160
      %v8204 = vunpack.c.l.b16 %v8161
      %v8205 = vunpack.c.l.b16 %v8162
      %v8206 = vunpack.c.l.b16 %v8163
      %v8207 = vunpack.c.l.b16 %v8164
      %v8208 = vunpack.c.l.b16 %v8165
      %v8209 = vunpack.c.l.b16 %v8166
      %v8210 = vunpack.c.l.b16 %v8167
      %v8211 = vunpack.c.l.b16 %v8168
      %v8212 = vunpack.c.l.b16 %v8169
      %v8213 = vunpack.c.l.b16 %v8170
      %v8214 = vunpack.c.l.b16 %v8171
      %v8215 = vunpack.c.l.b16 %v8172
      %v8216 = vunpack.c.l.b16 %v8173
      %v8217 = vunpack.c.l.b16 %v8174
      %v8218 = vunpack.c.l.b16 %v8175
      %v8219 = vunpack.c.l.b16 %v8176
      %v8220 = vpack.c.b16 %v8203, %v8202
      %v8221 = vpack.c.b16 %v8205, %v8204
      %v8222 = vpack.c.b16 %v8207, %v8206
      %v8223 = vpack.c.b16 %v8209, %v8208
      %v8224 = vpack.c.b16 %v8211, %v8210
      %v8225 = vpack.c.b16 %v8213, %v8212
      %v8226 = vpack.c.b16 %v8215, %v8214
      %v8227 = vpack.c.b16 %v8217, %v8216
      %v8228 = vpack.c.b16 %v8219, %v8218
      %vm8238 = vcmask 130048
      %v8240 = vsel %vm8238, %v8150, 0
      %v8243 = vsel %vm8238, %v8152, 0
      %v8246 = vsel %vm8238, %v8154, 0
      %v8249 = vsel %vm8238, %v8156, 0
      %v8252 = vsel %vm8238, %v8158, 0
      %8254 = vmatprep.subr.bf16.mxu0 0
      %8255 = vmatpush1.bf16.msra.mxu0 %v8220
      %8256 = vmatprep.subr.bf16.mxu0 0
      %8257 = vmatpush1.bf16.msra.mxu0 %v8221
      %8258 = vmatprep.subr.bf16.mxu0 0
      %8259 = vmatpush1.bf16.msra.mxu0 %v8222
      %8260 = vmatprep.subr.bf16.mxu0 0
      %8261 = vmatpush1.bf16.msra.mxu0 %v8223
      %8262 = vmatprep.subr.bf16.mxu0 0
      %8263 = vmatpush1.bf16.msra.mxu0 %v8224
      %8264 = vmatprep.subr.bf16.mxu0 0
      %8265 = vmatpush1.bf16.msra.mxu0 %v8225
      %8266 = vmatprep.subr.bf16.mxu0 0
      %8267 = vmatpush1.bf16.msra.mxu0 %v8226
      %8268 = vmatprep.subr.bf16.mxu0 0
      %8269 = vmatpush1.bf16.msra.mxu0 %v8227
      %8270 = vmatprep.subr.bf16.mxu0 0
      %8271 = vmatpush1.bf16.msra.mxu0 %v8228
      %8272 = vmatprep.subr.bf16.mxu0 0
      %8273 = vmatpush1.bf16.msra.mxu0 0
      %8274 = vmatprep.subr.bf16.mxu0 0
      %8275 = vmatpush1.bf16.msra.mxu0 0
      %8276 = vmatprep.subr.bf16.mxu0 0
      %8277 = vmatpush1.bf16.msra.mxu0 0
      %8278 = vmatprep.subr.bf16.mxu0 0
      %8279 = vmatpush1.bf16.msra.mxu0 0
      %8280 = vmatprep.subr.bf16.mxu0 0
      %8281 = vmatpush1.bf16.msra.mxu0 0
      %8282 = vmatprep.subr.bf16.mxu0 0
      %8283 = vmatpush1.bf16.msra.mxu0 0
      %8284 = vmatprep.subr.bf16.mxu0 0
      %8285 = vmatpush1.bf16.msra.mxu0 0
      %8286 = vmatprep.mubr.bf16.mxu0 %v8240
      %8287 = vmatmul.mubr.bf16.gmra.mrb[0].mxu0 %v8149
      %v8288 = vpop.f32.mrb[0].mxu0
      %v8289 = vadd.f32 %v8182, %v8288
      %v8290 = vpop.f32.mrb[0].mxu0
      %v8291 = vpop.f32.mrb[0].mxu0
      %v8292 = vadd.f32 %v8182, %v8291
      %v8293 = vpop.f32.mrb[0].mxu0
      %8294 = vmatprep.mubr.bf16.mxu0 %v8243
      %8295 = vmatmul.mubr.bf16.gmra.mrb[0].mxu0 %v8151
      %v8296 = vpop.f32.mrb[0].mxu0
      %v8297 = vadd.f32 %v8182, %v8296
      %v8298 = vpop.f32.mrb[0].mxu0
      %v8299 = vpop.f32.mrb[0].mxu0
      %v8300 = vadd.f32 %v8182, %v8299
      %v8301 = vpop.f32.mrb[0].mxu0
      %8302 = vmatprep.mubr.bf16.mxu0 %v8246
      %8303 = vmatmul.mubr.bf16.gmra.mrb[0].mxu0 %v8153
      %v8304 = vpop.f32.mrb[0].mxu0
      %v8305 = vadd.f32 %v8182, %v8304
      %v8306 = vpop.f32.mrb[0].mxu0
      %v8307 = vpop.f32.mrb[0].mxu0
      %v8308 = vadd.f32 %v8182, %v8307
      %v8309 = vpop.f32.mrb[0].mxu0
      %8310 = vmatprep.mubr.bf16.mxu0 %v8249
      %8311 = vmatmul.mubr.bf16.gmra.mrb[0].mxu0 %v8155
      %v8312 = vpop.f32.mrb[0].mxu0
      %v8313 = vadd.f32 %v8182, %v8312
      %v8314 = vpop.f32.mrb[0].mxu0
      %v8315 = vpop.f32.mrb[0].mxu0
      %v8316 = vadd.f32 %v8182, %v8315
      %v8317 = vpop.f32.mrb[0].mxu0
      %8318 = vmatprep.mubr.bf16.mxu0 %v8252
      %8319 = vmatmul.mubr.bf16.gmra.mrb[0].mxu0 %v8157
      %v8320 = vpop.f32.mrb[0].mxu0
      %v8321 = vadd.f32 %v8182, %v8320
      %v8322 = vpop.f32.mrb[0].mxu0
      %v8323 = vpop.f32.mrb[0].mxu0
      %v8324 = vadd.f32 %v8182, %v8323
      %v8325 = vpop.f32.mrb[0].mxu0
      %8326 = vdwg.mxu0
      %v8327 = vmax.f32 %v8289, 0.0
      %v8328 = vmax.f32 %v8292, 0.0
      %v8329 = vmax.f32 %v8297, 0.0
      %v8330 = vmax.f32 %v8300, 0.0
      %v8331 = vmax.f32 %v8305, 0.0
      %v8332 = vmax.f32 %v8308, 0.0
      %v8333 = vmax.f32 %v8313, 0.0
      %v8334 = vmax.f32 %v8316, 0.0
      %v8335 = vmax.f32 %v8321, 0.0
      %v8336 = vmax.f32 %v8324, 0.0
      %v8337 = vpack.c.bf16 %v8328, %v8327
      %v8338 = vpack.c.bf16 %v8330, %v8329
      %v8339 = vpack.c.bf16 %v8332, %v8331
      %v8340 = vpack.c.bf16 %v8334, %v8333
      %v8341 = vpack.c.bf16 %v8336, %v8335
      %v8342 = vld [vmem:[%s8] sm:$0x1]
      %v8343 = vld [vmem:[%s7] sm:$0xf]
      %v8344 = vld [vmem:[%s7 + $0x4] sm:$0xf]
      %v8345 = vld [vmem:[%s7 + $0x8] sm:$0xf]
      %v8346 = vld [vmem:[%s7 + $0xc] sm:$0xf]
      %v8347 = vld [vmem:[%s7 + $0x10] sm:$0xf]
      %v8348 = vld [vmem:[%s7 + $0x14] sm:$0xf]
      %v8349 = vld [vmem:[%s7 + $0x18] sm:$0xf]
      %v8350 = vld [vmem:[%s7 + $0x1c] sm:$0xf]
      %v8351 = vld [vmem:[%s7 + $0x20] sm:$0xf]
      %v8352 = vld [vmem:[%s7 + $0x24] sm:$0xf]
      %v8363 = vunpack.c.l.b16 %v8343
      %v8364 = vunpack.c.l.b16 %v8344
      %v8365 = vunpack.c.l.b16 %v8345
      %v8366 = vunpack.c.l.b16 %v8346
      %v8367 = vunpack.c.l.b16 %v8347
      %v8368 = vunpack.c.l.b16 %v8348
      %v8369 = vunpack.c.l.b16 %v8349
      %v8370 = vunpack.c.l.b16 %v8350
      %v8371 = vunpack.c.l.b16 %v8351
      %v8372 = vunpack.c.l.b16 %v8352
      %v8373 = vpack.c.b16 %v8364, %v8363
      %v8374 = vpack.c.b16 %v8366, %v8365
      %v8375 = vpack.c.b16 %v8368, %v8367
      %v8376 = vpack.c.b16 %v8370, %v8369
      %v8377 = vpack.c.b16 %v8372, %v8371
      %vm8383 = vcmask 654336
      %v8385 = vsel %vm8383, %v8337, 0
      %8387 = vmatprep.subr.bf16.mxu0 0
      %8388 = vmatpush1.bf16.msra.mxu0 %v8373
      %8389 = vmatprep.subr.bf16.mxu0 0
      %8390 = vmatpush1.bf16.msra.mxu0 %v8374
      %8391 = vmatprep.subr.bf16.mxu0 0
      %8392 = vmatpush1.bf16.msra.mxu0 %v8375
      %8393 = vmatprep.subr.bf16.mxu0 0
      %8394 = vmatpush1.bf16.msra.mxu0 %v8376
      %8395 = vmatprep.subr.bf16.mxu0 0
      %8396 = vmatpush1.bf16.msra.mxu0 %v8377
      %8397 = vmatprep.subr.bf16.mxu0 0
      %8398 = vmatpush1.bf16.msra.mxu0 0
      %8399 = vmatprep.subr.bf16.mxu0 0
      %8400 = vmatpush1.bf16.msra.mxu0 0
      %8401 = vmatprep.subr.bf16.mxu0 0
      %8402 = vmatpush1.bf16.msra.mxu0 0
      %8403 = vmatprep.subr.bf16.mxu0 0
      %8404 = vmatpush1.bf16.msra.mxu0 0
      %8405 = vmatprep.subr.bf16.mxu0 0
      %8406 = vmatpush1.bf16.msra.mxu0 0
      %8407 = vmatprep.subr.bf16.mxu0 0
      %8408 = vmatpush1.bf16.msra.mxu0 0
      %8409 = vmatprep.subr.bf16.mxu0 0
      %8410 = vmatpush1.bf16.msra.mxu0 0
      %8411 = vmatprep.subr.bf16.mxu0 0
      %8412 = vmatpush1.bf16.msra.mxu0 0
      %8413 = vmatprep.subr.bf16.mxu0 0
      %8414 = vmatpush1.bf16.msra.mxu0 0
      %8415 = vmatprep.subr.bf16.mxu0 0
      %8416 = vmatpush1.bf16.msra.mxu0 0
      %8417 = vmatprep.subr.bf16.mxu0 0
      %8418 = vmatpush1.bf16.msra.mxu0 0
      %8419 = vmatprep.mubr.bf16.mxu0 0
      %8420 = vmatmul.mubr.bf16.gmra.mrb[0].mxu0 %v8385
      %v8421 = vpop.f32.mrb[0].mxu0
      %v8422 = vadd.f32 0.0, %v8421
      %v8423 = vpop.f32.mrb[0].mxu0
      %v8424 = vpop.f32.mrb[0].mxu0
      %v8425 = vadd.f32 0.0, %v8424
      %v8426 = vpop.f32.mrb[0].mxu0
      %8427 = vdwg.mxu0
      %v8429 = vlaneseq
      %v8430 = vshrl.u32 %v8429, 7
      %v8431 = vsub.s32 0, %v8430
      %v8432 = vrot.slane %v8342, %v8431
      %v8434 = vadd.f32 %v8432, %v8422
      %v8435 = vadd.f32 %v8432, %v8425
      %s8436 = scalar_lea.vmem %s7, 40
      %v8437 = vld [vmem:[%s8436] sm:$0xf]
      %v8438 = vld [vmem:[%s8436 + $0x4] sm:$0xf]
      %v8439 = vld [vmem:[%s8436 + $0x8] sm:$0xf]
      %v8440 = vld [vmem:[%s8436 + $0xc] sm:$0xf]
      %v8441 = vld [vmem:[%s8436 + $0x10] sm:$0xf]
      %v8442 = vld [vmem:[%s8436 + $0x14] sm:$0xf]
      %v8443 = vld [vmem:[%s8436 + $0x18] sm:$0xf]
      %v8444 = vld [vmem:[%s8436 + $0x1c] sm:$0xf]
      %v8445 = vld [vmem:[%s8436 + $0x20] sm:$0xf]
      %v8446 = vld [vmem:[%s8436 + $0x24] sm:$0xf]
      %v8457 = vunpack.c.l.b16 %v8437
      %v8458 = vunpack.c.l.b16 %v8438
      %v8459 = vunpack.c.l.b16 %v8439
      %v8460 = vunpack.c.l.b16 %v8440
      %v8461 = vunpack.c.l.b16 %v8441
      %v8462 = vunpack.c.l.b16 %v8442
      %v8463 = vunpack.c.l.b16 %v8443
      %v8464 = vunpack.c.l.b16 %v8444
      %v8465 = vunpack.c.l.b16 %v8445
      %v8466 = vunpack.c.l.b16 %v8446
      %v8467 = vpack.c.b16 %v8458, %v8457
      %v8468 = vpack.c.b16 %v8460, %v8459
      %v8469 = vpack.c.b16 %v8462, %v8461
      %v8470 = vpack.c.b16 %v8464, %v8463
      %v8471 = vpack.c.b16 %v8466, %v8465
      %v8478 = vsel %vm8383, %v8338, 0
      %8480 = vmatprep.subr.bf16.mxu0 0
      %8481 = vmatpush1.bf16.msra.mxu0 %v8467
      %8482 = vmatprep.subr.bf16.mxu0 0
      %8483 = vmatpush1.bf16.msra.mxu0 %v8468
      %8484 = vmatprep.subr.bf16.mxu0 0
      %8485 = vmatpush1.bf16.msra.mxu0 %v8469
      %8486 = vmatprep.subr.bf16.mxu0 0
      %8487 = vmatpush1.bf16.msra.mxu0 %v8470
      %8488 = vmatprep.subr.bf16.mxu0 0
      %8489 = vmatpush1.bf16.msra.mxu0 %v8471
      %8490 = vmatprep.subr.bf16.mxu0 0
      %8491 = vmatpush1.bf16.msra.mxu0 0
      %8492 = vmatprep.subr.bf16.mxu0 0
      %8493 = vmatpush1.bf16.msra.mxu0 0
      %8494 = vmatprep.subr.bf16.mxu0 0
      %8495 = vmatpush1.bf16.msra.mxu0 0
      %8496 = vmatprep.subr.bf16.mxu0 0
      %8497 = vmatpush1.bf16.msra.mxu0 0
      %8498 = vmatprep.subr.bf16.mxu0 0
      %8499 = vmatpush1.bf16.msra.mxu0 0
      %8500 = vmatprep.subr.bf16.mxu0 0
      %8501 = vmatpush1.bf16.msra.mxu0 0
      %8502 = vmatprep.subr.bf16.mxu0 0
      %8503 = vmatpush1.bf16.msra.mxu0 0
      %8504 = vmatprep.subr.bf16.mxu0 0
      %8505 = vmatpush1.bf16.msra.mxu0 0
      %8506 = vmatprep.subr.bf16.mxu0 0
      %8507 = vmatpush1.bf16.msra.mxu0 0
      %8508 = vmatprep.subr.bf16.mxu0 0
      %8509 = vmatpush1.bf16.msra.mxu0 0
      %8510 = vmatprep.subr.bf16.mxu0 0
      %8511 = vmatpush1.bf16.msra.mxu0 0
      %8512 = vmatprep.mubr.bf16.mxu0 0
      %8513 = vmatmul.mubr.bf16.gmra.mrb[0].mxu0 %v8478
      %v8514 = vpop.f32.mrb[0].mxu0
      %v8515 = vadd.f32 0.0, %v8514
      %v8516 = vpop.f32.mrb[0].mxu0
      %v8517 = vpop.f32.mrb[0].mxu0
      %v8518 = vadd.f32 0.0, %v8517
      %v8519 = vpop.f32.mrb[0].mxu0
      %8520 = vdwg.mxu0
      %v8521 = vadd.f32 %v8434, %v8515
      %v8522 = vadd.f32 %v8435, %v8518
      %s8523 = scalar_lea.vmem %s7, 80
      %v8524 = vld [vmem:[%s8523] sm:$0xf]
      %v8525 = vld [vmem:[%s8523 + $0x4] sm:$0xf]
      %v8526 = vld [vmem:[%s8523 + $0x8] sm:$0xf]
      %v8527 = vld [vmem:[%s8523 + $0xc] sm:$0xf]
      %v8528 = vld [vmem:[%s8523 + $0x10] sm:$0xf]
      %v8529 = vld [vmem:[%s8523 + $0x14] sm:$0xf]
      %v8530 = vld [vmem:[%s8523 + $0x18] sm:$0xf]
      %v8531 = vld [vmem:[%s8523 + $0x1c] sm:$0xf]
      %v8532 = vld [vmem:[%s8523 + $0x20] sm:$0xf]
      %v8533 = vld [vmem:[%s8523 + $0x24] sm:$0xf]
      %v8544 = vunpack.c.l.b16 %v8524
      %v8545 = vunpack.c.l.b16 %v8525
      %v8546 = vunpack.c.l.b16 %v8526
      %v8547 = vunpack.c.l.b16 %v8527
      %v8548 = vunpack.c.l.b16 %v8528
      %v8549 = vunpack.c.l.b16 %v8529
      %v8550 = vunpack.c.l.b16 %v8530
      %v8551 = vunpack.c.l.b16 %v8531
      %v8552 = vunpack.c.l.b16 %v8532
      %v8553 = vunpack.c.l.b16 %v8533
      %v8554 = vpack.c.b16 %v8545, %v8544
      %v8555 = vpack.c.b16 %v8547, %v8546
      %v8556 = vpack.c.b16 %v8549, %v8548
      %v8557 = vpack.c.b16 %v8551, %v8550
      %v8558 = vpack.c.b16 %v8553, %v8552
      %v8565 = vsel %vm8383, %v8339, 0
      %8567 = vmatprep.subr.bf16.mxu0 0
      %8568 = vmatpush1.bf16.msra.mxu0 %v8554
      %8569 = vmatprep.subr.bf16.mxu0 0
      %8570 = vmatpush1.bf16.msra.mxu0 %v8555
      %8571 = vmatprep.subr.bf16.mxu0 0
      %8572 = vmatpush1.bf16.msra.mxu0 %v8556
      %8573 = vmatprep.subr.bf16.mxu0 0
      %8574 = vmatpush1.bf16.msra.mxu0 %v8557
      %8575 = vmatprep.subr.bf16.mxu0 0
      %8576 = vmatpush1.bf16.msra.mxu0 %v8558
      %8577 = vmatprep.subr.bf16.mxu0 0
      %8578 = vmatpush1.bf16.msra.mxu0 0
      %8579 = vmatprep.subr.bf16.mxu0 0
      %8580 = vmatpush1.bf16.msra.mxu0 0
      %8581 = vmatprep.subr.bf16.mxu0 0
      %8582 = vmatpush1.bf16.msra.mxu0 0
      %8583 = vmatprep.subr.bf16.mxu0 0
      %8584 = vmatpush1.bf16.msra.mxu0 0
      %8585 = vmatprep.subr.bf16.mxu0 0
      %8586 = vmatpush1.bf16.msra.mxu0 0
      %8587 = vmatprep.subr.bf16.mxu0 0
      %8588 = vmatpush1.bf16.msra.mxu0 0
      %8589 = vmatprep.subr.bf16.mxu0 0
      %8590 = vmatpush1.bf16.msra.mxu0 0
      %8591 = vmatprep.subr.bf16.mxu0 0
      %8592 = vmatpush1.bf16.msra.mxu0 0
      %8593 = vmatprep.subr.bf16.mxu0 0
      %8594 = vmatpush1.bf16.msra.mxu0 0
      %8595 = vmatprep.subr.bf16.mxu0 0
      %8596 = vmatpush1.bf16.msra.mxu0 0
      %8597 = vmatprep.subr.bf16.mxu0 0
      %8598 = vmatpush1.bf16.msra.mxu0 0
      %8599 = vmatprep.mubr.bf16.mxu0 0
      %8600 = vmatmul.mubr.bf16.gmra.mrb[0].mxu0 %v8565
      %v8601 = vpop.f32.mrb[0].mxu0
      %v8602 = vadd.f32 0.0, %v8601
      %v8603 = vpop.f32.mrb[0].mxu0
      %v8604 = vpop.f32.mrb[0].mxu0
      %v8605 = vadd.f32 0.0, %v8604
      %v8606 = vpop.f32.mrb[0].mxu0
      %8607 = vdwg.mxu0
      %v8608 = vadd.f32 %v8521, %v8602
      %v8609 = vadd.f32 %v8522, %v8605
      %s8610 = scalar_lea.vmem %s7, 120
      %v8611 = vld [vmem:[%s8610] sm:$0xf]
      %v8612 = vld [vmem:[%s8610 + $0x4] sm:$0xf]
      %v8613 = vld [vmem:[%s8610 + $0x8] sm:$0xf]
      %v8614 = vld [vmem:[%s8610 + $0xc] sm:$0xf]
      %v8615 = vld [vmem:[%s8610 + $0x10] sm:$0xf]
      %v8616 = vld [vmem:[%s8610 + $0x14] sm:$0xf]
      %v8617 = vld [vmem:[%s8610 + $0x18] sm:$0xf]
      %v8618 = vld [vmem:[%s8610 + $0x1c] sm:$0xf]
      %v8619 = vld [vmem:[%s8610 + $0x20] sm:$0xf]
      %v8620 = vld [vmem:[%s8610 + $0x24] sm:$0xf]
      %v8631 = vunpack.c.l.b16 %v8611
      %v8632 = vunpack.c.l.b16 %v8612
      %v8633 = vunpack.c.l.b16 %v8613
      %v8634 = vunpack.c.l.b16 %v8614
      %v8635 = vunpack.c.l.b16 %v8615
      %v8636 = vunpack.c.l.b16 %v8616
      %v8637 = vunpack.c.l.b16 %v8617
      %v8638 = vunpack.c.l.b16 %v8618
      %v8639 = vunpack.c.l.b16 %v8619
      %v8640 = vunpack.c.l.b16 %v8620
      %v8641 = vpack.c.b16 %v8632, %v8631
      %v8642 = vpack.c.b16 %v8634, %v8633
      %v8643 = vpack.c.b16 %v8636, %v8635
      %v8644 = vpack.c.b16 %v8638, %v8637
      %v8645 = vpack.c.b16 %v8640, %v8639
      %v8652 = vsel %vm8383, %v8340, 0
      %8654 = vmatprep.subr.bf16.mxu0 0
      %8655 = vmatpush1.bf16.msra.mxu0 %v8641
      %8656 = vmatprep.subr.bf16.mxu0 0
      %8657 = vmatpush1.bf16.msra.mxu0 %v8642
      %8658 = vmatprep.subr.bf16.mxu0 0
      %8659 = vmatpush1.bf16.msra.mxu0 %v8643
      %8660 = vmatprep.subr.bf16.mxu0 0
      %8661 = vmatpush1.bf16.msra.mxu0 %v8644
      %8662 = vmatprep.subr.bf16.mxu0 0
      %8663 = vmatpush1.bf16.msra.mxu0 %v8645
      %8664 = vmatprep.subr.bf16.mxu0 0
      %8665 = vmatpush1.bf16.msra.mxu0 0
      %8666 = vmatprep.subr.bf16.mxu0 0
      %8667 = vmatpush1.bf16.msra.mxu0 0
      %8668 = vmatprep.subr.bf16.mxu0 0
      %8669 = vmatpush1.bf16.msra.mxu0 0
      %8670 = vmatprep.subr.bf16.mxu0 0
      %8671 = vmatpush1.bf16.msra.mxu0 0
      %8672 = vmatprep.subr.bf16.mxu0 0
      %8673 = vmatpush1.bf16.msra.mxu0 0
      %8674 = vmatprep.subr.bf16.mxu0 0
      %8675 = vmatpush1.bf16.msra.mxu0 0
      %8676 = vmatprep.subr.bf16.mxu0 0
      %8677 = vmatpush1.bf16.msra.mxu0 0
      %8678 = vmatprep.subr.bf16.mxu0 0
      %8679 = vmatpush1.bf16.msra.mxu0 0
      %8680 = vmatprep.subr.bf16.mxu0 0
      %8681 = vmatpush1.bf16.msra.mxu0 0
      %8682 = vmatprep.subr.bf16.mxu0 0
      %8683 = vmatpush1.bf16.msra.mxu0 0
      %8684 = vmatprep.subr.bf16.mxu0 0
      %8685 = vmatpush1.bf16.msra.mxu0 0
      %8686 = vmatprep.mubr.bf16.mxu0 0
      %8687 = vmatmul.mubr.bf16.gmra.mrb[0].mxu0 %v8652
      %v8688 = vpop.f32.mrb[0].mxu0
      %v8689 = vadd.f32 0.0, %v8688
      %v8690 = vpop.f32.mrb[0].mxu0
      %v8691 = vpop.f32.mrb[0].mxu0
      %v8692 = vadd.f32 0.0, %v8691
      %v8693 = vpop.f32.mrb[0].mxu0
      %8694 = vdwg.mxu0
      %v8695 = vadd.f32 %v8608, %v8689
      %v8696 = vadd.f32 %v8609, %v8692
      %s8697 = scalar_lea.vmem %s7, 160
      %v8698 = vld [vmem:[%s8697] sm:$0xf]
      %v8699 = vld [vmem:[%s8697 + $0x4] sm:$0xf]
      %v8700 = vld [vmem:[%s8697 + $0x8] sm:$0xf]
      %v8701 = vld [vmem:[%s8697 + $0xc] sm:$0xf]
      %v8702 = vld [vmem:[%s8697 + $0x10] sm:$0xf]
      %v8703 = vld [vmem:[%s8697 + $0x14] sm:$0xf]
      %v8704 = vld [vmem:[%s8697 + $0x18] sm:$0xf]
      %v8705 = vld [vmem:[%s8697 + $0x1c] sm:$0xf]
      %v8706 = vld [vmem:[%s8697 + $0x20] sm:$0xf]
      %v8707 = vld [vmem:[%s8697 + $0x24] sm:$0xf]
      %v8718 = vunpack.c.l.b16 %v8698
      %v8719 = vunpack.c.l.b16 %v8699
      %v8720 = vunpack.c.l.b16 %v8700
      %v8721 = vunpack.c.l.b16 %v8701
      %v8722 = vunpack.c.l.b16 %v8702
      %v8723 = vunpack.c.l.b16 %v8703
      %v8724 = vunpack.c.l.b16 %v8704
      %v8725 = vunpack.c.l.b16 %v8705
      %v8726 = vunpack.c.l.b16 %v8706
      %v8727 = vunpack.c.l.b16 %v8707
      %v8728 = vpack.c.b16 %v8719, %v8718
      %v8729 = vpack.c.b16 %v8721, %v8720
      %v8730 = vpack.c.b16 %v8723, %v8722
      %v8731 = vpack.c.b16 %v8725, %v8724
      %v8732 = vpack.c.b16 %v8727, %v8726
      %v8739 = vsel %vm8383, %v8341, 0
      %8741 = vmatprep.subr.bf16.mxu0 0
      %8742 = vmatpush1.bf16.msra.mxu0 %v8728
      %8743 = vmatprep.subr.bf16.mxu0 0
      %8744 = vmatpush1.bf16.msra.mxu0 %v8729
      %8745 = vmatprep.subr.bf16.mxu0 0
      %8746 = vmatpush1.bf16.msra.mxu0 %v8730
      %8747 = vmatprep.subr.bf16.mxu0 0
      %8748 = vmatpush1.bf16.msra.mxu0 %v8731
      %8749 = vmatprep.subr.bf16.mxu0 0
      %8750 = vmatpush1.bf16.msra.mxu0 %v8732
      %8751 = vmatprep.subr.bf16.mxu0 0
      %8752 = vmatpush1.bf16.msra.mxu0 0
      %8753 = vmatprep.subr.bf16.mxu0 0
      %8754 = vmatpush1.bf16.msra.mxu0 0
      %8755 = vmatprep.subr.bf16.mxu0 0
      %8756 = vmatpush1.bf16.msra.mxu0 0
      %8757 = vmatprep.subr.bf16.mxu0 0
      %8758 = vmatpush1.bf16.msra.mxu0 0
      %8759 = vmatprep.subr.bf16.mxu0 0
      %8760 = vmatpush1.bf16.msra.mxu0 0
      %8761 = vmatprep.subr.bf16.mxu0 0
      %8762 = vmatpush1.bf16.msra.mxu0 0
      %8763 = vmatprep.subr.bf16.mxu0 0
      %8764 = vmatpush1.bf16.msra.mxu0 0
      %8765 = vmatprep.subr.bf16.mxu0 0
      %8766 = vmatpush1.bf16.msra.mxu0 0
      %8767 = vmatprep.subr.bf16.mxu0 0
      %8768 = vmatpush1.bf16.msra.mxu0 0
      %8769 = vmatprep.subr.bf16.mxu0 0
      %8770 = vmatpush1.bf16.msra.mxu0 0
      %8771 = vmatprep.subr.bf16.mxu0 0
      %8772 = vmatpush1.bf16.msra.mxu0 0
      %8773 = vmatprep.mubr.bf16.mxu0 0
      %8774 = vmatmul.mubr.bf16.gmra.mrb[0].mxu0 %v8739
      %v8775 = vpop.f32.mrb[0].mxu0
      %v8776 = vadd.f32 0.0, %v8775
      %v8777 = vpop.f32.mrb[0].mxu0
      %v8778 = vpop.f32.mrb[0].mxu0
      %v8779 = vadd.f32 0.0, %v8778
      %v8780 = vpop.f32.mrb[0].mxu0
      %8781 = vdwg.mxu0
      %v8782 = vadd.f32 %v8695, %v8776
      %v8783 = vadd.f32 %v8696, %v8779
      %v8784 = vmax.f32 %v8782, 0.0
      %v8785 = vmax.f32 %v8783, 0.0
      %v8786 = vpack.c.bf16 %v8785, %v8784
      %v8787 = vld [vmem:[%s9] sm:$0xf]
      %v8788 = vld [vmem:[%s9 + $0x4] sm:$0xf]
      %v8789 = vld [vmem:[%s9 + $0x8] sm:$0xf]
      %v8790 = vld [vmem:[%s9 + $0xc] sm:$0xf]
      %v8791 = vld [vmem:[%s9 + $0x10] sm:$0xf]
      %v8792 = vld [vmem:[%s9 + $0x14] sm:$0xf]
      %v8793 = vld [vmem:[%s9 + $0x18] sm:$0xf]
      %v8794 = vld [vmem:[%s9 + $0x1c] sm:$0xf]
      %v8795 = vld [vmem:[%s9 + $0x20] sm:$0xf]
      %v8796 = vld [vmem:[%s9 + $0x24] sm:$0xf]
      %v8797 = vld [vmem:[%s9 + $0x28] sm:$0xf]
      %v8798 = vld [vmem:[%s9 + $0x2c] sm:$0xf]
      %v8799 = vld [vmem:[%s9 + $0x30] sm:$0xf]
      %v8800 = vld [vmem:[%s9 + $0x34] sm:$0xf]
      %v8801 = vld [vmem:[%s9 + $0x38] sm:$0xf]
      %v8802 = vld [vmem:[%s9 + $0x3c] sm:$0xf]
      %v8803 = vld [vmem:[%s10] sm:$0x1]
      %v8805 = vlaneseq
      %v8806 = vshrl.u32 %v8805, 7
      %v8807 = vsub.s32 0, %v8806
      %v8808 = vrot.slane %v8803, %v8807
      %v8826 = vunpack.c.l.b16 %v8787
      %v8827 = vunpack.c.l.b16 %v8788
      %v8828 = vunpack.c.l.b16 %v8789
      %v8829 = vunpack.c.l.b16 %v8790
      %v8830 = vunpack.c.l.b16 %v8791
      %v8831 = vunpack.c.l.b16 %v8792
      %v8832 = vunpack.c.l.b16 %v8793
      %v8833 = vunpack.c.l.b16 %v8794
      %v8834 = vunpack.c.l.b16 %v8795
      %v8835 = vunpack.c.l.b16 %v8796
      %v8836 = vunpack.c.l.b16 %v8797
      %v8837 = vunpack.c.l.b16 %v8798
      %v8838 = vunpack.c.l.b16 %v8799
      %v8839 = vunpack.c.l.b16 %v8800
      %v8840 = vunpack.c.l.b16 %v8801
      %v8841 = vunpack.c.l.b16 %v8802
      %v8842 = vpack.c.b16 %v8827, %v8826
      %v8843 = vpack.c.b16 %v8829, %v8828
      %v8844 = vpack.c.b16 %v8831, %v8830
      %v8845 = vpack.c.b16 %v8833, %v8832
      %v8846 = vpack.c.b16 %v8835, %v8834
      %v8847 = vpack.c.b16 %v8837, %v8836
      %v8848 = vpack.c.b16 %v8839, %v8838
      %v8849 = vpack.c.b16 %v8841, %v8840
      %8858 = vmatprep.subr.bf16.mxu0 0
      %8859 = vmatpush1.bf16.msra.mxu0 %v8842
      %8860 = vmatprep.subr.bf16.mxu0 0
      %8861 = vmatpush1.bf16.msra.mxu0 %v8843
      %8862 = vmatprep.subr.bf16.mxu0 0
      %8863 = vmatpush1.bf16.msra.mxu0 %v8844
      %8864 = vmatprep.subr.bf16.mxu0 0
      %8865 = vmatpush1.bf16.msra.mxu0 %v8845
      %8866 = vmatprep.subr.bf16.mxu0 0
      %8867 = vmatpush1.bf16.msra.mxu0 %v8846
      %8868 = vmatprep.subr.bf16.mxu0 0
      %8869 = vmatpush1.bf16.msra.mxu0 %v8847
      %8870 = vmatprep.subr.bf16.mxu0 0
      %8871 = vmatpush1.bf16.msra.mxu0 %v8848
      %8872 = vmatprep.subr.bf16.mxu0 0
      %8873 = vmatpush1.bf16.msra.mxu0 %v8849
      %8874 = vmatprep.subr.bf16.mxu0 0
      %8875 = vmatpush1.bf16.msra.mxu0 0
      %8876 = vmatprep.subr.bf16.mxu0 0
      %8877 = vmatpush1.bf16.msra.mxu0 0
      %8878 = vmatprep.subr.bf16.mxu0 0
      %8879 = vmatpush1.bf16.msra.mxu0 0
      %8880 = vmatprep.subr.bf16.mxu0 0
      %8881 = vmatpush1.bf16.msra.mxu0 0
      %8882 = vmatprep.subr.bf16.mxu0 0
      %8883 = vmatpush1.bf16.msra.mxu0 0
      %8884 = vmatprep.subr.bf16.mxu0 0
      %8885 = vmatpush1.bf16.msra.mxu0 0
      %8886 = vmatprep.subr.bf16.mxu0 0
      %8887 = vmatpush1.bf16.msra.mxu0 0
      %8888 = vmatprep.subr.bf16.mxu0 0
      %8889 = vmatpush1.bf16.msra.mxu0 0
      %8890 = vmatprep.mubr.bf16.mxu0 0
      %8891 = vmatmul.mubr.bf16.gmra.mrb[0].mxu0 %v8786
      %v8892 = vpop.f32.mrb[0].mxu0
      %v8893 = vadd.f32 %v8808, %v8892
      %v8894 = vpop.f32.mrb[0].mxu0
      %v8895 = vpop.f32.mrb[0].mxu0
      %v8896 = vadd.f32 %v8808, %v8895
      %v8897 = vpop.f32.mrb[0].mxu0
      %8898 = vdwg.mxu0
      %v8899 = vmax.f32 %v8893, 0.0
      %v8900 = vmax.f32 %v8896, 0.0
      %v8901 = vpack.c.bf16 %v8900, %v8899
      %v8902 = vld [vmem:[%s11] sm:$0xf]
      %v8903 = vld [vmem:[%s11 + $0x4] sm:$0xf]
      %v8904 = vld [vmem:[%s11 + $0x8] sm:$0xf]
      %v8905 = vld [vmem:[%s11 + $0xc] sm:$0xf]
      %v8906 = vld [vmem:[%s11 + $0x10] sm:$0xf]
      %v8907 = vld [vmem:[%s11 + $0x14] sm:$0xf]
      %v8908 = vld [vmem:[%s11 + $0x18] sm:$0xf]
      %v8909 = vld [vmem:[%s11 + $0x1c] sm:$0xf]
      %v8910 = vld [vmem:[%s11 + $0x20] sm:$0xf]
      %v8911 = vld [vmem:[%s11 + $0x24] sm:$0xf]
      %v8912 = vld [vmem:[%s11 + $0x28] sm:$0xf]
      %v8913 = vld [vmem:[%s11 + $0x2c] sm:$0xf]
      %v8914 = vld [vmem:[%s11 + $0x30] sm:$0xf]
      %v8915 = vld [vmem:[%s11 + $0x34] sm:$0xf]
      %v8916 = vld [vmem:[%s11 + $0x38] sm:$0xf]
      %v8917 = vld [vmem:[%s11 + $0x3c] sm:$0xf]
      %v8918 = vld [vmem:[%s12] sm:$0x1]
      %v8920 = vlaneseq
      %v8921 = vshrl.u32 %v8920, 7
      %v8922 = vsub.s32 0, %v8921
      %v8923 = vrot.slane %v8918, %v8922
      %v8941 = vunpack.c.l.b16 %v8902
      %v8942 = vunpack.c.l.b16 %v8903
      %v8943 = vunpack.c.l.b16 %v8904
      %v8944 = vunpack.c.l.b16 %v8905
      %v8945 = vunpack.c.l.b16 %v8906
      %v8946 = vunpack.c.l.b16 %v8907
      %v8947 = vunpack.c.l.b16 %v8908
      %v8948 = vunpack.c.l.b16 %v8909
      %v8949 = vunpack.c.l.b16 %v8910
      %v8950 = vunpack.c.l.b16 %v8911
      %v8951 = vunpack.c.l.b16 %v8912
      %v8952 = vunpack.c.l.b16 %v8913
      %v8953 = vunpack.c.l.b16 %v8914
      %v8954 = vunpack.c.l.b16 %v8915
      %v8955 = vunpack.c.l.b16 %v8916
      %v8956 = vunpack.c.l.b16 %v8917
      %v8957 = vpack.c.b16 %v8942, %v8941
      %v8958 = vpack.c.b16 %v8944, %v8943
      %v8959 = vpack.c.b16 %v8946, %v8945
      %v8960 = vpack.c.b16 %v8948, %v8947
      %v8961 = vpack.c.b16 %v8950, %v8949
      %v8962 = vpack.c.b16 %v8952, %v8951
      %v8963 = vpack.c.b16 %v8954, %v8953
      %v8964 = vpack.c.b16 %v8956, %v8955
      %8973 = vmatprep.subr.bf16.mxu0 0
      %8974 = vmatpush1.bf16.msra.mxu0 %v8957
      %8975 = vmatprep.subr.bf16.mxu0 0
      %8976 = vmatpush1.bf16.msra.mxu0 %v8958
      %8977 = vmatprep.subr.bf16.mxu0 0
      %8978 = vmatpush1.bf16.msra.mxu0 %v8959
      %8979 = vmatprep.subr.bf16.mxu0 0
      %8980 = vmatpush1.bf16.msra.mxu0 %v8960
      %8981 = vmatprep.subr.bf16.mxu0 0
      %8982 = vmatpush1.bf16.msra.mxu0 %v8961
      %8983 = vmatprep.subr.bf16.mxu0 0
      %8984 = vmatpush1.bf16.msra.mxu0 %v8962
      %8985 = vmatprep.subr.bf16.mxu0 0
      %8986 = vmatpush1.bf16.msra.mxu0 %v8963
      %8987 = vmatprep.subr.bf16.mxu0 0
      %8988 = vmatpush1.bf16.msra.mxu0 %v8964
      %8989 = vmatprep.subr.bf16.mxu0 0
      %8990 = vmatpush1.bf16.msra.mxu0 0
      %8991 = vmatprep.subr.bf16.mxu0 0
      %8992 = vmatpush1.bf16.msra.mxu0 0
      %8993 = vmatprep.subr.bf16.mxu0 0
      %8994 = vmatpush1.bf16.msra.mxu0 0
      %8995 = vmatprep.subr.bf16.mxu0 0
      %8996 = vmatpush1.bf16.msra.mxu0 0
      %8997 = vmatprep.subr.bf16.mxu0 0
      %8998 = vmatpush1.bf16.msra.mxu0 0
      %8999 = vmatprep.subr.bf16.mxu0 0
      %9000 = vmatpush1.bf16.msra.mxu0 0
      %9001 = vmatprep.subr.bf16.mxu0 0
      %9002 = vmatpush1.bf16.msra.mxu0 0
      %9003 = vmatprep.subr.bf16.mxu0 0
      %9004 = vmatpush1.bf16.msra.mxu0 0
      %9005 = vmatprep.mubr.bf16.mxu0 0
      %9006 = vmatmul.mubr.bf16.gmra.mrb[0].mxu0 %v8901
      %v9007 = vpop.f32.mrb[0].mxu0
      %v9008 = vadd.f32 %v8923, %v9007
      %v9009 = vpop.f32.mrb[0].mxu0
      %v9010 = vpop.f32.mrb[0].mxu0
      %v9011 = vadd.f32 %v8923, %v9010
      %v9012 = vpop.f32.mrb[0].mxu0
      %9013 = vdwg.mxu0
      %9014 = vst [vmem:[%s440] sm:$0xff] %v9008
      %9015 = vst [vmem:[%s440 + $0x8] sm:$0xff] %v9011
      %s9016 = smul.u32 2, %s24
      %p9017 = scmp.lt.s32.totalorder %s9016, 3
      %s9018 = scalar_select %p9017, %s9016, 3
      %s9019 = smul.addr %s9018, 8
      %s9020 = scalar_lea.vmem %s13, %s9019
      // Predicated region
      $region73: #{lenet_forward_packed.1} parent=71 // pred_check
        %p9021 = pneg %p320
      $region74: #{lenet_forward_packed.1} parent=71 // pred_check_branch
        %9023 = sbr.rel (%p9021) target = $region76
      $region75: #{lenet_forward_packed.1} parent=71 // pred_region
        %s9024 = smul.u32 2, %s24
      $region76: #{lenet_forward_packed.1} parent=71 // pred_fallthru
        _
    $region72: #{lenet_forward_packed.1} parent=5 // pred_fallthru
      _
    %p9025 = scmp.le.s32.totalorder 2, %s19
    // Predicated region
    $region77: #{lenet_forward_packed.1} parent=5 // pred_check
      %p9026 = pneg %p9025
    $region78: #{lenet_forward_packed.1} parent=5 // pred_check_branch
      %9028 = sbr.rel (%p9026) target = $region80
    $region79: #{lenet_forward_packed.1} parent=5 // pred_region
      %s9029 = ssub.s32 %s19, 2
      // Predicated region
      $region81: #{lenet_forward_packed.1} parent=79 // pred_check
        %p9030 = pneg %p326
      $region82: #{lenet_forward_packed.1} parent=79 // pred_check_branch
        %9032 = sbr.rel (%p9030) target = $region84
      $region83: #{lenet_forward_packed.1} parent=79 // pred_region
        %s9033 = smul.u32 2, %s25
        %p9034 = scmp.lt.s32.totalorder %s9033, 3
        %s9035 = scalar_select %p9034, %s9033, 3
        %s9036 = smul.addr %s9035, 8
        %s9037 = scalar_lea.vmem %s13, %s9036
      $region84: #{lenet_forward_packed.1} parent=79 // pred_fallthru
        _
    $region80: #{lenet_forward_packed.1} parent=5 // pred_fallthru
      _
  $region6: #{lenet_forward_packed.1} parent=0 // loop_footer
    %s23 = sadd.s32 1, %s19
  $region7: #{lenet_forward_packed.1} parent=0 // loop_footer_branch
    %18 = sbr.rel target = $region3
  $region8: #{lenet_forward_packed.1} parent=0 // loop_exit
    _

</llo_original>
